<compile_context>
chip_gen: v6e
topology: v6e:2x2x1
jax: 0.10.0
libtpu: 0.0.40
codegen_flags: <defaults>
</compile_context>

<pallas_src>
import math

import jax
import jax.numpy as jnp
from jax.experimental import pallas as pl
from jax.experimental.pallas import tpu as pltpu

D_MODEL = 128
NUM_HEADS = 4
HEAD_DIM = D_MODEL // NUM_HEADS
NUM_LAYERS = 2
FF_DIM = 256
LN_EPS = 1e-5
BN_EPS = 1e-5
MAX_LEN = 366
TARGET_ROWS = 1024                       # slab-row target for batch packing
VMEM_LIMIT_BYTES = 48 * 1024 * 1024      # safe on v5e/v6e (128 MiB) and v7x (64 MiB)


# ----------------------------- Pallas kernel --------------------------------

def _layernorm(x, gamma, beta):
    mean = jnp.mean(x, axis=-1, keepdims=True)
    var = jnp.mean((x - mean) ** 2, axis=-1, keepdims=True)
    return (x - mean) * jax.lax.rsqrt(var + LN_EPS) * gamma + beta


def _make_kernel(bt, seq):
    """Kernel for one grid step: bt batch elements, seq = T+1 rows each."""
    n_rows = bt * seq

    def _softmax(s):                     # softmax over last axis, f32 statistics
        s = s - jnp.max(s, axis=-1, keepdims=True)
        p = jnp.exp(s)
        return p * pl.reciprocal(jnp.sum(p, axis=-1, keepdims=True), approx=True)

    def kernel(x_ref,
               wq_ref, wk_ref, wv_ref, bq_ref, bk_ref, bv_ref,
               wo_ref, bo_ref, w1_ref, b1_ref, w2_ref, b2_ref,
               ln1w_ref, ln1b_ref, ln2w_ref, ln2b_ref,
               bns_ref, bnb_ref,
               out_ref):

        def attention(xq, xkv, n_q, l):
            # xq: (bt*n_q, D) bf16 query rows; xkv: (n_rows, D) bf16 key/value rows.
            # 1/sqrt(head_dim) is pre-folded into wq/bq host-side.
            q = jnp.dot(xq, wq_ref[l], preferred_element_type=jnp.float32) + bq_ref[l]
            k = jnp.dot(xkv, wk_ref[l], preferred_element_type=jnp.float32) + bk_ref[l]
            v = jnp.dot(xkv, wv_ref[l], preferred_element_type=jnp.float32) + bv_ref[l]
            q3 = q.astype(jnp.bfloat16).reshape(bt, n_q, D_MODEL)
            k3 = k.astype(jnp.bfloat16).reshape(bt, seq, D_MODEL)
            v3 = v.astype(jnp.bfloat16).reshape(bt, seq, D_MODEL)
            ctx = []
            for h in range(NUM_HEADS):                        # static, 4 iterations
                lo, hi = h * HEAD_DIM, (h + 1) * HEAD_DIM
                s = jnp.einsum('bqd,bkd->bqk', q3[:, :, lo:hi], k3[:, :, lo:hi],
                               preferred_element_type=jnp.float32)
                p = _softmax(s).astype(jnp.bfloat16)
                ctx.append(jnp.einsum('bqk,bkd->bqd', p, v3[:, :, lo:hi],
                                      preferred_element_type=jnp.float32)
                           .astype(jnp.bfloat16))
            # lane-concat heads, then ONE K=128 output-projection matmul
            ctx = jnp.concatenate(ctx, axis=-1).reshape(bt * n_q, D_MODEL)
            return jnp.dot(ctx, wo_ref[l],
                           preferred_element_type=jnp.float32) + bo_ref[l]

        def ffn(y, l):
            h1 = jnp.dot(y.astype(jnp.bfloat16), w1_ref[l],
                         preferred_element_type=jnp.float32) + b1_ref[l]
            h1 = jnp.maximum(h1, 0.0).astype(jnp.bfloat16)    # ReLU
            return jnp.dot(h1, w2_ref[l],
                           preferred_element_type=jnp.float32) + b2_ref[l]

        x = x_ref[0]                                          # (n_rows, D) f32

        # ---- layers 0 .. L-2: full-sequence post-norm encoder layers ----
        for l in range(NUM_LAYERS - 1):
            xb = x.astype(jnp.bfloat16)
            x = _layernorm(x + attention(xb, xb, seq, l), ln1w_ref[l], ln1b_ref[l])
            x = _layernorm(x + ffn(x, l), ln2w_ref[l], ln2b_ref[l])

        # ---- last layer: only CLS rows reach the output -> CLS-only queries / FFN ----
        l = NUM_LAYERS - 1
        x_cls = x.reshape(bt, seq, D_MODEL)[:, 0, :]          # (bt, D) strided slice
        attn = attention(x_cls.astype(jnp.bfloat16), x.astype(jnp.bfloat16), 1, l)
        y = _layernorm(x_cls + attn, ln1w_ref[l], ln1b_ref[l])
        y = _layernorm(y + ffn(y, l), ln2w_ref[l], ln2b_ref[l])

        # eval-mode BatchNorm1d folded into per-feature scale/bias; lane-dense store
        out_ref[0] = y * bns_ref[...] + bnb_ref[...]          # (bt, D)

    return kernel


# ------------------------------ JAX wrapper ----------------------------------

def make_pe(max_len, d_model):
    pos = jnp.arange(max_len, dtype=jnp.float32)[:, None]
    div = jnp.exp(jnp.arange(0, d_model, 2, dtype=jnp.float32)
                  * (-math.log(10000.0) / d_model))
    pe = jnp.zeros((max_len, d_model), jnp.float32)
    pe = pe.at[:, 0::2].set(jnp.sin(pos * div))
    pe = pe.at[:, 1::2].set(jnp.cos(pos * div))
    return pe


def init_params(key):
    ks = jax.random.split(key, 9)

    def w(k, shape, scale=0.05):
        return jax.random.normal(k, shape, jnp.float32) * scale

    return dict(
        cls_token=jax.random.normal(ks[0], (1, 1, D_MODEL), jnp.float32),
        pe=make_pe(MAX_LEN, D_MODEL),
        in_proj_w=w(ks[1], (NUM_LAYERS, 3 * D_MODEL, D_MODEL)),
        in_proj_b=w(ks[2], (NUM_LAYERS, 3 * D_MODEL)),
        out_proj_w=w(ks[3], (NUM_LAYERS, D_MODEL, D_MODEL)),
        out_proj_b=w(ks[4], (NUM_LAYERS, D_MODEL)),
        lin1_w=w(ks[5], (NUM_LAYERS, FF_DIM, D_MODEL)),
        lin1_b=w(ks[6], (NUM_LAYERS, FF_DIM)),
        lin2_w=w(ks[7], (NUM_LAYERS, D_MODEL, FF_DIM)),
        lin2_b=w(ks[8], (NUM_LAYERS, D_MODEL)),
        ln1_w=jnp.ones((NUM_LAYERS, D_MODEL), jnp.float32),
        ln1_b=jnp.zeros((NUM_LAYERS, D_MODEL), jnp.float32),
        ln2_w=jnp.ones((NUM_LAYERS, D_MODEL), jnp.float32),
        ln2_b=jnp.zeros((NUM_LAYERS, D_MODEL), jnp.float32),
        # BatchNorm1d at init (eval mode uses running stats)
        bn_gamma=jnp.ones((D_MODEL,), jnp.float32),
        bn_beta=jnp.zeros((D_MODEL,), jnp.float32),
        bn_mean=jnp.zeros((D_MODEL,), jnp.float32),
        bn_var=jnp.ones((D_MODEL,), jnp.float32),
    )


def _pick_bt(batch, seq):
    """Batch elements per grid step: target ~TARGET_ROWS slab rows, but prefer >=2
    grid steps so the parallel grid axis can use both v7x TensorCores."""
    bt = max(1, min(batch, TARGET_ROWS // seq))
    if bt >= batch and batch > 1:
        bt = (batch + 1) // 2
    return bt


def transformer_time_encoder(x, day_of_year, params):
    B, T, F = x.shape
    assert F == D_MODEL
    S = T + 1

    # --- glue in plain JAX: positional-encoding gather, CLS concat, BN folding ---
    pos = params["pe"][day_of_year]                               # (B, T, D)
    xin = x.astype(jnp.float32) + pos
    cls = jnp.broadcast_to(params["cls_token"].astype(jnp.float32), (B, 1, D_MODEL))
    xin = jnp.concatenate([cls, xin], axis=1)                     # (B, S, D)

    Bt = _pick_bt(B, S)
    G = -(-B // Bt)
    Bpad = G * Bt
    if Bpad != B:
        xin = jnp.concatenate(
            [xin, jnp.zeros((Bpad - B, S, D_MODEL), jnp.float32)], axis=0)
    # 3-D slabs: each block's last two dims equal the array dims, so the (8,128)
    # BlockSpec rule is satisfied for any S / Bt without sequence padding.
    x_slab = xin.reshape(G, Bt * S, D_MODEL)

    # --- host-side weight prep: split + transpose, fold softmax scale, cast bf16 ---
    scale = 1.0 / math.sqrt(HEAD_DIM)
    ipw, ipb = params["in_proj_w"], params["in_proj_b"]
    tr = lambda w: jnp.transpose(w, (0, 2, 1))
    bf = lambda w: w.astype(jnp.bfloat16)
    r1 = lambda a, n: a.reshape(NUM_LAYERS, 1, n)

    wq = bf(tr(ipw[:, 0 * D_MODEL:1 * D_MODEL, :]) * scale)       # scale folded into Wq
    wk = bf(tr(ipw[:, 1 * D_MODEL:2 * D_MODEL, :]))
    wv = bf(tr(ipw[:, 2 * D_MODEL:3 * D_MODEL, :]))
    bq = r1(ipb[:, 0 * D_MODEL:1 * D_MODEL], D_MODEL) * scale
    bk = r1(ipb[:, 1 * D_MODEL:2 * D_MODEL], D_MODEL)
    bv = r1(ipb[:, 2 * D_MODEL:3 * D_MODEL], D_MODEL)

    bn_scale = params["bn_gamma"] / jnp.sqrt(params["bn_var"] + BN_EPS)
    bn_bias = params["bn_beta"] - params["bn_mean"] * bn_scale

    weight_args = (
        wq, wk, wv, bq, bk, bv,
        bf(tr(params["out_proj_w"])), r1(params["out_proj_b"], D_MODEL),
        bf(tr(params["lin1_w"])), r1(params["lin1_b"], FF_DIM),
        bf(tr(params["lin2_w"])), r1(params["lin2_b"], D_MODEL),
        r1(params["ln1_w"], D_MODEL), r1(params["ln1_b"], D_MODEL),
        r1(params["ln2_w"], D_MODEL), r1(params["ln2_b"], D_MODEL),
        bn_scale.reshape(1, D_MODEL), bn_bias.reshape(1, D_MODEL),
    )

    def run(single_buffer_weights):
        def const_spec(shape):
            idx = lambda i, _n=len(shape): (0,) * _n
            if single_buffer_weights:
                # constant across the grid -> no double buffering (VMEM saving)
                return pl.BlockSpec(shape, idx, pipeline_mode=pl.Buffered(1))
            return pl.BlockSpec(shape, idx)

        in_specs = [pl.BlockSpec((1, Bt * S, D_MODEL), lambda i: (i, 0, 0))]
        in_specs += [const_spec(a.shape) for a in weight_args]

        return pl.pallas_call(
            _make_kernel(Bt, S),
            out_shape=jax.ShapeDtypeStruct((G, Bt, D_MODEL), jnp.float32),
            grid=(G,),
            in_specs=in_specs,
            out_specs=pl.BlockSpec((1, Bt, D_MODEL), lambda i: (i, 0, 0)),
            compiler_params=pltpu.CompilerParams(
                dimension_semantics=("parallel",),
                vmem_limit_bytes=VMEM_LIMIT_BYTES),
        )(x_slab, *weight_args)

    try:
        out = run(single_buffer_weights=True)
    except Exception:  # fall back if pipeline_mode=Buffered(1) is unsupported here
        out = run(single_buffer_weights=False)

    return out.reshape(Bpad, D_MODEL)[:B]                         # (B, D)


# TODO(synk): dropout is a no-op here (eval mode); training-mode dropout RNG and
# BatchNorm batch-statistics updates are intentionally not reproduced.

if __name__ == "__main__":
    key = jax.random.PRNGKey(0)
    pkey, xkey, dkey = jax.random.split(key, 3)
    params = init_params(pkey)

    B, T = 2, 8
    x = jax.random.normal(xkey, (B, T, D_MODEL), jnp.float32)
    day_of_year = jax.random.randint(dkey, (B, T), 0, MAX_LEN)

    out = transformer_time_encoder(x, day_of_year, params)
    jax.block_until_ready(out)
    assert out.shape == (B, D_MODEL)
    assert bool(jnp.all(jnp.isfinite(out)))
    print("KERNEL_OK")
</pallas_src>

<mosaic_0001>
module attributes {stable_mosaic.version = 11 : i64} {
  func.func @kernel(%arg0: i32, %arg1: memref<1x9x128xf32, #tpu.memory_space<vmem>>, %arg2: memref<2x128x128xbf16, #tpu.memory_space<vmem>>, %arg3: memref<2x128x128xbf16, #tpu.memory_space<vmem>>, %arg4: memref<2x128x128xbf16, #tpu.memory_space<vmem>>, %arg5: memref<2x1x128xf32, #tpu.memory_space<vmem>>, %arg6: memref<2x1x128xf32, #tpu.memory_space<vmem>>, %arg7: memref<2x1x128xf32, #tpu.memory_space<vmem>>, %arg8: memref<2x128x128xbf16, #tpu.memory_space<vmem>>, %arg9: memref<2x1x128xf32, #tpu.memory_space<vmem>>, %arg10: memref<2x128x256xbf16, #tpu.memory_space<vmem>>, %arg11: memref<2x1x256xf32, #tpu.memory_space<vmem>>, %arg12: memref<2x256x128xbf16, #tpu.memory_space<vmem>>, %arg13: memref<2x1x128xf32, #tpu.memory_space<vmem>>, %arg14: memref<2x1x128xf32, #tpu.memory_space<vmem>>, %arg15: memref<2x1x128xf32, #tpu.memory_space<vmem>>, %arg16: memref<2x1x128xf32, #tpu.memory_space<vmem>>, %arg17: memref<2x1x128xf32, #tpu.memory_space<vmem>>, %arg18: memref<1x128xf32, #tpu.memory_space<vmem>>, %arg19: memref<1x128xf32, #tpu.memory_space<vmem>>, %arg20: memref<1x1x128xf32, #tpu.memory_space<vmem>>) attributes {dimension_semantics = [#tpu.dimension_semantics<parallel>], iteration_bounds = array<i64: 2>, scalar_prefetch = 0 : i64, scratch_operands = 0 : i64, tpu.core_type = #tpu.core_type<tc>, window_params = [{transform_indices = @transform_0, window_bounds = array<i64: 1, 9, 128>}, {pipeline_mode = #tpu.pipeline_mode<synchronous>, transform_indices = @transform_1, window_bounds = array<i64: 2, 128, 128>}, {pipeline_mode = #tpu.pipeline_mode<synchronous>, transform_indices = @transform_2, window_bounds = array<i64: 2, 128, 128>}, {pipeline_mode = #tpu.pipeline_mode<synchronous>, transform_indices = @transform_3, window_bounds = array<i64: 2, 128, 128>}, {pipeline_mode = #tpu.pipeline_mode<synchronous>, transform_indices = @transform_4, window_bounds = array<i64: 2, 1, 128>}, {pipeline_mode = #tpu.pipeline_mode<synchronous>, transform_indices = @transform_5, window_bounds = array<i64: 2, 1, 128>}, {pipeline_mode = #tpu.pipeline_mode<synchronous>, transform_indices = @transform_6, window_bounds = array<i64: 2, 1, 128>}, {pipeline_mode = #tpu.pipeline_mode<synchronous>, transform_indices = @transform_7, window_bounds = array<i64: 2, 128, 128>}, {pipeline_mode = #tpu.pipeline_mode<synchronous>, transform_indices = @transform_8, window_bounds = array<i64: 2, 1, 128>}, {pipeline_mode = #tpu.pipeline_mode<synchronous>, transform_indices = @transform_9, window_bounds = array<i64: 2, 128, 256>}, {pipeline_mode = #tpu.pipeline_mode<synchronous>, transform_indices = @transform_10, window_bounds = array<i64: 2, 1, 256>}, {pipeline_mode = #tpu.pipeline_mode<synchronous>, transform_indices = @transform_11, window_bounds = array<i64: 2, 256, 128>}, {pipeline_mode = #tpu.pipeline_mode<synchronous>, transform_indices = @transform_12, window_bounds = array<i64: 2, 1, 128>}, {pipeline_mode = #tpu.pipeline_mode<synchronous>, transform_indices = @transform_13, window_bounds = array<i64: 2, 1, 128>}, {pipeline_mode = #tpu.pipeline_mode<synchronous>, transform_indices = @transform_14, window_bounds = array<i64: 2, 1, 128>}, {pipeline_mode = #tpu.pipeline_mode<synchronous>, transform_indices = @transform_15, window_bounds = array<i64: 2, 1, 128>}, {pipeline_mode = #tpu.pipeline_mode<synchronous>, transform_indices = @transform_16, window_bounds = array<i64: 2, 1, 128>}, {pipeline_mode = #tpu.pipeline_mode<synchronous>, transform_indices = @transform_17, window_bounds = array<i64: 1, 128>}, {pipeline_mode = #tpu.pipeline_mode<synchronous>, transform_indices = @transform_18, window_bounds = array<i64: 1, 128>}, {transform_indices = @transform_19, window_bounds = array<i64: 1, 1, 128>}]} {
    %c0 = arith.constant 0 : index
    %c0_0 = arith.constant 0 : index
    %c0_1 = arith.constant 0 : index
    %0 = vector.load %arg1[%c0, %c0_0, %c0_1] : memref<1x9x128xf32, #tpu.memory_space<vmem>>, vector<1x9x128xf32>
    %1 = vector.shape_cast %0 : vector<1x9x128xf32> to vector<9x128xf32>
    %2 = arith.truncf %1 : vector<9x128xf32> to vector<9x128xbf16>
    %c0_2 = arith.constant 0 : index
    %c0_3 = arith.constant 0 : index
    %c0_4 = arith.constant 0 : index
    %3 = vector.load %arg2[%c0_2, %c0_3, %c0_4] : memref<2x128x128xbf16, #tpu.memory_space<vmem>>, vector<1x128x128xbf16>
    %4 = vector.shape_cast %3 : vector<1x128x128xbf16> to vector<128x128xbf16>
    %cst = arith.constant dense<0.000000e+00> : vector<9x128xf32>
    %5 = tpu.matmul %2, %4, %cst {dimension_numbers = #tpu.dot_dimension_numbers<[1], [0], [0], [1], [0, 0, 1, 1], [], []>} : vector<9x128xbf16>, vector<128x128xbf16>, vector<9x128xf32> -> vector<9x128xf32>
    %c0_5 = arith.constant 0 : index
    %c0_6 = arith.constant 0 : index
    %c0_7 = arith.constant 0 : index
    %6 = vector.load %arg5[%c0_5, %c0_6, %c0_7] : memref<2x1x128xf32, #tpu.memory_space<vmem>>, vector<1x1x128xf32>
    %7 = vector.shape_cast %6 : vector<1x1x128xf32> to vector<1x128xf32>
    %8 = vector.broadcast %7 : vector<1x128xf32> to vector<9x128xf32>
    %9 = arith.addf %5, %8 : vector<9x128xf32>
    %c0_8 = arith.constant 0 : index
    %c0_9 = arith.constant 0 : index
    %c0_10 = arith.constant 0 : index
    %10 = vector.load %arg3[%c0_8, %c0_9, %c0_10] : memref<2x128x128xbf16, #tpu.memory_space<vmem>>, vector<1x128x128xbf16>
    %11 = vector.shape_cast %10 : vector<1x128x128xbf16> to vector<128x128xbf16>
    %cst_11 = arith.constant dense<0.000000e+00> : vector<9x128xf32>
    %12 = tpu.matmul %2, %11, %cst_11 {dimension_numbers = #tpu.dot_dimension_numbers<[1], [0], [0], [1], [0, 0, 1, 1], [], []>} : vector<9x128xbf16>, vector<128x128xbf16>, vector<9x128xf32> -> vector<9x128xf32>
    %c0_12 = arith.constant 0 : index
    %c0_13 = arith.constant 0 : index
    %c0_14 = arith.constant 0 : index
    %13 = vector.load %arg6[%c0_12, %c0_13, %c0_14] : memref<2x1x128xf32, #tpu.memory_space<vmem>>, vector<1x1x128xf32>
    %14 = vector.shape_cast %13 : vector<1x1x128xf32> to vector<1x128xf32>
    %15 = vector.broadcast %14 : vector<1x128xf32> to vector<9x128xf32>
    %16 = arith.addf %12, %15 : vector<9x128xf32>
    %c0_15 = arith.constant 0 : index
    %c0_16 = arith.constant 0 : index
    %c0_17 = arith.constant 0 : index
    %17 = vector.load %arg4[%c0_15, %c0_16, %c0_17] : memref<2x128x128xbf16, #tpu.memory_space<vmem>>, vector<1x128x128xbf16>
    %18 = vector.shape_cast %17 : vector<1x128x128xbf16> to vector<128x128xbf16>
    %cst_18 = arith.constant dense<0.000000e+00> : vector<9x128xf32>
    %19 = tpu.matmul %2, %18, %cst_18 {dimension_numbers = #tpu.dot_dimension_numbers<[1], [0], [0], [1], [0, 0, 1, 1], [], []>} : vector<9x128xbf16>, vector<128x128xbf16>, vector<9x128xf32> -> vector<9x128xf32>
    %c0_19 = arith.constant 0 : index
    %c0_20 = arith.constant 0 : index
    %c0_21 = arith.constant 0 : index
    %20 = vector.load %arg7[%c0_19, %c0_20, %c0_21] : memref<2x1x128xf32, #tpu.memory_space<vmem>>, vector<1x1x128xf32>
    %21 = vector.shape_cast %20 : vector<1x1x128xf32> to vector<1x128xf32>
    %22 = vector.broadcast %21 : vector<1x128xf32> to vector<9x128xf32>
    %23 = arith.addf %19, %22 : vector<9x128xf32>
    %24 = arith.truncf %9 : vector<9x128xf32> to vector<9x128xbf16>
    %25 = vector.shape_cast %24 : vector<9x128xbf16> to vector<1x9x128xbf16>
    %26 = arith.truncf %16 : vector<9x128xf32> to vector<9x128xbf16>
    %27 = vector.shape_cast %26 : vector<9x128xbf16> to vector<1x9x128xbf16>
    %28 = arith.truncf %23 : vector<9x128xf32> to vector<9x128xbf16>
    %29 = vector.shape_cast %28 : vector<9x128xbf16> to vector<1x9x128xbf16>
    %30 = vector.extract_strided_slice %25 {offsets = [0, 0, 0], sizes = [1, 9, 32], strides = [1, 1, 1]} : vector<1x9x128xbf16> to vector<1x9x32xbf16>
    %31 = vector.extract_strided_slice %27 {offsets = [0, 0, 0], sizes = [1, 9, 32], strides = [1, 1, 1]} : vector<1x9x128xbf16> to vector<1x9x32xbf16>
    "tpu.trace_start"() <{level = 10 : i32, message = "bqd,bkd->bqk"}> : () -> ()
    %cst_22 = arith.constant dense<0.000000e+00> : vector<1x9x9xf32>
    %32 = tpu.matmul %30, %31, %cst_22 {dimension_numbers = #tpu.dot_dimension_numbers<[2], [2], [1], [1], [0, 0, 0, 1, 1, 1], [0], [0]>} : vector<1x9x32xbf16>, vector<1x9x32xbf16>, vector<1x9x9xf32> -> vector<1x9x9xf32>
    "tpu.trace_stop"() : () -> ()
    %cst_23 = arith.constant dense<0xFF800000> : vector<1x9xf32>
    %33 = vector.multi_reduction <maximumf>, %32, %cst_23 [2] : vector<1x9x9xf32> to vector<1x9xf32>
    %34 = vector.shape_cast %33 : vector<1x9xf32> to vector<1x9x1xf32>
    %35 = vector.broadcast %34 : vector<1x9x1xf32> to vector<1x9x9xf32>
    %36 = arith.subf %32, %35 : vector<1x9x9xf32>
    %37 = math.exp %36 : vector<1x9x9xf32>
    %cst_24 = arith.constant dense<0.000000e+00> : vector<1x9xf32>
    %38 = vector.multi_reduction <add>, %37, %cst_24 [2] : vector<1x9x9xf32> to vector<1x9xf32>
    %39 = vector.shape_cast %38 : vector<1x9xf32> to vector<1x9x1xf32>
    %40 = tpu.reciprocal %39 {approx = true} : vector<1x9x1xf32> -> vector<1x9x1xf32>
    %41 = vector.broadcast %40 : vector<1x9x1xf32> to vector<1x9x9xf32>
    %42 = arith.mulf %37, %41 : vector<1x9x9xf32>
    %43 = arith.truncf %42 : vector<1x9x9xf32> to vector<1x9x9xbf16>
    %44 = vector.extract_strided_slice %29 {offsets = [0, 0, 0], sizes = [1, 9, 32], strides = [1, 1, 1]} : vector<1x9x128xbf16> to vector<1x9x32xbf16>
    "tpu.trace_start"() <{level = 10 : i32, message = "bqk,bkd->bqd"}> : () -> ()
    %cst_25 = arith.constant dense<0.000000e+00> : vector<1x9x32xf32>
    %45 = tpu.matmul %43, %44, %cst_25 {dimension_numbers = #tpu.dot_dimension_numbers<[2], [1], [1], [2], [0, 0, 0, 1, 1, 2], [0], [0]>} : vector<1x9x9xbf16>, vector<1x9x32xbf16>, vector<1x9x32xf32> -> vector<1x9x32xf32>
    "tpu.trace_stop"() : () -> ()
    %46 = arith.truncf %45 : vector<1x9x32xf32> to vector<1x9x32xbf16>
    %47 = vector.extract_strided_slice %25 {offsets = [0, 0, 32], sizes = [1, 9, 32], strides = [1, 1, 1]} : vector<1x9x128xbf16> to vector<1x9x32xbf16>
    %48 = vector.extract_strided_slice %27 {offsets = [0, 0, 32], sizes = [1, 9, 32], strides = [1, 1, 1]} : vector<1x9x128xbf16> to vector<1x9x32xbf16>
    "tpu.trace_start"() <{level = 10 : i32, message = "bqd,bkd->bqk"}> : () -> ()
    %cst_26 = arith.constant dense<0.000000e+00> : vector<1x9x9xf32>
    %49 = tpu.matmul %47, %48, %cst_26 {dimension_numbers = #tpu.dot_dimension_numbers<[2], [2], [1], [1], [0, 0, 0, 1, 1, 1], [0], [0]>} : vector<1x9x32xbf16>, vector<1x9x32xbf16>, vector<1x9x9xf32> -> vector<1x9x9xf32>
    "tpu.trace_stop"() : () -> ()
    %cst_27 = arith.constant dense<0xFF800000> : vector<1x9xf32>
    %50 = vector.multi_reduction <maximumf>, %49, %cst_27 [2] : vector<1x9x9xf32> to vector<1x9xf32>
    %51 = vector.shape_cast %50 : vector<1x9xf32> to vector<1x9x1xf32>
    %52 = vector.broadcast %51 : vector<1x9x1xf32> to vector<1x9x9xf32>
    %53 = arith.subf %49, %52 : vector<1x9x9xf32>
    %54 = math.exp %53 : vector<1x9x9xf32>
    %cst_28 = arith.constant dense<0.000000e+00> : vector<1x9xf32>
    %55 = vector.multi_reduction <add>, %54, %cst_28 [2] : vector<1x9x9xf32> to vector<1x9xf32>
    %56 = vector.shape_cast %55 : vector<1x9xf32> to vector<1x9x1xf32>
    %57 = tpu.reciprocal %56 {approx = true} : vector<1x9x1xf32> -> vector<1x9x1xf32>
    %58 = vector.broadcast %57 : vector<1x9x1xf32> to vector<1x9x9xf32>
    %59 = arith.mulf %54, %58 : vector<1x9x9xf32>
    %60 = arith.truncf %59 : vector<1x9x9xf32> to vector<1x9x9xbf16>
    %61 = vector.extract_strided_slice %29 {offsets = [0, 0, 32], sizes = [1, 9, 32], strides = [1, 1, 1]} : vector<1x9x128xbf16> to vector<1x9x32xbf16>
    "tpu.trace_start"() <{level = 10 : i32, message = "bqk,bkd->bqd"}> : () -> ()
    %cst_29 = arith.constant dense<0.000000e+00> : vector<1x9x32xf32>
    %62 = tpu.matmul %60, %61, %cst_29 {dimension_numbers = #tpu.dot_dimension_numbers<[2], [1], [1], [2], [0, 0, 0, 1, 1, 2], [0], [0]>} : vector<1x9x9xbf16>, vector<1x9x32xbf16>, vector<1x9x32xf32> -> vector<1x9x32xf32>
    "tpu.trace_stop"() : () -> ()
    %63 = arith.truncf %62 : vector<1x9x32xf32> to vector<1x9x32xbf16>
    %64 = vector.extract_strided_slice %25 {offsets = [0, 0, 64], sizes = [1, 9, 32], strides = [1, 1, 1]} : vector<1x9x128xbf16> to vector<1x9x32xbf16>
    %65 = vector.extract_strided_slice %27 {offsets = [0, 0, 64], sizes = [1, 9, 32], strides = [1, 1, 1]} : vector<1x9x128xbf16> to vector<1x9x32xbf16>
    "tpu.trace_start"() <{level = 10 : i32, message = "bqd,bkd->bqk"}> : () -> ()
    %cst_30 = arith.constant dense<0.000000e+00> : vector<1x9x9xf32>
    %66 = tpu.matmul %64, %65, %cst_30 {dimension_numbers = #tpu.dot_dimension_numbers<[2], [2], [1], [1], [0, 0, 0, 1, 1, 1], [0], [0]>} : vector<1x9x32xbf16>, vector<1x9x32xbf16>, vector<1x9x9xf32> -> vector<1x9x9xf32>
    "tpu.trace_stop"() : () -> ()
    %cst_31 = arith.constant dense<0xFF800000> : vector<1x9xf32>
    %67 = vector.multi_reduction <maximumf>, %66, %cst_31 [2] : vector<1x9x9xf32> to vector<1x9xf32>
    %68 = vector.shape_cast %67 : vector<1x9xf32> to vector<1x9x1xf32>
    %69 = vector.broadcast %68 : vector<1x9x1xf32> to vector<1x9x9xf32>
    %70 = arith.subf %66, %69 : vector<1x9x9xf32>
    %71 = math.exp %70 : vector<1x9x9xf32>
    %cst_32 = arith.constant dense<0.000000e+00> : vector<1x9xf32>
    %72 = vector.multi_reduction <add>, %71, %cst_32 [2] : vector<1x9x9xf32> to vector<1x9xf32>
    %73 = vector.shape_cast %72 : vector<1x9xf32> to vector<1x9x1xf32>
    %74 = tpu.reciprocal %73 {approx = true} : vector<1x9x1xf32> -> vector<1x9x1xf32>
    %75 = vector.broadcast %74 : vector<1x9x1xf32> to vector<1x9x9xf32>
    %76 = arith.mulf %71, %75 : vector<1x9x9xf32>
    %77 = arith.truncf %76 : vector<1x9x9xf32> to vector<1x9x9xbf16>
    %78 = vector.extract_strided_slice %29 {offsets = [0, 0, 64], sizes = [1, 9, 32], strides = [1, 1, 1]} : vector<1x9x128xbf16> to vector<1x9x32xbf16>
    "tpu.trace_start"() <{level = 10 : i32, message = "bqk,bkd->bqd"}> : () -> ()
    %cst_33 = arith.constant dense<0.000000e+00> : vector<1x9x32xf32>
    %79 = tpu.matmul %77, %78, %cst_33 {dimension_numbers = #tpu.dot_dimension_numbers<[2], [1], [1], [2], [0, 0, 0, 1, 1, 2], [0], [0]>} : vector<1x9x9xbf16>, vector<1x9x32xbf16>, vector<1x9x32xf32> -> vector<1x9x32xf32>
    "tpu.trace_stop"() : () -> ()
    %80 = arith.truncf %79 : vector<1x9x32xf32> to vector<1x9x32xbf16>
    %81 = vector.extract_strided_slice %25 {offsets = [0, 0, 96], sizes = [1, 9, 32], strides = [1, 1, 1]} : vector<1x9x128xbf16> to vector<1x9x32xbf16>
    %82 = vector.extract_strided_slice %27 {offsets = [0, 0, 96], sizes = [1, 9, 32], strides = [1, 1, 1]} : vector<1x9x128xbf16> to vector<1x9x32xbf16>
    "tpu.trace_start"() <{level = 10 : i32, message = "bqd,bkd->bqk"}> : () -> ()
    %cst_34 = arith.constant dense<0.000000e+00> : vector<1x9x9xf32>
    %83 = tpu.matmul %81, %82, %cst_34 {dimension_numbers = #tpu.dot_dimension_numbers<[2], [2], [1], [1], [0, 0, 0, 1, 1, 1], [0], [0]>} : vector<1x9x32xbf16>, vector<1x9x32xbf16>, vector<1x9x9xf32> -> vector<1x9x9xf32>
    "tpu.trace_stop"() : () -> ()
    %cst_35 = arith.constant dense<0xFF800000> : vector<1x9xf32>
    %84 = vector.multi_reduction <maximumf>, %83, %cst_35 [2] : vector<1x9x9xf32> to vector<1x9xf32>
    %85 = vector.shape_cast %84 : vector<1x9xf32> to vector<1x9x1xf32>
    %86 = vector.broadcast %85 : vector<1x9x1xf32> to vector<1x9x9xf32>
    %87 = arith.subf %83, %86 : vector<1x9x9xf32>
    %88 = math.exp %87 : vector<1x9x9xf32>
    %cst_36 = arith.constant dense<0.000000e+00> : vector<1x9xf32>
    %89 = vector.multi_reduction <add>, %88, %cst_36 [2] : vector<1x9x9xf32> to vector<1x9xf32>
    %90 = vector.shape_cast %89 : vector<1x9xf32> to vector<1x9x1xf32>
    %91 = tpu.reciprocal %90 {approx = true} : vector<1x9x1xf32> -> vector<1x9x1xf32>
    %92 = vector.broadcast %91 : vector<1x9x1xf32> to vector<1x9x9xf32>
    %93 = arith.mulf %88, %92 : vector<1x9x9xf32>
    %94 = arith.truncf %93 : vector<1x9x9xf32> to vector<1x9x9xbf16>
    %95 = vector.extract_strided_slice %29 {offsets = [0, 0, 96], sizes = [1, 9, 32], strides = [1, 1, 1]} : vector<1x9x128xbf16> to vector<1x9x32xbf16>
    "tpu.trace_start"() <{level = 10 : i32, message = "bqk,bkd->bqd"}> : () -> ()
    %cst_37 = arith.constant dense<0.000000e+00> : vector<1x9x32xf32>
    %96 = tpu.matmul %94, %95, %cst_37 {dimension_numbers = #tpu.dot_dimension_numbers<[2], [1], [1], [2], [0, 0, 0, 1, 1, 2], [0], [0]>} : vector<1x9x9xbf16>, vector<1x9x32xbf16>, vector<1x9x32xf32> -> vector<1x9x32xf32>
    "tpu.trace_stop"() : () -> ()
    %97 = arith.truncf %96 : vector<1x9x32xf32> to vector<1x9x32xbf16>
    %98 = tpu.concatenate %46, %63, %80, %97 in 2 : vector<1x9x32xbf16>, vector<1x9x32xbf16>, vector<1x9x32xbf16>, vector<1x9x32xbf16> -> vector<1x9x128xbf16>
    %99 = vector.shape_cast %98 : vector<1x9x128xbf16> to vector<9x128xbf16>
    %c0_38 = arith.constant 0 : index
    %c0_39 = arith.constant 0 : index
    %c0_40 = arith.constant 0 : index
    %100 = vector.load %arg8[%c0_38, %c0_39, %c0_40] : memref<2x128x128xbf16, #tpu.memory_space<vmem>>, vector<1x128x128xbf16>
    %101 = vector.shape_cast %100 : vector<1x128x128xbf16> to vector<128x128xbf16>
    %cst_41 = arith.constant dense<0.000000e+00> : vector<9x128xf32>
    %102 = tpu.matmul %99, %101, %cst_41 {dimension_numbers = #tpu.dot_dimension_numbers<[1], [0], [0], [1], [0, 0, 1, 1], [], []>} : vector<9x128xbf16>, vector<128x128xbf16>, vector<9x128xf32> -> vector<9x128xf32>
    %c0_42 = arith.constant 0 : index
    %c0_43 = arith.constant 0 : index
    %c0_44 = arith.constant 0 : index
    %103 = vector.load %arg9[%c0_42, %c0_43, %c0_44] : memref<2x1x128xf32, #tpu.memory_space<vmem>>, vector<1x1x128xf32>
    %104 = vector.shape_cast %103 : vector<1x1x128xf32> to vector<1x128xf32>
    %105 = vector.broadcast %104 : vector<1x128xf32> to vector<9x128xf32>
    %106 = arith.addf %102, %105 : vector<9x128xf32>
    %107 = arith.addf %1, %106 : vector<9x128xf32>
    %c0_45 = arith.constant 0 : index
    %c0_46 = arith.constant 0 : index
    %c0_47 = arith.constant 0 : index
    %108 = vector.load %arg14[%c0_45, %c0_46, %c0_47] : memref<2x1x128xf32, #tpu.memory_space<vmem>>, vector<1x1x128xf32>
    %109 = vector.shape_cast %108 : vector<1x1x128xf32> to vector<1x128xf32>
    %c0_48 = arith.constant 0 : index
    %c0_49 = arith.constant 0 : index
    %c0_50 = arith.constant 0 : index
    %110 = vector.load %arg15[%c0_48, %c0_49, %c0_50] : memref<2x1x128xf32, #tpu.memory_space<vmem>>, vector<1x1x128xf32>
    %111 = vector.shape_cast %110 : vector<1x1x128xf32> to vector<1x128xf32>
    %cst_51 = arith.constant dense<0.000000e+00> : vector<9xf32>
    %112 = vector.multi_reduction <add>, %107, %cst_51 [1] : vector<9x128xf32> to vector<9xf32>
    %113 = vector.shape_cast %112 : vector<9xf32> to vector<9x1xf32>
    %cst_52 = arith.constant 1.280000e+02 : f32
    %114 = vector.broadcast %cst_52 : f32 to vector<9x1xf32>
    %115 = arith.divf %113, %114 : vector<9x1xf32>
    %116 = vector.broadcast %115 : vector<9x1xf32> to vector<9x128xf32>
    %117 = arith.subf %107, %116 : vector<9x128xf32>
    %118 = arith.mulf %117, %117 : vector<9x128xf32>
    %cst_53 = arith.constant dense<0.000000e+00> : vector<9xf32>
    %119 = vector.multi_reduction <add>, %118, %cst_53 [1] : vector<9x128xf32> to vector<9xf32>
    %120 = vector.shape_cast %119 : vector<9xf32> to vector<9x1xf32>
    %cst_54 = arith.constant 1.280000e+02 : f32
    %121 = vector.broadcast %cst_54 : f32 to vector<9x1xf32>
    %122 = arith.divf %120, %121 : vector<9x1xf32>
    %123 = vector.broadcast %115 : vector<9x1xf32> to vector<9x128xf32>
    %124 = arith.subf %107, %123 : vector<9x128xf32>
    %cst_55 = arith.constant 9.99999974E-6 : f32
    %125 = vector.broadcast %cst_55 : f32 to vector<9x1xf32>
    %126 = arith.addf %122, %125 : vector<9x1xf32>
    %127 = math.rsqrt %126 : vector<9x1xf32>
    %128 = vector.broadcast %127 : vector<9x1xf32> to vector<9x128xf32>
    %129 = arith.mulf %124, %128 : vector<9x128xf32>
    %130 = vector.broadcast %109 : vector<1x128xf32> to vector<9x128xf32>
    %131 = arith.mulf %129, %130 : vector<9x128xf32>
    %132 = vector.broadcast %111 : vector<1x128xf32> to vector<9x128xf32>
    %133 = arith.addf %131, %132 : vector<9x128xf32>
    %134 = arith.truncf %133 : vector<9x128xf32> to vector<9x128xbf16>
    %c0_56 = arith.constant 0 : index
    %c0_57 = arith.constant 0 : index
    %c0_58 = arith.constant 0 : index
    %135 = vector.load %arg10[%c0_56, %c0_57, %c0_58] : memref<2x128x256xbf16, #tpu.memory_space<vmem>>, vector<1x128x256xbf16>
    %136 = vector.shape_cast %135 : vector<1x128x256xbf16> to vector<128x256xbf16>
    %cst_59 = arith.constant dense<0.000000e+00> : vector<9x256xf32>
    %137 = tpu.matmul %134, %136, %cst_59 {dimension_numbers = #tpu.dot_dimension_numbers<[1], [0], [0], [1], [0, 0, 1, 1], [], []>} : vector<9x128xbf16>, vector<128x256xbf16>, vector<9x256xf32> -> vector<9x256xf32>
    %c0_60 = arith.constant 0 : index
    %c0_61 = arith.constant 0 : index
    %c0_62 = arith.constant 0 : index
    %138 = vector.load %arg11[%c0_60, %c0_61, %c0_62] : memref<2x1x256xf32, #tpu.memory_space<vmem>>, vector<1x1x256xf32>
    %139 = vector.shape_cast %138 : vector<1x1x256xf32> to vector<1x256xf32>
    %140 = vector.broadcast %139 : vector<1x256xf32> to vector<9x256xf32>
    %141 = arith.addf %137, %140 : vector<9x256xf32>
    %cst_63 = arith.constant 0.000000e+00 : f32
    %142 = vector.broadcast %cst_63 : f32 to vector<9x256xf32>
    %143 = arith.maximumf %141, %142 : vector<9x256xf32>
    %144 = arith.truncf %143 : vector<9x256xf32> to vector<9x256xbf16>
    %c0_64 = arith.constant 0 : index
    %c0_65 = arith.constant 0 : index
    %c0_66 = arith.constant 0 : index
    %145 = vector.load %arg12[%c0_64, %c0_65, %c0_66] : memref<2x256x128xbf16, #tpu.memory_space<vmem>>, vector<1x256x128xbf16>
    %146 = vector.shape_cast %145 : vector<1x256x128xbf16> to vector<256x128xbf16>
    %cst_67 = arith.constant dense<0.000000e+00> : vector<9x128xf32>
    %147 = tpu.matmul %144, %146, %cst_67 {dimension_numbers = #tpu.dot_dimension_numbers<[1], [0], [0], [1], [0, 0, 1, 1], [], []>} : vector<9x256xbf16>, vector<256x128xbf16>, vector<9x128xf32> -> vector<9x128xf32>
    %c0_68 = arith.constant 0 : index
    %c0_69 = arith.constant 0 : index
    %c0_70 = arith.constant 0 : index
    %148 = vector.load %arg13[%c0_68, %c0_69, %c0_70] : memref<2x1x128xf32, #tpu.memory_space<vmem>>, vector<1x1x128xf32>
    %149 = vector.shape_cast %148 : vector<1x1x128xf32> to vector<1x128xf32>
    %150 = vector.broadcast %149 : vector<1x128xf32> to vector<9x128xf32>
    %151 = arith.addf %147, %150 : vector<9x128xf32>
    %152 = arith.addf %133, %151 : vector<9x128xf32>
    %c0_71 = arith.constant 0 : index
    %c0_72 = arith.constant 0 : index
    %c0_73 = arith.constant 0 : index
    %153 = vector.load %arg16[%c0_71, %c0_72, %c0_73] : memref<2x1x128xf32, #tpu.memory_space<vmem>>, vector<1x1x128xf32>
    %154 = vector.shape_cast %153 : vector<1x1x128xf32> to vector<1x128xf32>
    %c0_74 = arith.constant 0 : index
    %c0_75 = arith.constant 0 : index
    %c0_76 = arith.constant 0 : index
    %155 = vector.load %arg17[%c0_74, %c0_75, %c0_76] : memref<2x1x128xf32, #tpu.memory_space<vmem>>, vector<1x1x128xf32>
    %156 = vector.shape_cast %155 : vector<1x1x128xf32> to vector<1x128xf32>
    %cst_77 = arith.constant dense<0.000000e+00> : vector<9xf32>
    %157 = vector.multi_reduction <add>, %152, %cst_77 [1] : vector<9x128xf32> to vector<9xf32>
    %158 = vector.shape_cast %157 : vector<9xf32> to vector<9x1xf32>
    %cst_78 = arith.constant 1.280000e+02 : f32
    %159 = vector.broadcast %cst_78 : f32 to vector<9x1xf32>
    %160 = arith.divf %158, %159 : vector<9x1xf32>
    %161 = vector.broadcast %160 : vector<9x1xf32> to vector<9x128xf32>
    %162 = arith.subf %152, %161 : vector<9x128xf32>
    %163 = arith.mulf %162, %162 : vector<9x128xf32>
    %cst_79 = arith.constant dense<0.000000e+00> : vector<9xf32>
    %164 = vector.multi_reduction <add>, %163, %cst_79 [1] : vector<9x128xf32> to vector<9xf32>
    %165 = vector.shape_cast %164 : vector<9xf32> to vector<9x1xf32>
    %cst_80 = arith.constant 1.280000e+02 : f32
    %166 = vector.broadcast %cst_80 : f32 to vector<9x1xf32>
    %167 = arith.divf %165, %166 : vector<9x1xf32>
    %168 = vector.broadcast %160 : vector<9x1xf32> to vector<9x128xf32>
    %169 = arith.subf %152, %168 : vector<9x128xf32>
    %cst_81 = arith.constant 9.99999974E-6 : f32
    %170 = vector.broadcast %cst_81 : f32 to vector<9x1xf32>
    %171 = arith.addf %167, %170 : vector<9x1xf32>
    %172 = math.rsqrt %171 : vector<9x1xf32>
    %173 = vector.broadcast %172 : vector<9x1xf32> to vector<9x128xf32>
    %174 = arith.mulf %169, %173 : vector<9x128xf32>
    %175 = vector.broadcast %154 : vector<1x128xf32> to vector<9x128xf32>
    %176 = arith.mulf %174, %175 : vector<9x128xf32>
    %177 = vector.broadcast %156 : vector<1x128xf32> to vector<9x128xf32>
    %178 = arith.addf %176, %177 : vector<9x128xf32>
    %179 = vector.shape_cast %178 : vector<9x128xf32> to vector<1x9x128xf32>
    %180 = vector.extract_strided_slice %179 {offsets = [0, 0, 0], sizes = [1, 1, 128], strides = [1, 1, 1]} : vector<1x9x128xf32> to vector<1x1x128xf32>
    %181 = vector.shape_cast %180 : vector<1x1x128xf32> to vector<1x128xf32>
    %182 = arith.truncf %181 : vector<1x128xf32> to vector<1x128xbf16>
    %183 = arith.truncf %178 : vector<9x128xf32> to vector<9x128xbf16>
    %c1 = arith.constant 1 : index
    %c0_82 = arith.constant 0 : index
    %c0_83 = arith.constant 0 : index
    %184 = vector.load %arg2[%c1, %c0_82, %c0_83] : memref<2x128x128xbf16, #tpu.memory_space<vmem>>, vector<1x128x128xbf16>
    %185 = vector.shape_cast %184 : vector<1x128x128xbf16> to vector<128x128xbf16>
    %cst_84 = arith.constant dense<0.000000e+00> : vector<1x128xf32>
    %186 = tpu.matmul %182, %185, %cst_84 {dimension_numbers = #tpu.dot_dimension_numbers<[1], [0], [0], [1], [0, 0, 1, 1], [], []>} : vector<1x128xbf16>, vector<128x128xbf16>, vector<1x128xf32> -> vector<1x128xf32>
    %c1_85 = arith.constant 1 : index
    %c0_86 = arith.constant 0 : index
    %c0_87 = arith.constant 0 : index
    %187 = vector.load %arg5[%c1_85, %c0_86, %c0_87] : memref<2x1x128xf32, #tpu.memory_space<vmem>>, vector<1x1x128xf32>
    %188 = vector.shape_cast %187 : vector<1x1x128xf32> to vector<1x128xf32>
    %189 = arith.addf %186, %188 : vector<1x128xf32>
    %c1_88 = arith.constant 1 : index
    %c0_89 = arith.constant 0 : index
    %c0_90 = arith.constant 0 : index
    %190 = vector.load %arg3[%c1_88, %c0_89, %c0_90] : memref<2x128x128xbf16, #tpu.memory_space<vmem>>, vector<1x128x128xbf16>
    %191 = vector.shape_cast %190 : vector<1x128x128xbf16> to vector<128x128xbf16>
    %cst_91 = arith.constant dense<0.000000e+00> : vector<9x128xf32>
    %192 = tpu.matmul %183, %191, %cst_91 {dimension_numbers = #tpu.dot_dimension_numbers<[1], [0], [0], [1], [0, 0, 1, 1], [], []>} : vector<9x128xbf16>, vector<128x128xbf16>, vector<9x128xf32> -> vector<9x128xf32>
    %c1_92 = arith.constant 1 : index
    %c0_93 = arith.constant 0 : index
    %c0_94 = arith.constant 0 : index
    %193 = vector.load %arg6[%c1_92, %c0_93, %c0_94] : memref<2x1x128xf32, #tpu.memory_space<vmem>>, vector<1x1x128xf32>
    %194 = vector.shape_cast %193 : vector<1x1x128xf32> to vector<1x128xf32>
    %195 = vector.broadcast %194 : vector<1x128xf32> to vector<9x128xf32>
    %196 = arith.addf %192, %195 : vector<9x128xf32>
    %c1_95 = arith.constant 1 : index
    %c0_96 = arith.constant 0 : index
    %c0_97 = arith.constant 0 : index
    %197 = vector.load %arg4[%c1_95, %c0_96, %c0_97] : memref<2x128x128xbf16, #tpu.memory_space<vmem>>, vector<1x128x128xbf16>
    %198 = vector.shape_cast %197 : vector<1x128x128xbf16> to vector<128x128xbf16>
    %cst_98 = arith.constant dense<0.000000e+00> : vector<9x128xf32>
    %199 = tpu.matmul %183, %198, %cst_98 {dimension_numbers = #tpu.dot_dimension_numbers<[1], [0], [0], [1], [0, 0, 1, 1], [], []>} : vector<9x128xbf16>, vector<128x128xbf16>, vector<9x128xf32> -> vector<9x128xf32>
    %c1_99 = arith.constant 1 : index
    %c0_100 = arith.constant 0 : index
    %c0_101 = arith.constant 0 : index
    %200 = vector.load %arg7[%c1_99, %c0_100, %c0_101] : memref<2x1x128xf32, #tpu.memory_space<vmem>>, vector<1x1x128xf32>
    %201 = vector.shape_cast %200 : vector<1x1x128xf32> to vector<1x128xf32>
    %202 = vector.broadcast %201 : vector<1x128xf32> to vector<9x128xf32>
    %203 = arith.addf %199, %202 : vector<9x128xf32>
    %204 = arith.truncf %189 : vector<1x128xf32> to vector<1x128xbf16>
    %205 = vector.shape_cast %204 : vector<1x128xbf16> to vector<1x1x128xbf16>
    %206 = arith.truncf %196 : vector<9x128xf32> to vector<9x128xbf16>
    %207 = vector.shape_cast %206 : vector<9x128xbf16> to vector<1x9x128xbf16>
    %208 = arith.truncf %203 : vector<9x128xf32> to vector<9x128xbf16>
    %209 = vector.shape_cast %208 : vector<9x128xbf16> to vector<1x9x128xbf16>
    %210 = vector.extract_strided_slice %205 {offsets = [0, 0, 0], sizes = [1, 1, 32], strides = [1, 1, 1]} : vector<1x1x128xbf16> to vector<1x1x32xbf16>
    %211 = vector.extract_strided_slice %207 {offsets = [0, 0, 0], sizes = [1, 9, 32], strides = [1, 1, 1]} : vector<1x9x128xbf16> to vector<1x9x32xbf16>
    "tpu.trace_start"() <{level = 10 : i32, message = "bqd,bkd->bqk"}> : () -> ()
    %cst_102 = arith.constant dense<0.000000e+00> : vector<1x1x9xf32>
    %212 = tpu.matmul %210, %211, %cst_102 {dimension_numbers = #tpu.dot_dimension_numbers<[2], [2], [1], [1], [0, 0, 0, 1, 1, 1], [0], [0]>} : vector<1x1x32xbf16>, vector<1x9x32xbf16>, vector<1x1x9xf32> -> vector<1x1x9xf32>
    "tpu.trace_stop"() : () -> ()
    %cst_103 = arith.constant dense<0xFF800000> : vector<1x1xf32>
    %213 = vector.multi_reduction <maximumf>, %212, %cst_103 [2] : vector<1x1x9xf32> to vector<1x1xf32>
    %214 = vector.shape_cast %213 : vector<1x1xf32> to vector<1x1x1xf32>
    %215 = vector.broadcast %214 : vector<1x1x1xf32> to vector<1x1x9xf32>
    %216 = arith.subf %212, %215 : vector<1x1x9xf32>
    %217 = math.exp %216 : vector<1x1x9xf32>
    %cst_104 = arith.constant dense<0.000000e+00> : vector<1x1xf32>
    %218 = vector.multi_reduction <add>, %217, %cst_104 [2] : vector<1x1x9xf32> to vector<1x1xf32>
    %219 = vector.shape_cast %218 : vector<1x1xf32> to vector<1x1x1xf32>
    %220 = tpu.reciprocal %219 {approx = true} : vector<1x1x1xf32> -> vector<1x1x1xf32>
    %221 = vector.broadcast %220 : vector<1x1x1xf32> to vector<1x1x9xf32>
    %222 = arith.mulf %217, %221 : vector<1x1x9xf32>
    %223 = arith.truncf %222 : vector<1x1x9xf32> to vector<1x1x9xbf16>
    %224 = vector.extract_strided_slice %209 {offsets = [0, 0, 0], sizes = [1, 9, 32], strides = [1, 1, 1]} : vector<1x9x128xbf16> to vector<1x9x32xbf16>
    "tpu.trace_start"() <{level = 10 : i32, message = "bqk,bkd->bqd"}> : () -> ()
    %cst_105 = arith.constant dense<0.000000e+00> : vector<1x1x32xf32>
    %225 = tpu.matmul %223, %224, %cst_105 {dimension_numbers = #tpu.dot_dimension_numbers<[2], [1], [1], [2], [0, 0, 0, 1, 1, 2], [0], [0]>} : vector<1x1x9xbf16>, vector<1x9x32xbf16>, vector<1x1x32xf32> -> vector<1x1x32xf32>
    "tpu.trace_stop"() : () -> ()
    %226 = arith.truncf %225 : vector<1x1x32xf32> to vector<1x1x32xbf16>
    %227 = vector.extract_strided_slice %205 {offsets = [0, 0, 32], sizes = [1, 1, 32], strides = [1, 1, 1]} : vector<1x1x128xbf16> to vector<1x1x32xbf16>
    %228 = vector.extract_strided_slice %207 {offsets = [0, 0, 32], sizes = [1, 9, 32], strides = [1, 1, 1]} : vector<1x9x128xbf16> to vector<1x9x32xbf16>
    "tpu.trace_start"() <{level = 10 : i32, message = "bqd,bkd->bqk"}> : () -> ()
    %cst_106 = arith.constant dense<0.000000e+00> : vector<1x1x9xf32>
    %229 = tpu.matmul %227, %228, %cst_106 {dimension_numbers = #tpu.dot_dimension_numbers<[2], [2], [1], [1], [0, 0, 0, 1, 1, 1], [0], [0]>} : vector<1x1x32xbf16>, vector<1x9x32xbf16>, vector<1x1x9xf32> -> vector<1x1x9xf32>
    "tpu.trace_stop"() : () -> ()
    %cst_107 = arith.constant dense<0xFF800000> : vector<1x1xf32>
    %230 = vector.multi_reduction <maximumf>, %229, %cst_107 [2] : vector<1x1x9xf32> to vector<1x1xf32>
    %231 = vector.shape_cast %230 : vector<1x1xf32> to vector<1x1x1xf32>
    %232 = vector.broadcast %231 : vector<1x1x1xf32> to vector<1x1x9xf32>
    %233 = arith.subf %229, %232 : vector<1x1x9xf32>
    %234 = math.exp %233 : vector<1x1x9xf32>
    %cst_108 = arith.constant dense<0.000000e+00> : vector<1x1xf32>
    %235 = vector.multi_reduction <add>, %234, %cst_108 [2] : vector<1x1x9xf32> to vector<1x1xf32>
    %236 = vector.shape_cast %235 : vector<1x1xf32> to vector<1x1x1xf32>
    %237 = tpu.reciprocal %236 {approx = true} : vector<1x1x1xf32> -> vector<1x1x1xf32>
    %238 = vector.broadcast %237 : vector<1x1x1xf32> to vector<1x1x9xf32>
    %239 = arith.mulf %234, %238 : vector<1x1x9xf32>
    %240 = arith.truncf %239 : vector<1x1x9xf32> to vector<1x1x9xbf16>
    %241 = vector.extract_strided_slice %209 {offsets = [0, 0, 32], sizes = [1, 9, 32], strides = [1, 1, 1]} : vector<1x9x128xbf16> to vector<1x9x32xbf16>
    "tpu.trace_start"() <{level = 10 : i32, message = "bqk,bkd->bqd"}> : () -> ()
    %cst_109 = arith.constant dense<0.000000e+00> : vector<1x1x32xf32>
    %242 = tpu.matmul %240, %241, %cst_109 {dimension_numbers = #tpu.dot_dimension_numbers<[2], [1], [1], [2], [0, 0, 0, 1, 1, 2], [0], [0]>} : vector<1x1x9xbf16>, vector<1x9x32xbf16>, vector<1x1x32xf32> -> vector<1x1x32xf32>
    "tpu.trace_stop"() : () -> ()
    %243 = arith.truncf %242 : vector<1x1x32xf32> to vector<1x1x32xbf16>
    %244 = vector.extract_strided_slice %205 {offsets = [0, 0, 64], sizes = [1, 1, 32], strides = [1, 1, 1]} : vector<1x1x128xbf16> to vector<1x1x32xbf16>
    %245 = vector.extract_strided_slice %207 {offsets = [0, 0, 64], sizes = [1, 9, 32], strides = [1, 1, 1]} : vector<1x9x128xbf16> to vector<1x9x32xbf16>
    "tpu.trace_start"() <{level = 10 : i32, message = "bqd,bkd->bqk"}> : () -> ()
    %cst_110 = arith.constant dense<0.000000e+00> : vector<1x1x9xf32>
    %246 = tpu.matmul %244, %245, %cst_110 {dimension_numbers = #tpu.dot_dimension_numbers<[2], [2], [1], [1], [0, 0, 0, 1, 1, 1], [0], [0]>} : vector<1x1x32xbf16>, vector<1x9x32xbf16>, vector<1x1x9xf32> -> vector<1x1x9xf32>
    "tpu.trace_stop"() : () -> ()
    %cst_111 = arith.constant dense<0xFF800000> : vector<1x1xf32>
    %247 = vector.multi_reduction <maximumf>, %246, %cst_111 [2] : vector<1x1x9xf32> to vector<1x1xf32>
    %248 = vector.shape_cast %247 : vector<1x1xf32> to vector<1x1x1xf32>
    %249 = vector.broadcast %248 : vector<1x1x1xf32> to vector<1x1x9xf32>
    %250 = arith.subf %246, %249 : vector<1x1x9xf32>
    %251 = math.exp %250 : vector<1x1x9xf32>
    %cst_112 = arith.constant dense<0.000000e+00> : vector<1x1xf32>
    %252 = vector.multi_reduction <add>, %251, %cst_112 [2] : vector<1x1x9xf32> to vector<1x1xf32>
    %253 = vector.shape_cast %252 : vector<1x1xf32> to vector<1x1x1xf32>
    %254 = tpu.reciprocal %253 {approx = true} : vector<1x1x1xf32> -> vector<1x1x1xf32>
    %255 = vector.broadcast %254 : vector<1x1x1xf32> to vector<1x1x9xf32>
    %256 = arith.mulf %251, %255 : vector<1x1x9xf32>
    %257 = arith.truncf %256 : vector<1x1x9xf32> to vector<1x1x9xbf16>
    %258 = vector.extract_strided_slice %209 {offsets = [0, 0, 64], sizes = [1, 9, 32], strides = [1, 1, 1]} : vector<1x9x128xbf16> to vector<1x9x32xbf16>
    "tpu.trace_start"() <{level = 10 : i32, message = "bqk,bkd->bqd"}> : () -> ()
    %cst_113 = arith.constant dense<0.000000e+00> : vector<1x1x32xf32>
    %259 = tpu.matmul %257, %258, %cst_113 {dimension_numbers = #tpu.dot_dimension_numbers<[2], [1], [1], [2], [0, 0, 0, 1, 1, 2], [0], [0]>} : vector<1x1x9xbf16>, vector<1x9x32xbf16>, vector<1x1x32xf32> -> vector<1x1x32xf32>
    "tpu.trace_stop"() : () -> ()
    %260 = arith.truncf %259 : vector<1x1x32xf32> to vector<1x1x32xbf16>
    %261 = vector.extract_strided_slice %205 {offsets = [0, 0, 96], sizes = [1, 1, 32], strides = [1, 1, 1]} : vector<1x1x128xbf16> to vector<1x1x32xbf16>
    %262 = vector.extract_strided_slice %207 {offsets = [0, 0, 96], sizes = [1, 9, 32], strides = [1, 1, 1]} : vector<1x9x128xbf16> to vector<1x9x32xbf16>
    "tpu.trace_start"() <{level = 10 : i32, message = "bqd,bkd->bqk"}> : () -> ()
    %cst_114 = arith.constant dense<0.000000e+00> : vector<1x1x9xf32>
    %263 = tpu.matmul %261, %262, %cst_114 {dimension_numbers = #tpu.dot_dimension_numbers<[2], [2], [1], [1], [0, 0, 0, 1, 1, 1], [0], [0]>} : vector<1x1x32xbf16>, vector<1x9x32xbf16>, vector<1x1x9xf32> -> vector<1x1x9xf32>
    "tpu.trace_stop"() : () -> ()
    %cst_115 = arith.constant dense<0xFF800000> : vector<1x1xf32>
    %264 = vector.multi_reduction <maximumf>, %263, %cst_115 [2] : vector<1x1x9xf32> to vector<1x1xf32>
    %265 = vector.shape_cast %264 : vector<1x1xf32> to vector<1x1x1xf32>
    %266 = vector.broadcast %265 : vector<1x1x1xf32> to vector<1x1x9xf32>
    %267 = arith.subf %263, %266 : vector<1x1x9xf32>
    %268 = math.exp %267 : vector<1x1x9xf32>
    %cst_116 = arith.constant dense<0.000000e+00> : vector<1x1xf32>
    %269 = vector.multi_reduction <add>, %268, %cst_116 [2] : vector<1x1x9xf32> to vector<1x1xf32>
    %270 = vector.shape_cast %269 : vector<1x1xf32> to vector<1x1x1xf32>
    %271 = tpu.reciprocal %270 {approx = true} : vector<1x1x1xf32> -> vector<1x1x1xf32>
    %272 = vector.broadcast %271 : vector<1x1x1xf32> to vector<1x1x9xf32>
    %273 = arith.mulf %268, %272 : vector<1x1x9xf32>
    %274 = arith.truncf %273 : vector<1x1x9xf32> to vector<1x1x9xbf16>
    %275 = vector.extract_strided_slice %209 {offsets = [0, 0, 96], sizes = [1, 9, 32], strides = [1, 1, 1]} : vector<1x9x128xbf16> to vector<1x9x32xbf16>
    "tpu.trace_start"() <{level = 10 : i32, message = "bqk,bkd->bqd"}> : () -> ()
    %cst_117 = arith.constant dense<0.000000e+00> : vector<1x1x32xf32>
    %276 = tpu.matmul %274, %275, %cst_117 {dimension_numbers = #tpu.dot_dimension_numbers<[2], [1], [1], [2], [0, 0, 0, 1, 1, 2], [0], [0]>} : vector<1x1x9xbf16>, vector<1x9x32xbf16>, vector<1x1x32xf32> -> vector<1x1x32xf32>
    "tpu.trace_stop"() : () -> ()
    %277 = arith.truncf %276 : vector<1x1x32xf32> to vector<1x1x32xbf16>
    %278 = tpu.concatenate %226, %243, %260, %277 in 2 : vector<1x1x32xbf16>, vector<1x1x32xbf16>, vector<1x1x32xbf16>, vector<1x1x32xbf16> -> vector<1x1x128xbf16>
    %279 = vector.shape_cast %278 : vector<1x1x128xbf16> to vector<1x128xbf16>
    %c1_118 = arith.constant 1 : index
    %c0_119 = arith.constant 0 : index
    %c0_120 = arith.constant 0 : index
    %280 = vector.load %arg8[%c1_118, %c0_119, %c0_120] : memref<2x128x128xbf16, #tpu.memory_space<vmem>>, vector<1x128x128xbf16>
    %281 = vector.shape_cast %280 : vector<1x128x128xbf16> to vector<128x128xbf16>
    %cst_121 = arith.constant dense<0.000000e+00> : vector<1x128xf32>
    %282 = tpu.matmul %279, %281, %cst_121 {dimension_numbers = #tpu.dot_dimension_numbers<[1], [0], [0], [1], [0, 0, 1, 1], [], []>} : vector<1x128xbf16>, vector<128x128xbf16>, vector<1x128xf32> -> vector<1x128xf32>
    %c1_122 = arith.constant 1 : index
    %c0_123 = arith.constant 0 : index
    %c0_124 = arith.constant 0 : index
    %283 = vector.load %arg9[%c1_122, %c0_123, %c0_124] : memref<2x1x128xf32, #tpu.memory_space<vmem>>, vector<1x1x128xf32>
    %284 = vector.shape_cast %283 : vector<1x1x128xf32> to vector<1x128xf32>
    %285 = arith.addf %282, %284 : vector<1x128xf32>
    %286 = arith.addf %181, %285 : vector<1x128xf32>
    %c1_125 = arith.constant 1 : index
    %c0_126 = arith.constant 0 : index
    %c0_127 = arith.constant 0 : index
    %287 = vector.load %arg14[%c1_125, %c0_126, %c0_127] : memref<2x1x128xf32, #tpu.memory_space<vmem>>, vector<1x1x128xf32>
    %288 = vector.shape_cast %287 : vector<1x1x128xf32> to vector<1x128xf32>
    %c1_128 = arith.constant 1 : index
    %c0_129 = arith.constant 0 : index
    %c0_130 = arith.constant 0 : index
    %289 = vector.load %arg15[%c1_128, %c0_129, %c0_130] : memref<2x1x128xf32, #tpu.memory_space<vmem>>, vector<1x1x128xf32>
    %290 = vector.shape_cast %289 : vector<1x1x128xf32> to vector<1x128xf32>
    %cst_131 = arith.constant dense<0.000000e+00> : vector<1xf32>
    %291 = vector.multi_reduction <add>, %286, %cst_131 [1] : vector<1x128xf32> to vector<1xf32>
    %292 = vector.shape_cast %291 : vector<1xf32> to vector<1x1xf32>
    %cst_132 = arith.constant 1.280000e+02 : f32
    %293 = vector.broadcast %cst_132 : f32 to vector<1x1xf32>
    %294 = arith.divf %292, %293 : vector<1x1xf32>
    %295 = vector.broadcast %294 : vector<1x1xf32> to vector<1x128xf32>
    %296 = arith.subf %286, %295 : vector<1x128xf32>
    %297 = arith.mulf %296, %296 : vector<1x128xf32>
    %cst_133 = arith.constant dense<0.000000e+00> : vector<1xf32>
    %298 = vector.multi_reduction <add>, %297, %cst_133 [1] : vector<1x128xf32> to vector<1xf32>
    %299 = vector.shape_cast %298 : vector<1xf32> to vector<1x1xf32>
    %cst_134 = arith.constant 1.280000e+02 : f32
    %300 = vector.broadcast %cst_134 : f32 to vector<1x1xf32>
    %301 = arith.divf %299, %300 : vector<1x1xf32>
    %302 = vector.broadcast %294 : vector<1x1xf32> to vector<1x128xf32>
    %303 = arith.subf %286, %302 : vector<1x128xf32>
    %cst_135 = arith.constant 9.99999974E-6 : f32
    %304 = vector.broadcast %cst_135 : f32 to vector<1x1xf32>
    %305 = arith.addf %301, %304 : vector<1x1xf32>
    %306 = math.rsqrt %305 : vector<1x1xf32>
    %307 = vector.broadcast %306 : vector<1x1xf32> to vector<1x128xf32>
    %308 = arith.mulf %303, %307 : vector<1x128xf32>
    %309 = arith.mulf %308, %288 : vector<1x128xf32>
    %310 = arith.addf %309, %290 : vector<1x128xf32>
    %311 = arith.truncf %310 : vector<1x128xf32> to vector<1x128xbf16>
    %c1_136 = arith.constant 1 : index
    %c0_137 = arith.constant 0 : index
    %c0_138 = arith.constant 0 : index
    %312 = vector.load %arg10[%c1_136, %c0_137, %c0_138] : memref<2x128x256xbf16, #tpu.memory_space<vmem>>, vector<1x128x256xbf16>
    %313 = vector.shape_cast %312 : vector<1x128x256xbf16> to vector<128x256xbf16>
    %cst_139 = arith.constant dense<0.000000e+00> : vector<1x256xf32>
    %314 = tpu.matmul %311, %313, %cst_139 {dimension_numbers = #tpu.dot_dimension_numbers<[1], [0], [0], [1], [0, 0, 1, 1], [], []>} : vector<1x128xbf16>, vector<128x256xbf16>, vector<1x256xf32> -> vector<1x256xf32>
    %c1_140 = arith.constant 1 : index
    %c0_141 = arith.constant 0 : index
    %c0_142 = arith.constant 0 : index
    %315 = vector.load %arg11[%c1_140, %c0_141, %c0_142] : memref<2x1x256xf32, #tpu.memory_space<vmem>>, vector<1x1x256xf32>
    %316 = vector.shape_cast %315 : vector<1x1x256xf32> to vector<1x256xf32>
    %317 = arith.addf %314, %316 : vector<1x256xf32>
    %cst_143 = arith.constant 0.000000e+00 : f32
    %318 = vector.broadcast %cst_143 : f32 to vector<1x256xf32>
    %319 = arith.maximumf %317, %318 : vector<1x256xf32>
    %320 = arith.truncf %319 : vector<1x256xf32> to vector<1x256xbf16>
    %c1_144 = arith.constant 1 : index
    %c0_145 = arith.constant 0 : index
    %c0_146 = arith.constant 0 : index
    %321 = vector.load %arg12[%c1_144, %c0_145, %c0_146] : memref<2x256x128xbf16, #tpu.memory_space<vmem>>, vector<1x256x128xbf16>
    %322 = vector.shape_cast %321 : vector<1x256x128xbf16> to vector<256x128xbf16>
    %cst_147 = arith.constant dense<0.000000e+00> : vector<1x128xf32>
    %323 = tpu.matmul %320, %322, %cst_147 {dimension_numbers = #tpu.dot_dimension_numbers<[1], [0], [0], [1], [0, 0, 1, 1], [], []>} : vector<1x256xbf16>, vector<256x128xbf16>, vector<1x128xf32> -> vector<1x128xf32>
    %c1_148 = arith.constant 1 : index
    %c0_149 = arith.constant 0 : index
    %c0_150 = arith.constant 0 : index
    %324 = vector.load %arg13[%c1_148, %c0_149, %c0_150] : memref<2x1x128xf32, #tpu.memory_space<vmem>>, vector<1x1x128xf32>
    %325 = vector.shape_cast %324 : vector<1x1x128xf32> to vector<1x128xf32>
    %326 = arith.addf %323, %325 : vector<1x128xf32>
    %327 = arith.addf %310, %326 : vector<1x128xf32>
    %c1_151 = arith.constant 1 : index
    %c0_152 = arith.constant 0 : index
    %c0_153 = arith.constant 0 : index
    %328 = vector.load %arg16[%c1_151, %c0_152, %c0_153] : memref<2x1x128xf32, #tpu.memory_space<vmem>>, vector<1x1x128xf32>
    %329 = vector.shape_cast %328 : vector<1x1x128xf32> to vector<1x128xf32>
    %c1_154 = arith.constant 1 : index
    %c0_155 = arith.constant 0 : index
    %c0_156 = arith.constant 0 : index
    %330 = vector.load %arg17[%c1_154, %c0_155, %c0_156] : memref<2x1x128xf32, #tpu.memory_space<vmem>>, vector<1x1x128xf32>
    %331 = vector.shape_cast %330 : vector<1x1x128xf32> to vector<1x128xf32>
    %cst_157 = arith.constant dense<0.000000e+00> : vector<1xf32>
    %332 = vector.multi_reduction <add>, %327, %cst_157 [1] : vector<1x128xf32> to vector<1xf32>
    %333 = vector.shape_cast %332 : vector<1xf32> to vector<1x1xf32>
    %cst_158 = arith.constant 1.280000e+02 : f32
    %334 = vector.broadcast %cst_158 : f32 to vector<1x1xf32>
    %335 = arith.divf %333, %334 : vector<1x1xf32>
    %336 = vector.broadcast %335 : vector<1x1xf32> to vector<1x128xf32>
    %337 = arith.subf %327, %336 : vector<1x128xf32>
    %338 = arith.mulf %337, %337 : vector<1x128xf32>
    %cst_159 = arith.constant dense<0.000000e+00> : vector<1xf32>
    %339 = vector.multi_reduction <add>, %338, %cst_159 [1] : vector<1x128xf32> to vector<1xf32>
    %340 = vector.shape_cast %339 : vector<1xf32> to vector<1x1xf32>
    %cst_160 = arith.constant 1.280000e+02 : f32
    %341 = vector.broadcast %cst_160 : f32 to vector<1x1xf32>
    %342 = arith.divf %340, %341 : vector<1x1xf32>
    %343 = vector.broadcast %335 : vector<1x1xf32> to vector<1x128xf32>
    %344 = arith.subf %327, %343 : vector<1x128xf32>
    %cst_161 = arith.constant 9.99999974E-6 : f32
    %345 = vector.broadcast %cst_161 : f32 to vector<1x1xf32>
    %346 = arith.addf %342, %345 : vector<1x1xf32>
    %347 = math.rsqrt %346 : vector<1x1xf32>
    %348 = vector.broadcast %347 : vector<1x1xf32> to vector<1x128xf32>
    %349 = arith.mulf %344, %348 : vector<1x128xf32>
    %350 = arith.mulf %349, %329 : vector<1x128xf32>
    %351 = arith.addf %350, %331 : vector<1x128xf32>
    %c0_162 = arith.constant 0 : index
    %c0_163 = arith.constant 0 : index
    %352 = vector.load %arg18[%c0_162, %c0_163] : memref<1x128xf32, #tpu.memory_space<vmem>>, vector<1x128xf32>
    %353 = arith.mulf %351, %352 : vector<1x128xf32>
    %c0_164 = arith.constant 0 : index
    %c0_165 = arith.constant 0 : index
    %354 = vector.load %arg19[%c0_164, %c0_165] : memref<1x128xf32, #tpu.memory_space<vmem>>, vector<1x128xf32>
    %355 = arith.addf %353, %354 : vector<1x128xf32>
    %c0_166 = arith.constant 0 : index
    %c0_167 = arith.constant 0 : index
    %c0_168 = arith.constant 0 : index
    %356 = vector.load %arg20[%c0_166, %c0_167, %c0_168] : memref<1x1x128xf32, #tpu.memory_space<vmem>>, vector<1x1x128xf32>
    %357 = vector.shape_cast %356 : vector<1x1x128xf32> to vector<1x128xf32>
    %358 = vector.shape_cast %355 : vector<1x128xf32> to vector<1x1x128xf32>
    tpu.vector_store %arg20[%c0_166, %c0_167, %c0_168], %358 {strides = array<i32>} : memref<1x1x128xf32, #tpu.memory_space<vmem>>, vector<1x1x128xf32>,
    return
  }
  func.func @transform_0(%arg0: i32) -> (i32, i32, i32) {
    %c0_i32 = arith.constant 0 : i32
    %c0_i32_0 = arith.constant 0 : i32
    %c0_i32_1 = arith.constant 0 : i32
    return %arg0, %c0_i32, %c0_i32_0 : i32, i32, i32
  }
  func.func @transform_1(%arg0: i32) -> (i32, i32, i32) {
    %c0_i32 = arith.constant 0 : i32
    %c0_i32_0 = arith.constant 0 : i32
    %c0_i32_1 = arith.constant 0 : i32
    %c0_i32_2 = arith.constant 0 : i32
    return %c0_i32, %c0_i32_0, %c0_i32_1 : i32, i32, i32
  }
  func.func @transform_2(%arg0: i32) -> (i32, i32, i32) {
    %c0_i32 = arith.constant 0 : i32
    %c0_i32_0 = arith.constant 0 : i32
    %c0_i32_1 = arith.constant 0 : i32
    %c0_i32_2 = arith.constant 0 : i32
    return %c0_i32, %c0_i32_0, %c0_i32_1 : i32, i32, i32
  }
  func.func @transform_3(%arg0: i32) -> (i32, i32, i32) {
    %c0_i32 = arith.constant 0 : i32
    %c0_i32_0 = arith.constant 0 : i32
    %c0_i32_1 = arith.constant 0 : i32
    %c0_i32_2 = arith.constant 0 : i32
    return %c0_i32, %c0_i32_0, %c0_i32_1 : i32, i32, i32
  }
  func.func @transform_4(%arg0: i32) -> (i32, i32, i32) {
    %c0_i32 = arith.constant 0 : i32
    %c0_i32_0 = arith.constant 0 : i32
    %c0_i32_1 = arith.constant 0 : i32
    %c0_i32_2 = arith.constant 0 : i32
    return %c0_i32, %c0_i32_0, %c0_i32_1 : i32, i32, i32
  }
  func.func @transform_5(%arg0: i32) -> (i32, i32, i32) {
    %c0_i32 = arith.constant 0 : i32
    %c0_i32_0 = arith.constant 0 : i32
    %c0_i32_1 = arith.constant 0 : i32
    %c0_i32_2 = arith.constant 0 : i32
    return %c0_i32, %c0_i32_0, %c0_i32_1 : i32, i32, i32
  }
  func.func @transform_6(%arg0: i32) -> (i32, i32, i32) {
    %c0_i32 = arith.constant 0 : i32
    %c0_i32_0 = arith.constant 0 : i32
    %c0_i32_1 = arith.constant 0 : i32
    %c0_i32_2 = arith.constant 0 : i32
    return %c0_i32, %c0_i32_0, %c0_i32_1 : i32, i32, i32
  }
  func.func @transform_7(%arg0: i32) -> (i32, i32, i32) {
    %c0_i32 = arith.constant 0 : i32
    %c0_i32_0 = arith.constant 0 : i32
    %c0_i32_1 = arith.constant 0 : i32
    %c0_i32_2 = arith.constant 0 : i32
    return %c0_i32, %c0_i32_0, %c0_i32_1 : i32, i32, i32
  }
  func.func @transform_8(%arg0: i32) -> (i32, i32, i32) {
    %c0_i32 = arith.constant 0 : i32
    %c0_i32_0 = arith.constant 0 : i32
    %c0_i32_1 = arith.constant 0 : i32
    %c0_i32_2 = arith.constant 0 : i32
    return %c0_i32, %c0_i32_0, %c0_i32_1 : i32, i32, i32
  }
  func.func @transform_9(%arg0: i32) -> (i32, i32, i32) {
    %c0_i32 = arith.constant 0 : i32
    %c0_i32_0 = arith.constant 0 : i32
    %c0_i32_1 = arith.constant 0 : i32
    %c0_i32_2 = arith.constant 0 : i32
    return %c0_i32, %c0_i32_0, %c0_i32_1 : i32, i32, i32
  }
  func.func @transform_10(%arg0: i32) -> (i32, i32, i32) {
    %c0_i32 = arith.constant 0 : i32
    %c0_i32_0 = arith.constant 0 : i32
    %c0_i32_1 = arith.constant 0 : i32
    %c0_i32_2 = arith.constant 0 : i32
    return %c0_i32, %c0_i32_0, %c0_i32_1 : i32, i32, i32
  }
  func.func @transform_11(%arg0: i32) -> (i32, i32, i32) {
    %c0_i32 = arith.constant 0 : i32
    %c0_i32_0 = arith.constant 0 : i32
    %c0_i32_1 = arith.constant 0 : i32
    %c0_i32_2 = arith.constant 0 : i32
    return %c0_i32, %c0_i32_0, %c0_i32_1 : i32, i32, i32
  }
  func.func @transform_12(%arg0: i32) -> (i32, i32, i32) {
    %c0_i32 = arith.constant 0 : i32
    %c0_i32_0 = arith.constant 0 : i32
    %c0_i32_1 = arith.constant 0 : i32
    %c0_i32_2 = arith.constant 0 : i32
    return %c0_i32, %c0_i32_0, %c0_i32_1 : i32, i32, i32
  }
  func.func @transform_13(%arg0: i32) -> (i32, i32, i32) {
    %c0_i32 = arith.constant 0 : i32
    %c0_i32_0 = arith.constant 0 : i32
    %c0_i32_1 = arith.constant 0 : i32
    %c0_i32_2 = arith.constant 0 : i32
    return %c0_i32, %c0_i32_0, %c0_i32_1 : i32, i32, i32
  }
  func.func @transform_14(%arg0: i32) -> (i32, i32, i32) {
    %c0_i32 = arith.constant 0 : i32
    %c0_i32_0 = arith.constant 0 : i32
    %c0_i32_1 = arith.constant 0 : i32
    %c0_i32_2 = arith.constant 0 : i32
    return %c0_i32, %c0_i32_0, %c0_i32_1 : i32, i32, i32
  }
  func.func @transform_15(%arg0: i32) -> (i32, i32, i32) {
    %c0_i32 = arith.constant 0 : i32
    %c0_i32_0 = arith.constant 0 : i32
    %c0_i32_1 = arith.constant 0 : i32
    %c0_i32_2 = arith.constant 0 : i32
    return %c0_i32, %c0_i32_0, %c0_i32_1 : i32, i32, i32
  }
  func.func @transform_16(%arg0: i32) -> (i32, i32, i32) {
    %c0_i32 = arith.constant 0 : i32
    %c0_i32_0 = arith.constant 0 : i32
    %c0_i32_1 = arith.constant 0 : i32
    %c0_i32_2 = arith.constant 0 : i32
    return %c0_i32, %c0_i32_0, %c0_i32_1 : i32, i32, i32
  }
  func.func @transform_17(%arg0: i32) -> (i32, i32) {
    %c0_i32 = arith.constant 0 : i32
    %c0_i32_0 = arith.constant 0 : i32
    %c0_i32_1 = arith.constant 0 : i32
    return %c0_i32, %c0_i32_0 : i32, i32
  }
  func.func @transform_18(%arg0: i32) -> (i32, i32) {
    %c0_i32 = arith.constant 0 : i32
    %c0_i32_0 = arith.constant 0 : i32
    %c0_i32_1 = arith.constant 0 : i32
    return %c0_i32, %c0_i32_0 : i32, i32
  }
  func.func @transform_19(%arg0: i32) -> (i32, i32, i32) {
    %c0_i32 = arith.constant 0 : i32
    %c0_i32_0 = arith.constant 0 : i32
    %c0_i32_1 = arith.constant 0 : i32
    return %arg0, %c0_i32, %c0_i32_0 : i32, i32, i32
  }
}

module attributes {stable_mosaic.version = 11 : i64} {
  func.func @kernel(%arg0: i32, %arg1: memref<1x9x128xf32, #tpu.memory_space<vmem>>, %arg2: memref<2x128x128xbf16, #tpu.memory_space<vmem>>, %arg3: memref<2x128x128xbf16, #tpu.memory_space<vmem>>, %arg4: memref<2x128x128xbf16, #tpu.memory_space<vmem>>, %arg5: memref<2x1x128xf32, #tpu.memory_space<vmem>>, %arg6: memref<2x1x128xf32, #tpu.memory_space<vmem>>, %arg7: memref<2x1x128xf32, #tpu.memory_space<vmem>>, %arg8: memref<2x128x128xbf16, #tpu.memory_space<vmem>>, %arg9: memref<2x1x128xf32, #tpu.memory_space<vmem>>, %arg10: memref<2x128x256xbf16, #tpu.memory_space<vmem>>, %arg11: memref<2x1x256xf32, #tpu.memory_space<vmem>>, %arg12: memref<2x256x128xbf16, #tpu.memory_space<vmem>>, %arg13: memref<2x1x128xf32, #tpu.memory_space<vmem>>, %arg14: memref<2x1x128xf32, #tpu.memory_space<vmem>>, %arg15: memref<2x1x128xf32, #tpu.memory_space<vmem>>, %arg16: memref<2x1x128xf32, #tpu.memory_space<vmem>>, %arg17: memref<2x1x128xf32, #tpu.memory_space<vmem>>, %arg18: memref<1x128xf32, #tpu.memory_space<vmem>>, %arg19: memref<1x128xf32, #tpu.memory_space<vmem>>, %arg20: memref<1x1x128xf32, #tpu.memory_space<vmem>>) attributes {dimension_semantics = [#tpu.dimension_semantics<parallel>], iteration_bounds = array<i64: 2>, scalar_prefetch = 0 : i64, scratch_operands = 0 : i64, tpu.core_type = #tpu.core_type<tc>, window_params = [{transform_indices = @transform_0, window_bounds = array<i64: 1, 9, 128>}, {pipeline_mode = #tpu.pipeline_mode<synchronous>, transform_indices = @transform_1, window_bounds = array<i64: 2, 128, 128>}, {pipeline_mode = #tpu.pipeline_mode<synchronous>, transform_indices = @transform_2, window_bounds = array<i64: 2, 128, 128>}, {pipeline_mode = #tpu.pipeline_mode<synchronous>, transform_indices = @transform_3, window_bounds = array<i64: 2, 128, 128>}, {pipeline_mode = #tpu.pipeline_mode<synchronous>, transform_indices = @transform_4, window_bounds = array<i64: 2, 1, 128>}, {pipeline_mode = #tpu.pipeline_mode<synchronous>, transform_indices = @transform_5, window_bounds = array<i64: 2, 1, 128>}, {pipeline_mode = #tpu.pipeline_mode<synchronous>, transform_indices = @transform_6, window_bounds = array<i64: 2, 1, 128>}, {pipeline_mode = #tpu.pipeline_mode<synchronous>, transform_indices = @transform_7, window_bounds = array<i64: 2, 128, 128>}, {pipeline_mode = #tpu.pipeline_mode<synchronous>, transform_indices = @transform_8, window_bounds = array<i64: 2, 1, 128>}, {pipeline_mode = #tpu.pipeline_mode<synchronous>, transform_indices = @transform_9, window_bounds = array<i64: 2, 128, 256>}, {pipeline_mode = #tpu.pipeline_mode<synchronous>, transform_indices = @transform_10, window_bounds = array<i64: 2, 1, 256>}, {pipeline_mode = #tpu.pipeline_mode<synchronous>, transform_indices = @transform_11, window_bounds = array<i64: 2, 256, 128>}, {pipeline_mode = #tpu.pipeline_mode<synchronous>, transform_indices = @transform_12, window_bounds = array<i64: 2, 1, 128>}, {pipeline_mode = #tpu.pipeline_mode<synchronous>, transform_indices = @transform_13, window_bounds = array<i64: 2, 1, 128>}, {pipeline_mode = #tpu.pipeline_mode<synchronous>, transform_indices = @transform_14, window_bounds = array<i64: 2, 1, 128>}, {pipeline_mode = #tpu.pipeline_mode<synchronous>, transform_indices = @transform_15, window_bounds = array<i64: 2, 1, 128>}, {pipeline_mode = #tpu.pipeline_mode<synchronous>, transform_indices = @transform_16, window_bounds = array<i64: 2, 1, 128>}, {pipeline_mode = #tpu.pipeline_mode<synchronous>, transform_indices = @transform_17, window_bounds = array<i64: 1, 128>}, {pipeline_mode = #tpu.pipeline_mode<synchronous>, transform_indices = @transform_18, window_bounds = array<i64: 1, 128>}, {transform_indices = @transform_19, window_bounds = array<i64: 1, 1, 128>}]} {
    %c0 = arith.constant 0 : index
    %c0_0 = arith.constant 0 : index
    %c0_1 = arith.constant 0 : index
    %0 = vector.load %arg1[%c0, %c0_0, %c0_1] : memref<1x9x128xf32, #tpu.memory_space<vmem>>, vector<1x9x128xf32>
    %1 = vector.shape_cast %0 : vector<1x9x128xf32> to vector<9x128xf32>
    %2 = arith.truncf %1 : vector<9x128xf32> to vector<9x128xbf16>
    %c0_2 = arith.constant 0 : index
    %c0_3 = arith.constant 0 : index
    %c0_4 = arith.constant 0 : index
    %3 = vector.load %arg2[%c0_2, %c0_3, %c0_4] : memref<2x128x128xbf16, #tpu.memory_space<vmem>>, vector<1x128x128xbf16>
    %4 = vector.shape_cast %3 : vector<1x128x128xbf16> to vector<128x128xbf16>
    %cst = arith.constant dense<0.000000e+00> : vector<9x128xf32>
    %5 = tpu.matmul %2, %4, %cst {dimension_numbers = #tpu.dot_dimension_numbers<[1], [0], [0], [1], [0, 0, 1, 1], [], []>} : vector<9x128xbf16>, vector<128x128xbf16>, vector<9x128xf32> -> vector<9x128xf32>
    %c0_5 = arith.constant 0 : index
    %c0_6 = arith.constant 0 : index
    %c0_7 = arith.constant 0 : index
    %6 = vector.load %arg5[%c0_5, %c0_6, %c0_7] : memref<2x1x128xf32, #tpu.memory_space<vmem>>, vector<1x1x128xf32>
    %7 = vector.shape_cast %6 : vector<1x1x128xf32> to vector<1x128xf32>
    %8 = vector.broadcast %7 : vector<1x128xf32> to vector<9x128xf32>
    %9 = arith.addf %5, %8 : vector<9x128xf32>
    %c0_8 = arith.constant 0 : index
    %c0_9 = arith.constant 0 : index
    %c0_10 = arith.constant 0 : index
    %10 = vector.load %arg3[%c0_8, %c0_9, %c0_10] : memref<2x128x128xbf16, #tpu.memory_space<vmem>>, vector<1x128x128xbf16>
    %11 = vector.shape_cast %10 : vector<1x128x128xbf16> to vector<128x128xbf16>
    %cst_11 = arith.constant dense<0.000000e+00> : vector<9x128xf32>
    %12 = tpu.matmul %2, %11, %cst_11 {dimension_numbers = #tpu.dot_dimension_numbers<[1], [0], [0], [1], [0, 0, 1, 1], [], []>} : vector<9x128xbf16>, vector<128x128xbf16>, vector<9x128xf32> -> vector<9x128xf32>
    %c0_12 = arith.constant 0 : index
    %c0_13 = arith.constant 0 : index
    %c0_14 = arith.constant 0 : index
    %13 = vector.load %arg6[%c0_12, %c0_13, %c0_14] : memref<2x1x128xf32, #tpu.memory_space<vmem>>, vector<1x1x128xf32>
    %14 = vector.shape_cast %13 : vector<1x1x128xf32> to vector<1x128xf32>
    %15 = vector.broadcast %14 : vector<1x128xf32> to vector<9x128xf32>
    %16 = arith.addf %12, %15 : vector<9x128xf32>
    %c0_15 = arith.constant 0 : index
    %c0_16 = arith.constant 0 : index
    %c0_17 = arith.constant 0 : index
    %17 = vector.load %arg4[%c0_15, %c0_16, %c0_17] : memref<2x128x128xbf16, #tpu.memory_space<vmem>>, vector<1x128x128xbf16>
    %18 = vector.shape_cast %17 : vector<1x128x128xbf16> to vector<128x128xbf16>
    %cst_18 = arith.constant dense<0.000000e+00> : vector<9x128xf32>
    %19 = tpu.matmul %2, %18, %cst_18 {dimension_numbers = #tpu.dot_dimension_numbers<[1], [0], [0], [1], [0, 0, 1, 1], [], []>} : vector<9x128xbf16>, vector<128x128xbf16>, vector<9x128xf32> -> vector<9x128xf32>
    %c0_19 = arith.constant 0 : index
    %c0_20 = arith.constant 0 : index
    %c0_21 = arith.constant 0 : index
    %20 = vector.load %arg7[%c0_19, %c0_20, %c0_21] : memref<2x1x128xf32, #tpu.memory_space<vmem>>, vector<1x1x128xf32>
    %21 = vector.shape_cast %20 : vector<1x1x128xf32> to vector<1x128xf32>
    %22 = vector.broadcast %21 : vector<1x128xf32> to vector<9x128xf32>
    %23 = arith.addf %19, %22 : vector<9x128xf32>
    %24 = arith.truncf %9 : vector<9x128xf32> to vector<9x128xbf16>
    %25 = vector.shape_cast %24 : vector<9x128xbf16> to vector<1x9x128xbf16>
    %26 = arith.truncf %16 : vector<9x128xf32> to vector<9x128xbf16>
    %27 = vector.shape_cast %26 : vector<9x128xbf16> to vector<1x9x128xbf16>
    %28 = arith.truncf %23 : vector<9x128xf32> to vector<9x128xbf16>
    %29 = vector.shape_cast %28 : vector<9x128xbf16> to vector<1x9x128xbf16>
    %30 = vector.extract_strided_slice %25 {offsets = [0, 0, 0], sizes = [1, 9, 32], strides = [1, 1, 1]} : vector<1x9x128xbf16> to vector<1x9x32xbf16>
    %31 = vector.extract_strided_slice %27 {offsets = [0, 0, 0], sizes = [1, 9, 32], strides = [1, 1, 1]} : vector<1x9x128xbf16> to vector<1x9x32xbf16>
    "tpu.trace_start"() <{level = 10 : i32, message = "bqd,bkd->bqk"}> : () -> ()
    %cst_22 = arith.constant dense<0.000000e+00> : vector<1x9x9xf32>
    %32 = tpu.matmul %30, %31, %cst_22 {dimension_numbers = #tpu.dot_dimension_numbers<[2], [2], [1], [1], [0, 0, 0, 1, 1, 1], [0], [0]>} : vector<1x9x32xbf16>, vector<1x9x32xbf16>, vector<1x9x9xf32> -> vector<1x9x9xf32>
    "tpu.trace_stop"() : () -> ()
    %cst_23 = arith.constant dense<0xFF800000> : vector<1x9xf32>
    %33 = vector.multi_reduction <maximumf>, %32, %cst_23 [2] : vector<1x9x9xf32> to vector<1x9xf32>
    %34 = vector.shape_cast %33 : vector<1x9xf32> to vector<1x9x1xf32>
    %35 = vector.broadcast %34 : vector<1x9x1xf32> to vector<1x9x9xf32>
    %36 = arith.subf %32, %35 : vector<1x9x9xf32>
    %37 = math.exp %36 : vector<1x9x9xf32>
    %cst_24 = arith.constant dense<0.000000e+00> : vector<1x9xf32>
    %38 = vector.multi_reduction <add>, %37, %cst_24 [2] : vector<1x9x9xf32> to vector<1x9xf32>
    %39 = vector.shape_cast %38 : vector<1x9xf32> to vector<1x9x1xf32>
    %40 = tpu.reciprocal %39 {approx = true} : vector<1x9x1xf32> -> vector<1x9x1xf32>
    %41 = vector.broadcast %40 : vector<1x9x1xf32> to vector<1x9x9xf32>
    %42 = arith.mulf %37, %41 : vector<1x9x9xf32>
    %43 = arith.truncf %42 : vector<1x9x9xf32> to vector<1x9x9xbf16>
    %44 = vector.extract_strided_slice %29 {offsets = [0, 0, 0], sizes = [1, 9, 32], strides = [1, 1, 1]} : vector<1x9x128xbf16> to vector<1x9x32xbf16>
    "tpu.trace_start"() <{level = 10 : i32, message = "bqk,bkd->bqd"}> : () -> ()
    %cst_25 = arith.constant dense<0.000000e+00> : vector<1x9x32xf32>
    %45 = tpu.matmul %43, %44, %cst_25 {dimension_numbers = #tpu.dot_dimension_numbers<[2], [1], [1], [2], [0, 0, 0, 1, 1, 2], [0], [0]>} : vector<1x9x9xbf16>, vector<1x9x32xbf16>, vector<1x9x32xf32> -> vector<1x9x32xf32>
    "tpu.trace_stop"() : () -> ()
    %46 = arith.truncf %45 : vector<1x9x32xf32> to vector<1x9x32xbf16>
    %47 = vector.extract_strided_slice %25 {offsets = [0, 0, 32], sizes = [1, 9, 32], strides = [1, 1, 1]} : vector<1x9x128xbf16> to vector<1x9x32xbf16>
    %48 = vector.extract_strided_slice %27 {offsets = [0, 0, 32], sizes = [1, 9, 32], strides = [1, 1, 1]} : vector<1x9x128xbf16> to vector<1x9x32xbf16>
    "tpu.trace_start"() <{level = 10 : i32, message = "bqd,bkd->bqk"}> : () -> ()
    %cst_26 = arith.constant dense<0.000000e+00> : vector<1x9x9xf32>
    %49 = tpu.matmul %47, %48, %cst_26 {dimension_numbers = #tpu.dot_dimension_numbers<[2], [2], [1], [1], [0, 0, 0, 1, 1, 1], [0], [0]>} : vector<1x9x32xbf16>, vector<1x9x32xbf16>, vector<1x9x9xf32> -> vector<1x9x9xf32>
    "tpu.trace_stop"() : () -> ()
    %cst_27 = arith.constant dense<0xFF800000> : vector<1x9xf32>
    %50 = vector.multi_reduction <maximumf>, %49, %cst_27 [2] : vector<1x9x9xf32> to vector<1x9xf32>
    %51 = vector.shape_cast %50 : vector<1x9xf32> to vector<1x9x1xf32>
    %52 = vector.broadcast %51 : vector<1x9x1xf32> to vector<1x9x9xf32>
    %53 = arith.subf %49, %52 : vector<1x9x9xf32>
    %54 = math.exp %53 : vector<1x9x9xf32>
    %cst_28 = arith.constant dense<0.000000e+00> : vector<1x9xf32>
    %55 = vector.multi_reduction <add>, %54, %cst_28 [2] : vector<1x9x9xf32> to vector<1x9xf32>
    %56 = vector.shape_cast %55 : vector<1x9xf32> to vector<1x9x1xf32>
    %57 = tpu.reciprocal %56 {approx = true} : vector<1x9x1xf32> -> vector<1x9x1xf32>
    %58 = vector.broadcast %57 : vector<1x9x1xf32> to vector<1x9x9xf32>
    %59 = arith.mulf %54, %58 : vector<1x9x9xf32>
    %60 = arith.truncf %59 : vector<1x9x9xf32> to vector<1x9x9xbf16>
    %61 = vector.extract_strided_slice %29 {offsets = [0, 0, 32], sizes = [1, 9, 32], strides = [1, 1, 1]} : vector<1x9x128xbf16> to vector<1x9x32xbf16>
    "tpu.trace_start"() <{level = 10 : i32, message = "bqk,bkd->bqd"}> : () -> ()
    %cst_29 = arith.constant dense<0.000000e+00> : vector<1x9x32xf32>
    %62 = tpu.matmul %60, %61, %cst_29 {dimension_numbers = #tpu.dot_dimension_numbers<[2], [1], [1], [2], [0, 0, 0, 1, 1, 2], [0], [0]>} : vector<1x9x9xbf16>, vector<1x9x32xbf16>, vector<1x9x32xf32> -> vector<1x9x32xf32>
    "tpu.trace_stop"() : () -> ()
    %63 = arith.truncf %62 : vector<1x9x32xf32> to vector<1x9x32xbf16>
    %64 = vector.extract_strided_slice %25 {offsets = [0, 0, 64], sizes = [1, 9, 32], strides = [1, 1, 1]} : vector<1x9x128xbf16> to vector<1x9x32xbf16>
    %65 = vector.extract_strided_slice %27 {offsets = [0, 0, 64], sizes = [1, 9, 32], strides = [1, 1, 1]} : vector<1x9x128xbf16> to vector<1x9x32xbf16>
    "tpu.trace_start"() <{level = 10 : i32, message = "bqd,bkd->bqk"}> : () -> ()
    %cst_30 = arith.constant dense<0.000000e+00> : vector<1x9x9xf32>
    %66 = tpu.matmul %64, %65, %cst_30 {dimension_numbers = #tpu.dot_dimension_numbers<[2], [2], [1], [1], [0, 0, 0, 1, 1, 1], [0], [0]>} : vector<1x9x32xbf16>, vector<1x9x32xbf16>, vector<1x9x9xf32> -> vector<1x9x9xf32>
    "tpu.trace_stop"() : () -> ()
    %cst_31 = arith.constant dense<0xFF800000> : vector<1x9xf32>
    %67 = vector.multi_reduction <maximumf>, %66, %cst_31 [2] : vector<1x9x9xf32> to vector<1x9xf32>
    %68 = vector.shape_cast %67 : vector<1x9xf32> to vector<1x9x1xf32>
    %69 = vector.broadcast %68 : vector<1x9x1xf32> to vector<1x9x9xf32>
    %70 = arith.subf %66, %69 : vector<1x9x9xf32>
    %71 = math.exp %70 : vector<1x9x9xf32>
    %cst_32 = arith.constant dense<0.000000e+00> : vector<1x9xf32>
    %72 = vector.multi_reduction <add>, %71, %cst_32 [2] : vector<1x9x9xf32> to vector<1x9xf32>
    %73 = vector.shape_cast %72 : vector<1x9xf32> to vector<1x9x1xf32>
    %74 = tpu.reciprocal %73 {approx = true} : vector<1x9x1xf32> -> vector<1x9x1xf32>
    %75 = vector.broadcast %74 : vector<1x9x1xf32> to vector<1x9x9xf32>
    %76 = arith.mulf %71, %75 : vector<1x9x9xf32>
    %77 = arith.truncf %76 : vector<1x9x9xf32> to vector<1x9x9xbf16>
    %78 = vector.extract_strided_slice %29 {offsets = [0, 0, 64], sizes = [1, 9, 32], strides = [1, 1, 1]} : vector<1x9x128xbf16> to vector<1x9x32xbf16>
    "tpu.trace_start"() <{level = 10 : i32, message = "bqk,bkd->bqd"}> : () -> ()
    %cst_33 = arith.constant dense<0.000000e+00> : vector<1x9x32xf32>
    %79 = tpu.matmul %77, %78, %cst_33 {dimension_numbers = #tpu.dot_dimension_numbers<[2], [1], [1], [2], [0, 0, 0, 1, 1, 2], [0], [0]>} : vector<1x9x9xbf16>, vector<1x9x32xbf16>, vector<1x9x32xf32> -> vector<1x9x32xf32>
    "tpu.trace_stop"() : () -> ()
    %80 = arith.truncf %79 : vector<1x9x32xf32> to vector<1x9x32xbf16>
    %81 = vector.extract_strided_slice %25 {offsets = [0, 0, 96], sizes = [1, 9, 32], strides = [1, 1, 1]} : vector<1x9x128xbf16> to vector<1x9x32xbf16>
    %82 = vector.extract_strided_slice %27 {offsets = [0, 0, 96], sizes = [1, 9, 32], strides = [1, 1, 1]} : vector<1x9x128xbf16> to vector<1x9x32xbf16>
    "tpu.trace_start"() <{level = 10 : i32, message = "bqd,bkd->bqk"}> : () -> ()
    %cst_34 = arith.constant dense<0.000000e+00> : vector<1x9x9xf32>
    %83 = tpu.matmul %81, %82, %cst_34 {dimension_numbers = #tpu.dot_dimension_numbers<[2], [2], [1], [1], [0, 0, 0, 1, 1, 1], [0], [0]>} : vector<1x9x32xbf16>, vector<1x9x32xbf16>, vector<1x9x9xf32> -> vector<1x9x9xf32>
    "tpu.trace_stop"() : () -> ()
    %cst_35 = arith.constant dense<0xFF800000> : vector<1x9xf32>
    %84 = vector.multi_reduction <maximumf>, %83, %cst_35 [2] : vector<1x9x9xf32> to vector<1x9xf32>
    %85 = vector.shape_cast %84 : vector<1x9xf32> to vector<1x9x1xf32>
    %86 = vector.broadcast %85 : vector<1x9x1xf32> to vector<1x9x9xf32>
    %87 = arith.subf %83, %86 : vector<1x9x9xf32>
    %88 = math.exp %87 : vector<1x9x9xf32>
    %cst_36 = arith.constant dense<0.000000e+00> : vector<1x9xf32>
    %89 = vector.multi_reduction <add>, %88, %cst_36 [2] : vector<1x9x9xf32> to vector<1x9xf32>
    %90 = vector.shape_cast %89 : vector<1x9xf32> to vector<1x9x1xf32>
    %91 = tpu.reciprocal %90 {approx = true} : vector<1x9x1xf32> -> vector<1x9x1xf32>
    %92 = vector.broadcast %91 : vector<1x9x1xf32> to vector<1x9x9xf32>
    %93 = arith.mulf %88, %92 : vector<1x9x9xf32>
    %94 = arith.truncf %93 : vector<1x9x9xf32> to vector<1x9x9xbf16>
    %95 = vector.extract_strided_slice %29 {offsets = [0, 0, 96], sizes = [1, 9, 32], strides = [1, 1, 1]} : vector<1x9x128xbf16> to vector<1x9x32xbf16>
    "tpu.trace_start"() <{level = 10 : i32, message = "bqk,bkd->bqd"}> : () -> ()
    %cst_37 = arith.constant dense<0.000000e+00> : vector<1x9x32xf32>
    %96 = tpu.matmul %94, %95, %cst_37 {dimension_numbers = #tpu.dot_dimension_numbers<[2], [1], [1], [2], [0, 0, 0, 1, 1, 2], [0], [0]>} : vector<1x9x9xbf16>, vector<1x9x32xbf16>, vector<1x9x32xf32> -> vector<1x9x32xf32>
    "tpu.trace_stop"() : () -> ()
    %97 = arith.truncf %96 : vector<1x9x32xf32> to vector<1x9x32xbf16>
    %98 = tpu.concatenate %46, %63, %80, %97 in 2 : vector<1x9x32xbf16>, vector<1x9x32xbf16>, vector<1x9x32xbf16>, vector<1x9x32xbf16> -> vector<1x9x128xbf16>
    %99 = vector.shape_cast %98 : vector<1x9x128xbf16> to vector<9x128xbf16>
    %c0_38 = arith.constant 0 : index
    %c0_39 = arith.constant 0 : index
    %c0_40 = arith.constant 0 : index
    %100 = vector.load %arg8[%c0_38, %c0_39, %c0_40] : memref<2x128x128xbf16, #tpu.memory_space<vmem>>, vector<1x128x128xbf16>
    %101 = vector.shape_cast %100 : vector<1x128x128xbf16> to vector<128x128xbf16>
    %cst_41 = arith.constant dense<0.000000e+00> : vector<9x128xf32>
    %102 = tpu.matmul %99, %101, %cst_41 {dimension_numbers = #tpu.dot_dimension_numbers<[1], [0], [0], [1], [0, 0, 1, 1], [], []>} : vector<9x128xbf16>, vector<128x128xbf16>, vector<9x128xf32> -> vector<9x128xf32>
    %c0_42 = arith.constant 0 : index
    %c0_43 = arith.constant 0 : index
    %c0_44 = arith.constant 0 : index
    %103 = vector.load %arg9[%c0_42, %c0_43, %c0_44] : memref<2x1x128xf32, #tpu.memory_space<vmem>>, vector<1x1x128xf32>
    %104 = vector.shape_cast %103 : vector<1x1x128xf32> to vector<1x128xf32>
    %105 = vector.broadcast %104 : vector<1x128xf32> to vector<9x128xf32>
    %106 = arith.addf %102, %105 : vector<9x128xf32>
    %107 = arith.addf %1, %106 : vector<9x128xf32>
    %c0_45 = arith.constant 0 : index
    %c0_46 = arith.constant 0 : index
    %c0_47 = arith.constant 0 : index
    %108 = vector.load %arg14[%c0_45, %c0_46, %c0_47] : memref<2x1x128xf32, #tpu.memory_space<vmem>>, vector<1x1x128xf32>
    %109 = vector.shape_cast %108 : vector<1x1x128xf32> to vector<1x128xf32>
    %c0_48 = arith.constant 0 : index
    %c0_49 = arith.constant 0 : index
    %c0_50 = arith.constant 0 : index
    %110 = vector.load %arg15[%c0_48, %c0_49, %c0_50] : memref<2x1x128xf32, #tpu.memory_space<vmem>>, vector<1x1x128xf32>
    %111 = vector.shape_cast %110 : vector<1x1x128xf32> to vector<1x128xf32>
    %cst_51 = arith.constant dense<0.000000e+00> : vector<9xf32>
    %112 = vector.multi_reduction <add>, %107, %cst_51 [1] : vector<9x128xf32> to vector<9xf32>
    %113 = vector.shape_cast %112 : vector<9xf32> to vector<9x1xf32>
    %cst_52 = arith.constant 1.280000e+02 : f32
    %114 = vector.broadcast %cst_52 : f32 to vector<9x1xf32>
    %115 = arith.divf %113, %114 : vector<9x1xf32>
    %116 = vector.broadcast %115 : vector<9x1xf32> to vector<9x128xf32>
    %117 = arith.subf %107, %116 : vector<9x128xf32>
    %118 = arith.mulf %117, %117 : vector<9x128xf32>
    %cst_53 = arith.constant dense<0.000000e+00> : vector<9xf32>
    %119 = vector.multi_reduction <add>, %118, %cst_53 [1] : vector<9x128xf32> to vector<9xf32>
    %120 = vector.shape_cast %119 : vector<9xf32> to vector<9x1xf32>
    %cst_54 = arith.constant 1.280000e+02 : f32
    %121 = vector.broadcast %cst_54 : f32 to vector<9x1xf32>
    %122 = arith.divf %120, %121 : vector<9x1xf32>
    %123 = vector.broadcast %115 : vector<9x1xf32> to vector<9x128xf32>
    %124 = arith.subf %107, %123 : vector<9x128xf32>
    %cst_55 = arith.constant 9.99999974E-6 : f32
    %125 = vector.broadcast %cst_55 : f32 to vector<9x1xf32>
    %126 = arith.addf %122, %125 : vector<9x1xf32>
    %127 = math.rsqrt %126 : vector<9x1xf32>
    %128 = vector.broadcast %127 : vector<9x1xf32> to vector<9x128xf32>
    %129 = arith.mulf %124, %128 : vector<9x128xf32>
    %130 = vector.broadcast %109 : vector<1x128xf32> to vector<9x128xf32>
    %131 = arith.mulf %129, %130 : vector<9x128xf32>
    %132 = vector.broadcast %111 : vector<1x128xf32> to vector<9x128xf32>
    %133 = arith.addf %131, %132 : vector<9x128xf32>
    %134 = arith.truncf %133 : vector<9x128xf32> to vector<9x128xbf16>
    %c0_56 = arith.constant 0 : index
    %c0_57 = arith.constant 0 : index
    %c0_58 = arith.constant 0 : index
    %135 = vector.load %arg10[%c0_56, %c0_57, %c0_58] : memref<2x128x256xbf16, #tpu.memory_space<vmem>>, vector<1x128x256xbf16>
    %136 = vector.shape_cast %135 : vector<1x128x256xbf16> to vector<128x256xbf16>
    %cst_59 = arith.constant dense<0.000000e+00> : vector<9x256xf32>
    %137 = tpu.matmul %134, %136, %cst_59 {dimension_numbers = #tpu.dot_dimension_numbers<[1], [0], [0], [1], [0, 0, 1, 1], [], []>} : vector<9x128xbf16>, vector<128x256xbf16>, vector<9x256xf32> -> vector<9x256xf32>
    %c0_60 = arith.constant 0 : index
    %c0_61 = arith.constant 0 : index
    %c0_62 = arith.constant 0 : index
    %138 = vector.load %arg11[%c0_60, %c0_61, %c0_62] : memref<2x1x256xf32, #tpu.memory_space<vmem>>, vector<1x1x256xf32>
    %139 = vector.shape_cast %138 : vector<1x1x256xf32> to vector<1x256xf32>
    %140 = vector.broadcast %139 : vector<1x256xf32> to vector<9x256xf32>
    %141 = arith.addf %137, %140 : vector<9x256xf32>
    %cst_63 = arith.constant 0.000000e+00 : f32
    %142 = vector.broadcast %cst_63 : f32 to vector<9x256xf32>
    %143 = arith.maximumf %141, %142 : vector<9x256xf32>
    %144 = arith.truncf %143 : vector<9x256xf32> to vector<9x256xbf16>
    %c0_64 = arith.constant 0 : index
    %c0_65 = arith.constant 0 : index
    %c0_66 = arith.constant 0 : index
    %145 = vector.load %arg12[%c0_64, %c0_65, %c0_66] : memref<2x256x128xbf16, #tpu.memory_space<vmem>>, vector<1x256x128xbf16>
    %146 = vector.shape_cast %145 : vector<1x256x128xbf16> to vector<256x128xbf16>
    %cst_67 = arith.constant dense<0.000000e+00> : vector<9x128xf32>
    %147 = tpu.matmul %144, %146, %cst_67 {dimension_numbers = #tpu.dot_dimension_numbers<[1], [0], [0], [1], [0, 0, 1, 1], [], []>} : vector<9x256xbf16>, vector<256x128xbf16>, vector<9x128xf32> -> vector<9x128xf32>
    %c0_68 = arith.constant 0 : index
    %c0_69 = arith.constant 0 : index
    %c0_70 = arith.constant 0 : index
    %148 = vector.load %arg13[%c0_68, %c0_69, %c0_70] : memref<2x1x128xf32, #tpu.memory_space<vmem>>, vector<1x1x128xf32>
    %149 = vector.shape_cast %148 : vector<1x1x128xf32> to vector<1x128xf32>
    %150 = vector.broadcast %149 : vector<1x128xf32> to vector<9x128xf32>
    %151 = arith.addf %147, %150 : vector<9x128xf32>
    %152 = arith.addf %133, %151 : vector<9x128xf32>
    %c0_71 = arith.constant 0 : index
    %c0_72 = arith.constant 0 : index
    %c0_73 = arith.constant 0 : index
    %153 = vector.load %arg16[%c0_71, %c0_72, %c0_73] : memref<2x1x128xf32, #tpu.memory_space<vmem>>, vector<1x1x128xf32>
    %154 = vector.shape_cast %153 : vector<1x1x128xf32> to vector<1x128xf32>
    %c0_74 = arith.constant 0 : index
    %c0_75 = arith.constant 0 : index
    %c0_76 = arith.constant 0 : index
    %155 = vector.load %arg17[%c0_74, %c0_75, %c0_76] : memref<2x1x128xf32, #tpu.memory_space<vmem>>, vector<1x1x128xf32>
    %156 = vector.shape_cast %155 : vector<1x1x128xf32> to vector<1x128xf32>
    %cst_77 = arith.constant dense<0.000000e+00> : vector<9xf32>
    %157 = vector.multi_reduction <add>, %152, %cst_77 [1] : vector<9x128xf32> to vector<9xf32>
    %158 = vector.shape_cast %157 : vector<9xf32> to vector<9x1xf32>
    %cst_78 = arith.constant 1.280000e+02 : f32
    %159 = vector.broadcast %cst_78 : f32 to vector<9x1xf32>
    %160 = arith.divf %158, %159 : vector<9x1xf32>
    %161 = vector.broadcast %160 : vector<9x1xf32> to vector<9x128xf32>
    %162 = arith.subf %152, %161 : vector<9x128xf32>
    %163 = arith.mulf %162, %162 : vector<9x128xf32>
    %cst_79 = arith.constant dense<0.000000e+00> : vector<9xf32>
    %164 = vector.multi_reduction <add>, %163, %cst_79 [1] : vector<9x128xf32> to vector<9xf32>
    %165 = vector.shape_cast %164 : vector<9xf32> to vector<9x1xf32>
    %cst_80 = arith.constant 1.280000e+02 : f32
    %166 = vector.broadcast %cst_80 : f32 to vector<9x1xf32>
    %167 = arith.divf %165, %166 : vector<9x1xf32>
    %168 = vector.broadcast %160 : vector<9x1xf32> to vector<9x128xf32>
    %169 = arith.subf %152, %168 : vector<9x128xf32>
    %cst_81 = arith.constant 9.99999974E-6 : f32
    %170 = vector.broadcast %cst_81 : f32 to vector<9x1xf32>
    %171 = arith.addf %167, %170 : vector<9x1xf32>
    %172 = math.rsqrt %171 : vector<9x1xf32>
    %173 = vector.broadcast %172 : vector<9x1xf32> to vector<9x128xf32>
    %174 = arith.mulf %169, %173 : vector<9x128xf32>
    %175 = vector.broadcast %154 : vector<1x128xf32> to vector<9x128xf32>
    %176 = arith.mulf %174, %175 : vector<9x128xf32>
    %177 = vector.broadcast %156 : vector<1x128xf32> to vector<9x128xf32>
    %178 = arith.addf %176, %177 : vector<9x128xf32>
    %179 = vector.shape_cast %178 : vector<9x128xf32> to vector<1x9x128xf32>
    %180 = vector.extract_strided_slice %179 {offsets = [0, 0, 0], sizes = [1, 1, 128], strides = [1, 1, 1]} : vector<1x9x128xf32> to vector<1x1x128xf32>
    %181 = vector.shape_cast %180 : vector<1x1x128xf32> to vector<1x128xf32>
    %182 = arith.truncf %181 : vector<1x128xf32> to vector<1x128xbf16>
    %183 = arith.truncf %178 : vector<9x128xf32> to vector<9x128xbf16>
    %c1 = arith.constant 1 : index
    %c0_82 = arith.constant 0 : index
    %c0_83 = arith.constant 0 : index
    %184 = vector.load %arg2[%c1, %c0_82, %c0_83] : memref<2x128x128xbf16, #tpu.memory_space<vmem>>, vector<1x128x128xbf16>
    %185 = vector.shape_cast %184 : vector<1x128x128xbf16> to vector<128x128xbf16>
    %cst_84 = arith.constant dense<0.000000e+00> : vector<1x128xf32>
    %186 = tpu.matmul %182, %185, %cst_84 {dimension_numbers = #tpu.dot_dimension_numbers<[1], [0], [0], [1], [0, 0, 1, 1], [], []>} : vector<1x128xbf16>, vector<128x128xbf16>, vector<1x128xf32> -> vector<1x128xf32>
    %c1_85 = arith.constant 1 : index
    %c0_86 = arith.constant 0 : index
    %c0_87 = arith.constant 0 : index
    %187 = vector.load %arg5[%c1_85, %c0_86, %c0_87] : memref<2x1x128xf32, #tpu.memory_space<vmem>>, vector<1x1x128xf32>
    %188 = vector.shape_cast %187 : vector<1x1x128xf32> to vector<1x128xf32>
    %189 = arith.addf %186, %188 : vector<1x128xf32>
    %c1_88 = arith.constant 1 : index
    %c0_89 = arith.constant 0 : index
    %c0_90 = arith.constant 0 : index
    %190 = vector.load %arg3[%c1_88, %c0_89, %c0_90] : memref<2x128x128xbf16, #tpu.memory_space<vmem>>, vector<1x128x128xbf16>
    %191 = vector.shape_cast %190 : vector<1x128x128xbf16> to vector<128x128xbf16>
    %cst_91 = arith.constant dense<0.000000e+00> : vector<9x128xf32>
    %192 = tpu.matmul %183, %191, %cst_91 {dimension_numbers = #tpu.dot_dimension_numbers<[1], [0], [0], [1], [0, 0, 1, 1], [], []>} : vector<9x128xbf16>, vector<128x128xbf16>, vector<9x128xf32> -> vector<9x128xf32>
    %c1_92 = arith.constant 1 : index
    %c0_93 = arith.constant 0 : index
    %c0_94 = arith.constant 0 : index
    %193 = vector.load %arg6[%c1_92, %c0_93, %c0_94] : memref<2x1x128xf32, #tpu.memory_space<vmem>>, vector<1x1x128xf32>
    %194 = vector.shape_cast %193 : vector<1x1x128xf32> to vector<1x128xf32>
    %195 = vector.broadcast %194 : vector<1x128xf32> to vector<9x128xf32>
    %196 = arith.addf %192, %195 : vector<9x128xf32>
    %c1_95 = arith.constant 1 : index
    %c0_96 = arith.constant 0 : index
    %c0_97 = arith.constant 0 : index
    %197 = vector.load %arg4[%c1_95, %c0_96, %c0_97] : memref<2x128x128xbf16, #tpu.memory_space<vmem>>, vector<1x128x128xbf16>
    %198 = vector.shape_cast %197 : vector<1x128x128xbf16> to vector<128x128xbf16>
    %cst_98 = arith.constant dense<0.000000e+00> : vector<9x128xf32>
    %199 = tpu.matmul %183, %198, %cst_98 {dimension_numbers = #tpu.dot_dimension_numbers<[1], [0], [0], [1], [0, 0, 1, 1], [], []>} : vector<9x128xbf16>, vector<128x128xbf16>, vector<9x128xf32> -> vector<9x128xf32>
    %c1_99 = arith.constant 1 : index
    %c0_100 = arith.constant 0 : index
    %c0_101 = arith.constant 0 : index
    %200 = vector.load %arg7[%c1_99, %c0_100, %c0_101] : memref<2x1x128xf32, #tpu.memory_space<vmem>>, vector<1x1x128xf32>
    %201 = vector.shape_cast %200 : vector<1x1x128xf32> to vector<1x128xf32>
    %202 = vector.broadcast %201 : vector<1x128xf32> to vector<9x128xf32>
    %203 = arith.addf %199, %202 : vector<9x128xf32>
    %204 = arith.truncf %189 : vector<1x128xf32> to vector<1x128xbf16>
    %205 = vector.shape_cast %204 : vector<1x128xbf16> to vector<1x1x128xbf16>
    %206 = arith.truncf %196 : vector<9x128xf32> to vector<9x128xbf16>
    %207 = vector.shape_cast %206 : vector<9x128xbf16> to vector<1x9x128xbf16>
    %208 = arith.truncf %203 : vector<9x128xf32> to vector<9x128xbf16>
    %209 = vector.shape_cast %208 : vector<9x128xbf16> to vector<1x9x128xbf16>
    %210 = vector.extract_strided_slice %205 {offsets = [0, 0, 0], sizes = [1, 1, 32], strides = [1, 1, 1]} : vector<1x1x128xbf16> to vector<1x1x32xbf16>
    %211 = vector.extract_strided_slice %207 {offsets = [0, 0, 0], sizes = [1, 9, 32], strides = [1, 1, 1]} : vector<1x9x128xbf16> to vector<1x9x32xbf16>
    "tpu.trace_start"() <{level = 10 : i32, message = "bqd,bkd->bqk"}> : () -> ()
    %cst_102 = arith.constant dense<0.000000e+00> : vector<1x1x9xf32>
    %212 = tpu.matmul %210, %211, %cst_102 {dimension_numbers = #tpu.dot_dimension_numbers<[2], [2], [1], [1], [0, 0, 0, 1, 1, 1], [0], [0]>} : vector<1x1x32xbf16>, vector<1x9x32xbf16>, vector<1x1x9xf32> -> vector<1x1x9xf32>
    "tpu.trace_stop"() : () -> ()
    %cst_103 = arith.constant dense<0xFF800000> : vector<1x1xf32>
    %213 = vector.multi_reduction <maximumf>, %212, %cst_103 [2] : vector<1x1x9xf32> to vector<1x1xf32>
    %214 = vector.shape_cast %213 : vector<1x1xf32> to vector<1x1x1xf32>
    %215 = vector.broadcast %214 : vector<1x1x1xf32> to vector<1x1x9xf32>
    %216 = arith.subf %212, %215 : vector<1x1x9xf32>
    %217 = math.exp %216 : vector<1x1x9xf32>
    %cst_104 = arith.constant dense<0.000000e+00> : vector<1x1xf32>
    %218 = vector.multi_reduction <add>, %217, %cst_104 [2] : vector<1x1x9xf32> to vector<1x1xf32>
    %219 = vector.shape_cast %218 : vector<1x1xf32> to vector<1x1x1xf32>
    %220 = tpu.reciprocal %219 {approx = true} : vector<1x1x1xf32> -> vector<1x1x1xf32>
    %221 = vector.broadcast %220 : vector<1x1x1xf32> to vector<1x1x9xf32>
    %222 = arith.mulf %217, %221 : vector<1x1x9xf32>
    %223 = arith.truncf %222 : vector<1x1x9xf32> to vector<1x1x9xbf16>
    %224 = vector.extract_strided_slice %209 {offsets = [0, 0, 0], sizes = [1, 9, 32], strides = [1, 1, 1]} : vector<1x9x128xbf16> to vector<1x9x32xbf16>
    "tpu.trace_start"() <{level = 10 : i32, message = "bqk,bkd->bqd"}> : () -> ()
    %cst_105 = arith.constant dense<0.000000e+00> : vector<1x1x32xf32>
    %225 = tpu.matmul %223, %224, %cst_105 {dimension_numbers = #tpu.dot_dimension_numbers<[2], [1], [1], [2], [0, 0, 0, 1, 1, 2], [0], [0]>} : vector<1x1x9xbf16>, vector<1x9x32xbf16>, vector<1x1x32xf32> -> vector<1x1x32xf32>
    "tpu.trace_stop"() : () -> ()
    %226 = arith.truncf %225 : vector<1x1x32xf32> to vector<1x1x32xbf16>
    %227 = vector.extract_strided_slice %205 {offsets = [0, 0, 32], sizes = [1, 1, 32], strides = [1, 1, 1]} : vector<1x1x128xbf16> to vector<1x1x32xbf16>
    %228 = vector.extract_strided_slice %207 {offsets = [0, 0, 32], sizes = [1, 9, 32], strides = [1, 1, 1]} : vector<1x9x128xbf16> to vector<1x9x32xbf16>
    "tpu.trace_start"() <{level = 10 : i32, message = "bqd,bkd->bqk"}> : () -> ()
    %cst_106 = arith.constant dense<0.000000e+00> : vector<1x1x9xf32>
    %229 = tpu.matmul %227, %228, %cst_106 {dimension_numbers = #tpu.dot_dimension_numbers<[2], [2], [1], [1], [0, 0, 0, 1, 1, 1], [0], [0]>} : vector<1x1x32xbf16>, vector<1x9x32xbf16>, vector<1x1x9xf32> -> vector<1x1x9xf32>
    "tpu.trace_stop"() : () -> ()
    %cst_107 = arith.constant dense<0xFF800000> : vector<1x1xf32>
    %230 = vector.multi_reduction <maximumf>, %229, %cst_107 [2] : vector<1x1x9xf32> to vector<1x1xf32>
    %231 = vector.shape_cast %230 : vector<1x1xf32> to vector<1x1x1xf32>
    %232 = vector.broadcast %231 : vector<1x1x1xf32> to vector<1x1x9xf32>
    %233 = arith.subf %229, %232 : vector<1x1x9xf32>
    %234 = math.exp %233 : vector<1x1x9xf32>
    %cst_108 = arith.constant dense<0.000000e+00> : vector<1x1xf32>
    %235 = vector.multi_reduction <add>, %234, %cst_108 [2] : vector<1x1x9xf32> to vector<1x1xf32>
    %236 = vector.shape_cast %235 : vector<1x1xf32> to vector<1x1x1xf32>
    %237 = tpu.reciprocal %236 {approx = true} : vector<1x1x1xf32> -> vector<1x1x1xf32>
    %238 = vector.broadcast %237 : vector<1x1x1xf32> to vector<1x1x9xf32>
    %239 = arith.mulf %234, %238 : vector<1x1x9xf32>
    %240 = arith.truncf %239 : vector<1x1x9xf32> to vector<1x1x9xbf16>
    %241 = vector.extract_strided_slice %209 {offsets = [0, 0, 32], sizes = [1, 9, 32], strides = [1, 1, 1]} : vector<1x9x128xbf16> to vector<1x9x32xbf16>
    "tpu.trace_start"() <{level = 10 : i32, message = "bqk,bkd->bqd"}> : () -> ()
    %cst_109 = arith.constant dense<0.000000e+00> : vector<1x1x32xf32>
    %242 = tpu.matmul %240, %241, %cst_109 {dimension_numbers = #tpu.dot_dimension_numbers<[2], [1], [1], [2], [0, 0, 0, 1, 1, 2], [0], [0]>} : vector<1x1x9xbf16>, vector<1x9x32xbf16>, vector<1x1x32xf32> -> vector<1x1x32xf32>
    "tpu.trace_stop"() : () -> ()
    %243 = arith.truncf %242 : vector<1x1x32xf32> to vector<1x1x32xbf16>
    %244 = vector.extract_strided_slice %205 {offsets = [0, 0, 64], sizes = [1, 1, 32], strides = [1, 1, 1]} : vector<1x1x128xbf16> to vector<1x1x32xbf16>
    %245 = vector.extract_strided_slice %207 {offsets = [0, 0, 64], sizes = [1, 9, 32], strides = [1, 1, 1]} : vector<1x9x128xbf16> to vector<1x9x32xbf16>
    "tpu.trace_start"() <{level = 10 : i32, message = "bqd,bkd->bqk"}> : () -> ()
    %cst_110 = arith.constant dense<0.000000e+00> : vector<1x1x9xf32>
    %246 = tpu.matmul %244, %245, %cst_110 {dimension_numbers = #tpu.dot_dimension_numbers<[2], [2], [1], [1], [0, 0, 0, 1, 1, 1], [0], [0]>} : vector<1x1x32xbf16>, vector<1x9x32xbf16>, vector<1x1x9xf32> -> vector<1x1x9xf32>
    "tpu.trace_stop"() : () -> ()
    %cst_111 = arith.constant dense<0xFF800000> : vector<1x1xf32>
    %247 = vector.multi_reduction <maximumf>, %246, %cst_111 [2] : vector<1x1x9xf32> to vector<1x1xf32>
    %248 = vector.shape_cast %247 : vector<1x1xf32> to vector<1x1x1xf32>
    %249 = vector.broadcast %248 : vector<1x1x1xf32> to vector<1x1x9xf32>
    %250 = arith.subf %246, %249 : vector<1x1x9xf32>
    %251 = math.exp %250 : vector<1x1x9xf32>
    %cst_112 = arith.constant dense<0.000000e+00> : vector<1x1xf32>
    %252 = vector.multi_reduction <add>, %251, %cst_112 [2] : vector<1x1x9xf32> to vector<1x1xf32>
    %253 = vector.shape_cast %252 : vector<1x1xf32> to vector<1x1x1xf32>
    %254 = tpu.reciprocal %253 {approx = true} : vector<1x1x1xf32> -> vector<1x1x1xf32>
    %255 = vector.broadcast %254 : vector<1x1x1xf32> to vector<1x1x9xf32>
    %256 = arith.mulf %251, %255 : vector<1x1x9xf32>
    %257 = arith.truncf %256 : vector<1x1x9xf32> to vector<1x1x9xbf16>
    %258 = vector.extract_strided_slice %209 {offsets = [0, 0, 64], sizes = [1, 9, 32], strides = [1, 1, 1]} : vector<1x9x128xbf16> to vector<1x9x32xbf16>
    "tpu.trace_start"() <{level = 10 : i32, message = "bqk,bkd->bqd"}> : () -> ()
    %cst_113 = arith.constant dense<0.000000e+00> : vector<1x1x32xf32>
    %259 = tpu.matmul %257, %258, %cst_113 {dimension_numbers = #tpu.dot_dimension_numbers<[2], [1], [1], [2], [0, 0, 0, 1, 1, 2], [0], [0]>} : vector<1x1x9xbf16>, vector<1x9x32xbf16>, vector<1x1x32xf32> -> vector<1x1x32xf32>
    "tpu.trace_stop"() : () -> ()
    %260 = arith.truncf %259 : vector<1x1x32xf32> to vector<1x1x32xbf16>
    %261 = vector.extract_strided_slice %205 {offsets = [0, 0, 96], sizes = [1, 1, 32], strides = [1, 1, 1]} : vector<1x1x128xbf16> to vector<1x1x32xbf16>
    %262 = vector.extract_strided_slice %207 {offsets = [0, 0, 96], sizes = [1, 9, 32], strides = [1, 1, 1]} : vector<1x9x128xbf16> to vector<1x9x32xbf16>
    "tpu.trace_start"() <{level = 10 : i32, message = "bqd,bkd->bqk"}> : () -> ()
    %cst_114 = arith.constant dense<0.000000e+00> : vector<1x1x9xf32>
    %263 = tpu.matmul %261, %262, %cst_114 {dimension_numbers = #tpu.dot_dimension_numbers<[2], [2], [1], [1], [0, 0, 0, 1, 1, 1], [0], [0]>} : vector<1x1x32xbf16>, vector<1x9x32xbf16>, vector<1x1x9xf32> -> vector<1x1x9xf32>
    "tpu.trace_stop"() : () -> ()
    %cst_115 = arith.constant dense<0xFF800000> : vector<1x1xf32>
    %264 = vector.multi_reduction <maximumf>, %263, %cst_115 [2] : vector<1x1x9xf32> to vector<1x1xf32>
    %265 = vector.shape_cast %264 : vector<1x1xf32> to vector<1x1x1xf32>
    %266 = vector.broadcast %265 : vector<1x1x1xf32> to vector<1x1x9xf32>
    %267 = arith.subf %263, %266 : vector<1x1x9xf32>
    %268 = math.exp %267 : vector<1x1x9xf32>
    %cst_116 = arith.constant dense<0.000000e+00> : vector<1x1xf32>
    %269 = vector.multi_reduction <add>, %268, %cst_116 [2] : vector<1x1x9xf32> to vector<1x1xf32>
    %270 = vector.shape_cast %269 : vector<1x1xf32> to vector<1x1x1xf32>
    %271 = tpu.reciprocal %270 {approx = true} : vector<1x1x1xf32> -> vector<1x1x1xf32>
    %272 = vector.broadcast %271 : vector<1x1x1xf32> to vector<1x1x9xf32>
    %273 = arith.mulf %268, %272 : vector<1x1x9xf32>
    %274 = arith.truncf %273 : vector<1x1x9xf32> to vector<1x1x9xbf16>
    %275 = vector.extract_strided_slice %209 {offsets = [0, 0, 96], sizes = [1, 9, 32], strides = [1, 1, 1]} : vector<1x9x128xbf16> to vector<1x9x32xbf16>
    "tpu.trace_start"() <{level = 10 : i32, message = "bqk,bkd->bqd"}> : () -> ()
    %cst_117 = arith.constant dense<0.000000e+00> : vector<1x1x32xf32>
    %276 = tpu.matmul %274, %275, %cst_117 {dimension_numbers = #tpu.dot_dimension_numbers<[2], [1], [1], [2], [0, 0, 0, 1, 1, 2], [0], [0]>} : vector<1x1x9xbf16>, vector<1x9x32xbf16>, vector<1x1x32xf32> -> vector<1x1x32xf32>
    "tpu.trace_stop"() : () -> ()
    %277 = arith.truncf %276 : vector<1x1x32xf32> to vector<1x1x32xbf16>
    %278 = tpu.concatenate %226, %243, %260, %277 in 2 : vector<1x1x32xbf16>, vector<1x1x32xbf16>, vector<1x1x32xbf16>, vector<1x1x32xbf16> -> vector<1x1x128xbf16>
    %279 = vector.shape_cast %278 : vector<1x1x128xbf16> to vector<1x128xbf16>
    %c1_118 = arith.constant 1 : index
    %c0_119 = arith.constant 0 : index
    %c0_120 = arith.constant 0 : index
    %280 = vector.load %arg8[%c1_118, %c0_119, %c0_120] : memref<2x128x128xbf16, #tpu.memory_space<vmem>>, vector<1x128x128xbf16>
    %281 = vector.shape_cast %280 : vector<1x128x128xbf16> to vector<128x128xbf16>
    %cst_121 = arith.constant dense<0.000000e+00> : vector<1x128xf32>
    %282 = tpu.matmul %279, %281, %cst_121 {dimension_numbers = #tpu.dot_dimension_numbers<[1], [0], [0], [1], [0, 0, 1, 1], [], []>} : vector<1x128xbf16>, vector<128x128xbf16>, vector<1x128xf32> -> vector<1x128xf32>
    %c1_122 = arith.constant 1 : index
    %c0_123 = arith.constant 0 : index
    %c0_124 = arith.constant 0 : index
    %283 = vector.load %arg9[%c1_122, %c0_123, %c0_124] : memref<2x1x128xf32, #tpu.memory_space<vmem>>, vector<1x1x128xf32>
    %284 = vector.shape_cast %283 : vector<1x1x128xf32> to vector<1x128xf32>
    %285 = arith.addf %282, %284 : vector<1x128xf32>
    %286 = arith.addf %181, %285 : vector<1x128xf32>
    %c1_125 = arith.constant 1 : index
    %c0_126 = arith.constant 0 : index
    %c0_127 = arith.constant 0 : index
    %287 = vector.load %arg14[%c1_125, %c0_126, %c0_127] : memref<2x1x128xf32, #tpu.memory_space<vmem>>, vector<1x1x128xf32>
    %288 = vector.shape_cast %287 : vector<1x1x128xf32> to vector<1x128xf32>
    %c1_128 = arith.constant 1 : index
    %c0_129 = arith.constant 0 : index
    %c0_130 = arith.constant 0 : index
    %289 = vector.load %arg15[%c1_128, %c0_129, %c0_130] : memref<2x1x128xf32, #tpu.memory_space<vmem>>, vector<1x1x128xf32>
    %290 = vector.shape_cast %289 : vector<1x1x128xf32> to vector<1x128xf32>
    %cst_131 = arith.constant dense<0.000000e+00> : vector<1xf32>
    %291 = vector.multi_reduction <add>, %286, %cst_131 [1] : vector<1x128xf32> to vector<1xf32>
    %292 = vector.shape_cast %291 : vector<1xf32> to vector<1x1xf32>
    %cst_132 = arith.constant 1.280000e+02 : f32
    %293 = vector.broadcast %cst_132 : f32 to vector<1x1xf32>
    %294 = arith.divf %292, %293 : vector<1x1xf32>
    %295 = vector.broadcast %294 : vector<1x1xf32> to vector<1x128xf32>
    %296 = arith.subf %286, %295 : vector<1x128xf32>
    %297 = arith.mulf %296, %296 : vector<1x128xf32>
    %cst_133 = arith.constant dense<0.000000e+00> : vector<1xf32>
    %298 = vector.multi_reduction <add>, %297, %cst_133 [1] : vector<1x128xf32> to vector<1xf32>
    %299 = vector.shape_cast %298 : vector<1xf32> to vector<1x1xf32>
    %cst_134 = arith.constant 1.280000e+02 : f32
    %300 = vector.broadcast %cst_134 : f32 to vector<1x1xf32>
    %301 = arith.divf %299, %300 : vector<1x1xf32>
    %302 = vector.broadcast %294 : vector<1x1xf32> to vector<1x128xf32>
    %303 = arith.subf %286, %302 : vector<1x128xf32>
    %cst_135 = arith.constant 9.99999974E-6 : f32
    %304 = vector.broadcast %cst_135 : f32 to vector<1x1xf32>
    %305 = arith.addf %301, %304 : vector<1x1xf32>
    %306 = math.rsqrt %305 : vector<1x1xf32>
    %307 = vector.broadcast %306 : vector<1x1xf32> to vector<1x128xf32>
    %308 = arith.mulf %303, %307 : vector<1x128xf32>
    %309 = arith.mulf %308, %288 : vector<1x128xf32>
    %310 = arith.addf %309, %290 : vector<1x128xf32>
    %311 = arith.truncf %310 : vector<1x128xf32> to vector<1x128xbf16>
    %c1_136 = arith.constant 1 : index
    %c0_137 = arith.constant 0 : index
    %c0_138 = arith.constant 0 : index
    %312 = vector.load %arg10[%c1_136, %c0_137, %c0_138] : memref<2x128x256xbf16, #tpu.memory_space<vmem>>, vector<1x128x256xbf16>
    %313 = vector.shape_cast %312 : vector<1x128x256xbf16> to vector<128x256xbf16>
    %cst_139 = arith.constant dense<0.000000e+00> : vector<1x256xf32>
    %314 = tpu.matmul %311, %313, %cst_139 {dimension_numbers = #tpu.dot_dimension_numbers<[1], [0], [0], [1], [0, 0, 1, 1], [], []>} : vector<1x128xbf16>, vector<128x256xbf16>, vector<1x256xf32> -> vector<1x256xf32>
    %c1_140 = arith.constant 1 : index
    %c0_141 = arith.constant 0 : index
    %c0_142 = arith.constant 0 : index
    %315 = vector.load %arg11[%c1_140, %c0_141, %c0_142] : memref<2x1x256xf32, #tpu.memory_space<vmem>>, vector<1x1x256xf32>
    %316 = vector.shape_cast %315 : vector<1x1x256xf32> to vector<1x256xf32>
    %317 = arith.addf %314, %316 : vector<1x256xf32>
    %cst_143 = arith.constant 0.000000e+00 : f32
    %318 = vector.broadcast %cst_143 : f32 to vector<1x256xf32>
    %319 = arith.maximumf %317, %318 : vector<1x256xf32>
    %320 = arith.truncf %319 : vector<1x256xf32> to vector<1x256xbf16>
    %c1_144 = arith.constant 1 : index
    %c0_145 = arith.constant 0 : index
    %c0_146 = arith.constant 0 : index
    %321 = vector.load %arg12[%c1_144, %c0_145, %c0_146] : memref<2x256x128xbf16, #tpu.memory_space<vmem>>, vector<1x256x128xbf16>
    %322 = vector.shape_cast %321 : vector<1x256x128xbf16> to vector<256x128xbf16>
    %cst_147 = arith.constant dense<0.000000e+00> : vector<1x128xf32>
    %323 = tpu.matmul %320, %322, %cst_147 {dimension_numbers = #tpu.dot_dimension_numbers<[1], [0], [0], [1], [0, 0, 1, 1], [], []>} : vector<1x256xbf16>, vector<256x128xbf16>, vector<1x128xf32> -> vector<1x128xf32>
    %c1_148 = arith.constant 1 : index
    %c0_149 = arith.constant 0 : index
    %c0_150 = arith.constant 0 : index
    %324 = vector.load %arg13[%c1_148, %c0_149, %c0_150] : memref<2x1x128xf32, #tpu.memory_space<vmem>>, vector<1x1x128xf32>
    %325 = vector.shape_cast %324 : vector<1x1x128xf32> to vector<1x128xf32>
    %326 = arith.addf %323, %325 : vector<1x128xf32>
    %327 = arith.addf %310, %326 : vector<1x128xf32>
    %c1_151 = arith.constant 1 : index
    %c0_152 = arith.constant 0 : index
    %c0_153 = arith.constant 0 : index
    %328 = vector.load %arg16[%c1_151, %c0_152, %c0_153] : memref<2x1x128xf32, #tpu.memory_space<vmem>>, vector<1x1x128xf32>
    %329 = vector.shape_cast %328 : vector<1x1x128xf32> to vector<1x128xf32>
    %c1_154 = arith.constant 1 : index
    %c0_155 = arith.constant 0 : index
    %c0_156 = arith.constant 0 : index
    %330 = vector.load %arg17[%c1_154, %c0_155, %c0_156] : memref<2x1x128xf32, #tpu.memory_space<vmem>>, vector<1x1x128xf32>
    %331 = vector.shape_cast %330 : vector<1x1x128xf32> to vector<1x128xf32>
    %cst_157 = arith.constant dense<0.000000e+00> : vector<1xf32>
    %332 = vector.multi_reduction <add>, %327, %cst_157 [1] : vector<1x128xf32> to vector<1xf32>
    %333 = vector.shape_cast %332 : vector<1xf32> to vector<1x1xf32>
    %cst_158 = arith.constant 1.280000e+02 : f32
    %334 = vector.broadcast %cst_158 : f32 to vector<1x1xf32>
    %335 = arith.divf %333, %334 : vector<1x1xf32>
    %336 = vector.broadcast %335 : vector<1x1xf32> to vector<1x128xf32>
    %337 = arith.subf %327, %336 : vector<1x128xf32>
    %338 = arith.mulf %337, %337 : vector<1x128xf32>
    %cst_159 = arith.constant dense<0.000000e+00> : vector<1xf32>
    %339 = vector.multi_reduction <add>, %338, %cst_159 [1] : vector<1x128xf32> to vector<1xf32>
    %340 = vector.shape_cast %339 : vector<1xf32> to vector<1x1xf32>
    %cst_160 = arith.constant 1.280000e+02 : f32
    %341 = vector.broadcast %cst_160 : f32 to vector<1x1xf32>
    %342 = arith.divf %340, %341 : vector<1x1xf32>
    %343 = vector.broadcast %335 : vector<1x1xf32> to vector<1x128xf32>
    %344 = arith.subf %327, %343 : vector<1x128xf32>
    %cst_161 = arith.constant 9.99999974E-6 : f32
    %345 = vector.broadcast %cst_161 : f32 to vector<1x1xf32>
    %346 = arith.addf %342, %345 : vector<1x1xf32>
    %347 = math.rsqrt %346 : vector<1x1xf32>
    %348 = vector.broadcast %347 : vector<1x1xf32> to vector<1x128xf32>
    %349 = arith.mulf %344, %348 : vector<1x128xf32>
    %350 = arith.mulf %349, %329 : vector<1x128xf32>
    %351 = arith.addf %350, %331 : vector<1x128xf32>
    %c0_162 = arith.constant 0 : index
    %c0_163 = arith.constant 0 : index
    %352 = vector.load %arg18[%c0_162, %c0_163] : memref<1x128xf32, #tpu.memory_space<vmem>>, vector<1x128xf32>
    %353 = arith.mulf %351, %352 : vector<1x128xf32>
    %c0_164 = arith.constant 0 : index
    %c0_165 = arith.constant 0 : index
    %354 = vector.load %arg19[%c0_164, %c0_165] : memref<1x128xf32, #tpu.memory_space<vmem>>, vector<1x128xf32>
    %355 = arith.addf %353, %354 : vector<1x128xf32>
    %c0_166 = arith.constant 0 : index
    %c0_167 = arith.constant 0 : index
    %c0_168 = arith.constant 0 : index
    %356 = vector.load %arg20[%c0_166, %c0_167, %c0_168] : memref<1x1x128xf32, #tpu.memory_space<vmem>>, vector<1x1x128xf32>
    %357 = vector.shape_cast %356 : vector<1x1x128xf32> to vector<1x128xf32>
    %358 = vector.shape_cast %355 : vector<1x128xf32> to vector<1x1x128xf32>
    tpu.vector_store %arg20[%c0_166, %c0_167, %c0_168], %358 {strides = array<i32>} : memref<1x1x128xf32, #tpu.memory_space<vmem>>, vector<1x1x128xf32>,
    return
  }
  func.func @transform_0(%arg0: i32) -> (i32, i32, i32) {
    %c0_i32 = arith.constant 0 : i32
    %c0_i32_0 = arith.constant 0 : i32
    %c0_i32_1 = arith.constant 0 : i32
    return %arg0, %c0_i32, %c0_i32_0 : i32, i32, i32
  }
  func.func @transform_1(%arg0: i32) -> (i32, i32, i32) {
    %c0_i32 = arith.constant 0 : i32
    %c0_i32_0 = arith.constant 0 : i32
    %c0_i32_1 = arith.constant 0 : i32
    %c0_i32_2 = arith.constant 0 : i32
    return %c0_i32, %c0_i32_0, %c0_i32_1 : i32, i32, i32
  }
  func.func @transform_2(%arg0: i32) -> (i32, i32, i32) {
    %c0_i32 = arith.constant 0 : i32
    %c0_i32_0 = arith.constant 0 : i32
    %c0_i32_1 = arith.constant 0 : i32
    %c0_i32_2 = arith.constant 0 : i32
    return %c0_i32, %c0_i32_0, %c0_i32_1 : i32, i32, i32
  }
  func.func @transform_3(%arg0: i32) -> (i32, i32, i32) {
    %c0_i32 = arith.constant 0 : i32
    %c0_i32_0 = arith.constant 0 : i32
    %c0_i32_1 = arith.constant 0 : i32
    %c0_i32_2 = arith.constant 0 : i32
    return %c0_i32, %c0_i32_0, %c0_i32_1 : i32, i32, i32
  }
  func.func @transform_4(%arg0: i32) -> (i32, i32, i32) {
    %c0_i32 = arith.constant 0 : i32
    %c0_i32_0 = arith.constant 0 : i32
    %c0_i32_1 = arith.constant 0 : i32
    %c0_i32_2 = arith.constant 0 : i32
    return %c0_i32, %c0_i32_0, %c0_i32_1 : i32, i32, i32
  }
  func.func @transform_5(%arg0: i32) -> (i32, i32, i32) {
    %c0_i32 = arith.constant 0 : i32
    %c0_i32_0 = arith.constant 0 : i32
    %c0_i32_1 = arith.constant 0 : i32
    %c0_i32_2 = arith.constant 0 : i32
    return %c0_i32, %c0_i32_0, %c0_i32_1 : i32, i32, i32
  }
  func.func @transform_6(%arg0: i32) -> (i32, i32, i32) {
    %c0_i32 = arith.constant 0 : i32
    %c0_i32_0 = arith.constant 0 : i32
    %c0_i32_1 = arith.constant 0 : i32
    %c0_i32_2 = arith.constant 0 : i32
    return %c0_i32, %c0_i32_0, %c0_i32_1 : i32, i32, i32
  }
  func.func @transform_7(%arg0: i32) -> (i32, i32, i32) {
    %c0_i32 = arith.constant 0 : i32
    %c0_i32_0 = arith.constant 0 : i32
    %c0_i32_1 = arith.constant 0 : i32
    %c0_i32_2 = arith.constant 0 : i32
    return %c0_i32, %c0_i32_0, %c0_i32_1 : i32, i32, i32
  }
  func.func @transform_8(%arg0: i32) -> (i32, i32, i32) {
    %c0_i32 = arith.constant 0 : i32
    %c0_i32_0 = arith.constant 0 : i32
    %c0_i32_1 = arith.constant 0 : i32
    %c0_i32_2 = arith.constant 0 : i32
    return %c0_i32, %c0_i32_0, %c0_i32_1 : i32, i32, i32
  }
  func.func @transform_9(%arg0: i32) -> (i32, i32, i32) {
    %c0_i32 = arith.constant 0 : i32
    %c0_i32_0 = arith.constant 0 : i32
    %c0_i32_1 = arith.constant 0 : i32
    %c0_i32_2 = arith.constant 0 : i32
    return %c0_i32, %c0_i32_0, %c0_i32_1 : i32, i32, i32
  }
  func.func @transform_10(%arg0: i32) -> (i32, i32, i32) {
    %c0_i32 = arith.constant 0 : i32
    %c0_i32_0 = arith.constant 0 : i32
    %c0_i32_1 = arith.constant 0 : i32
    %c0_i32_2 = arith.constant 0 : i32
    return %c0_i32, %c0_i32_0, %c0_i32_1 : i32, i32, i32
  }
  func.func @transform_11(%arg0: i32) -> (i32, i32, i32) {
    %c0_i32 = arith.constant 0 : i32
    %c0_i32_0 = arith.constant 0 : i32
    %c0_i32_1 = arith.constant 0 : i32
    %c0_i32_2 = arith.constant 0 : i32
    return %c0_i32, %c0_i32_0, %c0_i32_1 : i32, i32, i32
  }
  func.func @transform_12(%arg0: i32) -> (i32, i32, i32) {
    %c0_i32 = arith.constant 0 : i32
    %c0_i32_0 = arith.constant 0 : i32
    %c0_i32_1 = arith.constant 0 : i32
    %c0_i32_2 = arith.constant 0 : i32
    return %c0_i32, %c0_i32_0, %c0_i32_1 : i32, i32, i32
  }
  func.func @transform_13(%arg0: i32) -> (i32, i32, i32) {
    %c0_i32 = arith.constant 0 : i32
    %c0_i32_0 = arith.constant 0 : i32
    %c0_i32_1 = arith.constant 0 : i32
    %c0_i32_2 = arith.constant 0 : i32
    return %c0_i32, %c0_i32_0, %c0_i32_1 : i32, i32, i32
  }
  func.func @transform_14(%arg0: i32) -> (i32, i32, i32) {
    %c0_i32 = arith.constant 0 : i32
    %c0_i32_0 = arith.constant 0 : i32
    %c0_i32_1 = arith.constant 0 : i32
    %c0_i32_2 = arith.constant 0 : i32
    return %c0_i32, %c0_i32_0, %c0_i32_1 : i32, i32, i32
  }
  func.func @transform_15(%arg0: i32) -> (i32, i32, i32) {
    %c0_i32 = arith.constant 0 : i32
    %c0_i32_0 = arith.constant 0 : i32
    %c0_i32_1 = arith.constant 0 : i32
    %c0_i32_2 = arith.constant 0 : i32
    return %c0_i32, %c0_i32_0, %c0_i32_1 : i32, i32, i32
  }
  func.func @transform_16(%arg0: i32) -> (i32, i32, i32) {
    %c0_i32 = arith.constant 0 : i32
    %c0_i32_0 = arith.constant 0 : i32
    %c0_i32_1 = arith.constant 0 : i32
    %c0_i32_2 = arith.constant 0 : i32
    return %c0_i32, %c0_i32_0, %c0_i32_1 : i32, i32, i32
  }
  func.func @transform_17(%arg0: i32) -> (i32, i32) {
    %c0_i32 = arith.constant 0 : i32
    %c0_i32_0 = arith.constant 0 : i32
    %c0_i32_1 = arith.constant 0 : i32
    return %c0_i32, %c0_i32_0 : i32, i32
  }
  func.func @transform_18(%arg0: i32) -> (i32, i32) {
    %c0_i32 = arith.constant 0 : i32
    %c0_i32_0 = arith.constant 0 : i32
    %c0_i32_1 = arith.constant 0 : i32
    return %c0_i32, %c0_i32_0 : i32, i32
  }
  func.func @transform_19(%arg0: i32) -> (i32, i32, i32) {
    %c0_i32 = arith.constant 0 : i32
    %c0_i32_0 = arith.constant 0 : i32
    %c0_i32_1 = arith.constant 0 : i32
    return %arg0, %c0_i32, %c0_i32_0 : i32, i32, i32
  }
}

</mosaic_0001>

<llo_original>
// kernel: tpu_custom_call.1
$region0: #{tpu_custom_call.1}
  #allocation0 [shape = 'u32[]', space=smem, size = 0x4, offset = 0x4, fixed_abs, tag = 'smem constant byte address 0x4 - core index']
  #allocation1 [shape = 'u32[144,128]{1,0:T(1,128)}', space=vmem, size = 0x12000, scoped, tag = 'internal scratch']
  %s0 = inlined_call_operand.vmem [shape: f32[2,9,128], index: 0, kind: input, shape index: {}]
  %s1 = inlined_call_operand.hbm [shape: bf16[2,128,128], index: 1, kind: input, shape index: {}]
  %s2 = inlined_call_operand.hbm [shape: bf16[2,128,128], index: 2, kind: input, shape index: {}]
  %s3 = inlined_call_operand.hbm [shape: bf16[2,128,128], index: 3, kind: input, shape index: {}]
  %s4 = inlined_call_operand.vmem [shape: f32[2,1,128], index: 4, kind: input, shape index: {}]
  %s5 = inlined_call_operand.vmem [shape: f32[2,1,128], index: 5, kind: input, shape index: {}]
  %s6 = inlined_call_operand.vmem [shape: f32[2,1,128], index: 6, kind: input, shape index: {}]
  %s7 = inlined_call_operand.hbm [shape: bf16[2,128,128], index: 7, kind: input, shape index: {}]
  %s8 = inlined_call_operand.vmem [shape: f32[2,1,128], index: 8, kind: input, shape index: {}]
  %s9 = inlined_call_operand.hbm [shape: bf16[2,128,256], index: 9, kind: input, shape index: {}]
  %s10 = inlined_call_operand.vmem [shape: f32[2,1,256], index: 10, kind: input, shape index: {}]
  %s11 = inlined_call_operand.hbm [shape: bf16[2,256,128], index: 11, kind: input, shape index: {}]
  %s12 = inlined_call_operand.vmem [shape: f32[2,1,128], index: 12, kind: input, shape index: {}]
  %s13 = inlined_call_operand.vmem [shape: f32[2,1,128], index: 13, kind: input, shape index: {}]
  %s14 = inlined_call_operand.vmem [shape: f32[2,1,128], index: 14, kind: input, shape index: {}]
  %s15 = inlined_call_operand.vmem [shape: f32[2,1,128], index: 15, kind: input, shape index: {}]
  %s16 = inlined_call_operand.vmem [shape: f32[2,1,128], index: 16, kind: input, shape index: {}]
  %s17 = inlined_call_operand.vmem [shape: f32[1,128], index: 17, kind: input, shape index: {}]
  %s18 = inlined_call_operand.vmem [shape: f32[1,128], index: 18, kind: input, shape index: {}]
  %s19 = inlined_call_operand.hbm [shape: f32[2,1,128], index: 19, kind: output, shape index: {}]
  %s20 = sld [smem:[#allocation0]]
  $region133: #{tpu_custom_call.1} parent=0
    _
  %s22 = ssub.s32 1, %s20
  %s23 = scalar_select 0, %s22, %s20
  $region1: #{tpu_custom_call.1} parent=0
    #allocation2 [shape = 'u8[65536]{0}', space=vmem, size = 0x10000, scoped, tag = 'input window, operand 1, single buffered']
    #allocation3 [shape = 's32[2]{0}', space=sflag, size = 0x8, scoped, tag = 'scoped memory for tpu_custom_call.1']
    #allocation4 [shape = 's32[2]{0}', space=sflag, size = 0x8, scoped, tag = 'scoped memory for tpu_custom_call.1']
    #allocation5 [shape = 'u8[65536]{0}', space=vmem, size = 0x10000, scoped, tag = 'input window, operand 2, single buffered']
    #allocation6 [shape = 's32[1]{0}', space=sflag, size = 0x4, scoped, tag = 'scoped memory for tpu_custom_call.1']
    #allocation7 [shape = 'u8[65536]{0}', space=vmem, size = 0x10000, scoped, tag = 'input window, operand 3, single buffered']
    #allocation8 [shape = 'u8[65536]{0}', space=vmem, size = 0x10000, scoped, tag = 'input window, operand 7, single buffered']
    #allocation9 [shape = 's32[1]{0}', space=sflag, size = 0x4, scoped, tag = 'scoped memory for tpu_custom_call.1']
    #allocation10 [shape = 'u8[131072]{0}', space=vmem, size = 0x20000, scoped, tag = 'input window, operand 9, single buffered']
    #allocation11 [shape = 'u8[131072]{0}', space=vmem, size = 0x20000, scoped, tag = 'input window, operand 11, single buffered']
    #allocation12 [shape = 's32[1]{0}', space=sflag, size = 0x4, scoped, tag = 'scoped memory for tpu_custom_call.1']
    #allocation13 [shape = 'u8[1024]{0}', space=vmem, size = 0x400, scoped, tag = 'output window, operand 0']
    %24 = vsyncpa [#allocation3], 0
    %25 = vsyncpa [#allocation6], 0
    %26 = vsyncpa [#allocation9], 0
    %27 = vsyncpa [#allocation12], 0
    %28 = vsyncpa [#allocation4], 0
    %s29 = scalar_lea.sflag [#allocation4], 1
    %30 = vsyncpa %s29, 0
    loop: start=0, step=1, limit=4
    $region2: #{tpu_custom_call.1} parent=1 // loop_pre_header
      _
    $region3: #{tpu_custom_call.1} parent=1 // loop_header
      %s32 = sphi 0, %s36
      %p33 = scmp.ge.s32.totalorder %s32, 4
      %s42 = sphi 0, %s44
      %s45 = sphi 0, %s42
      %s46 = sphi 0, %s45
      %s62 = sphi 0, %s46
      %s66 = sphi 0, %s66
      %s68 = sphi 0, %s66
      %s69 = sphi 0, %s68
      %s83 = sphi 0, %s69
      %s87 = sphi 0, %s87
      %s89 = sphi 0, %s87
      %s90 = sphi 0, %s89
      %s104 = sphi 0, %s90
      %s108 = sphi 0, %s108
      %s110 = sphi 0, %s108
      %s111 = sphi 0, %s110
      %s125 = sphi 0, %s111
      %s129 = sphi 0, %s129
      %s131 = sphi 0, %s129
      %s132 = sphi 0, %s131
      %s146 = sphi 0, %s132
      %s150 = sphi 0, %s150
      %s152 = sphi 0, %s150
      %s153 = sphi 0, %s152
      %s167 = sphi 0, %s153
      %s171 = sphi 0, %s171
      %s173 = sphi 0, %s171
      %s174 = sphi 0, %s173
      %s188 = sphi 0, %s174
      %s192 = sphi 0, %s192
      %s194 = sphi 0, %s192
      %s195 = sphi 0, %s194
      %s209 = sphi 0, %s195
      %s213 = sphi 0, %s213
      %s215 = sphi 0, %s213
      %s216 = sphi 0, %s215
      %s230 = sphi 0, %s216
      %s234 = sphi 0, %s234
      %s236 = sphi 0, %s234
      %s237 = sphi 0, %s236
      %s251 = sphi 0, %s237
      %s255 = sphi 0, %s255
      %s257 = sphi 0, %s255
      %s258 = sphi 0, %s257
      %s272 = sphi 0, %s258
      %s276 = sphi 0, %s276
      %s278 = sphi 0, %s276
      %s279 = sphi 0, %s278
      %s293 = sphi 0, %s279
      %s297 = sphi 0, %s297
      %s299 = sphi 0, %s297
      %s300 = sphi 0, %s299
      %s314 = sphi 0, %s300
      %s318 = sphi 0, %s318
      %s320 = sphi 0, %s318
      %s321 = sphi 0, %s320
      %s335 = sphi 0, %s321
      %s339 = sphi 0, %s339
      %s341 = sphi 0, %s339
      %s342 = sphi 0, %s341
      %s356 = sphi 0, %s342
      %s360 = sphi 0, %s360
      %s362 = sphi 0, %s360
      %s363 = sphi 0, %s362
      %s377 = sphi 0, %s363
      %s381 = sphi 0, %s381
      %s383 = sphi 0, %s381
      %s384 = sphi 0, %s383
      %s398 = sphi 0, %s384
      %s402 = sphi 0, %s402
      %s404 = sphi 0, %s402
      %s405 = sphi 0, %s404
      %s419 = sphi 0, %s405
      %s423 = sphi 0, %s423
      %s425 = sphi 0, %s423
      %s426 = sphi 0, %s425
      %s440 = sphi 0, %s426
      %s446 = sphi 0, %s448
      %s449 = sphi 0, %s446
      %s450 = sphi 0, %s449
      %s466 = sphi 0, %s450
    $region4: #{tpu_custom_call.1} parent=1 // loop_header_branch
      %35 = sbr.rel (%p33) target = $region8
    $region5: #{tpu_custom_call.1} parent=1 // loop_body
      %s37 = ssub.s32 %s32, 1
      %s38 = ssub.s32 %s32, 2
      %s39 = sadd.s32 %s32, 1
      %s40 = ssub.s32 %s32, %s39
      %p41 = scmp.eq.s32.totalorder %s40, 0
      %s43 = sadd.s32 %s42, 1
      %s44 = scalar_select %p41, %s42, %s43
      %p47 = pneg %p41
      %p48 = scmp.eq.s32.totalorder %s32, 1
      %p49 = por %p47, %p48
      %p50 = scmp.ne.s32.totalorder %s42, %s45
      %p51 = scmp.eq.s32.totalorder %s32, 0
      %p52 = por %p50, %p51
      %p53 = scmp.ne.s32.totalorder %s42, %s45
      %p54 = scmp.eq.s32.totalorder %s37, 1
      %p55 = por %p53, %p54
      %p56 = scmp.ne.s32.totalorder %s45, %s46
      %p57 = scmp.eq.s32.totalorder %s37, 0
      %p58 = por %p56, %p57
      %p59 = scmp.ne.s32.totalorder %s45, %s46
      %p60 = scmp.eq.s32.totalorder %s38, 1
      %p61 = por %p59, %p60
      %p63 = scmp.ne.s32.totalorder %s46, %s62
      %p64 = scmp.eq.s32.totalorder %s38, 0
      %p65 = por %p63, %p64
      %s67 = sadd.s32 %s66, 1
      %p70 = scmp.eq.s32.totalorder %s32, 1
      %p71 = scmp.ne.s32.totalorder %s66, %s68
      %p72 = scmp.eq.s32.totalorder %s32, 0
      %p73 = por %p71, %p72
      %p74 = scmp.ne.s32.totalorder %s66, %s68
      %p75 = scmp.eq.s32.totalorder %s37, 1
      %p76 = por %p74, %p75
      %p77 = scmp.ne.s32.totalorder %s68, %s69
      %p78 = scmp.eq.s32.totalorder %s37, 0
      %p79 = por %p77, %p78
      %p80 = scmp.ne.s32.totalorder %s68, %s69
      %p81 = scmp.eq.s32.totalorder %s38, 1
      %p82 = por %p80, %p81
      %p84 = scmp.ne.s32.totalorder %s69, %s83
      %p85 = scmp.eq.s32.totalorder %s38, 0
      %p86 = por %p84, %p85
      %s88 = sadd.s32 %s87, 1
      %p91 = scmp.eq.s32.totalorder %s32, 1
      %p92 = scmp.ne.s32.totalorder %s87, %s89
      %p93 = scmp.eq.s32.totalorder %s32, 0
      %p94 = por %p92, %p93
      %p95 = scmp.ne.s32.totalorder %s87, %s89
      %p96 = scmp.eq.s32.totalorder %s37, 1
      %p97 = por %p95, %p96
      %p98 = scmp.ne.s32.totalorder %s89, %s90
      %p99 = scmp.eq.s32.totalorder %s37, 0
      %p100 = por %p98, %p99
      %p101 = scmp.ne.s32.totalorder %s89, %s90
      %p102 = scmp.eq.s32.totalorder %s38, 1
      %p103 = por %p101, %p102
      %p105 = scmp.ne.s32.totalorder %s90, %s104
      %p106 = scmp.eq.s32.totalorder %s38, 0
      %p107 = por %p105, %p106
      %s109 = sadd.s32 %s108, 1
      %p112 = scmp.eq.s32.totalorder %s32, 1
      %p113 = scmp.ne.s32.totalorder %s108, %s110
      %p114 = scmp.eq.s32.totalorder %s32, 0
      %p115 = por %p113, %p114
      %p116 = scmp.ne.s32.totalorder %s108, %s110
      %p117 = scmp.eq.s32.totalorder %s37, 1
      %p118 = por %p116, %p117
      %p119 = scmp.ne.s32.totalorder %s110, %s111
      %p120 = scmp.eq.s32.totalorder %s37, 0
      %p121 = por %p119, %p120
      %p122 = scmp.ne.s32.totalorder %s110, %s111
      %p123 = scmp.eq.s32.totalorder %s38, 1
      %p124 = por %p122, %p123
      %p126 = scmp.ne.s32.totalorder %s111, %s125
      %p127 = scmp.eq.s32.totalorder %s38, 0
      %p128 = por %p126, %p127
      %s130 = sadd.s32 %s129, 1
      %p133 = scmp.eq.s32.totalorder %s32, 1
      %p134 = scmp.ne.s32.totalorder %s129, %s131
      %p135 = scmp.eq.s32.totalorder %s32, 0
      %p136 = por %p134, %p135
      %p137 = scmp.ne.s32.totalorder %s129, %s131
      %p138 = scmp.eq.s32.totalorder %s37, 1
      %p139 = por %p137, %p138
      %p140 = scmp.ne.s32.totalorder %s131, %s132
      %p141 = scmp.eq.s32.totalorder %s37, 0
      %p142 = por %p140, %p141
      %p143 = scmp.ne.s32.totalorder %s131, %s132
      %p144 = scmp.eq.s32.totalorder %s38, 1
      %p145 = por %p143, %p144
      %p147 = scmp.ne.s32.totalorder %s132, %s146
      %p148 = scmp.eq.s32.totalorder %s38, 0
      %p149 = por %p147, %p148
      %s151 = sadd.s32 %s150, 1
      %p154 = scmp.eq.s32.totalorder %s32, 1
      %p155 = scmp.ne.s32.totalorder %s150, %s152
      %p156 = scmp.eq.s32.totalorder %s32, 0
      %p157 = por %p155, %p156
      %p158 = scmp.ne.s32.totalorder %s150, %s152
      %p159 = scmp.eq.s32.totalorder %s37, 1
      %p160 = por %p158, %p159
      %p161 = scmp.ne.s32.totalorder %s152, %s153
      %p162 = scmp.eq.s32.totalorder %s37, 0
      %p163 = por %p161, %p162
      %p164 = scmp.ne.s32.totalorder %s152, %s153
      %p165 = scmp.eq.s32.totalorder %s38, 1
      %p166 = por %p164, %p165
      %p168 = scmp.ne.s32.totalorder %s153, %s167
      %p169 = scmp.eq.s32.totalorder %s38, 0
      %p170 = por %p168, %p169
      %s172 = sadd.s32 %s171, 1
      %p175 = scmp.eq.s32.totalorder %s32, 1
      %p176 = scmp.ne.s32.totalorder %s171, %s173
      %p177 = scmp.eq.s32.totalorder %s32, 0
      %p178 = por %p176, %p177
      %p179 = scmp.ne.s32.totalorder %s171, %s173
      %p180 = scmp.eq.s32.totalorder %s37, 1
      %p181 = por %p179, %p180
      %p182 = scmp.ne.s32.totalorder %s173, %s174
      %p183 = scmp.eq.s32.totalorder %s37, 0
      %p184 = por %p182, %p183
      %p185 = scmp.ne.s32.totalorder %s173, %s174
      %p186 = scmp.eq.s32.totalorder %s38, 1
      %p187 = por %p185, %p186
      %p189 = scmp.ne.s32.totalorder %s174, %s188
      %p190 = scmp.eq.s32.totalorder %s38, 0
      %p191 = por %p189, %p190
      %s193 = sadd.s32 %s192, 1
      %p196 = scmp.eq.s32.totalorder %s32, 1
      %p197 = scmp.ne.s32.totalorder %s192, %s194
      %p198 = scmp.eq.s32.totalorder %s32, 0
      %p199 = por %p197, %p198
      %p200 = scmp.ne.s32.totalorder %s192, %s194
      %p201 = scmp.eq.s32.totalorder %s37, 1
      %p202 = por %p200, %p201
      %p203 = scmp.ne.s32.totalorder %s194, %s195
      %p204 = scmp.eq.s32.totalorder %s37, 0
      %p205 = por %p203, %p204
      %p206 = scmp.ne.s32.totalorder %s194, %s195
      %p207 = scmp.eq.s32.totalorder %s38, 1
      %p208 = por %p206, %p207
      %p210 = scmp.ne.s32.totalorder %s195, %s209
      %p211 = scmp.eq.s32.totalorder %s38, 0
      %p212 = por %p210, %p211
      %s214 = sadd.s32 %s213, 1
      %p217 = scmp.eq.s32.totalorder %s32, 1
      %p218 = scmp.ne.s32.totalorder %s213, %s215
      %p219 = scmp.eq.s32.totalorder %s32, 0
      %p220 = por %p218, %p219
      %p221 = scmp.ne.s32.totalorder %s213, %s215
      %p222 = scmp.eq.s32.totalorder %s37, 1
      %p223 = por %p221, %p222
      %p224 = scmp.ne.s32.totalorder %s215, %s216
      %p225 = scmp.eq.s32.totalorder %s37, 0
      %p226 = por %p224, %p225
      %p227 = scmp.ne.s32.totalorder %s215, %s216
      %p228 = scmp.eq.s32.totalorder %s38, 1
      %p229 = por %p227, %p228
      %p231 = scmp.ne.s32.totalorder %s216, %s230
      %p232 = scmp.eq.s32.totalorder %s38, 0
      %p233 = por %p231, %p232
      %s235 = sadd.s32 %s234, 1
      %p238 = scmp.eq.s32.totalorder %s32, 1
      %p239 = scmp.ne.s32.totalorder %s234, %s236
      %p240 = scmp.eq.s32.totalorder %s32, 0
      %p241 = por %p239, %p240
      %p242 = scmp.ne.s32.totalorder %s234, %s236
      %p243 = scmp.eq.s32.totalorder %s37, 1
      %p244 = por %p242, %p243
      %p245 = scmp.ne.s32.totalorder %s236, %s237
      %p246 = scmp.eq.s32.totalorder %s37, 0
      %p247 = por %p245, %p246
      %p248 = scmp.ne.s32.totalorder %s236, %s237
      %p249 = scmp.eq.s32.totalorder %s38, 1
      %p250 = por %p248, %p249
      %p252 = scmp.ne.s32.totalorder %s237, %s251
      %p253 = scmp.eq.s32.totalorder %s38, 0
      %p254 = por %p252, %p253
      %s256 = sadd.s32 %s255, 1
      %p259 = scmp.eq.s32.totalorder %s32, 1
      %p260 = scmp.ne.s32.totalorder %s255, %s257
      %p261 = scmp.eq.s32.totalorder %s32, 0
      %p262 = por %p260, %p261
      %p263 = scmp.ne.s32.totalorder %s255, %s257
      %p264 = scmp.eq.s32.totalorder %s37, 1
      %p265 = por %p263, %p264
      %p266 = scmp.ne.s32.totalorder %s257, %s258
      %p267 = scmp.eq.s32.totalorder %s37, 0
      %p268 = por %p266, %p267
      %p269 = scmp.ne.s32.totalorder %s257, %s258
      %p270 = scmp.eq.s32.totalorder %s38, 1
      %p271 = por %p269, %p270
      %p273 = scmp.ne.s32.totalorder %s258, %s272
      %p274 = scmp.eq.s32.totalorder %s38, 0
      %p275 = por %p273, %p274
      %s277 = sadd.s32 %s276, 1
      %p280 = scmp.eq.s32.totalorder %s32, 1
      %p281 = scmp.ne.s32.totalorder %s276, %s278
      %p282 = scmp.eq.s32.totalorder %s32, 0
      %p283 = por %p281, %p282
      %p284 = scmp.ne.s32.totalorder %s276, %s278
      %p285 = scmp.eq.s32.totalorder %s37, 1
      %p286 = por %p284, %p285
      %p287 = scmp.ne.s32.totalorder %s278, %s279
      %p288 = scmp.eq.s32.totalorder %s37, 0
      %p289 = por %p287, %p288
      %p290 = scmp.ne.s32.totalorder %s278, %s279
      %p291 = scmp.eq.s32.totalorder %s38, 1
      %p292 = por %p290, %p291
      %p294 = scmp.ne.s32.totalorder %s279, %s293
      %p295 = scmp.eq.s32.totalorder %s38, 0
      %p296 = por %p294, %p295
      %s298 = sadd.s32 %s297, 1
      %p301 = scmp.eq.s32.totalorder %s32, 1
      %p302 = scmp.ne.s32.totalorder %s297, %s299
      %p303 = scmp.eq.s32.totalorder %s32, 0
      %p304 = por %p302, %p303
      %p305 = scmp.ne.s32.totalorder %s297, %s299
      %p306 = scmp.eq.s32.totalorder %s37, 1
      %p307 = por %p305, %p306
      %p308 = scmp.ne.s32.totalorder %s299, %s300
      %p309 = scmp.eq.s32.totalorder %s37, 0
      %p310 = por %p308, %p309
      %p311 = scmp.ne.s32.totalorder %s299, %s300
      %p312 = scmp.eq.s32.totalorder %s38, 1
      %p313 = por %p311, %p312
      %p315 = scmp.ne.s32.totalorder %s300, %s314
      %p316 = scmp.eq.s32.totalorder %s38, 0
      %p317 = por %p315, %p316
      %s319 = sadd.s32 %s318, 1
      %p322 = scmp.eq.s32.totalorder %s32, 1
      %p323 = scmp.ne.s32.totalorder %s318, %s320
      %p324 = scmp.eq.s32.totalorder %s32, 0
      %p325 = por %p323, %p324
      %p326 = scmp.ne.s32.totalorder %s318, %s320
      %p327 = scmp.eq.s32.totalorder %s37, 1
      %p328 = por %p326, %p327
      %p329 = scmp.ne.s32.totalorder %s320, %s321
      %p330 = scmp.eq.s32.totalorder %s37, 0
      %p331 = por %p329, %p330
      %p332 = scmp.ne.s32.totalorder %s320, %s321
      %p333 = scmp.eq.s32.totalorder %s38, 1
      %p334 = por %p332, %p333
      %p336 = scmp.ne.s32.totalorder %s321, %s335
      %p337 = scmp.eq.s32.totalorder %s38, 0
      %p338 = por %p336, %p337
      %s340 = sadd.s32 %s339, 1
      %p343 = scmp.eq.s32.totalorder %s32, 1
      %p344 = scmp.ne.s32.totalorder %s339, %s341
      %p345 = scmp.eq.s32.totalorder %s32, 0
      %p346 = por %p344, %p345
      %p347 = scmp.ne.s32.totalorder %s339, %s341
      %p348 = scmp.eq.s32.totalorder %s37, 1
      %p349 = por %p347, %p348
      %p350 = scmp.ne.s32.totalorder %s341, %s342
      %p351 = scmp.eq.s32.totalorder %s37, 0
      %p352 = por %p350, %p351
      %p353 = scmp.ne.s32.totalorder %s341, %s342
      %p354 = scmp.eq.s32.totalorder %s38, 1
      %p355 = por %p353, %p354
      %p357 = scmp.ne.s32.totalorder %s342, %s356
      %p358 = scmp.eq.s32.totalorder %s38, 0
      %p359 = por %p357, %p358
      %s361 = sadd.s32 %s360, 1
      %p364 = scmp.eq.s32.totalorder %s32, 1
      %p365 = scmp.ne.s32.totalorder %s360, %s362
      %p366 = scmp.eq.s32.totalorder %s32, 0
      %p367 = por %p365, %p366
      %p368 = scmp.ne.s32.totalorder %s360, %s362
      %p369 = scmp.eq.s32.totalorder %s37, 1
      %p370 = por %p368, %p369
      %p371 = scmp.ne.s32.totalorder %s362, %s363
      %p372 = scmp.eq.s32.totalorder %s37, 0
      %p373 = por %p371, %p372
      %p374 = scmp.ne.s32.totalorder %s362, %s363
      %p375 = scmp.eq.s32.totalorder %s38, 1
      %p376 = por %p374, %p375
      %p378 = scmp.ne.s32.totalorder %s363, %s377
      %p379 = scmp.eq.s32.totalorder %s38, 0
      %p380 = por %p378, %p379
      %s382 = sadd.s32 %s381, 1
      %p385 = scmp.eq.s32.totalorder %s32, 1
      %p386 = scmp.ne.s32.totalorder %s381, %s383
      %p387 = scmp.eq.s32.totalorder %s32, 0
      %p388 = por %p386, %p387
      %p389 = scmp.ne.s32.totalorder %s381, %s383
      %p390 = scmp.eq.s32.totalorder %s37, 1
      %p391 = por %p389, %p390
      %p392 = scmp.ne.s32.totalorder %s383, %s384
      %p393 = scmp.eq.s32.totalorder %s37, 0
      %p394 = por %p392, %p393
      %p395 = scmp.ne.s32.totalorder %s383, %s384
      %p396 = scmp.eq.s32.totalorder %s38, 1
      %p397 = por %p395, %p396
      %p399 = scmp.ne.s32.totalorder %s384, %s398
      %p400 = scmp.eq.s32.totalorder %s38, 0
      %p401 = por %p399, %p400
      %s403 = sadd.s32 %s402, 1
      %p406 = scmp.eq.s32.totalorder %s32, 1
      %p407 = scmp.ne.s32.totalorder %s402, %s404
      %p408 = scmp.eq.s32.totalorder %s32, 0
      %p409 = por %p407, %p408
      %p410 = scmp.ne.s32.totalorder %s402, %s404
      %p411 = scmp.eq.s32.totalorder %s37, 1
      %p412 = por %p410, %p411
      %p413 = scmp.ne.s32.totalorder %s404, %s405
      %p414 = scmp.eq.s32.totalorder %s37, 0
      %p415 = por %p413, %p414
      %p416 = scmp.ne.s32.totalorder %s404, %s405
      %p417 = scmp.eq.s32.totalorder %s38, 1
      %p418 = por %p416, %p417
      %p420 = scmp.ne.s32.totalorder %s405, %s419
      %p421 = scmp.eq.s32.totalorder %s38, 0
      %p422 = por %p420, %p421
      %s424 = sadd.s32 %s423, 1
      %p427 = scmp.eq.s32.totalorder %s32, 1
      %p428 = scmp.ne.s32.totalorder %s423, %s425
      %p429 = scmp.eq.s32.totalorder %s32, 0
      %p430 = por %p428, %p429
      %p431 = scmp.ne.s32.totalorder %s423, %s425
      %p432 = scmp.eq.s32.totalorder %s37, 1
      %p433 = por %p431, %p432
      %p434 = scmp.ne.s32.totalorder %s425, %s426
      %p435 = scmp.eq.s32.totalorder %s37, 0
      %p436 = por %p434, %p435
      %p437 = scmp.ne.s32.totalorder %s425, %s426
      %p438 = scmp.eq.s32.totalorder %s38, 1
      %p439 = por %p437, %p438
      %p441 = scmp.ne.s32.totalorder %s426, %s440
      %p442 = scmp.eq.s32.totalorder %s38, 0
      %p443 = por %p441, %p442
      %s444 = ssub.s32 %s32, %s39
      %p445 = scmp.eq.s32.totalorder %s444, 0
      %s447 = sadd.s32 %s446, 1
      %s448 = scalar_select %p445, %s446, %s447
      %p451 = pneg %p445
      %p452 = scmp.eq.s32.totalorder %s32, 1
      %p453 = por %p451, %p452
      %p454 = scmp.ne.s32.totalorder %s446, %s449
      %p455 = scmp.eq.s32.totalorder %s32, 0
      %p456 = por %p454, %p455
      %p457 = scmp.ne.s32.totalorder %s446, %s449
      %p458 = scmp.eq.s32.totalorder %s37, 1
      %p459 = por %p457, %p458
      %p460 = scmp.ne.s32.totalorder %s449, %s450
      %p461 = scmp.eq.s32.totalorder %s37, 0
      %p462 = por %p460, %p461
      %p463 = scmp.ne.s32.totalorder %s449, %s450
      %p464 = scmp.eq.s32.totalorder %s38, 1
      %p465 = por %p463, %p464
      %p467 = scmp.ne.s32.totalorder %s450, %s466
      %p468 = scmp.eq.s32.totalorder %s38, 0
      %p469 = por %p467, %p468
      %p470 = scmp.le.s32.totalorder 1, %s32
      %p471 = scmp.lt.s32.totalorder %s32, 3
      %p472 = pnand %p470, %p471
      %p473 = pneg %p472
      // Predicated region
      $region9: #{tpu_custom_call.1} parent=5 // pred_check
        _
      $region10: #{tpu_custom_call.1} parent=5 // pred_check_branch
        %475 = sbr.rel (%p472) target = $region12
      $region11: #{tpu_custom_call.1} parent=5 // pred_region
        %s476 = ssub.s32 %s32, 1
        // Predicated region
        $region13: #{tpu_custom_call.1} parent=11 // pred_check
          %p477 = pneg %p79
        $region14: #{tpu_custom_call.1} parent=11 // pred_check_branch
          %479 = sbr.rel (%p477) target = $region16
        $region15: #{tpu_custom_call.1} parent=11 // pred_region
          %s481 = ssub.s32 2048, 2048
          %482 = vsyncadd [#allocation3], %s481
          %s483 = sshll.u32 [#allocation2], 4
          %s484 = int_to_ptr.vmem [resolvable:$true] %s483
          %489 = dma.hbm_to_vmem [thread:$0]  %s1, 2048, %s484, [#allocation3], 64, 64, 4
        $region16: #{tpu_custom_call.1} parent=11 // pred_fallthru
          _
        // Predicated region
        $region17: #{tpu_custom_call.1} parent=11 // pred_check
          %p490 = pneg %p100
        $region18: #{tpu_custom_call.1} parent=11 // pred_check_branch
          %492 = sbr.rel (%p490) target = $region20
        $region19: #{tpu_custom_call.1} parent=11 // pred_region
          %s494 = ssub.s32 2048, 2048
          %495 = vsyncadd [#allocation6], %s494
          %s496 = sshll.u32 [#allocation5], 4
          %s497 = int_to_ptr.vmem [resolvable:$true] %s496
          %502 = dma.hbm_to_vmem [thread:$0]  %s2, 2048, %s497, [#allocation6], 64, 64, 4
        $region20: #{tpu_custom_call.1} parent=11 // pred_fallthru
          _
        // Predicated region
        $region21: #{tpu_custom_call.1} parent=11 // pred_check
          %p503 = pneg %p121
        $region22: #{tpu_custom_call.1} parent=11 // pred_check_branch
          %505 = sbr.rel (%p503) target = $region24
        $region23: #{tpu_custom_call.1} parent=11 // pred_region
          %s507 = ssub.s32 2048, 2048
          %508 = vsyncadd [#allocation6], %s507
          %s509 = sshll.u32 [#allocation7], 4
          %s510 = int_to_ptr.vmem [resolvable:$true] %s509
          %515 = dma.hbm_to_vmem [thread:$0]  %s3, 2048, %s510, [#allocation6], 64, 64, 4
        $region24: #{tpu_custom_call.1} parent=11 // pred_fallthru
          _
        // Predicated region
        $region25: #{tpu_custom_call.1} parent=11 // pred_check
          %p516 = pneg %p142
        $region26: #{tpu_custom_call.1} parent=11 // pred_check_branch
          %518 = sbr.rel (%p516) target = $region28
        $region27: #{tpu_custom_call.1} parent=11 // pred_region
          _
        $region28: #{tpu_custom_call.1} parent=11 // pred_fallthru
          _
        // Predicated region
        $region29: #{tpu_custom_call.1} parent=11 // pred_check
          %p519 = pneg %p163
        $region30: #{tpu_custom_call.1} parent=11 // pred_check_branch
          %521 = sbr.rel (%p519) target = $region32
        $region31: #{tpu_custom_call.1} parent=11 // pred_region
          _
        $region32: #{tpu_custom_call.1} parent=11 // pred_fallthru
          _
        // Predicated region
        $region33: #{tpu_custom_call.1} parent=11 // pred_check
          %p522 = pneg %p184
        $region34: #{tpu_custom_call.1} parent=11 // pred_check_branch
          %524 = sbr.rel (%p522) target = $region36
        $region35: #{tpu_custom_call.1} parent=11 // pred_region
          _
        $region36: #{tpu_custom_call.1} parent=11 // pred_fallthru
          _
        // Predicated region
        $region37: #{tpu_custom_call.1} parent=11 // pred_check
          %p525 = pneg %p205
        $region38: #{tpu_custom_call.1} parent=11 // pred_check_branch
          %527 = sbr.rel (%p525) target = $region40
        $region39: #{tpu_custom_call.1} parent=11 // pred_region
          %s529 = ssub.s32 2048, 2048
          %530 = vsyncadd [#allocation9], %s529
          %s531 = sshll.u32 [#allocation8], 4
          %s532 = int_to_ptr.vmem [resolvable:$true] %s531
          %537 = dma.hbm_to_vmem [thread:$0]  %s7, 2048, %s532, [#allocation9], 64, 64, 4
        $region40: #{tpu_custom_call.1} parent=11 // pred_fallthru
          _
        // Predicated region
        $region41: #{tpu_custom_call.1} parent=11 // pred_check
          %p538 = pneg %p226
        $region42: #{tpu_custom_call.1} parent=11 // pred_check_branch
          %540 = sbr.rel (%p538) target = $region44
        $region43: #{tpu_custom_call.1} parent=11 // pred_region
          _
        $region44: #{tpu_custom_call.1} parent=11 // pred_fallthru
          _
        // Predicated region
        $region45: #{tpu_custom_call.1} parent=11 // pred_check
          %p541 = pneg %p247
        $region46: #{tpu_custom_call.1} parent=11 // pred_check_branch
          %543 = sbr.rel (%p541) target = $region48
        $region47: #{tpu_custom_call.1} parent=11 // pred_region
          %s545 = ssub.s32 4096, 4096
          %546 = vsyncadd [#allocation9], %s545
          %s547 = sshll.u32 [#allocation10], 4
          %s548 = int_to_ptr.vmem [resolvable:$true] %s547
          %553 = dma.hbm_to_vmem [thread:$0]  %s9, 4096, %s548, [#allocation9], 128, 128, 8
        $region48: #{tpu_custom_call.1} parent=11 // pred_fallthru
          _
        // Predicated region
        $region49: #{tpu_custom_call.1} parent=11 // pred_check
          %p554 = pneg %p268
        $region50: #{tpu_custom_call.1} parent=11 // pred_check_branch
          %556 = sbr.rel (%p554) target = $region52
        $region51: #{tpu_custom_call.1} parent=11 // pred_region
          _
        $region52: #{tpu_custom_call.1} parent=11 // pred_fallthru
          _
        // Predicated region
        $region53: #{tpu_custom_call.1} parent=11 // pred_check
          %p557 = pneg %p289
        $region54: #{tpu_custom_call.1} parent=11 // pred_check_branch
          %559 = sbr.rel (%p557) target = $region56
        $region55: #{tpu_custom_call.1} parent=11 // pred_region
          %s561 = ssub.s32 4096, 4096
          %562 = vsyncadd [#allocation12], %s561
          %s563 = sshll.u32 [#allocation11], 4
          %s564 = int_to_ptr.vmem [resolvable:$true] %s563
          %569 = dma.hbm_to_vmem [thread:$0]  %s11, 4096, %s564, [#allocation12], 64, 64, 4
        $region56: #{tpu_custom_call.1} parent=11 // pred_fallthru
          _
        // Predicated region
        $region57: #{tpu_custom_call.1} parent=11 // pred_check
          %p570 = pneg %p310
        $region58: #{tpu_custom_call.1} parent=11 // pred_check_branch
          %572 = sbr.rel (%p570) target = $region60
        $region59: #{tpu_custom_call.1} parent=11 // pred_region
          _
        $region60: #{tpu_custom_call.1} parent=11 // pred_fallthru
          _
        // Predicated region
        $region61: #{tpu_custom_call.1} parent=11 // pred_check
          %p573 = pneg %p331
        $region62: #{tpu_custom_call.1} parent=11 // pred_check_branch
          %575 = sbr.rel (%p573) target = $region64
        $region63: #{tpu_custom_call.1} parent=11 // pred_region
          _
        $region64: #{tpu_custom_call.1} parent=11 // pred_fallthru
          _
        // Predicated region
        $region65: #{tpu_custom_call.1} parent=11 // pred_check
          %p576 = pneg %p352
        $region66: #{tpu_custom_call.1} parent=11 // pred_check_branch
          %578 = sbr.rel (%p576) target = $region68
        $region67: #{tpu_custom_call.1} parent=11 // pred_region
          _
        $region68: #{tpu_custom_call.1} parent=11 // pred_fallthru
          _
        // Predicated region
        $region69: #{tpu_custom_call.1} parent=11 // pred_check
          %p579 = pneg %p373
        $region70: #{tpu_custom_call.1} parent=11 // pred_check_branch
          %581 = sbr.rel (%p579) target = $region72
        $region71: #{tpu_custom_call.1} parent=11 // pred_region
          _
        $region72: #{tpu_custom_call.1} parent=11 // pred_fallthru
          _
        // Predicated region
        $region73: #{tpu_custom_call.1} parent=11 // pred_check
          %p582 = pneg %p394
        $region74: #{tpu_custom_call.1} parent=11 // pred_check_branch
          %584 = sbr.rel (%p582) target = $region76
        $region75: #{tpu_custom_call.1} parent=11 // pred_region
          _
        $region76: #{tpu_custom_call.1} parent=11 // pred_fallthru
          _
        // Predicated region
        $region77: #{tpu_custom_call.1} parent=11 // pred_check
          %p585 = pneg %p415
        $region78: #{tpu_custom_call.1} parent=11 // pred_check_branch
          %587 = sbr.rel (%p585) target = $region80
        $region79: #{tpu_custom_call.1} parent=11 // pred_region
          _
        $region80: #{tpu_custom_call.1} parent=11 // pred_fallthru
          _
        // Predicated region
        $region81: #{tpu_custom_call.1} parent=11 // pred_check
          %p588 = pneg %p436
        $region82: #{tpu_custom_call.1} parent=11 // pred_check_branch
          %590 = sbr.rel (%p588) target = $region84
        $region83: #{tpu_custom_call.1} parent=11 // pred_region
          _
        $region84: #{tpu_custom_call.1} parent=11 // pred_fallthru
          _
      $region12: #{tpu_custom_call.1} parent=5 // pred_fallthru
        _
      %p591 = scmp.lt.s32.totalorder %s32, 2
      // Predicated region
      $region85: #{tpu_custom_call.1} parent=5 // pred_check
        %p592 = pneg %p591
      $region86: #{tpu_custom_call.1} parent=5 // pred_check_branch
        %594 = sbr.rel (%p592) target = $region88
      $region87: #{tpu_custom_call.1} parent=5 // pred_region
        // Predicated region
        $region89: #{tpu_custom_call.1} parent=87 // pred_check
          %p595 = pneg %p52
        $region90: #{tpu_custom_call.1} parent=87 // pred_check_branch
          %597 = sbr.rel (%p595) target = $region92
        $region91: #{tpu_custom_call.1} parent=87 // pred_region
          %p598 = scmp.lt.s32.totalorder %s32, 1
          %s599 = scalar_select %p598, %s32, 1
          %s600 = smul.addr %s599, 2
          %s601 = smul.addr %s600, 8
          %s602 = scalar_lea.vmem %s0, %s601
        $region92: #{tpu_custom_call.1} parent=87 // pred_fallthru
          _
      $region88: #{tpu_custom_call.1} parent=5 // pred_fallthru
        _
      %p603 = scmp.le.s32.totalorder 1, %s32
      %p604 = scmp.lt.s32.totalorder %s32, 3
      %p605 = pnand %p603, %p604
      %p606 = pneg %p605
      // Predicated region
      $region93: #{tpu_custom_call.1} parent=5 // pred_check
        _
      $region94: #{tpu_custom_call.1} parent=5 // pred_check_branch
        %608 = sbr.rel (%p605) target = $region96
      $region95: #{tpu_custom_call.1} parent=5 // pred_region
        %s609 = ssub.s32 %s32, 1
        // Predicated region
        $region97: #{tpu_custom_call.1} parent=95 // pred_check
          %p610 = pneg %p79
        $region98: #{tpu_custom_call.1} parent=95 // pred_check_branch
          %612 = sbr.rel (%p610) target = $region100
        $region99: #{tpu_custom_call.1} parent=95 // pred_region
          %613 = dma.done [#allocation3], 2048
        $region100: #{tpu_custom_call.1} parent=95 // pred_fallthru
          _
        // Predicated region
        $region101: #{tpu_custom_call.1} parent=95 // pred_check
          %p614 = pneg %p100
        $region102: #{tpu_custom_call.1} parent=95 // pred_check_branch
          %616 = sbr.rel (%p614) target = $region104
        $region103: #{tpu_custom_call.1} parent=95 // pred_region
          %617 = dma.done [#allocation6], 2048
        $region104: #{tpu_custom_call.1} parent=95 // pred_fallthru
          _
        // Predicated region
        $region105: #{tpu_custom_call.1} parent=95 // pred_check
          %p618 = pneg %p121
        $region106: #{tpu_custom_call.1} parent=95 // pred_check_branch
          %620 = sbr.rel (%p618) target = $region108
        $region107: #{tpu_custom_call.1} parent=95 // pred_region
          %621 = dma.done [#allocation6], 2048
        $region108: #{tpu_custom_call.1} parent=95 // pred_fallthru
          _
        // Predicated region
        $region109: #{tpu_custom_call.1} parent=95 // pred_check
          %p622 = pneg %p205
        $region110: #{tpu_custom_call.1} parent=95 // pred_check_branch
          %624 = sbr.rel (%p622) target = $region112
        $region111: #{tpu_custom_call.1} parent=95 // pred_region
          %625 = dma.done [#allocation9], 2048
        $region112: #{tpu_custom_call.1} parent=95 // pred_fallthru
          _
        // Predicated region
        $region113: #{tpu_custom_call.1} parent=95 // pred_check
          %p626 = pneg %p247
        $region114: #{tpu_custom_call.1} parent=95 // pred_check_branch
          %628 = sbr.rel (%p626) target = $region116
        $region115: #{tpu_custom_call.1} parent=95 // pred_region
          %629 = dma.done [#allocation9], 4096
        $region116: #{tpu_custom_call.1} parent=95 // pred_fallthru
          _
        // Predicated region
        $region117: #{tpu_custom_call.1} parent=95 // pred_check
          %p630 = pneg %p289
        $region118: #{tpu_custom_call.1} parent=95 // pred_check_branch
          %632 = sbr.rel (%p630) target = $region120
        $region119: #{tpu_custom_call.1} parent=95 // pred_region
          %633 = dma.done [#allocation12], 4096
        $region120: #{tpu_custom_call.1} parent=95 // pred_fallthru
          _
        %p634 = scmp.lt.s32.totalorder %s37, 1
        %s635 = scalar_select %p634, %s37, 1
        %s636 = smul.addr %s635, 2
        %s637 = smul.addr %s636, 8
        %s638 = scalar_lea.vmem %s0, %s637
        %p639 = pneg %p58
        %p640 = pneg %p55
        %p641 = pneg %p79
        %p642 = pneg %p76
        %p643 = pneg %p100
        %p644 = pneg %p97
        %p645 = pneg %p121
        %p646 = pneg %p118
        %p647 = pneg %p142
        %p648 = pneg %p139
        %p649 = pneg %p163
        %p650 = pneg %p160
        %p651 = pneg %p184
        %p652 = pneg %p181
        %p653 = pneg %p205
        %p654 = pneg %p202
        %p655 = pneg %p226
        %p656 = pneg %p223
        %p657 = pneg %p247
        %p658 = pneg %p244
        %p659 = pneg %p268
        %p660 = pneg %p265
        %p661 = pneg %p289
        %p662 = pneg %p286
        %p663 = pneg %p310
        %p664 = pneg %p307
        %p665 = pneg %p331
        %p666 = pneg %p328
        %p667 = pneg %p352
        %p668 = pneg %p349
        %p669 = pneg %p373
        %p670 = pneg %p370
        %p671 = pneg %p394
        %p672 = pneg %p391
        %p673 = pneg %p415
        %p674 = pneg %p412
        %p675 = pneg %p436
        %p676 = pneg %p433
        %p677 = pneg %p462
        %p678 = pneg %p459
        %s679 = sand.u32 %s449, 1
        %s680 = scalar_lea.sflag [#allocation4], %s679
        %s681 = sand.u32 %s449, 1
        %s682 = scalar_lea.vmem [#allocation13], %s681
        %p683 = scmp.lt.s32.totalorder %s37, 1
        %s684 = scalar_select %p683, %s37, 1
        %s685 = smul.addr %s684, 2
        %s686 = smul.addr %s685, 8
        %s687 = scalar_lea.vmem %s0, %s686
        %v689 = vld [vmem:[%s687] sm:$0xff]
        %v690 = vld [vmem:[%s687 + $0x8] sm:$0x1]
        %v691 = vpack.c.bf16 %v690, %v689
        %v692 = vld [vmem:[#allocation2] sm:$0xf]
        %v693 = vld [vmem:[#allocation2 + $0x4] sm:$0xf]
        %v694 = vld [vmem:[#allocation2 + $0x8] sm:$0xf]
        %v695 = vld [vmem:[#allocation2 + $0xc] sm:$0xf]
        %v696 = vld [vmem:[#allocation2 + $0x10] sm:$0xf]
        %v697 = vld [vmem:[#allocation2 + $0x14] sm:$0xf]
        %v698 = vld [vmem:[#allocation2 + $0x18] sm:$0xf]
        %v699 = vld [vmem:[#allocation2 + $0x1c] sm:$0xf]
        %v700 = vld [vmem:[#allocation2 + $0x20] sm:$0xf]
        %v701 = vld [vmem:[#allocation2 + $0x24] sm:$0xf]
        %v702 = vld [vmem:[#allocation2 + $0x28] sm:$0xf]
        %v703 = vld [vmem:[#allocation2 + $0x2c] sm:$0xf]
        %v704 = vld [vmem:[#allocation2 + $0x30] sm:$0xf]
        %v705 = vld [vmem:[#allocation2 + $0x34] sm:$0xf]
        %v706 = vld [vmem:[#allocation2 + $0x38] sm:$0xf]
        %v707 = vld [vmem:[#allocation2 + $0x3c] sm:$0xf]
        %v708 = vld [vmem:[%s4] sm:$0x1]
        %v710 = vlaneseq
        %v711 = vshrl.u32 %v710, 7
        %v712 = vsub.s32 0, %v711
        %v713 = vrot.slane %v708, %v712
        %v731 = vunpack.c.l.b16 %v692
        %v732 = vunpack.c.l.b16 %v693
        %v733 = vunpack.c.l.b16 %v694
        %v734 = vunpack.c.l.b16 %v695
        %v735 = vunpack.c.l.b16 %v696
        %v736 = vunpack.c.l.b16 %v697
        %v737 = vunpack.c.l.b16 %v698
        %v738 = vunpack.c.l.b16 %v699
        %v739 = vunpack.c.l.b16 %v700
        %v740 = vunpack.c.l.b16 %v701
        %v741 = vunpack.c.l.b16 %v702
        %v742 = vunpack.c.l.b16 %v703
        %v743 = vunpack.c.l.b16 %v704
        %v744 = vunpack.c.l.b16 %v705
        %v745 = vunpack.c.l.b16 %v706
        %v746 = vunpack.c.l.b16 %v707
        %v747 = vpack.c.b16 %v732, %v731
        %v748 = vpack.c.b16 %v734, %v733
        %v749 = vpack.c.b16 %v736, %v735
        %v750 = vpack.c.b16 %v738, %v737
        %v751 = vpack.c.b16 %v740, %v739
        %v752 = vpack.c.b16 %v742, %v741
        %v753 = vpack.c.b16 %v744, %v743
        %v754 = vpack.c.b16 %v746, %v745
        %763 = vmatprep.subr.bf16.mxu0 0
        %764 = vmatpush1.bf16.msra.mxu0 %v754
        %765 = vmatprep.subr.bf16.mxu0 0
        %766 = vmatpush1.bf16.msra.mxu0 %v753
        %767 = vmatprep.subr.bf16.mxu0 0
        %768 = vmatpush1.bf16.msra.mxu0 %v752
        %769 = vmatprep.subr.bf16.mxu0 0
        %770 = vmatpush1.bf16.msra.mxu0 %v751
        %771 = vmatprep.subr.bf16.mxu0 0
        %772 = vmatpush1.bf16.msra.mxu0 %v750
        %773 = vmatprep.subr.bf16.mxu0 0
        %774 = vmatpush1.bf16.msra.mxu0 %v749
        %775 = vmatprep.subr.bf16.mxu0 0
        %776 = vmatpush1.bf16.msra.mxu0 %v748
        %777 = vmatprep.subr.bf16.mxu0 0
        %778 = vmatpush1.bf16.msra.mxu0 %v747
        %779 = vmatprep.subr.bf16.mxu0 0
        %780 = vmatpush2.bf16.msra.mxu0 0
        %781 = vmatprep.subr.bf16.mxu0 0
        %782 = vmatpush2.bf16.msra.mxu0 0
        %783 = vmatprep.subr.bf16.mxu0 0
        %784 = vmatpush2.bf16.msra.mxu0 0
        %785 = vmatprep.subr.bf16.mxu0 0
        %786 = vmatpush2.bf16.msra.mxu0 0
        %787 = vmatprep.subr.bf16.mxu0 0
        %788 = vmatpush2.bf16.msra.mxu0 0
        %789 = vmatprep.subr.bf16.mxu0 0
        %790 = vmatpush2.bf16.msra.mxu0 0
        %791 = vmatprep.subr.bf16.mxu0 0
        %792 = vmatpush2.bf16.msra.mxu0 0
        %793 = vmatprep.subr.bf16.mxu0 0
        %794 = vmatpush2.bf16.msra.mxu0 0
        %795 = vmatprep.mubr.bf16.mxu0 0
        %796 = vmatmul.mubr.bf16.gmra.mxu0 %v691
        %v797 = vpop.f32.mrf.mxu0
        %v798 = vadd.f32 %v713, %v797
        %v799 = vpop.f32.mrf.mxu0
        %v800 = vpop.f32.mrf.mxu0
        %v801 = vadd.f32 %v713, %v800
        %v802 = vpop.f32.mrf.mxu0
        %803 = vdwg.mxu0
        %v804 = vld [vmem:[#allocation5] sm:$0xf]
        %v805 = vld [vmem:[#allocation5 + $0x4] sm:$0xf]
        %v806 = vld [vmem:[#allocation5 + $0x8] sm:$0xf]
        %v807 = vld [vmem:[#allocation5 + $0xc] sm:$0xf]
        %v808 = vld [vmem:[#allocation5 + $0x10] sm:$0xf]
        %v809 = vld [vmem:[#allocation5 + $0x14] sm:$0xf]
        %v810 = vld [vmem:[#allocation5 + $0x18] sm:$0xf]
        %v811 = vld [vmem:[#allocation5 + $0x1c] sm:$0xf]
        %v812 = vld [vmem:[#allocation5 + $0x20] sm:$0xf]
        %v813 = vld [vmem:[#allocation5 + $0x24] sm:$0xf]
        %v814 = vld [vmem:[#allocation5 + $0x28] sm:$0xf]
        %v815 = vld [vmem:[#allocation5 + $0x2c] sm:$0xf]
        %v816 = vld [vmem:[#allocation5 + $0x30] sm:$0xf]
        %v817 = vld [vmem:[#allocation5 + $0x34] sm:$0xf]
        %v818 = vld [vmem:[#allocation5 + $0x38] sm:$0xf]
        %v819 = vld [vmem:[#allocation5 + $0x3c] sm:$0xf]
        %v820 = vld [vmem:[%s5] sm:$0x1]
        %v822 = vlaneseq
        %v823 = vshrl.u32 %v822, 7
        %v824 = vsub.s32 0, %v823
        %v825 = vrot.slane %v820, %v824
        %v843 = vunpack.c.l.b16 %v804
        %v844 = vunpack.c.l.b16 %v805
        %v845 = vunpack.c.l.b16 %v806
        %v846 = vunpack.c.l.b16 %v807
        %v847 = vunpack.c.l.b16 %v808
        %v848 = vunpack.c.l.b16 %v809
        %v849 = vunpack.c.l.b16 %v810
        %v850 = vunpack.c.l.b16 %v811
        %v851 = vunpack.c.l.b16 %v812
        %v852 = vunpack.c.l.b16 %v813
        %v853 = vunpack.c.l.b16 %v814
        %v854 = vunpack.c.l.b16 %v815
        %v855 = vunpack.c.l.b16 %v816
        %v856 = vunpack.c.l.b16 %v817
        %v857 = vunpack.c.l.b16 %v818
        %v858 = vunpack.c.l.b16 %v819
        %v859 = vpack.c.b16 %v844, %v843
        %v860 = vpack.c.b16 %v846, %v845
        %v861 = vpack.c.b16 %v848, %v847
        %v862 = vpack.c.b16 %v850, %v849
        %v863 = vpack.c.b16 %v852, %v851
        %v864 = vpack.c.b16 %v854, %v853
        %v865 = vpack.c.b16 %v856, %v855
        %v866 = vpack.c.b16 %v858, %v857
        %875 = vmatprep.subr.bf16.mxu0 0
        %876 = vmatpush1.bf16.msra.mxu0 %v866
        %877 = vmatprep.subr.bf16.mxu0 0
        %878 = vmatpush1.bf16.msra.mxu0 %v865
        %879 = vmatprep.subr.bf16.mxu0 0
        %880 = vmatpush1.bf16.msra.mxu0 %v864
        %881 = vmatprep.subr.bf16.mxu0 0
        %882 = vmatpush1.bf16.msra.mxu0 %v863
        %883 = vmatprep.subr.bf16.mxu0 0
        %884 = vmatpush1.bf16.msra.mxu0 %v862
        %885 = vmatprep.subr.bf16.mxu0 0
        %886 = vmatpush1.bf16.msra.mxu0 %v861
        %887 = vmatprep.subr.bf16.mxu0 0
        %888 = vmatpush1.bf16.msra.mxu0 %v860
        %889 = vmatprep.subr.bf16.mxu0 0
        %890 = vmatpush1.bf16.msra.mxu0 %v859
        %891 = vmatprep.subr.bf16.mxu0 0
        %892 = vmatpush2.bf16.msra.mxu0 0
        %893 = vmatprep.subr.bf16.mxu0 0
        %894 = vmatpush2.bf16.msra.mxu0 0
        %895 = vmatprep.subr.bf16.mxu0 0
        %896 = vmatpush2.bf16.msra.mxu0 0
        %897 = vmatprep.subr.bf16.mxu0 0
        %898 = vmatpush2.bf16.msra.mxu0 0
        %899 = vmatprep.subr.bf16.mxu0 0
        %900 = vmatpush2.bf16.msra.mxu0 0
        %901 = vmatprep.subr.bf16.mxu0 0
        %902 = vmatpush2.bf16.msra.mxu0 0
        %903 = vmatprep.subr.bf16.mxu0 0
        %904 = vmatpush2.bf16.msra.mxu0 0
        %905 = vmatprep.subr.bf16.mxu0 0
        %906 = vmatpush2.bf16.msra.mxu0 0
        %907 = vmatprep.mubr.bf16.mxu0 0
        %908 = vmatmul.mubr.bf16.gmra.mxu0 %v691
        %v909 = vpop.f32.mrf.mxu0
        %v910 = vadd.f32 %v825, %v909
        %v911 = vpop.f32.mrf.mxu0
        %v912 = vpop.f32.mrf.mxu0
        %v913 = vadd.f32 %v825, %v912
        %v914 = vpop.f32.mrf.mxu0
        %915 = vdwg.mxu0
        %v916 = vld [vmem:[#allocation7] sm:$0xf]
        %v917 = vld [vmem:[#allocation7 + $0x4] sm:$0xf]
        %v918 = vld [vmem:[#allocation7 + $0x8] sm:$0xf]
        %v919 = vld [vmem:[#allocation7 + $0xc] sm:$0xf]
        %v920 = vld [vmem:[#allocation7 + $0x10] sm:$0xf]
        %v921 = vld [vmem:[#allocation7 + $0x14] sm:$0xf]
        %v922 = vld [vmem:[#allocation7 + $0x18] sm:$0xf]
        %v923 = vld [vmem:[#allocation7 + $0x1c] sm:$0xf]
        %v924 = vld [vmem:[#allocation7 + $0x20] sm:$0xf]
        %v925 = vld [vmem:[#allocation7 + $0x24] sm:$0xf]
        %v926 = vld [vmem:[#allocation7 + $0x28] sm:$0xf]
        %v927 = vld [vmem:[#allocation7 + $0x2c] sm:$0xf]
        %v928 = vld [vmem:[#allocation7 + $0x30] sm:$0xf]
        %v929 = vld [vmem:[#allocation7 + $0x34] sm:$0xf]
        %v930 = vld [vmem:[#allocation7 + $0x38] sm:$0xf]
        %v931 = vld [vmem:[#allocation7 + $0x3c] sm:$0xf]
        %v932 = vld [vmem:[%s6] sm:$0x1]
        %v934 = vlaneseq
        %v935 = vshrl.u32 %v934, 7
        %v936 = vsub.s32 0, %v935
        %v937 = vrot.slane %v932, %v936
        %v955 = vunpack.c.l.b16 %v916
        %v956 = vunpack.c.l.b16 %v917
        %v957 = vunpack.c.l.b16 %v918
        %v958 = vunpack.c.l.b16 %v919
        %v959 = vunpack.c.l.b16 %v920
        %v960 = vunpack.c.l.b16 %v921
        %v961 = vunpack.c.l.b16 %v922
        %v962 = vunpack.c.l.b16 %v923
        %v963 = vunpack.c.l.b16 %v924
        %v964 = vunpack.c.l.b16 %v925
        %v965 = vunpack.c.l.b16 %v926
        %v966 = vunpack.c.l.b16 %v927
        %v967 = vunpack.c.l.b16 %v928
        %v968 = vunpack.c.l.b16 %v929
        %v969 = vunpack.c.l.b16 %v930
        %v970 = vunpack.c.l.b16 %v931
        %v971 = vpack.c.b16 %v956, %v955
        %v972 = vpack.c.b16 %v958, %v957
        %v973 = vpack.c.b16 %v960, %v959
        %v974 = vpack.c.b16 %v962, %v961
        %v975 = vpack.c.b16 %v964, %v963
        %v976 = vpack.c.b16 %v966, %v965
        %v977 = vpack.c.b16 %v968, %v967
        %v978 = vpack.c.b16 %v970, %v969
        %987 = vmatprep.subr.bf16.mxu0 0
        %988 = vmatpush1.bf16.msra.mxu0 %v978
        %989 = vmatprep.subr.bf16.mxu0 0
        %990 = vmatpush1.bf16.msra.mxu0 %v977
        %991 = vmatprep.subr.bf16.mxu0 0
        %992 = vmatpush1.bf16.msra.mxu0 %v976
        %993 = vmatprep.subr.bf16.mxu0 0
        %994 = vmatpush1.bf16.msra.mxu0 %v975
        %995 = vmatprep.subr.bf16.mxu0 0
        %996 = vmatpush1.bf16.msra.mxu0 %v974
        %997 = vmatprep.subr.bf16.mxu0 0
        %998 = vmatpush1.bf16.msra.mxu0 %v973
        %999 = vmatprep.subr.bf16.mxu0 0
        %1000 = vmatpush1.bf16.msra.mxu0 %v972
        %1001 = vmatprep.subr.bf16.mxu0 0
        %1002 = vmatpush1.bf16.msra.mxu0 %v971
        %1003 = vmatprep.subr.bf16.mxu0 0
        %1004 = vmatpush2.bf16.msra.mxu0 0
        %1005 = vmatprep.subr.bf16.mxu0 0
        %1006 = vmatpush2.bf16.msra.mxu0 0
        %1007 = vmatprep.subr.bf16.mxu0 0
        %1008 = vmatpush2.bf16.msra.mxu0 0
        %1009 = vmatprep.subr.bf16.mxu0 0
        %1010 = vmatpush2.bf16.msra.mxu0 0
        %1011 = vmatprep.subr.bf16.mxu0 0
        %1012 = vmatpush2.bf16.msra.mxu0 0
        %1013 = vmatprep.subr.bf16.mxu0 0
        %1014 = vmatpush2.bf16.msra.mxu0 0
        %1015 = vmatprep.subr.bf16.mxu0 0
        %1016 = vmatpush2.bf16.msra.mxu0 0
        %1017 = vmatprep.subr.bf16.mxu0 0
        %1018 = vmatpush2.bf16.msra.mxu0 0
        %1019 = vmatprep.mubr.bf16.mxu0 0
        %1020 = vmatmul.mubr.bf16.gmra.mxu0 %v691
        %v1021 = vpop.f32.mrf.mxu0
        %v1022 = vadd.f32 %v937, %v1021
        %v1023 = vpop.f32.mrf.mxu0
        %v1024 = vpop.f32.mrf.mxu0
        %v1025 = vadd.f32 %v937, %v1024
        %v1026 = vpop.f32.mrf.mxu0
        %1027 = vdwg.mxu0
        %v1028 = vpack.c.bf16 %v801, %v798
        %v1029 = vpack.c.bf16 %v913, %v910
        %v1030 = vpack.c.bf16 %v1025, %v1022
        %vm1031 = vcmask 261120
        %v1033 = vsel %vm1031, %v1028, 0
        %v1036 = vsel %vm1031, %v1029, 0
        %1038 = vmatprep.subr.bf16.mxu0 0
        %1039 = vmatpush1.bf16.xpose.msra.mxu0 0
        %1040 = vmatprep.subr.bf16.mxu0 0
        %1041 = vmatpush1.bf16.xpose.msra.mxu0 0
        %1042 = vmatprep.subr.bf16.mxu0 0
        %1043 = vmatpush1.bf16.xpose.msra.mxu0 0
        %1044 = vmatprep.subr.bf16.mxu0 0
        %1045 = vmatpush1.bf16.xpose.msra.mxu0 0
        %1046 = vmatprep.subr.bf16.mxu0 0
        %1047 = vmatpush1.bf16.xpose.msra.mxu0 0
        %1048 = vmatprep.subr.bf16.mxu0 0
        %1049 = vmatpush1.bf16.xpose.msra.mxu0 0
        %1050 = vmatprep.subr.bf16.mxu0 0
        %1051 = vmatpush1.bf16.xpose.msra.mxu0 0
        %1052 = vmatprep.subr.bf16.mxu0 0
        %1053 = vmatpush1.bf16.xpose.msra.mxu0 %v1036
        %1054 = vmatprep.subr.bf16.mxu0 0
        %1055 = vmatpush2.bf16.xpose.msra.mxu0 0
        %1056 = vmatprep.subr.bf16.mxu0 0
        %1057 = vmatpush2.bf16.xpose.msra.mxu0 0
        %1058 = vmatprep.subr.bf16.mxu0 0
        %1059 = vmatpush2.bf16.xpose.msra.mxu0 0
        %1060 = vmatprep.subr.bf16.mxu0 0
        %1061 = vmatpush2.bf16.xpose.msra.mxu0 0
        %1062 = vmatprep.subr.bf16.mxu0 0
        %1063 = vmatpush2.bf16.xpose.msra.mxu0 0
        %1064 = vmatprep.subr.bf16.mxu0 0
        %1065 = vmatpush2.bf16.xpose.msra.mxu0 0
        %1066 = vmatprep.subr.bf16.mxu0 0
        %1067 = vmatpush2.bf16.xpose.msra.mxu0 0
        %1068 = vmatprep.subr.bf16.mxu0 0
        %1069 = vmatpush2.bf16.xpose.msra.mxu0 0
        %1070 = vmatprep.mubr.bf16.mxu0 0
        %1071 = vmatmul.mubr.bf16.gmra.mxu0 %v1033
        %v1072 = vpop.f32.mrf.mxu0
        %v1073 = vadd.f32 0.0, %v1072
        %v1074 = vpop.f32.mrf.mxu0
        %v1075 = vpop.f32.mrf.mxu0
        %v1076 = vadd.f32 0.0, %v1075
        %v1077 = vpop.f32.mrf.mxu0
        %1078 = vdwg.mxu0
        %vm1079 = vcmask 72704
        %v1080 = vsel %vm1079, %v1073, -inf
        %1081 = vmax.xlane.f32.xlu0 %v1080
        %v1082 = vpop.xlane.xlu0 %1081
        %vm1083 = vcmask 65536
        %v1084 = vsel %vm1083, %v1076, -inf
        %1085 = vmax.xlane.f32.xlu0 %v1084
        %v1086 = vpop.xlane.xlu0 %1085
        %v1087 = vsub.f32 %v1073, %v1082
        %v1088 = vsub.f32 %v1076, %v1086
        %v1089 = vmul.f32 %v1087, 1.442695
        %v1090 = vpow.pop %v1089
        %v1091 = vmul.f32 %v1088, 1.442695
        %v1092 = vpow.pop %v1091
        %v1093 = vsel %vm1079, %v1090, 0.0
        %1094 = vadd.xlane.f32.xlu0 %v1093
        %v1095 = vpop.xlane.xlu0 %1094
        %v1096 = vsel %vm1083, %v1092, 0.0
        %1097 = vadd.xlane.f32.xlu0 %v1096
        %v1098 = vpop.xlane.xlu0 %1097
        %v1099 = vrcp.pop %v1095
        %v1100 = vrcp.pop %v1098
        %v1101 = vmul.f32 %v1090, %v1099
        %v1102 = vmul.f32 %v1092, %v1100
        %v1103 = vpack.c.bf16 %v1102, %v1101
        %v1105 = vsel %vm1079, %v1103, 0
        %vm1107 = vcmask 1043456
        %vm1108 = vcmask 1044480
        %v1109 = vsel %vm1107, 4294967295, 65535
        %v1110 = vsel %vm1108, %v1109, 0
        %v1112 = vand.u32 %v1030, %v1110
        %1114 = vmatprep.subr.bf16.mxu0 0
        %1115 = vmatpush1.bf16.msra.mxu0 0
        %1116 = vmatprep.subr.bf16.mxu0 0
        %1117 = vmatpush1.bf16.msra.mxu0 0
        %1118 = vmatprep.subr.bf16.mxu0 0
        %1119 = vmatpush1.bf16.msra.mxu0 0
        %1120 = vmatprep.subr.bf16.mxu0 0
        %1121 = vmatpush1.bf16.msra.mxu0 0
        %1122 = vmatprep.subr.bf16.mxu0 0
        %1123 = vmatpush1.bf16.msra.mxu0 0
        %1124 = vmatprep.subr.bf16.mxu0 0
        %1125 = vmatpush1.bf16.msra.mxu0 0
        %1126 = vmatprep.subr.bf16.mxu0 0
        %1127 = vmatpush1.bf16.msra.mxu0 0
        %1128 = vmatprep.subr.bf16.mxu0 0
        %1129 = vmatpush1.bf16.msra.mxu0 %v1112
        %1130 = vmatprep.subr.bf16.mxu0 0
        %1131 = vmatpush2.bf16.msra.mxu0 0
        %1132 = vmatprep.subr.bf16.mxu0 0
        %1133 = vmatpush2.bf16.msra.mxu0 0
        %1134 = vmatprep.subr.bf16.mxu0 0
        %1135 = vmatpush2.bf16.msra.mxu0 0
        %1136 = vmatprep.subr.bf16.mxu0 0
        %1137 = vmatpush2.bf16.msra.mxu0 0
        %1138 = vmatprep.subr.bf16.mxu0 0
        %1139 = vmatpush2.bf16.msra.mxu0 0
        %1140 = vmatprep.subr.bf16.mxu0 0
        %1141 = vmatpush2.bf16.msra.mxu0 0
        %1142 = vmatprep.subr.bf16.mxu0 0
        %1143 = vmatpush2.bf16.msra.mxu0 0
        %1144 = vmatprep.subr.bf16.mxu0 0
        %1145 = vmatpush2.bf16.msra.mxu0 0
        %1146 = vmatprep.mubr.bf16.mxu0 0
        %1147 = vmatmul.mubr.bf16.gmra.mxu0 %v1105
        %v1148 = vpop.f32.mrf.mxu0
        %v1149 = vadd.f32 0.0, %v1148
        %v1150 = vpop.f32.mrf.mxu0
        %v1151 = vpop.f32.mrf.mxu0
        %v1152 = vadd.f32 0.0, %v1151
        %v1153 = vpop.f32.mrf.mxu0
        %1154 = vdwg.mxu0
        %v1155 = vpack.c.bf16 %v1152, %v1149
        %1157 = vrot.lane.b32.xlu0 %v1028, 96
        %v1158 = vpop.permute.xlu0 %1157
        %1160 = vrot.lane.b32.xlu0 %v1029, 96
        %v1161 = vpop.permute.xlu0 %1160
        %v1163 = vsel %vm1031, %v1158, 0
        %v1166 = vsel %vm1031, %v1161, 0
        %1168 = vmatprep.subr.bf16.mxu0 0
        %1169 = vmatpush1.bf16.xpose.msra.mxu0 0
        %1170 = vmatprep.subr.bf16.mxu0 0
        %1171 = vmatpush1.bf16.xpose.msra.mxu0 0
        %1172 = vmatprep.subr.bf16.mxu0 0
        %1173 = vmatpush1.bf16.xpose.msra.mxu0 0
        %1174 = vmatprep.subr.bf16.mxu0 0
        %1175 = vmatpush1.bf16.xpose.msra.mxu0 0
        %1176 = vmatprep.subr.bf16.mxu0 0
        %1177 = vmatpush1.bf16.xpose.msra.mxu0 0
        %1178 = vmatprep.subr.bf16.mxu0 0
        %1179 = vmatpush1.bf16.xpose.msra.mxu0 0
        %1180 = vmatprep.subr.bf16.mxu0 0
        %1181 = vmatpush1.bf16.xpose.msra.mxu0 0
        %1182 = vmatprep.subr.bf16.mxu0 0
        %1183 = vmatpush1.bf16.xpose.msra.mxu0 %v1166
        %1184 = vmatprep.subr.bf16.mxu0 0
        %1185 = vmatpush2.bf16.xpose.msra.mxu0 0
        %1186 = vmatprep.subr.bf16.mxu0 0
        %1187 = vmatpush2.bf16.xpose.msra.mxu0 0
        %1188 = vmatprep.subr.bf16.mxu0 0
        %1189 = vmatpush2.bf16.xpose.msra.mxu0 0
        %1190 = vmatprep.subr.bf16.mxu0 0
        %1191 = vmatpush2.bf16.xpose.msra.mxu0 0
        %1192 = vmatprep.subr.bf16.mxu0 0
        %1193 = vmatpush2.bf16.xpose.msra.mxu0 0
        %1194 = vmatprep.subr.bf16.mxu0 0
        %1195 = vmatpush2.bf16.xpose.msra.mxu0 0
        %1196 = vmatprep.subr.bf16.mxu0 0
        %1197 = vmatpush2.bf16.xpose.msra.mxu0 0
        %1198 = vmatprep.subr.bf16.mxu0 0
        %1199 = vmatpush2.bf16.xpose.msra.mxu0 0
        %1200 = vmatprep.mubr.bf16.mxu0 0
        %1201 = vmatmul.mubr.bf16.gmra.mxu0 %v1163
        %v1202 = vpop.f32.mrf.mxu0
        %v1203 = vadd.f32 0.0, %v1202
        %v1204 = vpop.f32.mrf.mxu0
        %v1205 = vpop.f32.mrf.mxu0
        %v1206 = vadd.f32 0.0, %v1205
        %v1207 = vpop.f32.mrf.mxu0
        %1208 = vdwg.mxu0
        %v1209 = vsel %vm1079, %v1203, -inf
        %1210 = vmax.xlane.f32.xlu0 %v1209
        %v1211 = vpop.xlane.xlu0 %1210
        %v1212 = vsel %vm1083, %v1206, -inf
        %1213 = vmax.xlane.f32.xlu0 %v1212
        %v1214 = vpop.xlane.xlu0 %1213
        %v1215 = vsub.f32 %v1203, %v1211
        %v1216 = vsub.f32 %v1206, %v1214
        %v1217 = vmul.f32 %v1215, 1.442695
        %v1218 = vpow.pop %v1217
        %v1219 = vmul.f32 %v1216, 1.442695
        %v1220 = vpow.pop %v1219
        %v1221 = vsel %vm1079, %v1218, 0.0
        %1222 = vadd.xlane.f32.xlu0 %v1221
        %v1223 = vpop.xlane.xlu0 %1222
        %v1224 = vsel %vm1083, %v1220, 0.0
        %1225 = vadd.xlane.f32.xlu0 %v1224
        %v1226 = vpop.xlane.xlu0 %1225
        %v1227 = vrcp.pop %v1223
        %v1228 = vrcp.pop %v1226
        %v1229 = vmul.f32 %v1218, %v1227
        %v1230 = vmul.f32 %v1220, %v1228
        %v1231 = vpack.c.bf16 %v1230, %v1229
        %1233 = vrot.lane.b32.xlu0 %v1030, 96
        %v1234 = vpop.permute.xlu0 %1233
        %v1236 = vsel %vm1079, %v1231, 0
        %v1239 = vand.u32 %v1234, %v1110
        %1241 = vmatprep.subr.bf16.mxu0 0
        %1242 = vmatpush1.bf16.msra.mxu0 0
        %1243 = vmatprep.subr.bf16.mxu0 0
        %1244 = vmatpush1.bf16.msra.mxu0 0
        %1245 = vmatprep.subr.bf16.mxu0 0
        %1246 = vmatpush1.bf16.msra.mxu0 0
        %1247 = vmatprep.subr.bf16.mxu0 0
        %1248 = vmatpush1.bf16.msra.mxu0 0
        %1249 = vmatprep.subr.bf16.mxu0 0
        %1250 = vmatpush1.bf16.msra.mxu0 0
        %1251 = vmatprep.subr.bf16.mxu0 0
        %1252 = vmatpush1.bf16.msra.mxu0 0
        %1253 = vmatprep.subr.bf16.mxu0 0
        %1254 = vmatpush1.bf16.msra.mxu0 0
        %1255 = vmatprep.subr.bf16.mxu0 0
        %1256 = vmatpush1.bf16.msra.mxu0 %v1239
        %1257 = vmatprep.subr.bf16.mxu0 0
        %1258 = vmatpush2.bf16.msra.mxu0 0
        %1259 = vmatprep.subr.bf16.mxu0 0
        %1260 = vmatpush2.bf16.msra.mxu0 0
        %1261 = vmatprep.subr.bf16.mxu0 0
        %1262 = vmatpush2.bf16.msra.mxu0 0
        %1263 = vmatprep.subr.bf16.mxu0 0
        %1264 = vmatpush2.bf16.msra.mxu0 0
        %1265 = vmatprep.subr.bf16.mxu0 0
        %1266 = vmatpush2.bf16.msra.mxu0 0
        %1267 = vmatprep.subr.bf16.mxu0 0
        %1268 = vmatpush2.bf16.msra.mxu0 0
        %1269 = vmatprep.subr.bf16.mxu0 0
        %1270 = vmatpush2.bf16.msra.mxu0 0
        %1271 = vmatprep.subr.bf16.mxu0 0
        %1272 = vmatpush2.bf16.msra.mxu0 0
        %1273 = vmatprep.mubr.bf16.mxu0 0
        %1274 = vmatmul.mubr.bf16.gmra.mxu0 %v1236
        %v1275 = vpop.f32.mrf.mxu0
        %v1276 = vadd.f32 0.0, %v1275
        %v1277 = vpop.f32.mrf.mxu0
        %v1278 = vpop.f32.mrf.mxu0
        %v1279 = vadd.f32 0.0, %v1278
        %v1280 = vpop.f32.mrf.mxu0
        %1281 = vdwg.mxu0
        %v1282 = vpack.c.bf16 %v1279, %v1276
        %1283 = vrot.lane.b32.xlu0 %v1028, 64
        %v1284 = vpop.permute.xlu0 %1283
        %1285 = vrot.lane.b32.xlu0 %v1029, 64
        %v1286 = vpop.permute.xlu0 %1285
        %v1288 = vsel %vm1031, %v1284, 0
        %v1291 = vsel %vm1031, %v1286, 0
        %1293 = vmatprep.subr.bf16.mxu0 0
        %1294 = vmatpush1.bf16.xpose.msra.mxu0 0
        %1295 = vmatprep.subr.bf16.mxu0 0
        %1296 = vmatpush1.bf16.xpose.msra.mxu0 0
        %1297 = vmatprep.subr.bf16.mxu0 0
        %1298 = vmatpush1.bf16.xpose.msra.mxu0 0
        %1299 = vmatprep.subr.bf16.mxu0 0
        %1300 = vmatpush1.bf16.xpose.msra.mxu0 0
        %1301 = vmatprep.subr.bf16.mxu0 0
        %1302 = vmatpush1.bf16.xpose.msra.mxu0 0
        %1303 = vmatprep.subr.bf16.mxu0 0
        %1304 = vmatpush1.bf16.xpose.msra.mxu0 0
        %1305 = vmatprep.subr.bf16.mxu0 0
        %1306 = vmatpush1.bf16.xpose.msra.mxu0 0
        %1307 = vmatprep.subr.bf16.mxu0 0
        %1308 = vmatpush1.bf16.xpose.msra.mxu0 %v1291
        %1309 = vmatprep.subr.bf16.mxu0 0
        %1310 = vmatpush2.bf16.xpose.msra.mxu0 0
        %1311 = vmatprep.subr.bf16.mxu0 0
        %1312 = vmatpush2.bf16.xpose.msra.mxu0 0
        %1313 = vmatprep.subr.bf16.mxu0 0
        %1314 = vmatpush2.bf16.xpose.msra.mxu0 0
        %1315 = vmatprep.subr.bf16.mxu0 0
        %1316 = vmatpush2.bf16.xpose.msra.mxu0 0
        %1317 = vmatprep.subr.bf16.mxu0 0
        %1318 = vmatpush2.bf16.xpose.msra.mxu0 0
        %1319 = vmatprep.subr.bf16.mxu0 0
        %1320 = vmatpush2.bf16.xpose.msra.mxu0 0
        %1321 = vmatprep.subr.bf16.mxu0 0
        %1322 = vmatpush2.bf16.xpose.msra.mxu0 0
        %1323 = vmatprep.subr.bf16.mxu0 0
        %1324 = vmatpush2.bf16.xpose.msra.mxu0 0
        %1325 = vmatprep.mubr.bf16.mxu0 0
        %1326 = vmatmul.mubr.bf16.gmra.mxu0 %v1288
        %v1327 = vpop.f32.mrf.mxu0
        %v1328 = vadd.f32 0.0, %v1327
        %v1329 = vpop.f32.mrf.mxu0
        %v1330 = vpop.f32.mrf.mxu0
        %v1331 = vadd.f32 0.0, %v1330
        %v1332 = vpop.f32.mrf.mxu0
        %1333 = vdwg.mxu0
        %v1334 = vsel %vm1079, %v1328, -inf
        %1335 = vmax.xlane.f32.xlu0 %v1334
        %v1336 = vpop.xlane.xlu0 %1335
        %v1337 = vsel %vm1083, %v1331, -inf
        %1338 = vmax.xlane.f32.xlu0 %v1337
        %v1339 = vpop.xlane.xlu0 %1338
        %v1340 = vsub.f32 %v1328, %v1336
        %v1341 = vsub.f32 %v1331, %v1339
        %v1342 = vmul.f32 %v1340, 1.442695
        %v1343 = vpow.pop %v1342
        %v1344 = vmul.f32 %v1341, 1.442695
        %v1345 = vpow.pop %v1344
        %v1346 = vsel %vm1079, %v1343, 0.0
        %1347 = vadd.xlane.f32.xlu0 %v1346
        %v1348 = vpop.xlane.xlu0 %1347
        %v1349 = vsel %vm1083, %v1345, 0.0
        %1350 = vadd.xlane.f32.xlu0 %v1349
        %v1351 = vpop.xlane.xlu0 %1350
        %v1352 = vrcp.pop %v1348
        %v1353 = vrcp.pop %v1351
        %v1354 = vmul.f32 %v1343, %v1352
        %v1355 = vmul.f32 %v1345, %v1353
        %v1356 = vpack.c.bf16 %v1355, %v1354
        %1357 = vrot.lane.b32.xlu0 %v1030, 64
        %v1358 = vpop.permute.xlu0 %1357
        %v1360 = vsel %vm1079, %v1356, 0
        %v1363 = vand.u32 %v1358, %v1110
        %1365 = vmatprep.subr.bf16.mxu0 0
        %1366 = vmatpush1.bf16.msra.mxu0 0
        %1367 = vmatprep.subr.bf16.mxu0 0
        %1368 = vmatpush1.bf16.msra.mxu0 0
        %1369 = vmatprep.subr.bf16.mxu0 0
        %1370 = vmatpush1.bf16.msra.mxu0 0
        %1371 = vmatprep.subr.bf16.mxu0 0
        %1372 = vmatpush1.bf16.msra.mxu0 0
        %1373 = vmatprep.subr.bf16.mxu0 0
        %1374 = vmatpush1.bf16.msra.mxu0 0
        %1375 = vmatprep.subr.bf16.mxu0 0
        %1376 = vmatpush1.bf16.msra.mxu0 0
        %1377 = vmatprep.subr.bf16.mxu0 0
        %1378 = vmatpush1.bf16.msra.mxu0 0
        %1379 = vmatprep.subr.bf16.mxu0 0
        %1380 = vmatpush1.bf16.msra.mxu0 %v1363
        %1381 = vmatprep.subr.bf16.mxu0 0
        %1382 = vmatpush2.bf16.msra.mxu0 0
        %1383 = vmatprep.subr.bf16.mxu0 0
        %1384 = vmatpush2.bf16.msra.mxu0 0
        %1385 = vmatprep.subr.bf16.mxu0 0
        %1386 = vmatpush2.bf16.msra.mxu0 0
        %1387 = vmatprep.subr.bf16.mxu0 0
        %1388 = vmatpush2.bf16.msra.mxu0 0
        %1389 = vmatprep.subr.bf16.mxu0 0
        %1390 = vmatpush2.bf16.msra.mxu0 0
        %1391 = vmatprep.subr.bf16.mxu0 0
        %1392 = vmatpush2.bf16.msra.mxu0 0
        %1393 = vmatprep.subr.bf16.mxu0 0
        %1394 = vmatpush2.bf16.msra.mxu0 0
        %1395 = vmatprep.subr.bf16.mxu0 0
        %1396 = vmatpush2.bf16.msra.mxu0 0
        %1397 = vmatprep.mubr.bf16.mxu0 0
        %1398 = vmatmul.mubr.bf16.gmra.mxu0 %v1360
        %v1399 = vpop.f32.mrf.mxu0
        %v1400 = vadd.f32 0.0, %v1399
        %v1401 = vpop.f32.mrf.mxu0
        %v1402 = vpop.f32.mrf.mxu0
        %v1403 = vadd.f32 0.0, %v1402
        %v1404 = vpop.f32.mrf.mxu0
        %1405 = vdwg.mxu0
        %v1406 = vpack.c.bf16 %v1403, %v1400
        %1407 = vrot.lane.b32.xlu0 %v1028, 32
        %v1408 = vpop.permute.xlu0 %1407
        %1409 = vrot.lane.b32.xlu0 %v1029, 32
        %v1410 = vpop.permute.xlu0 %1409
        %v1412 = vsel %vm1031, %v1408, 0
        %v1415 = vsel %vm1031, %v1410, 0
        %1417 = vmatprep.subr.bf16.mxu0 0
        %1418 = vmatpush1.bf16.xpose.msra.mxu0 0
        %1419 = vmatprep.subr.bf16.mxu0 0
        %1420 = vmatpush1.bf16.xpose.msra.mxu0 0
        %1421 = vmatprep.subr.bf16.mxu0 0
        %1422 = vmatpush1.bf16.xpose.msra.mxu0 0
        %1423 = vmatprep.subr.bf16.mxu0 0
        %1424 = vmatpush1.bf16.xpose.msra.mxu0 0
        %1425 = vmatprep.subr.bf16.mxu0 0
        %1426 = vmatpush1.bf16.xpose.msra.mxu0 0
        %1427 = vmatprep.subr.bf16.mxu0 0
        %1428 = vmatpush1.bf16.xpose.msra.mxu0 0
        %1429 = vmatprep.subr.bf16.mxu0 0
        %1430 = vmatpush1.bf16.xpose.msra.mxu0 0
        %1431 = vmatprep.subr.bf16.mxu0 0
        %1432 = vmatpush1.bf16.xpose.msra.mxu0 %v1415
        %1433 = vmatprep.subr.bf16.mxu0 0
        %1434 = vmatpush2.bf16.xpose.msra.mxu0 0
        %1435 = vmatprep.subr.bf16.mxu0 0
        %1436 = vmatpush2.bf16.xpose.msra.mxu0 0
        %1437 = vmatprep.subr.bf16.mxu0 0
        %1438 = vmatpush2.bf16.xpose.msra.mxu0 0
        %1439 = vmatprep.subr.bf16.mxu0 0
        %1440 = vmatpush2.bf16.xpose.msra.mxu0 0
        %1441 = vmatprep.subr.bf16.mxu0 0
        %1442 = vmatpush2.bf16.xpose.msra.mxu0 0
        %1443 = vmatprep.subr.bf16.mxu0 0
        %1444 = vmatpush2.bf16.xpose.msra.mxu0 0
        %1445 = vmatprep.subr.bf16.mxu0 0
        %1446 = vmatpush2.bf16.xpose.msra.mxu0 0
        %1447 = vmatprep.subr.bf16.mxu0 0
        %1448 = vmatpush2.bf16.xpose.msra.mxu0 0
        %1449 = vmatprep.mubr.bf16.mxu0 0
        %1450 = vmatmul.mubr.bf16.gmra.mxu0 %v1412
        %v1451 = vpop.f32.mrf.mxu0
        %v1452 = vadd.f32 0.0, %v1451
        %v1453 = vpop.f32.mrf.mxu0
        %v1454 = vpop.f32.mrf.mxu0
        %v1455 = vadd.f32 0.0, %v1454
        %v1456 = vpop.f32.mrf.mxu0
        %1457 = vdwg.mxu0
        %v1458 = vsel %vm1079, %v1452, -inf
        %1459 = vmax.xlane.f32.xlu0 %v1458
        %v1460 = vpop.xlane.xlu0 %1459
        %v1461 = vsel %vm1083, %v1455, -inf
        %1462 = vmax.xlane.f32.xlu0 %v1461
        %v1463 = vpop.xlane.xlu0 %1462
        %v1464 = vsub.f32 %v1452, %v1460
        %v1465 = vsub.f32 %v1455, %v1463
        %v1466 = vmul.f32 %v1464, 1.442695
        %v1467 = vpow.pop %v1466
        %v1468 = vmul.f32 %v1465, 1.442695
        %v1469 = vpow.pop %v1468
        %v1470 = vsel %vm1079, %v1467, 0.0
        %1471 = vadd.xlane.f32.xlu0 %v1470
        %v1472 = vpop.xlane.xlu0 %1471
        %v1473 = vsel %vm1083, %v1469, 0.0
        %1474 = vadd.xlane.f32.xlu0 %v1473
        %v1475 = vpop.xlane.xlu0 %1474
        %v1476 = vrcp.pop %v1472
        %v1477 = vrcp.pop %v1475
        %v1478 = vmul.f32 %v1467, %v1476
        %v1479 = vmul.f32 %v1469, %v1477
        %v1480 = vpack.c.bf16 %v1479, %v1478
        %1481 = vrot.lane.b32.xlu0 %v1030, 32
        %v1482 = vpop.permute.xlu0 %1481
        %v1484 = vsel %vm1079, %v1480, 0
        %v1487 = vand.u32 %v1482, %v1110
        %1489 = vmatprep.subr.bf16.mxu0 0
        %1490 = vmatpush1.bf16.msra.mxu0 0
        %1491 = vmatprep.subr.bf16.mxu0 0
        %1492 = vmatpush1.bf16.msra.mxu0 0
        %1493 = vmatprep.subr.bf16.mxu0 0
        %1494 = vmatpush1.bf16.msra.mxu0 0
        %1495 = vmatprep.subr.bf16.mxu0 0
        %1496 = vmatpush1.bf16.msra.mxu0 0
        %1497 = vmatprep.subr.bf16.mxu0 0
        %1498 = vmatpush1.bf16.msra.mxu0 0
        %1499 = vmatprep.subr.bf16.mxu0 0
        %1500 = vmatpush1.bf16.msra.mxu0 0
        %1501 = vmatprep.subr.bf16.mxu0 0
        %1502 = vmatpush1.bf16.msra.mxu0 0
        %1503 = vmatprep.subr.bf16.mxu0 0
        %1504 = vmatpush1.bf16.msra.mxu0 %v1487
        %1505 = vmatprep.subr.bf16.mxu0 0
        %1506 = vmatpush2.bf16.msra.mxu0 0
        %1507 = vmatprep.subr.bf16.mxu0 0
        %1508 = vmatpush2.bf16.msra.mxu0 0
        %1509 = vmatprep.subr.bf16.mxu0 0
        %1510 = vmatpush2.bf16.msra.mxu0 0
        %1511 = vmatprep.subr.bf16.mxu0 0
        %1512 = vmatpush2.bf16.msra.mxu0 0
        %1513 = vmatprep.subr.bf16.mxu0 0
        %1514 = vmatpush2.bf16.msra.mxu0 0
        %1515 = vmatprep.subr.bf16.mxu0 0
        %1516 = vmatpush2.bf16.msra.mxu0 0
        %1517 = vmatprep.subr.bf16.mxu0 0
        %1518 = vmatpush2.bf16.msra.mxu0 0
        %1519 = vmatprep.subr.bf16.mxu0 0
        %1520 = vmatpush2.bf16.msra.mxu0 0
        %1521 = vmatprep.mubr.bf16.mxu0 0
        %1522 = vmatmul.mubr.bf16.gmra.mxu0 %v1484
        %v1523 = vpop.f32.mrf.mxu0
        %v1524 = vadd.f32 0.0, %v1523
        %v1525 = vpop.f32.mrf.mxu0
        %v1526 = vpop.f32.mrf.mxu0
        %v1527 = vadd.f32 0.0, %v1526
        %v1528 = vpop.f32.mrf.mxu0
        %1529 = vdwg.mxu0
        %v1530 = vpack.c.bf16 %v1527, %v1524
        %1532 = vrot.lane.b32.xlu0 %v1282, 32
        %v1533 = vpop.permute.xlu0 %1532
        %1535 = vrot.lane.b32.xlu0 %v1406, 64
        %v1536 = vpop.permute.xlu0 %1535
        %1538 = vrot.lane.b32.xlu0 %v1530, 96
        %v1539 = vpop.permute.xlu0 %1538
        %v1542 = vsel %vm1031, %v1155, %v1533
        %vm1543 = vcmask 523264
        %v1545 = vsel %vm1543, %v1542, %v1536
        %vm1546 = vcmask 785408
        %v1548 = vsel %vm1546, %v1545, %v1539
        %v1550 = vld [vmem:[#allocation8] sm:$0xf]
        %v1551 = vld [vmem:[#allocation8 + $0x4] sm:$0xf]
        %v1552 = vld [vmem:[#allocation8 + $0x8] sm:$0xf]
        %v1553 = vld [vmem:[#allocation8 + $0xc] sm:$0xf]
        %v1554 = vld [vmem:[#allocation8 + $0x10] sm:$0xf]
        %v1555 = vld [vmem:[#allocation8 + $0x14] sm:$0xf]
        %v1556 = vld [vmem:[#allocation8 + $0x18] sm:$0xf]
        %v1557 = vld [vmem:[#allocation8 + $0x1c] sm:$0xf]
        %v1558 = vld [vmem:[#allocation8 + $0x20] sm:$0xf]
        %v1559 = vld [vmem:[#allocation8 + $0x24] sm:$0xf]
        %v1560 = vld [vmem:[#allocation8 + $0x28] sm:$0xf]
        %v1561 = vld [vmem:[#allocation8 + $0x2c] sm:$0xf]
        %v1562 = vld [vmem:[#allocation8 + $0x30] sm:$0xf]
        %v1563 = vld [vmem:[#allocation8 + $0x34] sm:$0xf]
        %v1564 = vld [vmem:[#allocation8 + $0x38] sm:$0xf]
        %v1565 = vld [vmem:[#allocation8 + $0x3c] sm:$0xf]
        %v1566 = vld [vmem:[%s8] sm:$0x1]
        %v1568 = vlaneseq
        %v1569 = vshrl.u32 %v1568, 7
        %v1570 = vsub.s32 0, %v1569
        %v1571 = vrot.slane %v1566, %v1570
        %v1589 = vunpack.c.l.b16 %v1550
        %v1590 = vunpack.c.l.b16 %v1551
        %v1591 = vunpack.c.l.b16 %v1552
        %v1592 = vunpack.c.l.b16 %v1553
        %v1593 = vunpack.c.l.b16 %v1554
        %v1594 = vunpack.c.l.b16 %v1555
        %v1595 = vunpack.c.l.b16 %v1556
        %v1596 = vunpack.c.l.b16 %v1557
        %v1597 = vunpack.c.l.b16 %v1558
        %v1598 = vunpack.c.l.b16 %v1559
        %v1599 = vunpack.c.l.b16 %v1560
        %v1600 = vunpack.c.l.b16 %v1561
        %v1601 = vunpack.c.l.b16 %v1562
        %v1602 = vunpack.c.l.b16 %v1563
        %v1603 = vunpack.c.l.b16 %v1564
        %v1604 = vunpack.c.l.b16 %v1565
        %v1605 = vpack.c.b16 %v1590, %v1589
        %v1606 = vpack.c.b16 %v1592, %v1591
        %v1607 = vpack.c.b16 %v1594, %v1593
        %v1608 = vpack.c.b16 %v1596, %v1595
        %v1609 = vpack.c.b16 %v1598, %v1597
        %v1610 = vpack.c.b16 %v1600, %v1599
        %v1611 = vpack.c.b16 %v1602, %v1601
        %v1612 = vpack.c.b16 %v1604, %v1603
        %1621 = vmatprep.subr.bf16.mxu0 0
        %1622 = vmatpush1.bf16.msra.mxu0 %v1612
        %1623 = vmatprep.subr.bf16.mxu0 0
        %1624 = vmatpush1.bf16.msra.mxu0 %v1611
        %1625 = vmatprep.subr.bf16.mxu0 0
        %1626 = vmatpush1.bf16.msra.mxu0 %v1610
        %1627 = vmatprep.subr.bf16.mxu0 0
        %1628 = vmatpush1.bf16.msra.mxu0 %v1609
        %1629 = vmatprep.subr.bf16.mxu0 0
        %1630 = vmatpush1.bf16.msra.mxu0 %v1608
        %1631 = vmatprep.subr.bf16.mxu0 0
        %1632 = vmatpush1.bf16.msra.mxu0 %v1607
        %1633 = vmatprep.subr.bf16.mxu0 0
        %1634 = vmatpush1.bf16.msra.mxu0 %v1606
        %1635 = vmatprep.subr.bf16.mxu0 0
        %1636 = vmatpush1.bf16.msra.mxu0 %v1605
        %1637 = vmatprep.subr.bf16.mxu0 0
        %1638 = vmatpush2.bf16.msra.mxu0 0
        %1639 = vmatprep.subr.bf16.mxu0 0
        %1640 = vmatpush2.bf16.msra.mxu0 0
        %1641 = vmatprep.subr.bf16.mxu0 0
        %1642 = vmatpush2.bf16.msra.mxu0 0
        %1643 = vmatprep.subr.bf16.mxu0 0
        %1644 = vmatpush2.bf16.msra.mxu0 0
        %1645 = vmatprep.subr.bf16.mxu0 0
        %1646 = vmatpush2.bf16.msra.mxu0 0
        %1647 = vmatprep.subr.bf16.mxu0 0
        %1648 = vmatpush2.bf16.msra.mxu0 0
        %1649 = vmatprep.subr.bf16.mxu0 0
        %1650 = vmatpush2.bf16.msra.mxu0 0
        %1651 = vmatprep.subr.bf16.mxu0 0
        %1652 = vmatpush2.bf16.msra.mxu0 0
        %1653 = vmatprep.mubr.bf16.mxu0 0
        %1654 = vmatmul.mubr.bf16.gmra.mxu0 %v1548
        %v1655 = vpop.f32.mrf.mxu0
        %v1656 = vadd.f32 %v1571, %v1655
        %v1657 = vpop.f32.mrf.mxu0
        %v1658 = vpop.f32.mrf.mxu0
        %v1659 = vadd.f32 %v1571, %v1658
        %v1660 = vpop.f32.mrf.mxu0
        %1661 = vdwg.mxu0
        %v1662 = vadd.f32 %v689, %v1656
        %v1663 = vadd.f32 %v690, %v1659
        %v1664 = vld [vmem:[%s13] sm:$0x1]
        %v1665 = vld [vmem:[%s14] sm:$0x1]
        %1666 = vadd.xlane.f32.xlu0 %v1662
        %v1667 = vpop.xlane.xlu0 %1666
        %vm1668 = vcmask 1040384
        %v1669 = vsel %vm1668, %v1663, 0.0
        %1670 = vadd.xlane.f32.xlu0 %v1669
        %v1671 = vpop.xlane.xlu0 %1670
        %v1672 = vrcp.pop 128.0
        %v1673 = vmul.f32 %v1667, %v1672
        %v1674 = vmul.f32 %v1671, %v1672
        %v1675 = vsub.f32 %v1662, %v1673
        %v1676 = vsub.f32 %v1663, %v1674
        %v1677 = vmul.f32 %v1675, %v1675
        %v1678 = vmul.f32 %v1676, %v1676
        %1679 = vadd.xlane.f32.xlu0 %v1677
        %v1680 = vpop.xlane.xlu0 %1679
        %v1681 = vsel %vm1668, %v1678, 0.0
        %1682 = vadd.xlane.f32.xlu0 %v1681
        %v1683 = vpop.xlane.xlu0 %1682
        %v1684 = vmul.f32 %v1680, %v1672
        %v1685 = vmul.f32 %v1683, %v1672
        %v1686 = vadd.f32 %v1684, 1e-05
        %v1687 = vadd.f32 %v1685, 1e-05
        %v1688 = vrsqrt.pop %v1686
        %v1689 = vrsqrt.pop %v1687
        %v1690 = vmul.f32 %v1675, %v1688
        %v1691 = vmul.f32 %v1676, %v1689
        %v1693 = vlaneseq
        %v1694 = vshrl.u32 %v1693, 7
        %v1695 = vsub.s32 0, %v1694
        %v1696 = vrot.slane %v1664, %v1695
        %v1698 = vmul.f32 %v1690, %v1696
        %v1699 = vmul.f32 %v1691, %v1696
        %v1701 = vlaneseq
        %v1702 = vshrl.u32 %v1701, 7
        %v1703 = vsub.s32 0, %v1702
        %v1704 = vrot.slane %v1665, %v1703
        %v1706 = vadd.f32 %v1698, %v1704
        %v1707 = vadd.f32 %v1699, %v1704
        %v1708 = vpack.c.bf16 %v1707, %v1706
        %v1709 = vld [vmem:[#allocation10] sm:$0xff]
        %v1710 = vld [vmem:[#allocation10 + $0x8] sm:$0xff]
        %v1711 = vld [vmem:[#allocation10 + $0x10] sm:$0xff]
        %v1712 = vld [vmem:[#allocation10 + $0x18] sm:$0xff]
        %v1713 = vld [vmem:[#allocation10 + $0x20] sm:$0xff]
        %v1714 = vld [vmem:[#allocation10 + $0x28] sm:$0xff]
        %v1715 = vld [vmem:[#allocation10 + $0x30] sm:$0xff]
        %v1716 = vld [vmem:[#allocation10 + $0x38] sm:$0xff]
        %v1717 = vld [vmem:[#allocation10 + $0x40] sm:$0xff]
        %v1718 = vld [vmem:[#allocation10 + $0x48] sm:$0xff]
        %v1719 = vld [vmem:[#allocation10 + $0x50] sm:$0xff]
        %v1720 = vld [vmem:[#allocation10 + $0x58] sm:$0xff]
        %v1721 = vld [vmem:[#allocation10 + $0x60] sm:$0xff]
        %v1722 = vld [vmem:[#allocation10 + $0x68] sm:$0xff]
        %v1723 = vld [vmem:[#allocation10 + $0x70] sm:$0xff]
        %v1724 = vld [vmem:[#allocation10 + $0x78] sm:$0xff]
        %v1725 = vld [vmem:[%s10] sm:$0x3]
        %v1727 = vlaneseq
        %v1728 = vshrl.u32 %v1727, 7
        %v1729 = vsub.s32 0, %v1728
        %v1730 = vrot.slane %v1725, %v1729
        %v1731 = vlaneseq
        %v1732 = vshrl.u32 %v1731, 7
        %v1733 = vsub.s32 1, %v1732
        %v1734 = vrot.slane %v1725, %v1733
        %v1753 = vunpack.c.l.b16 %v1709
        %v1754 = vunpack.c.h.b16 %v1709
        %v1755 = vunpack.c.l.b16 %v1710
        %v1756 = vunpack.c.h.b16 %v1710
        %v1757 = vunpack.c.l.b16 %v1711
        %v1758 = vunpack.c.h.b16 %v1711
        %v1759 = vunpack.c.l.b16 %v1712
        %v1760 = vunpack.c.h.b16 %v1712
        %v1761 = vunpack.c.l.b16 %v1713
        %v1762 = vunpack.c.h.b16 %v1713
        %v1763 = vunpack.c.l.b16 %v1714
        %v1764 = vunpack.c.h.b16 %v1714
        %v1765 = vunpack.c.l.b16 %v1715
        %v1766 = vunpack.c.h.b16 %v1715
        %v1767 = vunpack.c.l.b16 %v1716
        %v1768 = vunpack.c.h.b16 %v1716
        %v1769 = vunpack.c.l.b16 %v1717
        %v1770 = vunpack.c.h.b16 %v1717
        %v1771 = vunpack.c.l.b16 %v1718
        %v1772 = vunpack.c.h.b16 %v1718
        %v1773 = vunpack.c.l.b16 %v1719
        %v1774 = vunpack.c.h.b16 %v1719
        %v1775 = vunpack.c.l.b16 %v1720
        %v1776 = vunpack.c.h.b16 %v1720
        %v1777 = vunpack.c.l.b16 %v1721
        %v1778 = vunpack.c.h.b16 %v1721
        %v1779 = vunpack.c.l.b16 %v1722
        %v1780 = vunpack.c.h.b16 %v1722
        %v1781 = vunpack.c.l.b16 %v1723
        %v1782 = vunpack.c.h.b16 %v1723
        %v1783 = vunpack.c.l.b16 %v1724
        %v1784 = vunpack.c.h.b16 %v1724
        %v1785 = vpack.c.b16 %v1755, %v1753
        %v1786 = vpack.c.b16 %v1756, %v1754
        %v1787 = vpack.c.b16 %v1759, %v1757
        %v1788 = vpack.c.b16 %v1760, %v1758
        %v1789 = vpack.c.b16 %v1763, %v1761
        %v1790 = vpack.c.b16 %v1764, %v1762
        %v1791 = vpack.c.b16 %v1767, %v1765
        %v1792 = vpack.c.b16 %v1768, %v1766
        %v1793 = vpack.c.b16 %v1771, %v1769
        %v1794 = vpack.c.b16 %v1772, %v1770
        %v1795 = vpack.c.b16 %v1775, %v1773
        %v1796 = vpack.c.b16 %v1776, %v1774
        %v1797 = vpack.c.b16 %v1779, %v1777
        %v1798 = vpack.c.b16 %v1780, %v1778
        %v1799 = vpack.c.b16 %v1783, %v1781
        %v1800 = vpack.c.b16 %v1784, %v1782
        %1817 = vmatprep.subr.bf16.mxu0 %v1800
        %1818 = vmatpush1.bf16.msra.mxu0 %v1799
        %1819 = vmatprep.subr.bf16.mxu0 %v1798
        %1820 = vmatpush1.bf16.msra.mxu0 %v1797
        %1821 = vmatprep.subr.bf16.mxu0 %v1796
        %1822 = vmatpush1.bf16.msra.mxu0 %v1795
        %1823 = vmatprep.subr.bf16.mxu0 %v1794
        %1824 = vmatpush1.bf16.msra.mxu0 %v1793
        %1825 = vmatprep.subr.bf16.mxu0 %v1792
        %1826 = vmatpush1.bf16.msra.mxu0 %v1791
        %1827 = vmatprep.subr.bf16.mxu0 %v1790
        %1828 = vmatpush1.bf16.msra.mxu0 %v1789
        %1829 = vmatprep.subr.bf16.mxu0 %v1788
        %1830 = vmatpush1.bf16.msra.mxu0 %v1787
        %1831 = vmatprep.subr.bf16.mxu0 %v1786
        %1832 = vmatpush1.bf16.msra.mxu0 %v1785
        %1833 = vmatprep.subr.bf16.mxu0 0
        %1834 = vmatpush2.bf16.msra.mxu0 0
        %1835 = vmatprep.subr.bf16.mxu0 0
        %1836 = vmatpush2.bf16.msra.mxu0 0
        %1837 = vmatprep.subr.bf16.mxu0 0
        %1838 = vmatpush2.bf16.msra.mxu0 0
        %1839 = vmatprep.subr.bf16.mxu0 0
        %1840 = vmatpush2.bf16.msra.mxu0 0
        %1841 = vmatprep.subr.bf16.mxu0 0
        %1842 = vmatpush2.bf16.msra.mxu0 0
        %1843 = vmatprep.subr.bf16.mxu0 0
        %1844 = vmatpush2.bf16.msra.mxu0 0
        %1845 = vmatprep.subr.bf16.mxu0 0
        %1846 = vmatpush2.bf16.msra.mxu0 0
        %1847 = vmatprep.subr.bf16.mxu0 0
        %1848 = vmatpush2.bf16.msra.mxu0 0
        %1849 = vmatprep.mubr.bf16.mxu0 0
        %1850 = vmatmul.mubr.bf16.gmra.mxu0 %v1708
        %v1851 = vpop.f32.mrf.mxu0
        %v1852 = vadd.f32 %v1730, %v1851
        %v1853 = vpop.f32.mrf.mxu0
        %v1854 = vadd.f32 %v1734, %v1853
        %v1855 = vpop.f32.mrf.mxu0
        %v1856 = vadd.f32 %v1730, %v1855
        %v1857 = vpop.f32.mrf.mxu0
        %v1858 = vadd.f32 %v1734, %v1857
        %1859 = vdwg.mxu0
        %v1860 = vmax.f32 %v1852, 0.0
        %v1861 = vmax.f32 %v1854, 0.0
        %v1862 = vmax.f32 %v1856, 0.0
        %v1863 = vmax.f32 %v1858, 0.0
        %v1864 = vpack.c.bf16 %v1862, %v1860
        %v1865 = vpack.c.bf16 %v1863, %v1861
        %v1866 = vld [vmem:[#allocation11] sm:$0xf]
        %v1867 = vld [vmem:[#allocation11 + $0x4] sm:$0xf]
        %v1868 = vld [vmem:[#allocation11 + $0x8] sm:$0xf]
        %v1869 = vld [vmem:[#allocation11 + $0xc] sm:$0xf]
        %v1870 = vld [vmem:[#allocation11 + $0x10] sm:$0xf]
        %v1871 = vld [vmem:[#allocation11 + $0x14] sm:$0xf]
        %v1872 = vld [vmem:[#allocation11 + $0x18] sm:$0xf]
        %v1873 = vld [vmem:[#allocation11 + $0x1c] sm:$0xf]
        %v1874 = vld [vmem:[#allocation11 + $0x20] sm:$0xf]
        %v1875 = vld [vmem:[#allocation11 + $0x24] sm:$0xf]
        %v1876 = vld [vmem:[#allocation11 + $0x28] sm:$0xf]
        %v1877 = vld [vmem:[#allocation11 + $0x2c] sm:$0xf]
        %v1878 = vld [vmem:[#allocation11 + $0x30] sm:$0xf]
        %v1879 = vld [vmem:[#allocation11 + $0x34] sm:$0xf]
        %v1880 = vld [vmem:[#allocation11 + $0x38] sm:$0xf]
        %v1881 = vld [vmem:[#allocation11 + $0x3c] sm:$0xf]
        %v1882 = vld [vmem:[#allocation11 + $0x40] sm:$0xf]
        %v1883 = vld [vmem:[#allocation11 + $0x44] sm:$0xf]
        %v1884 = vld [vmem:[#allocation11 + $0x48] sm:$0xf]
        %v1885 = vld [vmem:[#allocation11 + $0x4c] sm:$0xf]
        %v1886 = vld [vmem:[#allocation11 + $0x50] sm:$0xf]
        %v1887 = vld [vmem:[#allocation11 + $0x54] sm:$0xf]
        %v1888 = vld [vmem:[#allocation11 + $0x58] sm:$0xf]
        %v1889 = vld [vmem:[#allocation11 + $0x5c] sm:$0xf]
        %v1890 = vld [vmem:[#allocation11 + $0x60] sm:$0xf]
        %v1891 = vld [vmem:[#allocation11 + $0x64] sm:$0xf]
        %v1892 = vld [vmem:[#allocation11 + $0x68] sm:$0xf]
        %v1893 = vld [vmem:[#allocation11 + $0x6c] sm:$0xf]
        %v1894 = vld [vmem:[#allocation11 + $0x70] sm:$0xf]
        %v1895 = vld [vmem:[#allocation11 + $0x74] sm:$0xf]
        %v1896 = vld [vmem:[#allocation11 + $0x78] sm:$0xf]
        %v1897 = vld [vmem:[#allocation11 + $0x7c] sm:$0xf]
        %v1898 = vld [vmem:[%s12] sm:$0x1]
        %v1900 = vlaneseq
        %v1901 = vshrl.u32 %v1900, 7
        %v1902 = vsub.s32 0, %v1901
        %v1903 = vrot.slane %v1898, %v1902
        %v1937 = vunpack.c.l.b16 %v1866
        %v1938 = vunpack.c.l.b16 %v1867
        %v1939 = vunpack.c.l.b16 %v1868
        %v1940 = vunpack.c.l.b16 %v1869
        %v1941 = vunpack.c.l.b16 %v1870
        %v1942 = vunpack.c.l.b16 %v1871
        %v1943 = vunpack.c.l.b16 %v1872
        %v1944 = vunpack.c.l.b16 %v1873
        %v1945 = vunpack.c.l.b16 %v1874
        %v1946 = vunpack.c.l.b16 %v1875
        %v1947 = vunpack.c.l.b16 %v1876
        %v1948 = vunpack.c.l.b16 %v1877
        %v1949 = vunpack.c.l.b16 %v1878
        %v1950 = vunpack.c.l.b16 %v1879
        %v1951 = vunpack.c.l.b16 %v1880
        %v1952 = vunpack.c.l.b16 %v1881
        %v1953 = vunpack.c.l.b16 %v1882
        %v1954 = vunpack.c.l.b16 %v1883
        %v1955 = vunpack.c.l.b16 %v1884
        %v1956 = vunpack.c.l.b16 %v1885
        %v1957 = vunpack.c.l.b16 %v1886
        %v1958 = vunpack.c.l.b16 %v1887
        %v1959 = vunpack.c.l.b16 %v1888
        %v1960 = vunpack.c.l.b16 %v1889
        %v1961 = vunpack.c.l.b16 %v1890
        %v1962 = vunpack.c.l.b16 %v1891
        %v1963 = vunpack.c.l.b16 %v1892
        %v1964 = vunpack.c.l.b16 %v1893
        %v1965 = vunpack.c.l.b16 %v1894
        %v1966 = vunpack.c.l.b16 %v1895
        %v1967 = vunpack.c.l.b16 %v1896
        %v1968 = vunpack.c.l.b16 %v1897
        %v1969 = vpack.c.b16 %v1938, %v1937
        %v1970 = vpack.c.b16 %v1940, %v1939
        %v1971 = vpack.c.b16 %v1942, %v1941
        %v1972 = vpack.c.b16 %v1944, %v1943
        %v1973 = vpack.c.b16 %v1946, %v1945
        %v1974 = vpack.c.b16 %v1948, %v1947
        %v1975 = vpack.c.b16 %v1950, %v1949
        %v1976 = vpack.c.b16 %v1952, %v1951
        %v1977 = vpack.c.b16 %v1954, %v1953
        %v1978 = vpack.c.b16 %v1956, %v1955
        %v1979 = vpack.c.b16 %v1958, %v1957
        %v1980 = vpack.c.b16 %v1960, %v1959
        %v1981 = vpack.c.b16 %v1962, %v1961
        %v1982 = vpack.c.b16 %v1964, %v1963
        %v1983 = vpack.c.b16 %v1966, %v1965
        %v1984 = vpack.c.b16 %v1968, %v1967
        %2001 = vmatprep.subr.bf16.mxu0 0
        %2002 = vmatpush1.bf16.msra.mxu0 %v1976
        %2003 = vmatprep.subr.bf16.mxu0 0
        %2004 = vmatpush1.bf16.msra.mxu0 %v1975
        %2005 = vmatprep.subr.bf16.mxu0 0
        %2006 = vmatpush1.bf16.msra.mxu0 %v1974
        %2007 = vmatprep.subr.bf16.mxu0 0
        %2008 = vmatpush1.bf16.msra.mxu0 %v1973
        %2009 = vmatprep.subr.bf16.mxu0 0
        %2010 = vmatpush1.bf16.msra.mxu0 %v1972
        %2011 = vmatprep.subr.bf16.mxu0 0
        %2012 = vmatpush1.bf16.msra.mxu0 %v1971
        %2013 = vmatprep.subr.bf16.mxu0 0
        %2014 = vmatpush1.bf16.msra.mxu0 %v1970
        %2015 = vmatprep.subr.bf16.mxu0 0
        %2016 = vmatpush1.bf16.msra.mxu0 %v1969
        %2017 = vmatprep.subr.bf16.mxu0 0
        %2018 = vmatpush2.bf16.msra.mxu0 %v1984
        %2019 = vmatprep.subr.bf16.mxu0 0
        %2020 = vmatpush2.bf16.msra.mxu0 %v1983
        %2021 = vmatprep.subr.bf16.mxu0 0
        %2022 = vmatpush2.bf16.msra.mxu0 %v1982
        %2023 = vmatprep.subr.bf16.mxu0 0
        %2024 = vmatpush2.bf16.msra.mxu0 %v1981
        %2025 = vmatprep.subr.bf16.mxu0 0
        %2026 = vmatpush2.bf16.msra.mxu0 %v1980
        %2027 = vmatprep.subr.bf16.mxu0 0
        %2028 = vmatpush2.bf16.msra.mxu0 %v1979
        %2029 = vmatprep.subr.bf16.mxu0 0
        %2030 = vmatpush2.bf16.msra.mxu0 %v1978
        %2031 = vmatprep.subr.bf16.mxu0 0
        %2032 = vmatpush2.bf16.msra.mxu0 %v1977
        %2033 = vmatprep.mubr.bf16.mxu0 %v1865
        %2034 = vmatmul.mubr.bf16.gmra.mxu0 %v1864
        %v2035 = vpop.f32.mrf.mxu0
        %v2036 = vadd.f32 %v1903, %v2035
        %v2037 = vpop.f32.mrf.mxu0
        %v2038 = vpop.f32.mrf.mxu0
        %v2039 = vadd.f32 %v1903, %v2038
        %v2040 = vpop.f32.mrf.mxu0
        %2041 = vdwg.mxu0
        %v2042 = vadd.f32 %v1706, %v2036
        %v2043 = vadd.f32 %v1707, %v2039
        %v2044 = vld [vmem:[%s15] sm:$0x1]
        %v2045 = vld [vmem:[%s16] sm:$0x1]
        %2046 = vadd.xlane.f32.xlu0 %v2042
        %v2047 = vpop.xlane.xlu0 %2046
        %v2048 = vsel %vm1668, %v2043, 0.0
        %2049 = vadd.xlane.f32.xlu0 %v2048
        %v2050 = vpop.xlane.xlu0 %2049
        %v2051 = vmul.f32 %v2047, %v1672
        %v2052 = vmul.f32 %v2050, %v1672
        %v2053 = vsub.f32 %v2042, %v2051
        %v2054 = vsub.f32 %v2043, %v2052
        %v2055 = vmul.f32 %v2053, %v2053
        %v2056 = vmul.f32 %v2054, %v2054
        %2057 = vadd.xlane.f32.xlu0 %v2055
        %v2058 = vpop.xlane.xlu0 %2057
        %v2059 = vsel %vm1668, %v2056, 0.0
        %2060 = vadd.xlane.f32.xlu0 %v2059
        %v2061 = vpop.xlane.xlu0 %2060
        %v2062 = vmul.f32 %v2058, %v1672
        %v2063 = vmul.f32 %v2061, %v1672
        %v2064 = vadd.f32 %v2062, 1e-05
        %v2065 = vadd.f32 %v2063, 1e-05
        %v2066 = vrsqrt.pop %v2064
        %v2067 = vrsqrt.pop %v2065
        %v2068 = vmul.f32 %v2053, %v2066
        %v2069 = vmul.f32 %v2054, %v2067
        %v2071 = vlaneseq
        %v2072 = vshrl.u32 %v2071, 7
        %v2073 = vsub.s32 0, %v2072
        %v2074 = vrot.slane %v2044, %v2073
        %v2076 = vmul.f32 %v2068, %v2074
        %v2077 = vmul.f32 %v2069, %v2074
        %v2079 = vlaneseq
        %v2080 = vshrl.u32 %v2079, 7
        %v2081 = vsub.s32 0, %v2080
        %v2082 = vrot.slane %v2045, %v2081
        %v2084 = vadd.f32 %v2076, %v2082
        %v2085 = vadd.f32 %v2077, %v2082
        %v2086 = vpack.c.bf16 %v2084, %v2084
        %v2087 = vpack.c.bf16 %v2085, %v2084
        %s2088 = scalar_lea.vmem [#allocation2], 64
        %v2089 = vld [vmem:[%s2088] sm:$0xf]
        %v2090 = vld [vmem:[%s2088 + $0x4] sm:$0xf]
        %v2091 = vld [vmem:[%s2088 + $0x8] sm:$0xf]
        %v2092 = vld [vmem:[%s2088 + $0xc] sm:$0xf]
        %v2093 = vld [vmem:[%s2088 + $0x10] sm:$0xf]
        %v2094 = vld [vmem:[%s2088 + $0x14] sm:$0xf]
        %v2095 = vld [vmem:[%s2088 + $0x18] sm:$0xf]
        %v2096 = vld [vmem:[%s2088 + $0x1c] sm:$0xf]
        %v2097 = vld [vmem:[%s2088 + $0x20] sm:$0xf]
        %v2098 = vld [vmem:[%s2088 + $0x24] sm:$0xf]
        %v2099 = vld [vmem:[%s2088 + $0x28] sm:$0xf]
        %v2100 = vld [vmem:[%s2088 + $0x2c] sm:$0xf]
        %v2101 = vld [vmem:[%s2088 + $0x30] sm:$0xf]
        %v2102 = vld [vmem:[%s2088 + $0x34] sm:$0xf]
        %v2103 = vld [vmem:[%s2088 + $0x38] sm:$0xf]
        %v2104 = vld [vmem:[%s2088 + $0x3c] sm:$0xf]
        %s2105 = scalar_lea.vmem %s4, 1
        %v2106 = vld [vmem:[%s2105] sm:$0x1]
        %v2123 = vunpack.c.l.b16 %v2089
        %v2124 = vunpack.c.l.b16 %v2090
        %v2125 = vunpack.c.l.b16 %v2091
        %v2126 = vunpack.c.l.b16 %v2092
        %v2127 = vunpack.c.l.b16 %v2093
        %v2128 = vunpack.c.l.b16 %v2094
        %v2129 = vunpack.c.l.b16 %v2095
        %v2130 = vunpack.c.l.b16 %v2096
        %v2131 = vunpack.c.l.b16 %v2097
        %v2132 = vunpack.c.l.b16 %v2098
        %v2133 = vunpack.c.l.b16 %v2099
        %v2134 = vunpack.c.l.b16 %v2100
        %v2135 = vunpack.c.l.b16 %v2101
        %v2136 = vunpack.c.l.b16 %v2102
        %v2137 = vunpack.c.l.b16 %v2103
        %v2138 = vunpack.c.l.b16 %v2104
        %v2139 = vpack.c.b16 %v2124, %v2123
        %v2140 = vpack.c.b16 %v2126, %v2125
        %v2141 = vpack.c.b16 %v2128, %v2127
        %v2142 = vpack.c.b16 %v2130, %v2129
        %v2143 = vpack.c.b16 %v2132, %v2131
        %v2144 = vpack.c.b16 %v2134, %v2133
        %v2145 = vpack.c.b16 %v2136, %v2135
        %v2146 = vpack.c.b16 %v2138, %v2137
        %2155 = vmatprep.subr.bf16.mxu0 0
        %2156 = vmatpush1.bf16.msra.mxu0 %v2146
        %2157 = vmatprep.subr.bf16.mxu0 0
        %2158 = vmatpush1.bf16.msra.mxu0 %v2145
        %2159 = vmatprep.subr.bf16.mxu0 0
        %2160 = vmatpush1.bf16.msra.mxu0 %v2144
        %2161 = vmatprep.subr.bf16.mxu0 0
        %2162 = vmatpush1.bf16.msra.mxu0 %v2143
        %2163 = vmatprep.subr.bf16.mxu0 0
        %2164 = vmatpush1.bf16.msra.mxu0 %v2142
        %2165 = vmatprep.subr.bf16.mxu0 0
        %2166 = vmatpush1.bf16.msra.mxu0 %v2141
        %2167 = vmatprep.subr.bf16.mxu0 0
        %2168 = vmatpush1.bf16.msra.mxu0 %v2140
        %2169 = vmatprep.subr.bf16.mxu0 0
        %2170 = vmatpush1.bf16.msra.mxu0 %v2139
        %2171 = vmatprep.subr.bf16.mxu0 0
        %2172 = vmatpush2.bf16.msra.mxu0 0
        %2173 = vmatprep.subr.bf16.mxu0 0
        %2174 = vmatpush2.bf16.msra.mxu0 0
        %2175 = vmatprep.subr.bf16.mxu0 0
        %2176 = vmatpush2.bf16.msra.mxu0 0
        %2177 = vmatprep.subr.bf16.mxu0 0
        %2178 = vmatpush2.bf16.msra.mxu0 0
        %2179 = vmatprep.subr.bf16.mxu0 0
        %2180 = vmatpush2.bf16.msra.mxu0 0
        %2181 = vmatprep.subr.bf16.mxu0 0
        %2182 = vmatpush2.bf16.msra.mxu0 0
        %2183 = vmatprep.subr.bf16.mxu0 0
        %2184 = vmatpush2.bf16.msra.mxu0 0
        %2185 = vmatprep.subr.bf16.mxu0 0
        %2186 = vmatpush2.bf16.msra.mxu0 0
        %2187 = vmatprep.mubr.bf16.mxu0 0
        %2188 = vmatmul.mubr.bf16.gmra.mxu0 %v2086
        %v2189 = vpop.f32.mrf.mxu0
        %v2190 = vadd.f32 %v2106, %v2189
        %v2191 = vpop.f32.mrf.mxu0
        %v2192 = vpop.f32.mrf.mxu0
        %v2193 = vpop.f32.mrf.mxu0
        %2194 = vdwg.mxu0
        %s2195 = scalar_lea.vmem [#allocation5], 64
        %v2196 = vld [vmem:[%s2195] sm:$0xf]
        %v2197 = vld [vmem:[%s2195 + $0x4] sm:$0xf]
        %v2198 = vld [vmem:[%s2195 + $0x8] sm:$0xf]
        %v2199 = vld [vmem:[%s2195 + $0xc] sm:$0xf]
        %v2200 = vld [vmem:[%s2195 + $0x10] sm:$0xf]
        %v2201 = vld [vmem:[%s2195 + $0x14] sm:$0xf]
        %v2202 = vld [vmem:[%s2195 + $0x18] sm:$0xf]
        %v2203 = vld [vmem:[%s2195 + $0x1c] sm:$0xf]
        %v2204 = vld [vmem:[%s2195 + $0x20] sm:$0xf]
        %v2205 = vld [vmem:[%s2195 + $0x24] sm:$0xf]
        %v2206 = vld [vmem:[%s2195 + $0x28] sm:$0xf]
        %v2207 = vld [vmem:[%s2195 + $0x2c] sm:$0xf]
        %v2208 = vld [vmem:[%s2195 + $0x30] sm:$0xf]
        %v2209 = vld [vmem:[%s2195 + $0x34] sm:$0xf]
        %v2210 = vld [vmem:[%s2195 + $0x38] sm:$0xf]
        %v2211 = vld [vmem:[%s2195 + $0x3c] sm:$0xf]
        %s2212 = scalar_lea.vmem %s5, 1
        %v2213 = vld [vmem:[%s2212] sm:$0x1]
        %v2215 = vlaneseq
        %v2216 = vshrl.u32 %v2215, 7
        %v2217 = vsub.s32 0, %v2216
        %v2218 = vrot.slane %v2213, %v2217
        %v2236 = vunpack.c.l.b16 %v2196
        %v2237 = vunpack.c.l.b16 %v2197
        %v2238 = vunpack.c.l.b16 %v2198
        %v2239 = vunpack.c.l.b16 %v2199
        %v2240 = vunpack.c.l.b16 %v2200
        %v2241 = vunpack.c.l.b16 %v2201
        %v2242 = vunpack.c.l.b16 %v2202
        %v2243 = vunpack.c.l.b16 %v2203
        %v2244 = vunpack.c.l.b16 %v2204
        %v2245 = vunpack.c.l.b16 %v2205
        %v2246 = vunpack.c.l.b16 %v2206
        %v2247 = vunpack.c.l.b16 %v2207
        %v2248 = vunpack.c.l.b16 %v2208
        %v2249 = vunpack.c.l.b16 %v2209
        %v2250 = vunpack.c.l.b16 %v2210
        %v2251 = vunpack.c.l.b16 %v2211
        %v2252 = vpack.c.b16 %v2237, %v2236
        %v2253 = vpack.c.b16 %v2239, %v2238
        %v2254 = vpack.c.b16 %v2241, %v2240
        %v2255 = vpack.c.b16 %v2243, %v2242
        %v2256 = vpack.c.b16 %v2245, %v2244
        %v2257 = vpack.c.b16 %v2247, %v2246
        %v2258 = vpack.c.b16 %v2249, %v2248
        %v2259 = vpack.c.b16 %v2251, %v2250
        %2268 = vmatprep.subr.bf16.mxu0 0
        %2269 = vmatpush1.bf16.msra.mxu0 %v2259
        %2270 = vmatprep.subr.bf16.mxu0 0
        %2271 = vmatpush1.bf16.msra.mxu0 %v2258
        %2272 = vmatprep.subr.bf16.mxu0 0
        %2273 = vmatpush1.bf16.msra.mxu0 %v2257
        %2274 = vmatprep.subr.bf16.mxu0 0
        %2275 = vmatpush1.bf16.msra.mxu0 %v2256
        %2276 = vmatprep.subr.bf16.mxu0 0
        %2277 = vmatpush1.bf16.msra.mxu0 %v2255
        %2278 = vmatprep.subr.bf16.mxu0 0
        %2279 = vmatpush1.bf16.msra.mxu0 %v2254
        %2280 = vmatprep.subr.bf16.mxu0 0
        %2281 = vmatpush1.bf16.msra.mxu0 %v2253
        %2282 = vmatprep.subr.bf16.mxu0 0
        %2283 = vmatpush1.bf16.msra.mxu0 %v2252
        %2284 = vmatprep.subr.bf16.mxu0 0
        %2285 = vmatpush2.bf16.msra.mxu0 0
        %2286 = vmatprep.subr.bf16.mxu0 0
        %2287 = vmatpush2.bf16.msra.mxu0 0
        %2288 = vmatprep.subr.bf16.mxu0 0
        %2289 = vmatpush2.bf16.msra.mxu0 0
        %2290 = vmatprep.subr.bf16.mxu0 0
        %2291 = vmatpush2.bf16.msra.mxu0 0
        %2292 = vmatprep.subr.bf16.mxu0 0
        %2293 = vmatpush2.bf16.msra.mxu0 0
        %2294 = vmatprep.subr.bf16.mxu0 0
        %2295 = vmatpush2.bf16.msra.mxu0 0
        %2296 = vmatprep.subr.bf16.mxu0 0
        %2297 = vmatpush2.bf16.msra.mxu0 0
        %2298 = vmatprep.subr.bf16.mxu0 0
        %2299 = vmatpush2.bf16.msra.mxu0 0
        %2300 = vmatprep.mubr.bf16.mxu0 0
        %2301 = vmatmul.mubr.bf16.gmra.mxu0 %v2087
        %v2302 = vpop.f32.mrf.mxu0
        %v2303 = vadd.f32 %v2218, %v2302
        %v2304 = vpop.f32.mrf.mxu0
        %v2305 = vpop.f32.mrf.mxu0
        %v2306 = vadd.f32 %v2218, %v2305
        %v2307 = vpop.f32.mrf.mxu0
        %2308 = vdwg.mxu0
        %s2309 = scalar_lea.vmem [#allocation7], 64
        %v2310 = vld [vmem:[%s2309] sm:$0xf]
        %v2311 = vld [vmem:[%s2309 + $0x4] sm:$0xf]
        %v2312 = vld [vmem:[%s2309 + $0x8] sm:$0xf]
        %v2313 = vld [vmem:[%s2309 + $0xc] sm:$0xf]
        %v2314 = vld [vmem:[%s2309 + $0x10] sm:$0xf]
        %v2315 = vld [vmem:[%s2309 + $0x14] sm:$0xf]
        %v2316 = vld [vmem:[%s2309 + $0x18] sm:$0xf]
        %v2317 = vld [vmem:[%s2309 + $0x1c] sm:$0xf]
        %v2318 = vld [vmem:[%s2309 + $0x20] sm:$0xf]
        %v2319 = vld [vmem:[%s2309 + $0x24] sm:$0xf]
        %v2320 = vld [vmem:[%s2309 + $0x28] sm:$0xf]
        %v2321 = vld [vmem:[%s2309 + $0x2c] sm:$0xf]
        %v2322 = vld [vmem:[%s2309 + $0x30] sm:$0xf]
        %v2323 = vld [vmem:[%s2309 + $0x34] sm:$0xf]
        %v2324 = vld [vmem:[%s2309 + $0x38] sm:$0xf]
        %v2325 = vld [vmem:[%s2309 + $0x3c] sm:$0xf]
        %s2326 = scalar_lea.vmem %s6, 1
        %v2327 = vld [vmem:[%s2326] sm:$0x1]
        %v2329 = vlaneseq
        %v2330 = vshrl.u32 %v2329, 7
        %v2331 = vsub.s32 0, %v2330
        %v2332 = vrot.slane %v2327, %v2331
        %v2350 = vunpack.c.l.b16 %v2310
        %v2351 = vunpack.c.l.b16 %v2311
        %v2352 = vunpack.c.l.b16 %v2312
        %v2353 = vunpack.c.l.b16 %v2313
        %v2354 = vunpack.c.l.b16 %v2314
        %v2355 = vunpack.c.l.b16 %v2315
        %v2356 = vunpack.c.l.b16 %v2316
        %v2357 = vunpack.c.l.b16 %v2317
        %v2358 = vunpack.c.l.b16 %v2318
        %v2359 = vunpack.c.l.b16 %v2319
        %v2360 = vunpack.c.l.b16 %v2320
        %v2361 = vunpack.c.l.b16 %v2321
        %v2362 = vunpack.c.l.b16 %v2322
        %v2363 = vunpack.c.l.b16 %v2323
        %v2364 = vunpack.c.l.b16 %v2324
        %v2365 = vunpack.c.l.b16 %v2325
        %v2366 = vpack.c.b16 %v2351, %v2350
        %v2367 = vpack.c.b16 %v2353, %v2352
        %v2368 = vpack.c.b16 %v2355, %v2354
        %v2369 = vpack.c.b16 %v2357, %v2356
        %v2370 = vpack.c.b16 %v2359, %v2358
        %v2371 = vpack.c.b16 %v2361, %v2360
        %v2372 = vpack.c.b16 %v2363, %v2362
        %v2373 = vpack.c.b16 %v2365, %v2364
        %2382 = vmatprep.subr.bf16.mxu0 0
        %2383 = vmatpush1.bf16.msra.mxu0 %v2373
        %2384 = vmatprep.subr.bf16.mxu0 0
        %2385 = vmatpush1.bf16.msra.mxu0 %v2372
        %2386 = vmatprep.subr.bf16.mxu0 0
        %2387 = vmatpush1.bf16.msra.mxu0 %v2371
        %2388 = vmatprep.subr.bf16.mxu0 0
        %2389 = vmatpush1.bf16.msra.mxu0 %v2370
        %2390 = vmatprep.subr.bf16.mxu0 0
        %2391 = vmatpush1.bf16.msra.mxu0 %v2369
        %2392 = vmatprep.subr.bf16.mxu0 0
        %2393 = vmatpush1.bf16.msra.mxu0 %v2368
        %2394 = vmatprep.subr.bf16.mxu0 0
        %2395 = vmatpush1.bf16.msra.mxu0 %v2367
        %2396 = vmatprep.subr.bf16.mxu0 0
        %2397 = vmatpush1.bf16.msra.mxu0 %v2366
        %2398 = vmatprep.subr.bf16.mxu0 0
        %2399 = vmatpush2.bf16.msra.mxu0 0
        %2400 = vmatprep.subr.bf16.mxu0 0
        %2401 = vmatpush2.bf16.msra.mxu0 0
        %2402 = vmatprep.subr.bf16.mxu0 0
        %2403 = vmatpush2.bf16.msra.mxu0 0
        %2404 = vmatprep.subr.bf16.mxu0 0
        %2405 = vmatpush2.bf16.msra.mxu0 0
        %2406 = vmatprep.subr.bf16.mxu0 0
        %2407 = vmatpush2.bf16.msra.mxu0 0
        %2408 = vmatprep.subr.bf16.mxu0 0
        %2409 = vmatpush2.bf16.msra.mxu0 0
        %2410 = vmatprep.subr.bf16.mxu0 0
        %2411 = vmatpush2.bf16.msra.mxu0 0
        %2412 = vmatprep.subr.bf16.mxu0 0
        %2413 = vmatpush2.bf16.msra.mxu0 0
        %2414 = vmatprep.mubr.bf16.mxu0 0
        %2415 = vmatmul.mubr.bf16.gmra.mxu0 %v2087
        %v2416 = vpop.f32.mrf.mxu0
        %v2417 = vadd.f32 %v2332, %v2416
        %v2418 = vpop.f32.mrf.mxu0
        %v2419 = vpop.f32.mrf.mxu0
        %v2420 = vadd.f32 %v2332, %v2419
        %v2421 = vpop.f32.mrf.mxu0
        %2422 = vdwg.mxu0
        %v2423 = vpack.c.bf16 %v2190, %v2190
        %v2424 = vpack.c.bf16 %v2306, %v2303
        %v2425 = vpack.c.bf16 %v2420, %v2417
        %v2427 = vsel %vm1031, %v2423, 0
        %v2430 = vsel %vm1031, %v2424, 0
        %2432 = vmatprep.subr.bf16.mxu0 0
        %2433 = vmatpush1.bf16.xpose.msra.mxu0 0
        %2434 = vmatprep.subr.bf16.mxu0 0
        %2435 = vmatpush1.bf16.xpose.msra.mxu0 0
        %2436 = vmatprep.subr.bf16.mxu0 0
        %2437 = vmatpush1.bf16.xpose.msra.mxu0 0
        %2438 = vmatprep.subr.bf16.mxu0 0
        %2439 = vmatpush1.bf16.xpose.msra.mxu0 0
        %2440 = vmatprep.subr.bf16.mxu0 0
        %2441 = vmatpush1.bf16.xpose.msra.mxu0 0
        %2442 = vmatprep.subr.bf16.mxu0 0
        %2443 = vmatpush1.bf16.xpose.msra.mxu0 0
        %2444 = vmatprep.subr.bf16.mxu0 0
        %2445 = vmatpush1.bf16.xpose.msra.mxu0 0
        %2446 = vmatprep.subr.bf16.mxu0 0
        %2447 = vmatpush1.bf16.xpose.msra.mxu0 %v2430
        %2448 = vmatprep.subr.bf16.mxu0 0
        %2449 = vmatpush2.bf16.xpose.msra.mxu0 0
        %2450 = vmatprep.subr.bf16.mxu0 0
        %2451 = vmatpush2.bf16.xpose.msra.mxu0 0
        %2452 = vmatprep.subr.bf16.mxu0 0
        %2453 = vmatpush2.bf16.xpose.msra.mxu0 0
        %2454 = vmatprep.subr.bf16.mxu0 0
        %2455 = vmatpush2.bf16.xpose.msra.mxu0 0
        %2456 = vmatprep.subr.bf16.mxu0 0
        %2457 = vmatpush2.bf16.xpose.msra.mxu0 0
        %2458 = vmatprep.subr.bf16.mxu0 0
        %2459 = vmatpush2.bf16.xpose.msra.mxu0 0
        %2460 = vmatprep.subr.bf16.mxu0 0
        %2461 = vmatpush2.bf16.xpose.msra.mxu0 0
        %2462 = vmatprep.subr.bf16.mxu0 0
        %2463 = vmatpush2.bf16.xpose.msra.mxu0 0
        %2464 = vmatprep.mubr.bf16.mxu0 0
        %2465 = vmatmul.mubr.bf16.gmra.mxu0 %v2427
        %v2466 = vpop.f32.mrf.mxu0
        %v2467 = vadd.f32 0.0, %v2466
        %v2468 = vpop.f32.mrf.mxu0
        %v2469 = vpop.f32.mrf.mxu0
        %v2470 = vpop.f32.mrf.mxu0
        %2471 = vdwg.mxu0
        %v2472 = vsel %vm1083, %v2467, -inf
        %2473 = vmax.xlane.f32.xlu0 %v2472
        %v2474 = vpop.xlane.xlu0 %2473
        %v2475 = vsub.f32 %v2467, %v2474
        %v2476 = vmul.f32 %v2475, 1.442695
        %v2477 = vpow.pop %v2476
        %v2478 = vsel %vm1083, %v2477, 0.0
        %2479 = vadd.xlane.f32.xlu0 %v2478
        %v2480 = vpop.xlane.xlu0 %2479
        %v2481 = vrcp.pop %v2480
        %v2482 = vmul.f32 %v2477, %v2481
        %v2483 = vpack.c.bf16 %v2482, %v2482
        %v2485 = vsel %vm1079, %v2483, 0
        %v2488 = vand.u32 %v2425, %v1110
        %2490 = vmatprep.subr.bf16.mxu0 0
        %2491 = vmatpush1.bf16.msra.mxu0 0
        %2492 = vmatprep.subr.bf16.mxu0 0
        %2493 = vmatpush1.bf16.msra.mxu0 0
        %2494 = vmatprep.subr.bf16.mxu0 0
        %2495 = vmatpush1.bf16.msra.mxu0 0
        %2496 = vmatprep.subr.bf16.mxu0 0
        %2497 = vmatpush1.bf16.msra.mxu0 0
        %2498 = vmatprep.subr.bf16.mxu0 0
        %2499 = vmatpush1.bf16.msra.mxu0 0
        %2500 = vmatprep.subr.bf16.mxu0 0
        %2501 = vmatpush1.bf16.msra.mxu0 0
        %2502 = vmatprep.subr.bf16.mxu0 0
        %2503 = vmatpush1.bf16.msra.mxu0 0
        %2504 = vmatprep.subr.bf16.mxu0 0
        %2505 = vmatpush1.bf16.msra.mxu0 %v2488
        %2506 = vmatprep.subr.bf16.mxu0 0
        %2507 = vmatpush2.bf16.msra.mxu0 0
        %2508 = vmatprep.subr.bf16.mxu0 0
        %2509 = vmatpush2.bf16.msra.mxu0 0
        %2510 = vmatprep.subr.bf16.mxu0 0
        %2511 = vmatpush2.bf16.msra.mxu0 0
        %2512 = vmatprep.subr.bf16.mxu0 0
        %2513 = vmatpush2.bf16.msra.mxu0 0
        %2514 = vmatprep.subr.bf16.mxu0 0
        %2515 = vmatpush2.bf16.msra.mxu0 0
        %2516 = vmatprep.subr.bf16.mxu0 0
        %2517 = vmatpush2.bf16.msra.mxu0 0
        %2518 = vmatprep.subr.bf16.mxu0 0
        %2519 = vmatpush2.bf16.msra.mxu0 0
        %2520 = vmatprep.subr.bf16.mxu0 0
        %2521 = vmatpush2.bf16.msra.mxu0 0
        %2522 = vmatprep.mubr.bf16.mxu0 0
        %2523 = vmatmul.mubr.bf16.gmra.mxu0 %v2485
        %v2524 = vpop.f32.mrf.mxu0
        %v2525 = vadd.f32 0.0, %v2524
        %v2526 = vpop.f32.mrf.mxu0
        %v2527 = vpop.f32.mrf.mxu0
        %v2528 = vpop.f32.mrf.mxu0
        %2529 = vdwg.mxu0
        %v2530 = vpack.c.bf16 %v2525, %v2525
        %2532 = vrot.lane.b32.xlu0 %v2423, 96
        %v2533 = vpop.permute.xlu0 %2532
        %2535 = vrot.lane.b32.xlu0 %v2424, 96
        %v2536 = vpop.permute.xlu0 %2535
        %v2538 = vsel %vm1031, %v2533, 0
        %v2541 = vsel %vm1031, %v2536, 0
        %2543 = vmatprep.subr.bf16.mxu0 0
        %2544 = vmatpush1.bf16.xpose.msra.mxu0 0
        %2545 = vmatprep.subr.bf16.mxu0 0
        %2546 = vmatpush1.bf16.xpose.msra.mxu0 0
        %2547 = vmatprep.subr.bf16.mxu0 0
        %2548 = vmatpush1.bf16.xpose.msra.mxu0 0
        %2549 = vmatprep.subr.bf16.mxu0 0
        %2550 = vmatpush1.bf16.xpose.msra.mxu0 0
        %2551 = vmatprep.subr.bf16.mxu0 0
        %2552 = vmatpush1.bf16.xpose.msra.mxu0 0
        %2553 = vmatprep.subr.bf16.mxu0 0
        %2554 = vmatpush1.bf16.xpose.msra.mxu0 0
        %2555 = vmatprep.subr.bf16.mxu0 0
        %2556 = vmatpush1.bf16.xpose.msra.mxu0 0
        %2557 = vmatprep.subr.bf16.mxu0 0
        %2558 = vmatpush1.bf16.xpose.msra.mxu0 %v2541
        %2559 = vmatprep.subr.bf16.mxu0 0
        %2560 = vmatpush2.bf16.xpose.msra.mxu0 0
        %2561 = vmatprep.subr.bf16.mxu0 0
        %2562 = vmatpush2.bf16.xpose.msra.mxu0 0
        %2563 = vmatprep.subr.bf16.mxu0 0
        %2564 = vmatpush2.bf16.xpose.msra.mxu0 0
        %2565 = vmatprep.subr.bf16.mxu0 0
        %2566 = vmatpush2.bf16.xpose.msra.mxu0 0
        %2567 = vmatprep.subr.bf16.mxu0 0
        %2568 = vmatpush2.bf16.xpose.msra.mxu0 0
        %2569 = vmatprep.subr.bf16.mxu0 0
        %2570 = vmatpush2.bf16.xpose.msra.mxu0 0
        %2571 = vmatprep.subr.bf16.mxu0 0
        %2572 = vmatpush2.bf16.xpose.msra.mxu0 0
        %2573 = vmatprep.subr.bf16.mxu0 0
        %2574 = vmatpush2.bf16.xpose.msra.mxu0 0
        %2575 = vmatprep.mubr.bf16.mxu0 0
        %2576 = vmatmul.mubr.bf16.gmra.mxu0 %v2538
        %v2577 = vpop.f32.mrf.mxu0
        %v2578 = vadd.f32 0.0, %v2577
        %v2579 = vpop.f32.mrf.mxu0
        %v2580 = vpop.f32.mrf.mxu0
        %v2581 = vpop.f32.mrf.mxu0
        %2582 = vdwg.mxu0
        %v2583 = vsel %vm1083, %v2578, -inf
        %2584 = vmax.xlane.f32.xlu0 %v2583
        %v2585 = vpop.xlane.xlu0 %2584
        %v2586 = vsub.f32 %v2578, %v2585
        %v2587 = vmul.f32 %v2586, 1.442695
        %v2588 = vpow.pop %v2587
        %v2589 = vsel %vm1083, %v2588, 0.0
        %2590 = vadd.xlane.f32.xlu0 %v2589
        %v2591 = vpop.xlane.xlu0 %2590
        %v2592 = vrcp.pop %v2591
        %v2593 = vmul.f32 %v2588, %v2592
        %v2594 = vpack.c.bf16 %v2593, %v2593
        %2596 = vrot.lane.b32.xlu0 %v2425, 96
        %v2597 = vpop.permute.xlu0 %2596
        %v2599 = vsel %vm1079, %v2594, 0
        %v2602 = vand.u32 %v2597, %v1110
        %2604 = vmatprep.subr.bf16.mxu0 0
        %2605 = vmatpush1.bf16.msra.mxu0 0
        %2606 = vmatprep.subr.bf16.mxu0 0
        %2607 = vmatpush1.bf16.msra.mxu0 0
        %2608 = vmatprep.subr.bf16.mxu0 0
        %2609 = vmatpush1.bf16.msra.mxu0 0
        %2610 = vmatprep.subr.bf16.mxu0 0
        %2611 = vmatpush1.bf16.msra.mxu0 0
        %2612 = vmatprep.subr.bf16.mxu0 0
        %2613 = vmatpush1.bf16.msra.mxu0 0
        %2614 = vmatprep.subr.bf16.mxu0 0
        %2615 = vmatpush1.bf16.msra.mxu0 0
        %2616 = vmatprep.subr.bf16.mxu0 0
        %2617 = vmatpush1.bf16.msra.mxu0 0
        %2618 = vmatprep.subr.bf16.mxu0 0
        %2619 = vmatpush1.bf16.msra.mxu0 %v2602
        %2620 = vmatprep.subr.bf16.mxu0 0
        %2621 = vmatpush2.bf16.msra.mxu0 0
        %2622 = vmatprep.subr.bf16.mxu0 0
        %2623 = vmatpush2.bf16.msra.mxu0 0
        %2624 = vmatprep.subr.bf16.mxu0 0
        %2625 = vmatpush2.bf16.msra.mxu0 0
        %2626 = vmatprep.subr.bf16.mxu0 0
        %2627 = vmatpush2.bf16.msra.mxu0 0
        %2628 = vmatprep.subr.bf16.mxu0 0
        %2629 = vmatpush2.bf16.msra.mxu0 0
        %2630 = vmatprep.subr.bf16.mxu0 0
        %2631 = vmatpush2.bf16.msra.mxu0 0
        %2632 = vmatprep.subr.bf16.mxu0 0
        %2633 = vmatpush2.bf16.msra.mxu0 0
        %2634 = vmatprep.subr.bf16.mxu0 0
        %2635 = vmatpush2.bf16.msra.mxu0 0
        %2636 = vmatprep.mubr.bf16.mxu0 0
        %2637 = vmatmul.mubr.bf16.gmra.mxu0 %v2599
        %v2638 = vpop.f32.mrf.mxu0
        %v2639 = vadd.f32 0.0, %v2638
        %v2640 = vpop.f32.mrf.mxu0
        %v2641 = vpop.f32.mrf.mxu0
        %v2642 = vpop.f32.mrf.mxu0
        %2643 = vdwg.mxu0
        %v2644 = vpack.c.bf16 %v2639, %v2639
        %2645 = vrot.lane.b32.xlu0 %v2423, 64
        %v2646 = vpop.permute.xlu0 %2645
        %2647 = vrot.lane.b32.xlu0 %v2424, 64
        %v2648 = vpop.permute.xlu0 %2647
        %v2650 = vsel %vm1031, %v2646, 0
        %v2653 = vsel %vm1031, %v2648, 0
        %2655 = vmatprep.subr.bf16.mxu0 0
        %2656 = vmatpush1.bf16.xpose.msra.mxu0 0
        %2657 = vmatprep.subr.bf16.mxu0 0
        %2658 = vmatpush1.bf16.xpose.msra.mxu0 0
        %2659 = vmatprep.subr.bf16.mxu0 0
        %2660 = vmatpush1.bf16.xpose.msra.mxu0 0
        %2661 = vmatprep.subr.bf16.mxu0 0
        %2662 = vmatpush1.bf16.xpose.msra.mxu0 0
        %2663 = vmatprep.subr.bf16.mxu0 0
        %2664 = vmatpush1.bf16.xpose.msra.mxu0 0
        %2665 = vmatprep.subr.bf16.mxu0 0
        %2666 = vmatpush1.bf16.xpose.msra.mxu0 0
        %2667 = vmatprep.subr.bf16.mxu0 0
        %2668 = vmatpush1.bf16.xpose.msra.mxu0 0
        %2669 = vmatprep.subr.bf16.mxu0 0
        %2670 = vmatpush1.bf16.xpose.msra.mxu0 %v2653
        %2671 = vmatprep.subr.bf16.mxu0 0
        %2672 = vmatpush2.bf16.xpose.msra.mxu0 0
        %2673 = vmatprep.subr.bf16.mxu0 0
        %2674 = vmatpush2.bf16.xpose.msra.mxu0 0
        %2675 = vmatprep.subr.bf16.mxu0 0
        %2676 = vmatpush2.bf16.xpose.msra.mxu0 0
        %2677 = vmatprep.subr.bf16.mxu0 0
        %2678 = vmatpush2.bf16.xpose.msra.mxu0 0
        %2679 = vmatprep.subr.bf16.mxu0 0
        %2680 = vmatpush2.bf16.xpose.msra.mxu0 0
        %2681 = vmatprep.subr.bf16.mxu0 0
        %2682 = vmatpush2.bf16.xpose.msra.mxu0 0
        %2683 = vmatprep.subr.bf16.mxu0 0
        %2684 = vmatpush2.bf16.xpose.msra.mxu0 0
        %2685 = vmatprep.subr.bf16.mxu0 0
        %2686 = vmatpush2.bf16.xpose.msra.mxu0 0
        %2687 = vmatprep.mubr.bf16.mxu0 0
        %2688 = vmatmul.mubr.bf16.gmra.mxu0 %v2650
        %v2689 = vpop.f32.mrf.mxu0
        %v2690 = vadd.f32 0.0, %v2689
        %v2691 = vpop.f32.mrf.mxu0
        %v2692 = vpop.f32.mrf.mxu0
        %v2693 = vpop.f32.mrf.mxu0
        %2694 = vdwg.mxu0
        %v2695 = vsel %vm1083, %v2690, -inf
        %2696 = vmax.xlane.f32.xlu0 %v2695
        %v2697 = vpop.xlane.xlu0 %2696
        %v2698 = vsub.f32 %v2690, %v2697
        %v2699 = vmul.f32 %v2698, 1.442695
        %v2700 = vpow.pop %v2699
        %v2701 = vsel %vm1083, %v2700, 0.0
        %2702 = vadd.xlane.f32.xlu0 %v2701
        %v2703 = vpop.xlane.xlu0 %2702
        %v2704 = vrcp.pop %v2703
        %v2705 = vmul.f32 %v2700, %v2704
        %v2706 = vpack.c.bf16 %v2705, %v2705
        %2707 = vrot.lane.b32.xlu0 %v2425, 64
        %v2708 = vpop.permute.xlu0 %2707
        %v2710 = vsel %vm1079, %v2706, 0
        %v2713 = vand.u32 %v2708, %v1110
        %2715 = vmatprep.subr.bf16.mxu0 0
        %2716 = vmatpush1.bf16.msra.mxu0 0
        %2717 = vmatprep.subr.bf16.mxu0 0
        %2718 = vmatpush1.bf16.msra.mxu0 0
        %2719 = vmatprep.subr.bf16.mxu0 0
        %2720 = vmatpush1.bf16.msra.mxu0 0
        %2721 = vmatprep.subr.bf16.mxu0 0
        %2722 = vmatpush1.bf16.msra.mxu0 0
        %2723 = vmatprep.subr.bf16.mxu0 0
        %2724 = vmatpush1.bf16.msra.mxu0 0
        %2725 = vmatprep.subr.bf16.mxu0 0
        %2726 = vmatpush1.bf16.msra.mxu0 0
        %2727 = vmatprep.subr.bf16.mxu0 0
        %2728 = vmatpush1.bf16.msra.mxu0 0
        %2729 = vmatprep.subr.bf16.mxu0 0
        %2730 = vmatpush1.bf16.msra.mxu0 %v2713
        %2731 = vmatprep.subr.bf16.mxu0 0
        %2732 = vmatpush2.bf16.msra.mxu0 0
        %2733 = vmatprep.subr.bf16.mxu0 0
        %2734 = vmatpush2.bf16.msra.mxu0 0
        %2735 = vmatprep.subr.bf16.mxu0 0
        %2736 = vmatpush2.bf16.msra.mxu0 0
        %2737 = vmatprep.subr.bf16.mxu0 0
        %2738 = vmatpush2.bf16.msra.mxu0 0
        %2739 = vmatprep.subr.bf16.mxu0 0
        %2740 = vmatpush2.bf16.msra.mxu0 0
        %2741 = vmatprep.subr.bf16.mxu0 0
        %2742 = vmatpush2.bf16.msra.mxu0 0
        %2743 = vmatprep.subr.bf16.mxu0 0
        %2744 = vmatpush2.bf16.msra.mxu0 0
        %2745 = vmatprep.subr.bf16.mxu0 0
        %2746 = vmatpush2.bf16.msra.mxu0 0
        %2747 = vmatprep.mubr.bf16.mxu0 0
        %2748 = vmatmul.mubr.bf16.gmra.mxu0 %v2710
        %v2749 = vpop.f32.mrf.mxu0
        %v2750 = vadd.f32 0.0, %v2749
        %v2751 = vpop.f32.mrf.mxu0
        %v2752 = vpop.f32.mrf.mxu0
        %v2753 = vpop.f32.mrf.mxu0
        %2754 = vdwg.mxu0
        %v2755 = vpack.c.bf16 %v2750, %v2750
        %2756 = vrot.lane.b32.xlu0 %v2423, 32
        %v2757 = vpop.permute.xlu0 %2756
        %2758 = vrot.lane.b32.xlu0 %v2424, 32
        %v2759 = vpop.permute.xlu0 %2758
        %v2761 = vsel %vm1031, %v2757, 0
        %v2764 = vsel %vm1031, %v2759, 0
        %2766 = vmatprep.subr.bf16.mxu0 0
        %2767 = vmatpush1.bf16.xpose.msra.mxu0 0
        %2768 = vmatprep.subr.bf16.mxu0 0
        %2769 = vmatpush1.bf16.xpose.msra.mxu0 0
        %2770 = vmatprep.subr.bf16.mxu0 0
        %2771 = vmatpush1.bf16.xpose.msra.mxu0 0
        %2772 = vmatprep.subr.bf16.mxu0 0
        %2773 = vmatpush1.bf16.xpose.msra.mxu0 0
        %2774 = vmatprep.subr.bf16.mxu0 0
        %2775 = vmatpush1.bf16.xpose.msra.mxu0 0
        %2776 = vmatprep.subr.bf16.mxu0 0
        %2777 = vmatpush1.bf16.xpose.msra.mxu0 0
        %2778 = vmatprep.subr.bf16.mxu0 0
        %2779 = vmatpush1.bf16.xpose.msra.mxu0 0
        %2780 = vmatprep.subr.bf16.mxu0 0
        %2781 = vmatpush1.bf16.xpose.msra.mxu0 %v2764
        %2782 = vmatprep.subr.bf16.mxu0 0
        %2783 = vmatpush2.bf16.xpose.msra.mxu0 0
        %2784 = vmatprep.subr.bf16.mxu0 0
        %2785 = vmatpush2.bf16.xpose.msra.mxu0 0
        %2786 = vmatprep.subr.bf16.mxu0 0
        %2787 = vmatpush2.bf16.xpose.msra.mxu0 0
        %2788 = vmatprep.subr.bf16.mxu0 0
        %2789 = vmatpush2.bf16.xpose.msra.mxu0 0
        %2790 = vmatprep.subr.bf16.mxu0 0
        %2791 = vmatpush2.bf16.xpose.msra.mxu0 0
        %2792 = vmatprep.subr.bf16.mxu0 0
        %2793 = vmatpush2.bf16.xpose.msra.mxu0 0
        %2794 = vmatprep.subr.bf16.mxu0 0
        %2795 = vmatpush2.bf16.xpose.msra.mxu0 0
        %2796 = vmatprep.subr.bf16.mxu0 0
        %2797 = vmatpush2.bf16.xpose.msra.mxu0 0
        %2798 = vmatprep.mubr.bf16.mxu0 0
        %2799 = vmatmul.mubr.bf16.gmra.mxu0 %v2761
        %v2800 = vpop.f32.mrf.mxu0
        %v2801 = vadd.f32 0.0, %v2800
        %v2802 = vpop.f32.mrf.mxu0
        %v2803 = vpop.f32.mrf.mxu0
        %v2804 = vpop.f32.mrf.mxu0
        %2805 = vdwg.mxu0
        %v2806 = vsel %vm1083, %v2801, -inf
        %2807 = vmax.xlane.f32.xlu0 %v2806
        %v2808 = vpop.xlane.xlu0 %2807
        %v2809 = vsub.f32 %v2801, %v2808
        %v2810 = vmul.f32 %v2809, 1.442695
        %v2811 = vpow.pop %v2810
        %v2812 = vsel %vm1083, %v2811, 0.0
        %2813 = vadd.xlane.f32.xlu0 %v2812
        %v2814 = vpop.xlane.xlu0 %2813
        %v2815 = vrcp.pop %v2814
        %v2816 = vmul.f32 %v2811, %v2815
        %v2817 = vpack.c.bf16 %v2816, %v2816
        %2818 = vrot.lane.b32.xlu0 %v2425, 32
        %v2819 = vpop.permute.xlu0 %2818
        %v2821 = vsel %vm1079, %v2817, 0
        %v2824 = vand.u32 %v2819, %v1110
        %2826 = vmatprep.subr.bf16.mxu0 0
        %2827 = vmatpush1.bf16.msra.mxu0 0
        %2828 = vmatprep.subr.bf16.mxu0 0
        %2829 = vmatpush1.bf16.msra.mxu0 0
        %2830 = vmatprep.subr.bf16.mxu0 0
        %2831 = vmatpush1.bf16.msra.mxu0 0
        %2832 = vmatprep.subr.bf16.mxu0 0
        %2833 = vmatpush1.bf16.msra.mxu0 0
        %2834 = vmatprep.subr.bf16.mxu0 0
        %2835 = vmatpush1.bf16.msra.mxu0 0
        %2836 = vmatprep.subr.bf16.mxu0 0
        %2837 = vmatpush1.bf16.msra.mxu0 0
        %2838 = vmatprep.subr.bf16.mxu0 0
        %2839 = vmatpush1.bf16.msra.mxu0 0
        %2840 = vmatprep.subr.bf16.mxu0 0
        %2841 = vmatpush1.bf16.msra.mxu0 %v2824
        %2842 = vmatprep.subr.bf16.mxu0 0
        %2843 = vmatpush2.bf16.msra.mxu0 0
        %2844 = vmatprep.subr.bf16.mxu0 0
        %2845 = vmatpush2.bf16.msra.mxu0 0
        %2846 = vmatprep.subr.bf16.mxu0 0
        %2847 = vmatpush2.bf16.msra.mxu0 0
        %2848 = vmatprep.subr.bf16.mxu0 0
        %2849 = vmatpush2.bf16.msra.mxu0 0
        %2850 = vmatprep.subr.bf16.mxu0 0
        %2851 = vmatpush2.bf16.msra.mxu0 0
        %2852 = vmatprep.subr.bf16.mxu0 0
        %2853 = vmatpush2.bf16.msra.mxu0 0
        %2854 = vmatprep.subr.bf16.mxu0 0
        %2855 = vmatpush2.bf16.msra.mxu0 0
        %2856 = vmatprep.subr.bf16.mxu0 0
        %2857 = vmatpush2.bf16.msra.mxu0 0
        %2858 = vmatprep.mubr.bf16.mxu0 0
        %2859 = vmatmul.mubr.bf16.gmra.mxu0 %v2821
        %v2860 = vpop.f32.mrf.mxu0
        %v2861 = vadd.f32 0.0, %v2860
        %v2862 = vpop.f32.mrf.mxu0
        %v2863 = vpop.f32.mrf.mxu0
        %v2864 = vpop.f32.mrf.mxu0
        %2865 = vdwg.mxu0
        %v2866 = vpack.c.bf16 %v2861, %v2861
        %2868 = vrot.lane.b32.xlu0 %v2644, 32
        %v2869 = vpop.permute.xlu0 %2868
        %2871 = vrot.lane.b32.xlu0 %v2755, 64
        %v2872 = vpop.permute.xlu0 %2871
        %2874 = vrot.lane.b32.xlu0 %v2866, 96
        %v2875 = vpop.permute.xlu0 %2874
        %v2878 = vsel %vm1031, %v2530, %v2869
        %v2880 = vsel %vm1543, %v2878, %v2872
        %v2882 = vsel %vm1546, %v2880, %v2875
        %s2884 = scalar_lea.vmem [#allocation8], 64
        %v2885 = vld [vmem:[%s2884] sm:$0xf]
        %v2886 = vld [vmem:[%s2884 + $0x4] sm:$0xf]
        %v2887 = vld [vmem:[%s2884 + $0x8] sm:$0xf]
        %v2888 = vld [vmem:[%s2884 + $0xc] sm:$0xf]
        %v2889 = vld [vmem:[%s2884 + $0x10] sm:$0xf]
        %v2890 = vld [vmem:[%s2884 + $0x14] sm:$0xf]
        %v2891 = vld [vmem:[%s2884 + $0x18] sm:$0xf]
        %v2892 = vld [vmem:[%s2884 + $0x1c] sm:$0xf]
        %v2893 = vld [vmem:[%s2884 + $0x20] sm:$0xf]
        %v2894 = vld [vmem:[%s2884 + $0x24] sm:$0xf]
        %v2895 = vld [vmem:[%s2884 + $0x28] sm:$0xf]
        %v2896 = vld [vmem:[%s2884 + $0x2c] sm:$0xf]
        %v2897 = vld [vmem:[%s2884 + $0x30] sm:$0xf]
        %v2898 = vld [vmem:[%s2884 + $0x34] sm:$0xf]
        %v2899 = vld [vmem:[%s2884 + $0x38] sm:$0xf]
        %v2900 = vld [vmem:[%s2884 + $0x3c] sm:$0xf]
        %s2901 = scalar_lea.vmem %s8, 1
        %v2902 = vld [vmem:[%s2901] sm:$0x1]
        %v2919 = vunpack.c.l.b16 %v2885
        %v2920 = vunpack.c.l.b16 %v2886
        %v2921 = vunpack.c.l.b16 %v2887
        %v2922 = vunpack.c.l.b16 %v2888
        %v2923 = vunpack.c.l.b16 %v2889
        %v2924 = vunpack.c.l.b16 %v2890
        %v2925 = vunpack.c.l.b16 %v2891
        %v2926 = vunpack.c.l.b16 %v2892
        %v2927 = vunpack.c.l.b16 %v2893
        %v2928 = vunpack.c.l.b16 %v2894
        %v2929 = vunpack.c.l.b16 %v2895
        %v2930 = vunpack.c.l.b16 %v2896
        %v2931 = vunpack.c.l.b16 %v2897
        %v2932 = vunpack.c.l.b16 %v2898
        %v2933 = vunpack.c.l.b16 %v2899
        %v2934 = vunpack.c.l.b16 %v2900
        %v2935 = vpack.c.b16 %v2920, %v2919
        %v2936 = vpack.c.b16 %v2922, %v2921
        %v2937 = vpack.c.b16 %v2924, %v2923
        %v2938 = vpack.c.b16 %v2926, %v2925
        %v2939 = vpack.c.b16 %v2928, %v2927
        %v2940 = vpack.c.b16 %v2930, %v2929
        %v2941 = vpack.c.b16 %v2932, %v2931
        %v2942 = vpack.c.b16 %v2934, %v2933
        %2951 = vmatprep.subr.bf16.mxu0 0
        %2952 = vmatpush1.bf16.msra.mxu0 %v2942
        %2953 = vmatprep.subr.bf16.mxu0 0
        %2954 = vmatpush1.bf16.msra.mxu0 %v2941
        %2955 = vmatprep.subr.bf16.mxu0 0
        %2956 = vmatpush1.bf16.msra.mxu0 %v2940
        %2957 = vmatprep.subr.bf16.mxu0 0
        %2958 = vmatpush1.bf16.msra.mxu0 %v2939
        %2959 = vmatprep.subr.bf16.mxu0 0
        %2960 = vmatpush1.bf16.msra.mxu0 %v2938
        %2961 = vmatprep.subr.bf16.mxu0 0
        %2962 = vmatpush1.bf16.msra.mxu0 %v2937
        %2963 = vmatprep.subr.bf16.mxu0 0
        %2964 = vmatpush1.bf16.msra.mxu0 %v2936
        %2965 = vmatprep.subr.bf16.mxu0 0
        %2966 = vmatpush1.bf16.msra.mxu0 %v2935
        %2967 = vmatprep.subr.bf16.mxu0 0
        %2968 = vmatpush2.bf16.msra.mxu0 0
        %2969 = vmatprep.subr.bf16.mxu0 0
        %2970 = vmatpush2.bf16.msra.mxu0 0
        %2971 = vmatprep.subr.bf16.mxu0 0
        %2972 = vmatpush2.bf16.msra.mxu0 0
        %2973 = vmatprep.subr.bf16.mxu0 0
        %2974 = vmatpush2.bf16.msra.mxu0 0
        %2975 = vmatprep.subr.bf16.mxu0 0
        %2976 = vmatpush2.bf16.msra.mxu0 0
        %2977 = vmatprep.subr.bf16.mxu0 0
        %2978 = vmatpush2.bf16.msra.mxu0 0
        %2979 = vmatprep.subr.bf16.mxu0 0
        %2980 = vmatpush2.bf16.msra.mxu0 0
        %2981 = vmatprep.subr.bf16.mxu0 0
        %2982 = vmatpush2.bf16.msra.mxu0 0
        %2983 = vmatprep.mubr.bf16.mxu0 0
        %2984 = vmatmul.mubr.bf16.gmra.mxu0 %v2882
        %v2985 = vpop.f32.mrf.mxu0
        %v2986 = vadd.f32 %v2902, %v2985
        %v2987 = vpop.f32.mrf.mxu0
        %v2988 = vpop.f32.mrf.mxu0
        %v2989 = vpop.f32.mrf.mxu0
        %2990 = vdwg.mxu0
        %v2991 = vadd.f32 %v2084, %v2986
        %s2992 = scalar_lea.vmem %s13, 1
        %v2993 = vld [vmem:[%s2992] sm:$0x1]
        %s2994 = scalar_lea.vmem %s14, 1
        %v2995 = vld [vmem:[%s2994] sm:$0x1]
        %v2996 = vsel %vm1668, %v2991, 0.0
        %2997 = vadd.xlane.f32.xlu0 %v2996
        %v2998 = vpop.xlane.xlu0 %2997
        %v2999 = vmul.f32 %v2998, %v1672
        %v3000 = vsub.f32 %v2991, %v2999
        %v3001 = vmul.f32 %v3000, %v3000
        %v3002 = vsel %vm1668, %v3001, 0.0
        %3003 = vadd.xlane.f32.xlu0 %v3002
        %v3004 = vpop.xlane.xlu0 %3003
        %v3005 = vmul.f32 %v3004, %v1672
        %v3006 = vadd.f32 %v3005, 1e-05
        %v3007 = vrsqrt.pop %v3006
        %v3008 = vmul.f32 %v3000, %v3007
        %v3009 = vmul.f32 %v3008, %v2993
        %v3010 = vadd.f32 %v3009, %v2995
        %v3011 = vpack.c.bf16 %v3010, %v3010
        %s3012 = scalar_lea.vmem [#allocation10], 128
        %v3013 = vld [vmem:[%s3012] sm:$0xff]
        %v3014 = vld [vmem:[%s3012 + $0x8] sm:$0xff]
        %v3015 = vld [vmem:[%s3012 + $0x10] sm:$0xff]
        %v3016 = vld [vmem:[%s3012 + $0x18] sm:$0xff]
        %v3017 = vld [vmem:[%s3012 + $0x20] sm:$0xff]
        %v3018 = vld [vmem:[%s3012 + $0x28] sm:$0xff]
        %v3019 = vld [vmem:[%s3012 + $0x30] sm:$0xff]
        %v3020 = vld [vmem:[%s3012 + $0x38] sm:$0xff]
        %v3021 = vld [vmem:[%s3012 + $0x40] sm:$0xff]
        %v3022 = vld [vmem:[%s3012 + $0x48] sm:$0xff]
        %v3023 = vld [vmem:[%s3012 + $0x50] sm:$0xff]
        %v3024 = vld [vmem:[%s3012 + $0x58] sm:$0xff]
        %v3025 = vld [vmem:[%s3012 + $0x60] sm:$0xff]
        %v3026 = vld [vmem:[%s3012 + $0x68] sm:$0xff]
        %v3027 = vld [vmem:[%s3012 + $0x70] sm:$0xff]
        %v3028 = vld [vmem:[%s3012 + $0x78] sm:$0xff]
        %s3029 = scalar_lea.vmem %s10, 2
        %v3030 = vld [vmem:[%s3029] sm:$0x3]
        %v3047 = vunpack.c.l.b16 %v3013
        %v3048 = vunpack.c.h.b16 %v3013
        %v3049 = vunpack.c.l.b16 %v3014
        %v3050 = vunpack.c.h.b16 %v3014
        %v3051 = vunpack.c.l.b16 %v3015
        %v3052 = vunpack.c.h.b16 %v3015
        %v3053 = vunpack.c.l.b16 %v3016
        %v3054 = vunpack.c.h.b16 %v3016
        %v3055 = vunpack.c.l.b16 %v3017
        %v3056 = vunpack.c.h.b16 %v3017
        %v3057 = vunpack.c.l.b16 %v3018
        %v3058 = vunpack.c.h.b16 %v3018
        %v3059 = vunpack.c.l.b16 %v3019
        %v3060 = vunpack.c.h.b16 %v3019
        %v3061 = vunpack.c.l.b16 %v3020
        %v3062 = vunpack.c.h.b16 %v3020
        %v3063 = vunpack.c.l.b16 %v3021
        %v3064 = vunpack.c.h.b16 %v3021
        %v3065 = vunpack.c.l.b16 %v3022
        %v3066 = vunpack.c.h.b16 %v3022
        %v3067 = vunpack.c.l.b16 %v3023
        %v3068 = vunpack.c.h.b16 %v3023
        %v3069 = vunpack.c.l.b16 %v3024
        %v3070 = vunpack.c.h.b16 %v3024
        %v3071 = vunpack.c.l.b16 %v3025
        %v3072 = vunpack.c.h.b16 %v3025
        %v3073 = vunpack.c.l.b16 %v3026
        %v3074 = vunpack.c.h.b16 %v3026
        %v3075 = vunpack.c.l.b16 %v3027
        %v3076 = vunpack.c.h.b16 %v3027
        %v3077 = vunpack.c.l.b16 %v3028
        %v3078 = vunpack.c.h.b16 %v3028
        %v3079 = vpack.c.b16 %v3049, %v3047
        %v3080 = vpack.c.b16 %v3050, %v3048
        %v3081 = vpack.c.b16 %v3053, %v3051
        %v3082 = vpack.c.b16 %v3054, %v3052
        %v3083 = vpack.c.b16 %v3057, %v3055
        %v3084 = vpack.c.b16 %v3058, %v3056
        %v3085 = vpack.c.b16 %v3061, %v3059
        %v3086 = vpack.c.b16 %v3062, %v3060
        %v3087 = vpack.c.b16 %v3065, %v3063
        %v3088 = vpack.c.b16 %v3066, %v3064
        %v3089 = vpack.c.b16 %v3069, %v3067
        %v3090 = vpack.c.b16 %v3070, %v3068
        %v3091 = vpack.c.b16 %v3073, %v3071
        %v3092 = vpack.c.b16 %v3074, %v3072
        %v3093 = vpack.c.b16 %v3077, %v3075
        %v3094 = vpack.c.b16 %v3078, %v3076
        %v3112 = vlaneseq
        %v3113 = vshrl.u32 %v3112, 7
        %v3114 = vsub.s32 0, %v3113
        %v3115 = vrot.slane %v3030, %v3114
        %v3116 = vlaneseq
        %v3117 = vshrl.u32 %v3116, 7
        %v3118 = vsub.s32 1, %v3117
        %v3119 = vrot.slane %v3030, %v3118
        %3122 = vmatprep.subr.bf16.mxu0 %v3094
        %3123 = vmatpush1.bf16.msra.mxu0 %v3093
        %3124 = vmatprep.subr.bf16.mxu0 %v3092
        %3125 = vmatpush1.bf16.msra.mxu0 %v3091
        %3126 = vmatprep.subr.bf16.mxu0 %v3090
        %3127 = vmatpush1.bf16.msra.mxu0 %v3089
        %3128 = vmatprep.subr.bf16.mxu0 %v3088
        %3129 = vmatpush1.bf16.msra.mxu0 %v3087
        %3130 = vmatprep.subr.bf16.mxu0 %v3086
        %3131 = vmatpush1.bf16.msra.mxu0 %v3085
        %3132 = vmatprep.subr.bf16.mxu0 %v3084
        %3133 = vmatpush1.bf16.msra.mxu0 %v3083
        %3134 = vmatprep.subr.bf16.mxu0 %v3082
        %3135 = vmatpush1.bf16.msra.mxu0 %v3081
        %3136 = vmatprep.subr.bf16.mxu0 %v3080
        %3137 = vmatpush1.bf16.msra.mxu0 %v3079
        %3138 = vmatprep.subr.bf16.mxu0 0
        %3139 = vmatpush2.bf16.msra.mxu0 0
        %3140 = vmatprep.subr.bf16.mxu0 0
        %3141 = vmatpush2.bf16.msra.mxu0 0
        %3142 = vmatprep.subr.bf16.mxu0 0
        %3143 = vmatpush2.bf16.msra.mxu0 0
        %3144 = vmatprep.subr.bf16.mxu0 0
        %3145 = vmatpush2.bf16.msra.mxu0 0
        %3146 = vmatprep.subr.bf16.mxu0 0
        %3147 = vmatpush2.bf16.msra.mxu0 0
        %3148 = vmatprep.subr.bf16.mxu0 0
        %3149 = vmatpush2.bf16.msra.mxu0 0
        %3150 = vmatprep.subr.bf16.mxu0 0
        %3151 = vmatpush2.bf16.msra.mxu0 0
        %3152 = vmatprep.subr.bf16.mxu0 0
        %3153 = vmatpush2.bf16.msra.mxu0 0
        %3154 = vmatprep.mubr.bf16.mxu0 0
        %3155 = vmatmul.mubr.bf16.gmra.mxu0 %v3011
        %v3156 = vpop.f32.mrf.mxu0
        %v3157 = vadd.f32 %v3115, %v3156
        %v3158 = vpop.f32.mrf.mxu0
        %v3159 = vadd.f32 %v3119, %v3158
        %v3160 = vpop.f32.mrf.mxu0
        %v3161 = vpop.f32.mrf.mxu0
        %3162 = vdwg.mxu0
        %v3163 = vmax.f32 %v3157, 0.0
        %v3164 = vmax.f32 %v3159, 0.0
        %v3165 = vpack.c.bf16 %v3163, %v3163
        %v3166 = vpack.c.bf16 %v3164, %v3164
        %s3167 = scalar_lea.vmem [#allocation11], 128
        %v3168 = vld [vmem:[%s3167] sm:$0xf]
        %v3169 = vld [vmem:[%s3167 + $0x4] sm:$0xf]
        %v3170 = vld [vmem:[%s3167 + $0x8] sm:$0xf]
        %v3171 = vld [vmem:[%s3167 + $0xc] sm:$0xf]
        %v3172 = vld [vmem:[%s3167 + $0x10] sm:$0xf]
        %v3173 = vld [vmem:[%s3167 + $0x14] sm:$0xf]
        %v3174 = vld [vmem:[%s3167 + $0x18] sm:$0xf]
        %v3175 = vld [vmem:[%s3167 + $0x1c] sm:$0xf]
        %v3176 = vld [vmem:[%s3167 + $0x20] sm:$0xf]
        %v3177 = vld [vmem:[%s3167 + $0x24] sm:$0xf]
        %v3178 = vld [vmem:[%s3167 + $0x28] sm:$0xf]
        %v3179 = vld [vmem:[%s3167 + $0x2c] sm:$0xf]
        %v3180 = vld [vmem:[%s3167 + $0x30] sm:$0xf]
        %v3181 = vld [vmem:[%s3167 + $0x34] sm:$0xf]
        %v3182 = vld [vmem:[%s3167 + $0x38] sm:$0xf]
        %v3183 = vld [vmem:[%s3167 + $0x3c] sm:$0xf]
        %v3184 = vld [vmem:[%s3167 + $0x40] sm:$0xf]
        %v3185 = vld [vmem:[%s3167 + $0x44] sm:$0xf]
        %v3186 = vld [vmem:[%s3167 + $0x48] sm:$0xf]
        %v3187 = vld [vmem:[%s3167 + $0x4c] sm:$0xf]
        %v3188 = vld [vmem:[%s3167 + $0x50] sm:$0xf]
        %v3189 = vld [vmem:[%s3167 + $0x54] sm:$0xf]
        %v3190 = vld [vmem:[%s3167 + $0x58] sm:$0xf]
        %v3191 = vld [vmem:[%s3167 + $0x5c] sm:$0xf]
        %v3192 = vld [vmem:[%s3167 + $0x60] sm:$0xf]
        %v3193 = vld [vmem:[%s3167 + $0x64] sm:$0xf]
        %v3194 = vld [vmem:[%s3167 + $0x68] sm:$0xf]
        %v3195 = vld [vmem:[%s3167 + $0x6c] sm:$0xf]
        %v3196 = vld [vmem:[%s3167 + $0x70] sm:$0xf]
        %v3197 = vld [vmem:[%s3167 + $0x74] sm:$0xf]
        %v3198 = vld [vmem:[%s3167 + $0x78] sm:$0xf]
        %v3199 = vld [vmem:[%s3167 + $0x7c] sm:$0xf]
        %s3200 = scalar_lea.vmem %s12, 1
        %v3201 = vld [vmem:[%s3200] sm:$0x1]
        %v3234 = vunpack.c.l.b16 %v3168
        %v3235 = vunpack.c.l.b16 %v3169
        %v3236 = vunpack.c.l.b16 %v3170
        %v3237 = vunpack.c.l.b16 %v3171
        %v3238 = vunpack.c.l.b16 %v3172
        %v3239 = vunpack.c.l.b16 %v3173
        %v3240 = vunpack.c.l.b16 %v3174
        %v3241 = vunpack.c.l.b16 %v3175
        %v3242 = vunpack.c.l.b16 %v3176
        %v3243 = vunpack.c.l.b16 %v3177
        %v3244 = vunpack.c.l.b16 %v3178
        %v3245 = vunpack.c.l.b16 %v3179
        %v3246 = vunpack.c.l.b16 %v3180
        %v3247 = vunpack.c.l.b16 %v3181
        %v3248 = vunpack.c.l.b16 %v3182
        %v3249 = vunpack.c.l.b16 %v3183
        %v3250 = vunpack.c.l.b16 %v3184
        %v3251 = vunpack.c.l.b16 %v3185
        %v3252 = vunpack.c.l.b16 %v3186
        %v3253 = vunpack.c.l.b16 %v3187
        %v3254 = vunpack.c.l.b16 %v3188
        %v3255 = vunpack.c.l.b16 %v3189
        %v3256 = vunpack.c.l.b16 %v3190
        %v3257 = vunpack.c.l.b16 %v3191
        %v3258 = vunpack.c.l.b16 %v3192
        %v3259 = vunpack.c.l.b16 %v3193
        %v3260 = vunpack.c.l.b16 %v3194
        %v3261 = vunpack.c.l.b16 %v3195
        %v3262 = vunpack.c.l.b16 %v3196
        %v3263 = vunpack.c.l.b16 %v3197
        %v3264 = vunpack.c.l.b16 %v3198
        %v3265 = vunpack.c.l.b16 %v3199
        %v3266 = vpack.c.b16 %v3235, %v3234
        %v3267 = vpack.c.b16 %v3237, %v3236
        %v3268 = vpack.c.b16 %v3239, %v3238
        %v3269 = vpack.c.b16 %v3241, %v3240
        %v3270 = vpack.c.b16 %v3243, %v3242
        %v3271 = vpack.c.b16 %v3245, %v3244
        %v3272 = vpack.c.b16 %v3247, %v3246
        %v3273 = vpack.c.b16 %v3249, %v3248
        %v3274 = vpack.c.b16 %v3251, %v3250
        %v3275 = vpack.c.b16 %v3253, %v3252
        %v3276 = vpack.c.b16 %v3255, %v3254
        %v3277 = vpack.c.b16 %v3257, %v3256
        %v3278 = vpack.c.b16 %v3259, %v3258
        %v3279 = vpack.c.b16 %v3261, %v3260
        %v3280 = vpack.c.b16 %v3263, %v3262
        %v3281 = vpack.c.b16 %v3265, %v3264
        %3298 = vmatprep.subr.bf16.mxu0 0
        %3299 = vmatpush1.bf16.msra.mxu0 %v3273
        %3300 = vmatprep.subr.bf16.mxu0 0
        %3301 = vmatpush1.bf16.msra.mxu0 %v3272
        %3302 = vmatprep.subr.bf16.mxu0 0
        %3303 = vmatpush1.bf16.msra.mxu0 %v3271
        %3304 = vmatprep.subr.bf16.mxu0 0
        %3305 = vmatpush1.bf16.msra.mxu0 %v3270
        %3306 = vmatprep.subr.bf16.mxu0 0
        %3307 = vmatpush1.bf16.msra.mxu0 %v3269
        %3308 = vmatprep.subr.bf16.mxu0 0
        %3309 = vmatpush1.bf16.msra.mxu0 %v3268
        %3310 = vmatprep.subr.bf16.mxu0 0
        %3311 = vmatpush1.bf16.msra.mxu0 %v3267
        %3312 = vmatprep.subr.bf16.mxu0 0
        %3313 = vmatpush1.bf16.msra.mxu0 %v3266
        %3314 = vmatprep.subr.bf16.mxu0 0
        %3315 = vmatpush2.bf16.msra.mxu0 %v3281
        %3316 = vmatprep.subr.bf16.mxu0 0
        %3317 = vmatpush2.bf16.msra.mxu0 %v3280
        %3318 = vmatprep.subr.bf16.mxu0 0
        %3319 = vmatpush2.bf16.msra.mxu0 %v3279
        %3320 = vmatprep.subr.bf16.mxu0 0
        %3321 = vmatpush2.bf16.msra.mxu0 %v3278
        %3322 = vmatprep.subr.bf16.mxu0 0
        %3323 = vmatpush2.bf16.msra.mxu0 %v3277
        %3324 = vmatprep.subr.bf16.mxu0 0
        %3325 = vmatpush2.bf16.msra.mxu0 %v3276
        %3326 = vmatprep.subr.bf16.mxu0 0
        %3327 = vmatpush2.bf16.msra.mxu0 %v3275
        %3328 = vmatprep.subr.bf16.mxu0 0
        %3329 = vmatpush2.bf16.msra.mxu0 %v3274
        %3330 = vmatprep.mubr.bf16.mxu0 %v3166
        %3331 = vmatmul.mubr.bf16.gmra.mxu0 %v3165
        %v3332 = vpop.f32.mrf.mxu0
        %v3333 = vadd.f32 %v3201, %v3332
        %v3334 = vpop.f32.mrf.mxu0
        %v3335 = vpop.f32.mrf.mxu0
        %v3336 = vpop.f32.mrf.mxu0
        %3337 = vdwg.mxu0
        %v3338 = vadd.f32 %v3010, %v3333
        %s3339 = scalar_lea.vmem %s15, 1
        %v3340 = vld [vmem:[%s3339] sm:$0x1]
        %s3341 = scalar_lea.vmem %s16, 1
        %v3342 = vld [vmem:[%s3341] sm:$0x1]
        %v3343 = vsel %vm1668, %v3338, 0.0
        %3344 = vadd.xlane.f32.xlu0 %v3343
        %v3345 = vpop.xlane.xlu0 %3344
        %v3346 = vmul.f32 %v3345, %v1672
        %v3347 = vsub.f32 %v3338, %v3346
        %v3348 = vmul.f32 %v3347, %v3347
        %v3349 = vsel %vm1668, %v3348, 0.0
        %3350 = vadd.xlane.f32.xlu0 %v3349
        %v3351 = vpop.xlane.xlu0 %3350
        %v3352 = vmul.f32 %v3351, %v1672
        %v3353 = vadd.f32 %v3352, 1e-05
        %v3354 = vrsqrt.pop %v3353
        %v3355 = vmul.f32 %v3347, %v3354
        %v3356 = vmul.f32 %v3355, %v3340
        %v3357 = vadd.f32 %v3356, %v3342
        %v3358 = vld [vmem:[%s17] sm:$0x1]
        %v3359 = vmul.f32 %v3357, %v3358
        %v3360 = vld [vmem:[%s18] sm:$0x1]
        %v3361 = vadd.f32 %v3359, %v3360
        %3362 = vst [vmem:[%s682] sm:$0x1] %v3361
        %s3363 = sand.u32 %s449, 1
        %s3364 = scalar_lea.sflag [#allocation4], %s3363
        %s3365 = sand.u32 %s449, 1
        %s3366 = scalar_lea.vmem [#allocation13], %s3365
        // Predicated region
        $region121: #{tpu_custom_call.1} parent=95 // pred_check
          %p3367 = pneg %p459
        $region122: #{tpu_custom_call.1} parent=95 // pred_check_branch
          %3369 = sbr.rel (%p3367) target = $region124
        $region123: #{tpu_custom_call.1} parent=95 // pred_region
          %s3371 = ssub.s32 16, 16
          %3372 = vsyncadd %s3364, %s3371
          %s3373 = smul.addr %s37, 16
          %s3374 = scalar_lea.hbm %s19, %s3373
          %s3376 = sshll.u32 %s3366, 4
          %s3377 = int_to_ptr.vmem [resolvable:$true] %s3376
          %3379 = dma.vmem_to_hbm [thread:$0]  %s3377, 16, %s3374, %s3364
        $region124: #{tpu_custom_call.1} parent=95 // pred_fallthru
          _
      $region96: #{tpu_custom_call.1} parent=5 // pred_fallthru
        _
      %p3380 = scmp.le.s32.totalorder 2, %s32
      // Predicated region
      $region125: #{tpu_custom_call.1} parent=5 // pred_check
        %p3381 = pneg %p3380
      $region126: #{tpu_custom_call.1} parent=5 // pred_check_branch
        %3383 = sbr.rel (%p3381) target = $region128
      $region127: #{tpu_custom_call.1} parent=5 // pred_region
        %s3384 = ssub.s32 %s32, 2
        // Predicated region
        $region129: #{tpu_custom_call.1} parent=127 // pred_check
          %p3385 = pneg %p465
        $region130: #{tpu_custom_call.1} parent=127 // pred_check_branch
          %3387 = sbr.rel (%p3385) target = $region132
        $region131: #{tpu_custom_call.1} parent=127 // pred_region
          %s3388 = sand.u32 %s450, 1
          %s3389 = scalar_lea.sflag [#allocation4], %s3388
          %s3390 = sand.u32 %s450, 1
          %s3391 = scalar_lea.vmem [#allocation13], %s3390
          %3392 = dma.done %s3389, 16
        $region132: #{tpu_custom_call.1} parent=127 // pred_fallthru
          _
      $region128: #{tpu_custom_call.1} parent=5 // pred_fallthru
        _
    $region6: #{tpu_custom_call.1} parent=1 // loop_footer
      %s36 = sadd.s32 1, %s32
    $region7: #{tpu_custom_call.1} parent=1 // loop_footer_branch
      %31 = sbr.rel target = $region3
    $region8: #{tpu_custom_call.1} parent=1 // loop_exit
      _
    %3393 = vsyncpa [#allocation3], 1
    %s3394 = scalar_lea.sflag [#allocation3], 1
    %3395 = vsyncpa %s3394, 1
    %3396 = vsyncpa [#allocation6], 1
    %3397 = vsyncpa [#allocation9], 1
    %3398 = vsyncpa [#allocation12], 1
    %3399 = vsyncpa [#allocation4], 1
    %s3400 = scalar_lea.sflag [#allocation4], 1
    %3401 = vsyncpa %s3400, 1

// kernel: tpu_custom_call.1
$region0: #{tpu_custom_call.1}
  #allocation0 [shape = 'u32[]', space=smem, size = 0x4, offset = 0x4, fixed_abs, tag = 'smem constant byte address 0x4 - core index']
  #allocation1 [shape = 'u32[144,128]{1,0:T(1,128)}', space=vmem, size = 0x12000, scoped, tag = 'internal scratch']
  %s0 = inlined_call_operand.vmem [shape: f32[2,9,128], index: 0, kind: input, shape index: {}]
  %s1 = inlined_call_operand.hbm [shape: bf16[2,128,128], index: 1, kind: input, shape index: {}]
  %s2 = inlined_call_operand.hbm [shape: bf16[2,128,128], index: 2, kind: input, shape index: {}]
  %s3 = inlined_call_operand.hbm [shape: bf16[2,128,128], index: 3, kind: input, shape index: {}]
  %s4 = inlined_call_operand.vmem [shape: f32[2,1,128], index: 4, kind: input, shape index: {}]
  %s5 = inlined_call_operand.vmem [shape: f32[2,1,128], index: 5, kind: input, shape index: {}]
  %s6 = inlined_call_operand.vmem [shape: f32[2,1,128], index: 6, kind: input, shape index: {}]
  %s7 = inlined_call_operand.hbm [shape: bf16[2,128,128], index: 7, kind: input, shape index: {}]
  %s8 = inlined_call_operand.vmem [shape: f32[2,1,128], index: 8, kind: input, shape index: {}]
  %s9 = inlined_call_operand.hbm [shape: bf16[2,128,256], index: 9, kind: input, shape index: {}]
  %s10 = inlined_call_operand.vmem [shape: f32[2,1,256], index: 10, kind: input, shape index: {}]
  %s11 = inlined_call_operand.hbm [shape: bf16[2,256,128], index: 11, kind: input, shape index: {}]
  %s12 = inlined_call_operand.vmem [shape: f32[2,1,128], index: 12, kind: input, shape index: {}]
  %s13 = inlined_call_operand.vmem [shape: f32[2,1,128], index: 13, kind: input, shape index: {}]
  %s14 = inlined_call_operand.vmem [shape: f32[2,1,128], index: 14, kind: input, shape index: {}]
  %s15 = inlined_call_operand.vmem [shape: f32[2,1,128], index: 15, kind: input, shape index: {}]
  %s16 = inlined_call_operand.vmem [shape: f32[2,1,128], index: 16, kind: input, shape index: {}]
  %s17 = inlined_call_operand.vmem [shape: f32[1,128], index: 17, kind: input, shape index: {}]
  %s18 = inlined_call_operand.vmem [shape: f32[1,128], index: 18, kind: input, shape index: {}]
  %s19 = inlined_call_operand.hbm [shape: f32[2,1,128], index: 19, kind: output, shape index: {}]
  %s20 = sld [smem:[#allocation0]]
  $region133: #{tpu_custom_call.1} parent=0
    _
  %s22 = ssub.s32 1, %s20
  %s23 = scalar_select 0, %s22, %s20
  $region1: #{tpu_custom_call.1} parent=0
    #allocation2 [shape = 'u8[65536]{0}', space=vmem, size = 0x10000, scoped, tag = 'input window, operand 1, single buffered']
    #allocation3 [shape = 's32[2]{0}', space=sflag, size = 0x8, scoped, tag = 'scoped memory for tpu_custom_call.1']
    #allocation4 [shape = 's32[2]{0}', space=sflag, size = 0x8, scoped, tag = 'scoped memory for tpu_custom_call.1']
    #allocation5 [shape = 'u8[65536]{0}', space=vmem, size = 0x10000, scoped, tag = 'input window, operand 2, single buffered']
    #allocation6 [shape = 's32[1]{0}', space=sflag, size = 0x4, scoped, tag = 'scoped memory for tpu_custom_call.1']
    #allocation7 [shape = 'u8[65536]{0}', space=vmem, size = 0x10000, scoped, tag = 'input window, operand 3, single buffered']
    #allocation8 [shape = 'u8[65536]{0}', space=vmem, size = 0x10000, scoped, tag = 'input window, operand 7, single buffered']
    #allocation9 [shape = 's32[1]{0}', space=sflag, size = 0x4, scoped, tag = 'scoped memory for tpu_custom_call.1']
    #allocation10 [shape = 'u8[131072]{0}', space=vmem, size = 0x20000, scoped, tag = 'input window, operand 9, single buffered']
    #allocation11 [shape = 'u8[131072]{0}', space=vmem, size = 0x20000, scoped, tag = 'input window, operand 11, single buffered']
    #allocation12 [shape = 's32[1]{0}', space=sflag, size = 0x4, scoped, tag = 'scoped memory for tpu_custom_call.1']
    #allocation13 [shape = 'u8[1024]{0}', space=vmem, size = 0x400, scoped, tag = 'output window, operand 0']
    %24 = vsyncpa [#allocation3], 0
    %25 = vsyncpa [#allocation6], 0
    %26 = vsyncpa [#allocation9], 0
    %27 = vsyncpa [#allocation12], 0
    %28 = vsyncpa [#allocation4], 0
    %s29 = scalar_lea.sflag [#allocation4], 1
    %30 = vsyncpa %s29, 0
    loop: start=0, step=1, limit=4
    $region2: #{tpu_custom_call.1} parent=1 // loop_pre_header
      _
    $region3: #{tpu_custom_call.1} parent=1 // loop_header
      %s32 = sphi 0, %s36
      %p33 = scmp.ge.s32.totalorder %s32, 4
      %s42 = sphi 0, %s44
      %s45 = sphi 0, %s42
      %s46 = sphi 0, %s45
      %s62 = sphi 0, %s46
      %s66 = sphi 0, %s66
      %s68 = sphi 0, %s66
      %s69 = sphi 0, %s68
      %s83 = sphi 0, %s69
      %s87 = sphi 0, %s87
      %s89 = sphi 0, %s87
      %s90 = sphi 0, %s89
      %s104 = sphi 0, %s90
      %s108 = sphi 0, %s108
      %s110 = sphi 0, %s108
      %s111 = sphi 0, %s110
      %s125 = sphi 0, %s111
      %s129 = sphi 0, %s129
      %s131 = sphi 0, %s129
      %s132 = sphi 0, %s131
      %s146 = sphi 0, %s132
      %s150 = sphi 0, %s150
      %s152 = sphi 0, %s150
      %s153 = sphi 0, %s152
      %s167 = sphi 0, %s153
      %s171 = sphi 0, %s171
      %s173 = sphi 0, %s171
      %s174 = sphi 0, %s173
      %s188 = sphi 0, %s174
      %s192 = sphi 0, %s192
      %s194 = sphi 0, %s192
      %s195 = sphi 0, %s194
      %s209 = sphi 0, %s195
      %s213 = sphi 0, %s213
      %s215 = sphi 0, %s213
      %s216 = sphi 0, %s215
      %s230 = sphi 0, %s216
      %s234 = sphi 0, %s234
      %s236 = sphi 0, %s234
      %s237 = sphi 0, %s236
      %s251 = sphi 0, %s237
      %s255 = sphi 0, %s255
      %s257 = sphi 0, %s255
      %s258 = sphi 0, %s257
      %s272 = sphi 0, %s258
      %s276 = sphi 0, %s276
      %s278 = sphi 0, %s276
      %s279 = sphi 0, %s278
      %s293 = sphi 0, %s279
      %s297 = sphi 0, %s297
      %s299 = sphi 0, %s297
      %s300 = sphi 0, %s299
      %s314 = sphi 0, %s300
      %s318 = sphi 0, %s318
      %s320 = sphi 0, %s318
      %s321 = sphi 0, %s320
      %s335 = sphi 0, %s321
      %s339 = sphi 0, %s339
      %s341 = sphi 0, %s339
      %s342 = sphi 0, %s341
      %s356 = sphi 0, %s342
      %s360 = sphi 0, %s360
      %s362 = sphi 0, %s360
      %s363 = sphi 0, %s362
      %s377 = sphi 0, %s363
      %s381 = sphi 0, %s381
      %s383 = sphi 0, %s381
      %s384 = sphi 0, %s383
      %s398 = sphi 0, %s384
      %s402 = sphi 0, %s402
      %s404 = sphi 0, %s402
      %s405 = sphi 0, %s404
      %s419 = sphi 0, %s405
      %s423 = sphi 0, %s423
      %s425 = sphi 0, %s423
      %s426 = sphi 0, %s425
      %s440 = sphi 0, %s426
      %s446 = sphi 0, %s448
      %s449 = sphi 0, %s446
      %s450 = sphi 0, %s449
      %s466 = sphi 0, %s450
    $region4: #{tpu_custom_call.1} parent=1 // loop_header_branch
      %35 = sbr.rel (%p33) target = $region8
    $region5: #{tpu_custom_call.1} parent=1 // loop_body
      %s37 = ssub.s32 %s32, 1
      %s38 = ssub.s32 %s32, 2
      %s39 = sadd.s32 %s32, 1
      %s40 = ssub.s32 %s32, %s39
      %p41 = scmp.eq.s32.totalorder %s40, 0
      %s43 = sadd.s32 %s42, 1
      %s44 = scalar_select %p41, %s42, %s43
      %p47 = pneg %p41
      %p48 = scmp.eq.s32.totalorder %s32, 1
      %p49 = por %p47, %p48
      %p50 = scmp.ne.s32.totalorder %s42, %s45
      %p51 = scmp.eq.s32.totalorder %s32, 0
      %p52 = por %p50, %p51
      %p53 = scmp.ne.s32.totalorder %s42, %s45
      %p54 = scmp.eq.s32.totalorder %s37, 1
      %p55 = por %p53, %p54
      %p56 = scmp.ne.s32.totalorder %s45, %s46
      %p57 = scmp.eq.s32.totalorder %s37, 0
      %p58 = por %p56, %p57
      %p59 = scmp.ne.s32.totalorder %s45, %s46
      %p60 = scmp.eq.s32.totalorder %s38, 1
      %p61 = por %p59, %p60
      %p63 = scmp.ne.s32.totalorder %s46, %s62
      %p64 = scmp.eq.s32.totalorder %s38, 0
      %p65 = por %p63, %p64
      %s67 = sadd.s32 %s66, 1
      %p70 = scmp.eq.s32.totalorder %s32, 1
      %p71 = scmp.ne.s32.totalorder %s66, %s68
      %p72 = scmp.eq.s32.totalorder %s32, 0
      %p73 = por %p71, %p72
      %p74 = scmp.ne.s32.totalorder %s66, %s68
      %p75 = scmp.eq.s32.totalorder %s37, 1
      %p76 = por %p74, %p75
      %p77 = scmp.ne.s32.totalorder %s68, %s69
      %p78 = scmp.eq.s32.totalorder %s37, 0
      %p79 = por %p77, %p78
      %p80 = scmp.ne.s32.totalorder %s68, %s69
      %p81 = scmp.eq.s32.totalorder %s38, 1
      %p82 = por %p80, %p81
      %p84 = scmp.ne.s32.totalorder %s69, %s83
      %p85 = scmp.eq.s32.totalorder %s38, 0
      %p86 = por %p84, %p85
      %s88 = sadd.s32 %s87, 1
      %p91 = scmp.eq.s32.totalorder %s32, 1
      %p92 = scmp.ne.s32.totalorder %s87, %s89
      %p93 = scmp.eq.s32.totalorder %s32, 0
      %p94 = por %p92, %p93
      %p95 = scmp.ne.s32.totalorder %s87, %s89
      %p96 = scmp.eq.s32.totalorder %s37, 1
      %p97 = por %p95, %p96
      %p98 = scmp.ne.s32.totalorder %s89, %s90
      %p99 = scmp.eq.s32.totalorder %s37, 0
      %p100 = por %p98, %p99
      %p101 = scmp.ne.s32.totalorder %s89, %s90
      %p102 = scmp.eq.s32.totalorder %s38, 1
      %p103 = por %p101, %p102
      %p105 = scmp.ne.s32.totalorder %s90, %s104
      %p106 = scmp.eq.s32.totalorder %s38, 0
      %p107 = por %p105, %p106
      %s109 = sadd.s32 %s108, 1
      %p112 = scmp.eq.s32.totalorder %s32, 1
      %p113 = scmp.ne.s32.totalorder %s108, %s110
      %p114 = scmp.eq.s32.totalorder %s32, 0
      %p115 = por %p113, %p114
      %p116 = scmp.ne.s32.totalorder %s108, %s110
      %p117 = scmp.eq.s32.totalorder %s37, 1
      %p118 = por %p116, %p117
      %p119 = scmp.ne.s32.totalorder %s110, %s111
      %p120 = scmp.eq.s32.totalorder %s37, 0
      %p121 = por %p119, %p120
      %p122 = scmp.ne.s32.totalorder %s110, %s111
      %p123 = scmp.eq.s32.totalorder %s38, 1
      %p124 = por %p122, %p123
      %p126 = scmp.ne.s32.totalorder %s111, %s125
      %p127 = scmp.eq.s32.totalorder %s38, 0
      %p128 = por %p126, %p127
      %s130 = sadd.s32 %s129, 1
      %p133 = scmp.eq.s32.totalorder %s32, 1
      %p134 = scmp.ne.s32.totalorder %s129, %s131
      %p135 = scmp.eq.s32.totalorder %s32, 0
      %p136 = por %p134, %p135
      %p137 = scmp.ne.s32.totalorder %s129, %s131
      %p138 = scmp.eq.s32.totalorder %s37, 1
      %p139 = por %p137, %p138
      %p140 = scmp.ne.s32.totalorder %s131, %s132
      %p141 = scmp.eq.s32.totalorder %s37, 0
      %p142 = por %p140, %p141
      %p143 = scmp.ne.s32.totalorder %s131, %s132
      %p144 = scmp.eq.s32.totalorder %s38, 1
      %p145 = por %p143, %p144
      %p147 = scmp.ne.s32.totalorder %s132, %s146
      %p148 = scmp.eq.s32.totalorder %s38, 0
      %p149 = por %p147, %p148
      %s151 = sadd.s32 %s150, 1
      %p154 = scmp.eq.s32.totalorder %s32, 1
      %p155 = scmp.ne.s32.totalorder %s150, %s152
      %p156 = scmp.eq.s32.totalorder %s32, 0
      %p157 = por %p155, %p156
      %p158 = scmp.ne.s32.totalorder %s150, %s152
      %p159 = scmp.eq.s32.totalorder %s37, 1
      %p160 = por %p158, %p159
      %p161 = scmp.ne.s32.totalorder %s152, %s153
      %p162 = scmp.eq.s32.totalorder %s37, 0
      %p163 = por %p161, %p162
      %p164 = scmp.ne.s32.totalorder %s152, %s153
      %p165 = scmp.eq.s32.totalorder %s38, 1
      %p166 = por %p164, %p165
      %p168 = scmp.ne.s32.totalorder %s153, %s167
      %p169 = scmp.eq.s32.totalorder %s38, 0
      %p170 = por %p168, %p169
      %s172 = sadd.s32 %s171, 1
      %p175 = scmp.eq.s32.totalorder %s32, 1
      %p176 = scmp.ne.s32.totalorder %s171, %s173
      %p177 = scmp.eq.s32.totalorder %s32, 0
      %p178 = por %p176, %p177
      %p179 = scmp.ne.s32.totalorder %s171, %s173
      %p180 = scmp.eq.s32.totalorder %s37, 1
      %p181 = por %p179, %p180
      %p182 = scmp.ne.s32.totalorder %s173, %s174
      %p183 = scmp.eq.s32.totalorder %s37, 0
      %p184 = por %p182, %p183
      %p185 = scmp.ne.s32.totalorder %s173, %s174
      %p186 = scmp.eq.s32.totalorder %s38, 1
      %p187 = por %p185, %p186
      %p189 = scmp.ne.s32.totalorder %s174, %s188
      %p190 = scmp.eq.s32.totalorder %s38, 0
      %p191 = por %p189, %p190
      %s193 = sadd.s32 %s192, 1
      %p196 = scmp.eq.s32.totalorder %s32, 1
      %p197 = scmp.ne.s32.totalorder %s192, %s194
      %p198 = scmp.eq.s32.totalorder %s32, 0
      %p199 = por %p197, %p198
      %p200 = scmp.ne.s32.totalorder %s192, %s194
      %p201 = scmp.eq.s32.totalorder %s37, 1
      %p202 = por %p200, %p201
      %p203 = scmp.ne.s32.totalorder %s194, %s195
      %p204 = scmp.eq.s32.totalorder %s37, 0
      %p205 = por %p203, %p204
      %p206 = scmp.ne.s32.totalorder %s194, %s195
      %p207 = scmp.eq.s32.totalorder %s38, 1
      %p208 = por %p206, %p207
      %p210 = scmp.ne.s32.totalorder %s195, %s209
      %p211 = scmp.eq.s32.totalorder %s38, 0
      %p212 = por %p210, %p211
      %s214 = sadd.s32 %s213, 1
      %p217 = scmp.eq.s32.totalorder %s32, 1
      %p218 = scmp.ne.s32.totalorder %s213, %s215
      %p219 = scmp.eq.s32.totalorder %s32, 0
      %p220 = por %p218, %p219
      %p221 = scmp.ne.s32.totalorder %s213, %s215
      %p222 = scmp.eq.s32.totalorder %s37, 1
      %p223 = por %p221, %p222
      %p224 = scmp.ne.s32.totalorder %s215, %s216
      %p225 = scmp.eq.s32.totalorder %s37, 0
      %p226 = por %p224, %p225
      %p227 = scmp.ne.s32.totalorder %s215, %s216
      %p228 = scmp.eq.s32.totalorder %s38, 1
      %p229 = por %p227, %p228
      %p231 = scmp.ne.s32.totalorder %s216, %s230
      %p232 = scmp.eq.s32.totalorder %s38, 0
      %p233 = por %p231, %p232
      %s235 = sadd.s32 %s234, 1
      %p238 = scmp.eq.s32.totalorder %s32, 1
      %p239 = scmp.ne.s32.totalorder %s234, %s236
      %p240 = scmp.eq.s32.totalorder %s32, 0
      %p241 = por %p239, %p240
      %p242 = scmp.ne.s32.totalorder %s234, %s236
      %p243 = scmp.eq.s32.totalorder %s37, 1
      %p244 = por %p242, %p243
      %p245 = scmp.ne.s32.totalorder %s236, %s237
      %p246 = scmp.eq.s32.totalorder %s37, 0
      %p247 = por %p245, %p246
      %p248 = scmp.ne.s32.totalorder %s236, %s237
      %p249 = scmp.eq.s32.totalorder %s38, 1
      %p250 = por %p248, %p249
      %p252 = scmp.ne.s32.totalorder %s237, %s251
      %p253 = scmp.eq.s32.totalorder %s38, 0
      %p254 = por %p252, %p253
      %s256 = sadd.s32 %s255, 1
      %p259 = scmp.eq.s32.totalorder %s32, 1
      %p260 = scmp.ne.s32.totalorder %s255, %s257
      %p261 = scmp.eq.s32.totalorder %s32, 0
      %p262 = por %p260, %p261
      %p263 = scmp.ne.s32.totalorder %s255, %s257
      %p264 = scmp.eq.s32.totalorder %s37, 1
      %p265 = por %p263, %p264
      %p266 = scmp.ne.s32.totalorder %s257, %s258
      %p267 = scmp.eq.s32.totalorder %s37, 0
      %p268 = por %p266, %p267
      %p269 = scmp.ne.s32.totalorder %s257, %s258
      %p270 = scmp.eq.s32.totalorder %s38, 1
      %p271 = por %p269, %p270
      %p273 = scmp.ne.s32.totalorder %s258, %s272
      %p274 = scmp.eq.s32.totalorder %s38, 0
      %p275 = por %p273, %p274
      %s277 = sadd.s32 %s276, 1
      %p280 = scmp.eq.s32.totalorder %s32, 1
      %p281 = scmp.ne.s32.totalorder %s276, %s278
      %p282 = scmp.eq.s32.totalorder %s32, 0
      %p283 = por %p281, %p282
      %p284 = scmp.ne.s32.totalorder %s276, %s278
      %p285 = scmp.eq.s32.totalorder %s37, 1
      %p286 = por %p284, %p285
      %p287 = scmp.ne.s32.totalorder %s278, %s279
      %p288 = scmp.eq.s32.totalorder %s37, 0
      %p289 = por %p287, %p288
      %p290 = scmp.ne.s32.totalorder %s278, %s279
      %p291 = scmp.eq.s32.totalorder %s38, 1
      %p292 = por %p290, %p291
      %p294 = scmp.ne.s32.totalorder %s279, %s293
      %p295 = scmp.eq.s32.totalorder %s38, 0
      %p296 = por %p294, %p295
      %s298 = sadd.s32 %s297, 1
      %p301 = scmp.eq.s32.totalorder %s32, 1
      %p302 = scmp.ne.s32.totalorder %s297, %s299
      %p303 = scmp.eq.s32.totalorder %s32, 0
      %p304 = por %p302, %p303
      %p305 = scmp.ne.s32.totalorder %s297, %s299
      %p306 = scmp.eq.s32.totalorder %s37, 1
      %p307 = por %p305, %p306
      %p308 = scmp.ne.s32.totalorder %s299, %s300
      %p309 = scmp.eq.s32.totalorder %s37, 0
      %p310 = por %p308, %p309
      %p311 = scmp.ne.s32.totalorder %s299, %s300
      %p312 = scmp.eq.s32.totalorder %s38, 1
      %p313 = por %p311, %p312
      %p315 = scmp.ne.s32.totalorder %s300, %s314
      %p316 = scmp.eq.s32.totalorder %s38, 0
      %p317 = por %p315, %p316
      %s319 = sadd.s32 %s318, 1
      %p322 = scmp.eq.s32.totalorder %s32, 1
      %p323 = scmp.ne.s32.totalorder %s318, %s320
      %p324 = scmp.eq.s32.totalorder %s32, 0
      %p325 = por %p323, %p324
      %p326 = scmp.ne.s32.totalorder %s318, %s320
      %p327 = scmp.eq.s32.totalorder %s37, 1
      %p328 = por %p326, %p327
      %p329 = scmp.ne.s32.totalorder %s320, %s321
      %p330 = scmp.eq.s32.totalorder %s37, 0
      %p331 = por %p329, %p330
      %p332 = scmp.ne.s32.totalorder %s320, %s321
      %p333 = scmp.eq.s32.totalorder %s38, 1
      %p334 = por %p332, %p333
      %p336 = scmp.ne.s32.totalorder %s321, %s335
      %p337 = scmp.eq.s32.totalorder %s38, 0
      %p338 = por %p336, %p337
      %s340 = sadd.s32 %s339, 1
      %p343 = scmp.eq.s32.totalorder %s32, 1
      %p344 = scmp.ne.s32.totalorder %s339, %s341
      %p345 = scmp.eq.s32.totalorder %s32, 0
      %p346 = por %p344, %p345
      %p347 = scmp.ne.s32.totalorder %s339, %s341
      %p348 = scmp.eq.s32.totalorder %s37, 1
      %p349 = por %p347, %p348
      %p350 = scmp.ne.s32.totalorder %s341, %s342
      %p351 = scmp.eq.s32.totalorder %s37, 0
      %p352 = por %p350, %p351
      %p353 = scmp.ne.s32.totalorder %s341, %s342
      %p354 = scmp.eq.s32.totalorder %s38, 1
      %p355 = por %p353, %p354
      %p357 = scmp.ne.s32.totalorder %s342, %s356
      %p358 = scmp.eq.s32.totalorder %s38, 0
      %p359 = por %p357, %p358
      %s361 = sadd.s32 %s360, 1
      %p364 = scmp.eq.s32.totalorder %s32, 1
      %p365 = scmp.ne.s32.totalorder %s360, %s362
      %p366 = scmp.eq.s32.totalorder %s32, 0
      %p367 = por %p365, %p366
      %p368 = scmp.ne.s32.totalorder %s360, %s362
      %p369 = scmp.eq.s32.totalorder %s37, 1
      %p370 = por %p368, %p369
      %p371 = scmp.ne.s32.totalorder %s362, %s363
      %p372 = scmp.eq.s32.totalorder %s37, 0
      %p373 = por %p371, %p372
      %p374 = scmp.ne.s32.totalorder %s362, %s363
      %p375 = scmp.eq.s32.totalorder %s38, 1
      %p376 = por %p374, %p375
      %p378 = scmp.ne.s32.totalorder %s363, %s377
      %p379 = scmp.eq.s32.totalorder %s38, 0
      %p380 = por %p378, %p379
      %s382 = sadd.s32 %s381, 1
      %p385 = scmp.eq.s32.totalorder %s32, 1
      %p386 = scmp.ne.s32.totalorder %s381, %s383
      %p387 = scmp.eq.s32.totalorder %s32, 0
      %p388 = por %p386, %p387
      %p389 = scmp.ne.s32.totalorder %s381, %s383
      %p390 = scmp.eq.s32.totalorder %s37, 1
      %p391 = por %p389, %p390
      %p392 = scmp.ne.s32.totalorder %s383, %s384
      %p393 = scmp.eq.s32.totalorder %s37, 0
      %p394 = por %p392, %p393
      %p395 = scmp.ne.s32.totalorder %s383, %s384
      %p396 = scmp.eq.s32.totalorder %s38, 1
      %p397 = por %p395, %p396
      %p399 = scmp.ne.s32.totalorder %s384, %s398
      %p400 = scmp.eq.s32.totalorder %s38, 0
      %p401 = por %p399, %p400
      %s403 = sadd.s32 %s402, 1
      %p406 = scmp.eq.s32.totalorder %s32, 1
      %p407 = scmp.ne.s32.totalorder %s402, %s404
      %p408 = scmp.eq.s32.totalorder %s32, 0
      %p409 = por %p407, %p408
      %p410 = scmp.ne.s32.totalorder %s402, %s404
      %p411 = scmp.eq.s32.totalorder %s37, 1
      %p412 = por %p410, %p411
      %p413 = scmp.ne.s32.totalorder %s404, %s405
      %p414 = scmp.eq.s32.totalorder %s37, 0
      %p415 = por %p413, %p414
      %p416 = scmp.ne.s32.totalorder %s404, %s405
      %p417 = scmp.eq.s32.totalorder %s38, 1
      %p418 = por %p416, %p417
      %p420 = scmp.ne.s32.totalorder %s405, %s419
      %p421 = scmp.eq.s32.totalorder %s38, 0
      %p422 = por %p420, %p421
      %s424 = sadd.s32 %s423, 1
      %p427 = scmp.eq.s32.totalorder %s32, 1
      %p428 = scmp.ne.s32.totalorder %s423, %s425
      %p429 = scmp.eq.s32.totalorder %s32, 0
      %p430 = por %p428, %p429
      %p431 = scmp.ne.s32.totalorder %s423, %s425
      %p432 = scmp.eq.s32.totalorder %s37, 1
      %p433 = por %p431, %p432
      %p434 = scmp.ne.s32.totalorder %s425, %s426
      %p435 = scmp.eq.s32.totalorder %s37, 0
      %p436 = por %p434, %p435
      %p437 = scmp.ne.s32.totalorder %s425, %s426
      %p438 = scmp.eq.s32.totalorder %s38, 1
      %p439 = por %p437, %p438
      %p441 = scmp.ne.s32.totalorder %s426, %s440
      %p442 = scmp.eq.s32.totalorder %s38, 0
      %p443 = por %p441, %p442
      %s444 = ssub.s32 %s32, %s39
      %p445 = scmp.eq.s32.totalorder %s444, 0
      %s447 = sadd.s32 %s446, 1
      %s448 = scalar_select %p445, %s446, %s447
      %p451 = pneg %p445
      %p452 = scmp.eq.s32.totalorder %s32, 1
      %p453 = por %p451, %p452
      %p454 = scmp.ne.s32.totalorder %s446, %s449
      %p455 = scmp.eq.s32.totalorder %s32, 0
      %p456 = por %p454, %p455
      %p457 = scmp.ne.s32.totalorder %s446, %s449
      %p458 = scmp.eq.s32.totalorder %s37, 1
      %p459 = por %p457, %p458
      %p460 = scmp.ne.s32.totalorder %s449, %s450
      %p461 = scmp.eq.s32.totalorder %s37, 0
      %p462 = por %p460, %p461
      %p463 = scmp.ne.s32.totalorder %s449, %s450
      %p464 = scmp.eq.s32.totalorder %s38, 1
      %p465 = por %p463, %p464
      %p467 = scmp.ne.s32.totalorder %s450, %s466
      %p468 = scmp.eq.s32.totalorder %s38, 0
      %p469 = por %p467, %p468
      %p470 = scmp.le.s32.totalorder 1, %s32
      %p471 = scmp.lt.s32.totalorder %s32, 3
      %p472 = pnand %p470, %p471
      %p473 = pneg %p472
      // Predicated region
      $region9: #{tpu_custom_call.1} parent=5 // pred_check
        _
      $region10: #{tpu_custom_call.1} parent=5 // pred_check_branch
        %475 = sbr.rel (%p472) target = $region12
      $region11: #{tpu_custom_call.1} parent=5 // pred_region
        %s476 = ssub.s32 %s32, 1
        // Predicated region
        $region13: #{tpu_custom_call.1} parent=11 // pred_check
          %p477 = pneg %p79
        $region14: #{tpu_custom_call.1} parent=11 // pred_check_branch
          %479 = sbr.rel (%p477) target = $region16
        $region15: #{tpu_custom_call.1} parent=11 // pred_region
          %s481 = ssub.s32 2048, 2048
          %482 = vsyncadd [#allocation3], %s481
          %s483 = sshll.u32 [#allocation2], 4
          %s484 = int_to_ptr.vmem [resolvable:$true] %s483
          %489 = dma.hbm_to_vmem [thread:$0]  %s1, 2048, %s484, [#allocation3], 64, 64, 4
        $region16: #{tpu_custom_call.1} parent=11 // pred_fallthru
          _
        // Predicated region
        $region17: #{tpu_custom_call.1} parent=11 // pred_check
          %p490 = pneg %p100
        $region18: #{tpu_custom_call.1} parent=11 // pred_check_branch
          %492 = sbr.rel (%p490) target = $region20
        $region19: #{tpu_custom_call.1} parent=11 // pred_region
          %s494 = ssub.s32 2048, 2048
          %495 = vsyncadd [#allocation6], %s494
          %s496 = sshll.u32 [#allocation5], 4
          %s497 = int_to_ptr.vmem [resolvable:$true] %s496
          %502 = dma.hbm_to_vmem [thread:$0]  %s2, 2048, %s497, [#allocation6], 64, 64, 4
        $region20: #{tpu_custom_call.1} parent=11 // pred_fallthru
          _
        // Predicated region
        $region21: #{tpu_custom_call.1} parent=11 // pred_check
          %p503 = pneg %p121
        $region22: #{tpu_custom_call.1} parent=11 // pred_check_branch
          %505 = sbr.rel (%p503) target = $region24
        $region23: #{tpu_custom_call.1} parent=11 // pred_region
          %s507 = ssub.s32 2048, 2048
          %508 = vsyncadd [#allocation6], %s507
          %s509 = sshll.u32 [#allocation7], 4
          %s510 = int_to_ptr.vmem [resolvable:$true] %s509
          %515 = dma.hbm_to_vmem [thread:$0]  %s3, 2048, %s510, [#allocation6], 64, 64, 4
        $region24: #{tpu_custom_call.1} parent=11 // pred_fallthru
          _
        // Predicated region
        $region25: #{tpu_custom_call.1} parent=11 // pred_check
          %p516 = pneg %p142
        $region26: #{tpu_custom_call.1} parent=11 // pred_check_branch
          %518 = sbr.rel (%p516) target = $region28
        $region27: #{tpu_custom_call.1} parent=11 // pred_region
          _
        $region28: #{tpu_custom_call.1} parent=11 // pred_fallthru
          _
        // Predicated region
        $region29: #{tpu_custom_call.1} parent=11 // pred_check
          %p519 = pneg %p163
        $region30: #{tpu_custom_call.1} parent=11 // pred_check_branch
          %521 = sbr.rel (%p519) target = $region32
        $region31: #{tpu_custom_call.1} parent=11 // pred_region
          _
        $region32: #{tpu_custom_call.1} parent=11 // pred_fallthru
          _
        // Predicated region
        $region33: #{tpu_custom_call.1} parent=11 // pred_check
          %p522 = pneg %p184
        $region34: #{tpu_custom_call.1} parent=11 // pred_check_branch
          %524 = sbr.rel (%p522) target = $region36
        $region35: #{tpu_custom_call.1} parent=11 // pred_region
          _
        $region36: #{tpu_custom_call.1} parent=11 // pred_fallthru
          _
        // Predicated region
        $region37: #{tpu_custom_call.1} parent=11 // pred_check
          %p525 = pneg %p205
        $region38: #{tpu_custom_call.1} parent=11 // pred_check_branch
          %527 = sbr.rel (%p525) target = $region40
        $region39: #{tpu_custom_call.1} parent=11 // pred_region
          %s529 = ssub.s32 2048, 2048
          %530 = vsyncadd [#allocation9], %s529
          %s531 = sshll.u32 [#allocation8], 4
          %s532 = int_to_ptr.vmem [resolvable:$true] %s531
          %537 = dma.hbm_to_vmem [thread:$0]  %s7, 2048, %s532, [#allocation9], 64, 64, 4
        $region40: #{tpu_custom_call.1} parent=11 // pred_fallthru
          _
        // Predicated region
        $region41: #{tpu_custom_call.1} parent=11 // pred_check
          %p538 = pneg %p226
        $region42: #{tpu_custom_call.1} parent=11 // pred_check_branch
          %540 = sbr.rel (%p538) target = $region44
        $region43: #{tpu_custom_call.1} parent=11 // pred_region
          _
        $region44: #{tpu_custom_call.1} parent=11 // pred_fallthru
          _
        // Predicated region
        $region45: #{tpu_custom_call.1} parent=11 // pred_check
          %p541 = pneg %p247
        $region46: #{tpu_custom_call.1} parent=11 // pred_check_branch
          %543 = sbr.rel (%p541) target = $region48
        $region47: #{tpu_custom_call.1} parent=11 // pred_region
          %s545 = ssub.s32 4096, 4096
          %546 = vsyncadd [#allocation9], %s545
          %s547 = sshll.u32 [#allocation10], 4
          %s548 = int_to_ptr.vmem [resolvable:$true] %s547
          %553 = dma.hbm_to_vmem [thread:$0]  %s9, 4096, %s548, [#allocation9], 128, 128, 8
        $region48: #{tpu_custom_call.1} parent=11 // pred_fallthru
          _
        // Predicated region
        $region49: #{tpu_custom_call.1} parent=11 // pred_check
          %p554 = pneg %p268
        $region50: #{tpu_custom_call.1} parent=11 // pred_check_branch
          %556 = sbr.rel (%p554) target = $region52
        $region51: #{tpu_custom_call.1} parent=11 // pred_region
          _
        $region52: #{tpu_custom_call.1} parent=11 // pred_fallthru
          _
        // Predicated region
        $region53: #{tpu_custom_call.1} parent=11 // pred_check
          %p557 = pneg %p289
        $region54: #{tpu_custom_call.1} parent=11 // pred_check_branch
          %559 = sbr.rel (%p557) target = $region56
        $region55: #{tpu_custom_call.1} parent=11 // pred_region
          %s561 = ssub.s32 4096, 4096
          %562 = vsyncadd [#allocation12], %s561
          %s563 = sshll.u32 [#allocation11], 4
          %s564 = int_to_ptr.vmem [resolvable:$true] %s563
          %569 = dma.hbm_to_vmem [thread:$0]  %s11, 4096, %s564, [#allocation12], 64, 64, 4
        $region56: #{tpu_custom_call.1} parent=11 // pred_fallthru
          _
        // Predicated region
        $region57: #{tpu_custom_call.1} parent=11 // pred_check
          %p570 = pneg %p310
        $region58: #{tpu_custom_call.1} parent=11 // pred_check_branch
          %572 = sbr.rel (%p570) target = $region60
        $region59: #{tpu_custom_call.1} parent=11 // pred_region
          _
        $region60: #{tpu_custom_call.1} parent=11 // pred_fallthru
          _
        // Predicated region
        $region61: #{tpu_custom_call.1} parent=11 // pred_check
          %p573 = pneg %p331
        $region62: #{tpu_custom_call.1} parent=11 // pred_check_branch
          %575 = sbr.rel (%p573) target = $region64
        $region63: #{tpu_custom_call.1} parent=11 // pred_region
          _
        $region64: #{tpu_custom_call.1} parent=11 // pred_fallthru
          _
        // Predicated region
        $region65: #{tpu_custom_call.1} parent=11 // pred_check
          %p576 = pneg %p352
        $region66: #{tpu_custom_call.1} parent=11 // pred_check_branch
          %578 = sbr.rel (%p576) target = $region68
        $region67: #{tpu_custom_call.1} parent=11 // pred_region
          _
        $region68: #{tpu_custom_call.1} parent=11 // pred_fallthru
          _
        // Predicated region
        $region69: #{tpu_custom_call.1} parent=11 // pred_check
          %p579 = pneg %p373
        $region70: #{tpu_custom_call.1} parent=11 // pred_check_branch
          %581 = sbr.rel (%p579) target = $region72
        $region71: #{tpu_custom_call.1} parent=11 // pred_region
          _
        $region72: #{tpu_custom_call.1} parent=11 // pred_fallthru
          _
        // Predicated region
        $region73: #{tpu_custom_call.1} parent=11 // pred_check
          %p582 = pneg %p394
        $region74: #{tpu_custom_call.1} parent=11 // pred_check_branch
          %584 = sbr.rel (%p582) target = $region76
        $region75: #{tpu_custom_call.1} parent=11 // pred_region
          _
        $region76: #{tpu_custom_call.1} parent=11 // pred_fallthru
          _
        // Predicated region
        $region77: #{tpu_custom_call.1} parent=11 // pred_check
          %p585 = pneg %p415
        $region78: #{tpu_custom_call.1} parent=11 // pred_check_branch
          %587 = sbr.rel (%p585) target = $region80
        $region79: #{tpu_custom_call.1} parent=11 // pred_region
          _
        $region80: #{tpu_custom_call.1} parent=11 // pred_fallthru
          _
        // Predicated region
        $region81: #{tpu_custom_call.1} parent=11 // pred_check
          %p588 = pneg %p436
        $region82: #{tpu_custom_call.1} parent=11 // pred_check_branch
          %590 = sbr.rel (%p588) target = $region84
        $region83: #{tpu_custom_call.1} parent=11 // pred_region
          _
        $region84: #{tpu_custom_call.1} parent=11 // pred_fallthru
          _
      $region12: #{tpu_custom_call.1} parent=5 // pred_fallthru
        _
      %p591 = scmp.lt.s32.totalorder %s32, 2
      // Predicated region
      $region85: #{tpu_custom_call.1} parent=5 // pred_check
        %p592 = pneg %p591
      $region86: #{tpu_custom_call.1} parent=5 // pred_check_branch
        %594 = sbr.rel (%p592) target = $region88
      $region87: #{tpu_custom_call.1} parent=5 // pred_region
        // Predicated region
        $region89: #{tpu_custom_call.1} parent=87 // pred_check
          %p595 = pneg %p52
        $region90: #{tpu_custom_call.1} parent=87 // pred_check_branch
          %597 = sbr.rel (%p595) target = $region92
        $region91: #{tpu_custom_call.1} parent=87 // pred_region
          %p598 = scmp.lt.s32.totalorder %s32, 1
          %s599 = scalar_select %p598, %s32, 1
          %s600 = smul.addr %s599, 2
          %s601 = smul.addr %s600, 8
          %s602 = scalar_lea.vmem %s0, %s601
        $region92: #{tpu_custom_call.1} parent=87 // pred_fallthru
          _
      $region88: #{tpu_custom_call.1} parent=5 // pred_fallthru
        _
      %p603 = scmp.le.s32.totalorder 1, %s32
      %p604 = scmp.lt.s32.totalorder %s32, 3
      %p605 = pnand %p603, %p604
      %p606 = pneg %p605
      // Predicated region
      $region93: #{tpu_custom_call.1} parent=5 // pred_check
        _
      $region94: #{tpu_custom_call.1} parent=5 // pred_check_branch
        %608 = sbr.rel (%p605) target = $region96
      $region95: #{tpu_custom_call.1} parent=5 // pred_region
        %s609 = ssub.s32 %s32, 1
        // Predicated region
        $region97: #{tpu_custom_call.1} parent=95 // pred_check
          %p610 = pneg %p79
        $region98: #{tpu_custom_call.1} parent=95 // pred_check_branch
          %612 = sbr.rel (%p610) target = $region100
        $region99: #{tpu_custom_call.1} parent=95 // pred_region
          %613 = dma.done [#allocation3], 2048
        $region100: #{tpu_custom_call.1} parent=95 // pred_fallthru
          _
        // Predicated region
        $region101: #{tpu_custom_call.1} parent=95 // pred_check
          %p614 = pneg %p100
        $region102: #{tpu_custom_call.1} parent=95 // pred_check_branch
          %616 = sbr.rel (%p614) target = $region104
        $region103: #{tpu_custom_call.1} parent=95 // pred_region
          %617 = dma.done [#allocation6], 2048
        $region104: #{tpu_custom_call.1} parent=95 // pred_fallthru
          _
        // Predicated region
        $region105: #{tpu_custom_call.1} parent=95 // pred_check
          %p618 = pneg %p121
        $region106: #{tpu_custom_call.1} parent=95 // pred_check_branch
          %620 = sbr.rel (%p618) target = $region108
        $region107: #{tpu_custom_call.1} parent=95 // pred_region
          %621 = dma.done [#allocation6], 2048
        $region108: #{tpu_custom_call.1} parent=95 // pred_fallthru
          _
        // Predicated region
        $region109: #{tpu_custom_call.1} parent=95 // pred_check
          %p622 = pneg %p205
        $region110: #{tpu_custom_call.1} parent=95 // pred_check_branch
          %624 = sbr.rel (%p622) target = $region112
        $region111: #{tpu_custom_call.1} parent=95 // pred_region
          %625 = dma.done [#allocation9], 2048
        $region112: #{tpu_custom_call.1} parent=95 // pred_fallthru
          _
        // Predicated region
        $region113: #{tpu_custom_call.1} parent=95 // pred_check
          %p626 = pneg %p247
        $region114: #{tpu_custom_call.1} parent=95 // pred_check_branch
          %628 = sbr.rel (%p626) target = $region116
        $region115: #{tpu_custom_call.1} parent=95 // pred_region
          %629 = dma.done [#allocation9], 4096
        $region116: #{tpu_custom_call.1} parent=95 // pred_fallthru
          _
        // Predicated region
        $region117: #{tpu_custom_call.1} parent=95 // pred_check
          %p630 = pneg %p289
        $region118: #{tpu_custom_call.1} parent=95 // pred_check_branch
          %632 = sbr.rel (%p630) target = $region120
        $region119: #{tpu_custom_call.1} parent=95 // pred_region
          %633 = dma.done [#allocation12], 4096
        $region120: #{tpu_custom_call.1} parent=95 // pred_fallthru
          _
        %p634 = scmp.lt.s32.totalorder %s37, 1
        %s635 = scalar_select %p634, %s37, 1
        %s636 = smul.addr %s635, 2
        %s637 = smul.addr %s636, 8
        %s638 = scalar_lea.vmem %s0, %s637
        %p639 = pneg %p58
        %p640 = pneg %p55
        %p641 = pneg %p79
        %p642 = pneg %p76
        %p643 = pneg %p100
        %p644 = pneg %p97
        %p645 = pneg %p121
        %p646 = pneg %p118
        %p647 = pneg %p142
        %p648 = pneg %p139
        %p649 = pneg %p163
        %p650 = pneg %p160
        %p651 = pneg %p184
        %p652 = pneg %p181
        %p653 = pneg %p205
        %p654 = pneg %p202
        %p655 = pneg %p226
        %p656 = pneg %p223
        %p657 = pneg %p247
        %p658 = pneg %p244
        %p659 = pneg %p268
        %p660 = pneg %p265
        %p661 = pneg %p289
        %p662 = pneg %p286
        %p663 = pneg %p310
        %p664 = pneg %p307
        %p665 = pneg %p331
        %p666 = pneg %p328
        %p667 = pneg %p352
        %p668 = pneg %p349
        %p669 = pneg %p373
        %p670 = pneg %p370
        %p671 = pneg %p394
        %p672 = pneg %p391
        %p673 = pneg %p415
        %p674 = pneg %p412
        %p675 = pneg %p436
        %p676 = pneg %p433
        %p677 = pneg %p462
        %p678 = pneg %p459
        %s679 = sand.u32 %s449, 1
        %s680 = scalar_lea.sflag [#allocation4], %s679
        %s681 = sand.u32 %s449, 1
        %s682 = scalar_lea.vmem [#allocation13], %s681
        %p683 = scmp.lt.s32.totalorder %s37, 1
        %s684 = scalar_select %p683, %s37, 1
        %s685 = smul.addr %s684, 2
        %s686 = smul.addr %s685, 8
        %s687 = scalar_lea.vmem %s0, %s686
        %v689 = vld [vmem:[%s687] sm:$0xff]
        %v690 = vld [vmem:[%s687 + $0x8] sm:$0x1]
        %v691 = vpack.c.bf16 %v690, %v689
        %v692 = vld [vmem:[#allocation2] sm:$0xf]
        %v693 = vld [vmem:[#allocation2 + $0x4] sm:$0xf]
        %v694 = vld [vmem:[#allocation2 + $0x8] sm:$0xf]
        %v695 = vld [vmem:[#allocation2 + $0xc] sm:$0xf]
        %v696 = vld [vmem:[#allocation2 + $0x10] sm:$0xf]
        %v697 = vld [vmem:[#allocation2 + $0x14] sm:$0xf]
        %v698 = vld [vmem:[#allocation2 + $0x18] sm:$0xf]
        %v699 = vld [vmem:[#allocation2 + $0x1c] sm:$0xf]
        %v700 = vld [vmem:[#allocation2 + $0x20] sm:$0xf]
        %v701 = vld [vmem:[#allocation2 + $0x24] sm:$0xf]
        %v702 = vld [vmem:[#allocation2 + $0x28] sm:$0xf]
        %v703 = vld [vmem:[#allocation2 + $0x2c] sm:$0xf]
        %v704 = vld [vmem:[#allocation2 + $0x30] sm:$0xf]
        %v705 = vld [vmem:[#allocation2 + $0x34] sm:$0xf]
        %v706 = vld [vmem:[#allocation2 + $0x38] sm:$0xf]
        %v707 = vld [vmem:[#allocation2 + $0x3c] sm:$0xf]
        %v708 = vld [vmem:[%s4] sm:$0x1]
        %v710 = vlaneseq
        %v711 = vshrl.u32 %v710, 7
        %v712 = vsub.s32 0, %v711
        %v713 = vrot.slane %v708, %v712
        %v731 = vunpack.c.l.b16 %v692
        %v732 = vunpack.c.l.b16 %v693
        %v733 = vunpack.c.l.b16 %v694
        %v734 = vunpack.c.l.b16 %v695
        %v735 = vunpack.c.l.b16 %v696
        %v736 = vunpack.c.l.b16 %v697
        %v737 = vunpack.c.l.b16 %v698
        %v738 = vunpack.c.l.b16 %v699
        %v739 = vunpack.c.l.b16 %v700
        %v740 = vunpack.c.l.b16 %v701
        %v741 = vunpack.c.l.b16 %v702
        %v742 = vunpack.c.l.b16 %v703
        %v743 = vunpack.c.l.b16 %v704
        %v744 = vunpack.c.l.b16 %v705
        %v745 = vunpack.c.l.b16 %v706
        %v746 = vunpack.c.l.b16 %v707
        %v747 = vpack.c.b16 %v732, %v731
        %v748 = vpack.c.b16 %v734, %v733
        %v749 = vpack.c.b16 %v736, %v735
        %v750 = vpack.c.b16 %v738, %v737
        %v751 = vpack.c.b16 %v740, %v739
        %v752 = vpack.c.b16 %v742, %v741
        %v753 = vpack.c.b16 %v744, %v743
        %v754 = vpack.c.b16 %v746, %v745
        %763 = vmatprep.subr.bf16.mxu0 0
        %764 = vmatpush1.bf16.msra.mxu0 %v754
        %765 = vmatprep.subr.bf16.mxu0 0
        %766 = vmatpush1.bf16.msra.mxu0 %v753
        %767 = vmatprep.subr.bf16.mxu0 0
        %768 = vmatpush1.bf16.msra.mxu0 %v752
        %769 = vmatprep.subr.bf16.mxu0 0
        %770 = vmatpush1.bf16.msra.mxu0 %v751
        %771 = vmatprep.subr.bf16.mxu0 0
        %772 = vmatpush1.bf16.msra.mxu0 %v750
        %773 = vmatprep.subr.bf16.mxu0 0
        %774 = vmatpush1.bf16.msra.mxu0 %v749
        %775 = vmatprep.subr.bf16.mxu0 0
        %776 = vmatpush1.bf16.msra.mxu0 %v748
        %777 = vmatprep.subr.bf16.mxu0 0
        %778 = vmatpush1.bf16.msra.mxu0 %v747
        %779 = vmatprep.subr.bf16.mxu0 0
        %780 = vmatpush2.bf16.msra.mxu0 0
        %781 = vmatprep.subr.bf16.mxu0 0
        %782 = vmatpush2.bf16.msra.mxu0 0
        %783 = vmatprep.subr.bf16.mxu0 0
        %784 = vmatpush2.bf16.msra.mxu0 0
        %785 = vmatprep.subr.bf16.mxu0 0
        %786 = vmatpush2.bf16.msra.mxu0 0
        %787 = vmatprep.subr.bf16.mxu0 0
        %788 = vmatpush2.bf16.msra.mxu0 0
        %789 = vmatprep.subr.bf16.mxu0 0
        %790 = vmatpush2.bf16.msra.mxu0 0
        %791 = vmatprep.subr.bf16.mxu0 0
        %792 = vmatpush2.bf16.msra.mxu0 0
        %793 = vmatprep.subr.bf16.mxu0 0
        %794 = vmatpush2.bf16.msra.mxu0 0
        %795 = vmatprep.mubr.bf16.mxu0 0
        %796 = vmatmul.mubr.bf16.gmra.mxu0 %v691
        %v797 = vpop.f32.mrf.mxu0
        %v798 = vadd.f32 %v713, %v797
        %v799 = vpop.f32.mrf.mxu0
        %v800 = vpop.f32.mrf.mxu0
        %v801 = vadd.f32 %v713, %v800
        %v802 = vpop.f32.mrf.mxu0
        %803 = vdwg.mxu0
        %v804 = vld [vmem:[#allocation5] sm:$0xf]
        %v805 = vld [vmem:[#allocation5 + $0x4] sm:$0xf]
        %v806 = vld [vmem:[#allocation5 + $0x8] sm:$0xf]
        %v807 = vld [vmem:[#allocation5 + $0xc] sm:$0xf]
        %v808 = vld [vmem:[#allocation5 + $0x10] sm:$0xf]
        %v809 = vld [vmem:[#allocation5 + $0x14] sm:$0xf]
        %v810 = vld [vmem:[#allocation5 + $0x18] sm:$0xf]
        %v811 = vld [vmem:[#allocation5 + $0x1c] sm:$0xf]
        %v812 = vld [vmem:[#allocation5 + $0x20] sm:$0xf]
        %v813 = vld [vmem:[#allocation5 + $0x24] sm:$0xf]
        %v814 = vld [vmem:[#allocation5 + $0x28] sm:$0xf]
        %v815 = vld [vmem:[#allocation5 + $0x2c] sm:$0xf]
        %v816 = vld [vmem:[#allocation5 + $0x30] sm:$0xf]
        %v817 = vld [vmem:[#allocation5 + $0x34] sm:$0xf]
        %v818 = vld [vmem:[#allocation5 + $0x38] sm:$0xf]
        %v819 = vld [vmem:[#allocation5 + $0x3c] sm:$0xf]
        %v820 = vld [vmem:[%s5] sm:$0x1]
        %v822 = vlaneseq
        %v823 = vshrl.u32 %v822, 7
        %v824 = vsub.s32 0, %v823
        %v825 = vrot.slane %v820, %v824
        %v843 = vunpack.c.l.b16 %v804
        %v844 = vunpack.c.l.b16 %v805
        %v845 = vunpack.c.l.b16 %v806
        %v846 = vunpack.c.l.b16 %v807
        %v847 = vunpack.c.l.b16 %v808
        %v848 = vunpack.c.l.b16 %v809
        %v849 = vunpack.c.l.b16 %v810
        %v850 = vunpack.c.l.b16 %v811
        %v851 = vunpack.c.l.b16 %v812
        %v852 = vunpack.c.l.b16 %v813
        %v853 = vunpack.c.l.b16 %v814
        %v854 = vunpack.c.l.b16 %v815
        %v855 = vunpack.c.l.b16 %v816
        %v856 = vunpack.c.l.b16 %v817
        %v857 = vunpack.c.l.b16 %v818
        %v858 = vunpack.c.l.b16 %v819
        %v859 = vpack.c.b16 %v844, %v843
        %v860 = vpack.c.b16 %v846, %v845
        %v861 = vpack.c.b16 %v848, %v847
        %v862 = vpack.c.b16 %v850, %v849
        %v863 = vpack.c.b16 %v852, %v851
        %v864 = vpack.c.b16 %v854, %v853
        %v865 = vpack.c.b16 %v856, %v855
        %v866 = vpack.c.b16 %v858, %v857
        %875 = vmatprep.subr.bf16.mxu0 0
        %876 = vmatpush1.bf16.msra.mxu0 %v866
        %877 = vmatprep.subr.bf16.mxu0 0
        %878 = vmatpush1.bf16.msra.mxu0 %v865
        %879 = vmatprep.subr.bf16.mxu0 0
        %880 = vmatpush1.bf16.msra.mxu0 %v864
        %881 = vmatprep.subr.bf16.mxu0 0
        %882 = vmatpush1.bf16.msra.mxu0 %v863
        %883 = vmatprep.subr.bf16.mxu0 0
        %884 = vmatpush1.bf16.msra.mxu0 %v862
        %885 = vmatprep.subr.bf16.mxu0 0
        %886 = vmatpush1.bf16.msra.mxu0 %v861
        %887 = vmatprep.subr.bf16.mxu0 0
        %888 = vmatpush1.bf16.msra.mxu0 %v860
        %889 = vmatprep.subr.bf16.mxu0 0
        %890 = vmatpush1.bf16.msra.mxu0 %v859
        %891 = vmatprep.subr.bf16.mxu0 0
        %892 = vmatpush2.bf16.msra.mxu0 0
        %893 = vmatprep.subr.bf16.mxu0 0
        %894 = vmatpush2.bf16.msra.mxu0 0
        %895 = vmatprep.subr.bf16.mxu0 0
        %896 = vmatpush2.bf16.msra.mxu0 0
        %897 = vmatprep.subr.bf16.mxu0 0
        %898 = vmatpush2.bf16.msra.mxu0 0
        %899 = vmatprep.subr.bf16.mxu0 0
        %900 = vmatpush2.bf16.msra.mxu0 0
        %901 = vmatprep.subr.bf16.mxu0 0
        %902 = vmatpush2.bf16.msra.mxu0 0
        %903 = vmatprep.subr.bf16.mxu0 0
        %904 = vmatpush2.bf16.msra.mxu0 0
        %905 = vmatprep.subr.bf16.mxu0 0
        %906 = vmatpush2.bf16.msra.mxu0 0
        %907 = vmatprep.mubr.bf16.mxu0 0
        %908 = vmatmul.mubr.bf16.gmra.mxu0 %v691
        %v909 = vpop.f32.mrf.mxu0
        %v910 = vadd.f32 %v825, %v909
        %v911 = vpop.f32.mrf.mxu0
        %v912 = vpop.f32.mrf.mxu0
        %v913 = vadd.f32 %v825, %v912
        %v914 = vpop.f32.mrf.mxu0
        %915 = vdwg.mxu0
        %v916 = vld [vmem:[#allocation7] sm:$0xf]
        %v917 = vld [vmem:[#allocation7 + $0x4] sm:$0xf]
        %v918 = vld [vmem:[#allocation7 + $0x8] sm:$0xf]
        %v919 = vld [vmem:[#allocation7 + $0xc] sm:$0xf]
        %v920 = vld [vmem:[#allocation7 + $0x10] sm:$0xf]
        %v921 = vld [vmem:[#allocation7 + $0x14] sm:$0xf]
        %v922 = vld [vmem:[#allocation7 + $0x18] sm:$0xf]
        %v923 = vld [vmem:[#allocation7 + $0x1c] sm:$0xf]
        %v924 = vld [vmem:[#allocation7 + $0x20] sm:$0xf]
        %v925 = vld [vmem:[#allocation7 + $0x24] sm:$0xf]
        %v926 = vld [vmem:[#allocation7 + $0x28] sm:$0xf]
        %v927 = vld [vmem:[#allocation7 + $0x2c] sm:$0xf]
        %v928 = vld [vmem:[#allocation7 + $0x30] sm:$0xf]
        %v929 = vld [vmem:[#allocation7 + $0x34] sm:$0xf]
        %v930 = vld [vmem:[#allocation7 + $0x38] sm:$0xf]
        %v931 = vld [vmem:[#allocation7 + $0x3c] sm:$0xf]
        %v932 = vld [vmem:[%s6] sm:$0x1]
        %v934 = vlaneseq
        %v935 = vshrl.u32 %v934, 7
        %v936 = vsub.s32 0, %v935
        %v937 = vrot.slane %v932, %v936
        %v955 = vunpack.c.l.b16 %v916
        %v956 = vunpack.c.l.b16 %v917
        %v957 = vunpack.c.l.b16 %v918
        %v958 = vunpack.c.l.b16 %v919
        %v959 = vunpack.c.l.b16 %v920
        %v960 = vunpack.c.l.b16 %v921
        %v961 = vunpack.c.l.b16 %v922
        %v962 = vunpack.c.l.b16 %v923
        %v963 = vunpack.c.l.b16 %v924
        %v964 = vunpack.c.l.b16 %v925
        %v965 = vunpack.c.l.b16 %v926
        %v966 = vunpack.c.l.b16 %v927
        %v967 = vunpack.c.l.b16 %v928
        %v968 = vunpack.c.l.b16 %v929
        %v969 = vunpack.c.l.b16 %v930
        %v970 = vunpack.c.l.b16 %v931
        %v971 = vpack.c.b16 %v956, %v955
        %v972 = vpack.c.b16 %v958, %v957
        %v973 = vpack.c.b16 %v960, %v959
        %v974 = vpack.c.b16 %v962, %v961
        %v975 = vpack.c.b16 %v964, %v963
        %v976 = vpack.c.b16 %v966, %v965
        %v977 = vpack.c.b16 %v968, %v967
        %v978 = vpack.c.b16 %v970, %v969
        %987 = vmatprep.subr.bf16.mxu0 0
        %988 = vmatpush1.bf16.msra.mxu0 %v978
        %989 = vmatprep.subr.bf16.mxu0 0
        %990 = vmatpush1.bf16.msra.mxu0 %v977
        %991 = vmatprep.subr.bf16.mxu0 0
        %992 = vmatpush1.bf16.msra.mxu0 %v976
        %993 = vmatprep.subr.bf16.mxu0 0
        %994 = vmatpush1.bf16.msra.mxu0 %v975
        %995 = vmatprep.subr.bf16.mxu0 0
        %996 = vmatpush1.bf16.msra.mxu0 %v974
        %997 = vmatprep.subr.bf16.mxu0 0
        %998 = vmatpush1.bf16.msra.mxu0 %v973
        %999 = vmatprep.subr.bf16.mxu0 0
        %1000 = vmatpush1.bf16.msra.mxu0 %v972
        %1001 = vmatprep.subr.bf16.mxu0 0
        %1002 = vmatpush1.bf16.msra.mxu0 %v971
        %1003 = vmatprep.subr.bf16.mxu0 0
        %1004 = vmatpush2.bf16.msra.mxu0 0
        %1005 = vmatprep.subr.bf16.mxu0 0
        %1006 = vmatpush2.bf16.msra.mxu0 0
        %1007 = vmatprep.subr.bf16.mxu0 0
        %1008 = vmatpush2.bf16.msra.mxu0 0
        %1009 = vmatprep.subr.bf16.mxu0 0
        %1010 = vmatpush2.bf16.msra.mxu0 0
        %1011 = vmatprep.subr.bf16.mxu0 0
        %1012 = vmatpush2.bf16.msra.mxu0 0
        %1013 = vmatprep.subr.bf16.mxu0 0
        %1014 = vmatpush2.bf16.msra.mxu0 0
        %1015 = vmatprep.subr.bf16.mxu0 0
        %1016 = vmatpush2.bf16.msra.mxu0 0
        %1017 = vmatprep.subr.bf16.mxu0 0
        %1018 = vmatpush2.bf16.msra.mxu0 0
        %1019 = vmatprep.mubr.bf16.mxu0 0
        %1020 = vmatmul.mubr.bf16.gmra.mxu0 %v691
        %v1021 = vpop.f32.mrf.mxu0
        %v1022 = vadd.f32 %v937, %v1021
        %v1023 = vpop.f32.mrf.mxu0
        %v1024 = vpop.f32.mrf.mxu0
        %v1025 = vadd.f32 %v937, %v1024
        %v1026 = vpop.f32.mrf.mxu0
        %1027 = vdwg.mxu0
        %v1028 = vpack.c.bf16 %v801, %v798
        %v1029 = vpack.c.bf16 %v913, %v910
        %v1030 = vpack.c.bf16 %v1025, %v1022
        %vm1031 = vcmask 261120
        %v1033 = vsel %vm1031, %v1028, 0
        %v1036 = vsel %vm1031, %v1029, 0
        %1038 = vmatprep.subr.bf16.mxu0 0
        %1039 = vmatpush1.bf16.xpose.msra.mxu0 0
        %1040 = vmatprep.subr.bf16.mxu0 0
        %1041 = vmatpush1.bf16.xpose.msra.mxu0 0
        %1042 = vmatprep.subr.bf16.mxu0 0
        %1043 = vmatpush1.bf16.xpose.msra.mxu0 0
        %1044 = vmatprep.subr.bf16.mxu0 0
        %1045 = vmatpush1.bf16.xpose.msra.mxu0 0
        %1046 = vmatprep.subr.bf16.mxu0 0
        %1047 = vmatpush1.bf16.xpose.msra.mxu0 0
        %1048 = vmatprep.subr.bf16.mxu0 0
        %1049 = vmatpush1.bf16.xpose.msra.mxu0 0
        %1050 = vmatprep.subr.bf16.mxu0 0
        %1051 = vmatpush1.bf16.xpose.msra.mxu0 0
        %1052 = vmatprep.subr.bf16.mxu0 0
        %1053 = vmatpush1.bf16.xpose.msra.mxu0 %v1036
        %1054 = vmatprep.subr.bf16.mxu0 0
        %1055 = vmatpush2.bf16.xpose.msra.mxu0 0
        %1056 = vmatprep.subr.bf16.mxu0 0
        %1057 = vmatpush2.bf16.xpose.msra.mxu0 0
        %1058 = vmatprep.subr.bf16.mxu0 0
        %1059 = vmatpush2.bf16.xpose.msra.mxu0 0
        %1060 = vmatprep.subr.bf16.mxu0 0
        %1061 = vmatpush2.bf16.xpose.msra.mxu0 0
        %1062 = vmatprep.subr.bf16.mxu0 0
        %1063 = vmatpush2.bf16.xpose.msra.mxu0 0
        %1064 = vmatprep.subr.bf16.mxu0 0
        %1065 = vmatpush2.bf16.xpose.msra.mxu0 0
        %1066 = vmatprep.subr.bf16.mxu0 0
        %1067 = vmatpush2.bf16.xpose.msra.mxu0 0
        %1068 = vmatprep.subr.bf16.mxu0 0
        %1069 = vmatpush2.bf16.xpose.msra.mxu0 0
        %1070 = vmatprep.mubr.bf16.mxu0 0
        %1071 = vmatmul.mubr.bf16.gmra.mxu0 %v1033
        %v1072 = vpop.f32.mrf.mxu0
        %v1073 = vadd.f32 0.0, %v1072
        %v1074 = vpop.f32.mrf.mxu0
        %v1075 = vpop.f32.mrf.mxu0
        %v1076 = vadd.f32 0.0, %v1075
        %v1077 = vpop.f32.mrf.mxu0
        %1078 = vdwg.mxu0
        %vm1079 = vcmask 72704
        %v1080 = vsel %vm1079, %v1073, -inf
        %1081 = vmax.xlane.f32.xlu0 %v1080
        %v1082 = vpop.xlane.xlu0 %1081
        %vm1083 = vcmask 65536
        %v1084 = vsel %vm1083, %v1076, -inf
        %1085 = vmax.xlane.f32.xlu0 %v1084
        %v1086 = vpop.xlane.xlu0 %1085
        %v1087 = vsub.f32 %v1073, %v1082
        %v1088 = vsub.f32 %v1076, %v1086
        %v1089 = vmul.f32 %v1087, 1.442695
        %v1090 = vpow.pop %v1089
        %v1091 = vmul.f32 %v1088, 1.442695
        %v1092 = vpow.pop %v1091
        %v1093 = vsel %vm1079, %v1090, 0.0
        %1094 = vadd.xlane.f32.xlu0 %v1093
        %v1095 = vpop.xlane.xlu0 %1094
        %v1096 = vsel %vm1083, %v1092, 0.0
        %1097 = vadd.xlane.f32.xlu0 %v1096
        %v1098 = vpop.xlane.xlu0 %1097
        %v1099 = vrcp.pop %v1095
        %v1100 = vrcp.pop %v1098
        %v1101 = vmul.f32 %v1090, %v1099
        %v1102 = vmul.f32 %v1092, %v1100
        %v1103 = vpack.c.bf16 %v1102, %v1101
        %v1105 = vsel %vm1079, %v1103, 0
        %vm1107 = vcmask 1043456
        %vm1108 = vcmask 1044480
        %v1109 = vsel %vm1107, 4294967295, 65535
        %v1110 = vsel %vm1108, %v1109, 0
        %v1112 = vand.u32 %v1030, %v1110
        %1114 = vmatprep.subr.bf16.mxu0 0
        %1115 = vmatpush1.bf16.msra.mxu0 0
        %1116 = vmatprep.subr.bf16.mxu0 0
        %1117 = vmatpush1.bf16.msra.mxu0 0
        %1118 = vmatprep.subr.bf16.mxu0 0
        %1119 = vmatpush1.bf16.msra.mxu0 0
        %1120 = vmatprep.subr.bf16.mxu0 0
        %1121 = vmatpush1.bf16.msra.mxu0 0
        %1122 = vmatprep.subr.bf16.mxu0 0
        %1123 = vmatpush1.bf16.msra.mxu0 0
        %1124 = vmatprep.subr.bf16.mxu0 0
        %1125 = vmatpush1.bf16.msra.mxu0 0
        %1126 = vmatprep.subr.bf16.mxu0 0
        %1127 = vmatpush1.bf16.msra.mxu0 0
        %1128 = vmatprep.subr.bf16.mxu0 0
        %1129 = vmatpush1.bf16.msra.mxu0 %v1112
        %1130 = vmatprep.subr.bf16.mxu0 0
        %1131 = vmatpush2.bf16.msra.mxu0 0
        %1132 = vmatprep.subr.bf16.mxu0 0
        %1133 = vmatpush2.bf16.msra.mxu0 0
        %1134 = vmatprep.subr.bf16.mxu0 0
        %1135 = vmatpush2.bf16.msra.mxu0 0
        %1136 = vmatprep.subr.bf16.mxu0 0
        %1137 = vmatpush2.bf16.msra.mxu0 0
        %1138 = vmatprep.subr.bf16.mxu0 0
        %1139 = vmatpush2.bf16.msra.mxu0 0
        %1140 = vmatprep.subr.bf16.mxu0 0
        %1141 = vmatpush2.bf16.msra.mxu0 0
        %1142 = vmatprep.subr.bf16.mxu0 0
        %1143 = vmatpush2.bf16.msra.mxu0 0
        %1144 = vmatprep.subr.bf16.mxu0 0
        %1145 = vmatpush2.bf16.msra.mxu0 0
        %1146 = vmatprep.mubr.bf16.mxu0 0
        %1147 = vmatmul.mubr.bf16.gmra.mxu0 %v1105
        %v1148 = vpop.f32.mrf.mxu0
        %v1149 = vadd.f32 0.0, %v1148
        %v1150 = vpop.f32.mrf.mxu0
        %v1151 = vpop.f32.mrf.mxu0
        %v1152 = vadd.f32 0.0, %v1151
        %v1153 = vpop.f32.mrf.mxu0
        %1154 = vdwg.mxu0
        %v1155 = vpack.c.bf16 %v1152, %v1149
        %1157 = vrot.lane.b32.xlu0 %v1028, 96
        %v1158 = vpop.permute.xlu0 %1157
        %1160 = vrot.lane.b32.xlu0 %v1029, 96
        %v1161 = vpop.permute.xlu0 %1160
        %v1163 = vsel %vm1031, %v1158, 0
        %v1166 = vsel %vm1031, %v1161, 0
        %1168 = vmatprep.subr.bf16.mxu0 0
        %1169 = vmatpush1.bf16.xpose.msra.mxu0 0
        %1170 = vmatprep.subr.bf16.mxu0 0
        %1171 = vmatpush1.bf16.xpose.msra.mxu0 0
        %1172 = vmatprep.subr.bf16.mxu0 0
        %1173 = vmatpush1.bf16.xpose.msra.mxu0 0
        %1174 = vmatprep.subr.bf16.mxu0 0
        %1175 = vmatpush1.bf16.xpose.msra.mxu0 0
        %1176 = vmatprep.subr.bf16.mxu0 0
        %1177 = vmatpush1.bf16.xpose.msra.mxu0 0
        %1178 = vmatprep.subr.bf16.mxu0 0
        %1179 = vmatpush1.bf16.xpose.msra.mxu0 0
        %1180 = vmatprep.subr.bf16.mxu0 0
        %1181 = vmatpush1.bf16.xpose.msra.mxu0 0
        %1182 = vmatprep.subr.bf16.mxu0 0
        %1183 = vmatpush1.bf16.xpose.msra.mxu0 %v1166
        %1184 = vmatprep.subr.bf16.mxu0 0
        %1185 = vmatpush2.bf16.xpose.msra.mxu0 0
        %1186 = vmatprep.subr.bf16.mxu0 0
        %1187 = vmatpush2.bf16.xpose.msra.mxu0 0
        %1188 = vmatprep.subr.bf16.mxu0 0
        %1189 = vmatpush2.bf16.xpose.msra.mxu0 0
        %1190 = vmatprep.subr.bf16.mxu0 0
        %1191 = vmatpush2.bf16.xpose.msra.mxu0 0
        %1192 = vmatprep.subr.bf16.mxu0 0
        %1193 = vmatpush2.bf16.xpose.msra.mxu0 0
        %1194 = vmatprep.subr.bf16.mxu0 0
        %1195 = vmatpush2.bf16.xpose.msra.mxu0 0
        %1196 = vmatprep.subr.bf16.mxu0 0
        %1197 = vmatpush2.bf16.xpose.msra.mxu0 0
        %1198 = vmatprep.subr.bf16.mxu0 0
        %1199 = vmatpush2.bf16.xpose.msra.mxu0 0
        %1200 = vmatprep.mubr.bf16.mxu0 0
        %1201 = vmatmul.mubr.bf16.gmra.mxu0 %v1163
        %v1202 = vpop.f32.mrf.mxu0
        %v1203 = vadd.f32 0.0, %v1202
        %v1204 = vpop.f32.mrf.mxu0
        %v1205 = vpop.f32.mrf.mxu0
        %v1206 = vadd.f32 0.0, %v1205
        %v1207 = vpop.f32.mrf.mxu0
        %1208 = vdwg.mxu0
        %v1209 = vsel %vm1079, %v1203, -inf
        %1210 = vmax.xlane.f32.xlu0 %v1209
        %v1211 = vpop.xlane.xlu0 %1210
        %v1212 = vsel %vm1083, %v1206, -inf
        %1213 = vmax.xlane.f32.xlu0 %v1212
        %v1214 = vpop.xlane.xlu0 %1213
        %v1215 = vsub.f32 %v1203, %v1211
        %v1216 = vsub.f32 %v1206, %v1214
        %v1217 = vmul.f32 %v1215, 1.442695
        %v1218 = vpow.pop %v1217
        %v1219 = vmul.f32 %v1216, 1.442695
        %v1220 = vpow.pop %v1219
        %v1221 = vsel %vm1079, %v1218, 0.0
        %1222 = vadd.xlane.f32.xlu0 %v1221
        %v1223 = vpop.xlane.xlu0 %1222
        %v1224 = vsel %vm1083, %v1220, 0.0
        %1225 = vadd.xlane.f32.xlu0 %v1224
        %v1226 = vpop.xlane.xlu0 %1225
        %v1227 = vrcp.pop %v1223
        %v1228 = vrcp.pop %v1226
        %v1229 = vmul.f32 %v1218, %v1227
        %v1230 = vmul.f32 %v1220, %v1228
        %v1231 = vpack.c.bf16 %v1230, %v1229
        %1233 = vrot.lane.b32.xlu0 %v1030, 96
        %v1234 = vpop.permute.xlu0 %1233
        %v1236 = vsel %vm1079, %v1231, 0
        %v1239 = vand.u32 %v1234, %v1110
        %1241 = vmatprep.subr.bf16.mxu0 0
        %1242 = vmatpush1.bf16.msra.mxu0 0
        %1243 = vmatprep.subr.bf16.mxu0 0
        %1244 = vmatpush1.bf16.msra.mxu0 0
        %1245 = vmatprep.subr.bf16.mxu0 0
        %1246 = vmatpush1.bf16.msra.mxu0 0
        %1247 = vmatprep.subr.bf16.mxu0 0
        %1248 = vmatpush1.bf16.msra.mxu0 0
        %1249 = vmatprep.subr.bf16.mxu0 0
        %1250 = vmatpush1.bf16.msra.mxu0 0
        %1251 = vmatprep.subr.bf16.mxu0 0
        %1252 = vmatpush1.bf16.msra.mxu0 0
        %1253 = vmatprep.subr.bf16.mxu0 0
        %1254 = vmatpush1.bf16.msra.mxu0 0
        %1255 = vmatprep.subr.bf16.mxu0 0
        %1256 = vmatpush1.bf16.msra.mxu0 %v1239
        %1257 = vmatprep.subr.bf16.mxu0 0
        %1258 = vmatpush2.bf16.msra.mxu0 0
        %1259 = vmatprep.subr.bf16.mxu0 0
        %1260 = vmatpush2.bf16.msra.mxu0 0
        %1261 = vmatprep.subr.bf16.mxu0 0
        %1262 = vmatpush2.bf16.msra.mxu0 0
        %1263 = vmatprep.subr.bf16.mxu0 0
        %1264 = vmatpush2.bf16.msra.mxu0 0
        %1265 = vmatprep.subr.bf16.mxu0 0
        %1266 = vmatpush2.bf16.msra.mxu0 0
        %1267 = vmatprep.subr.bf16.mxu0 0
        %1268 = vmatpush2.bf16.msra.mxu0 0
        %1269 = vmatprep.subr.bf16.mxu0 0
        %1270 = vmatpush2.bf16.msra.mxu0 0
        %1271 = vmatprep.subr.bf16.mxu0 0
        %1272 = vmatpush2.bf16.msra.mxu0 0
        %1273 = vmatprep.mubr.bf16.mxu0 0
        %1274 = vmatmul.mubr.bf16.gmra.mxu0 %v1236
        %v1275 = vpop.f32.mrf.mxu0
        %v1276 = vadd.f32 0.0, %v1275
        %v1277 = vpop.f32.mrf.mxu0
        %v1278 = vpop.f32.mrf.mxu0
        %v1279 = vadd.f32 0.0, %v1278
        %v1280 = vpop.f32.mrf.mxu0
        %1281 = vdwg.mxu0
        %v1282 = vpack.c.bf16 %v1279, %v1276
        %1283 = vrot.lane.b32.xlu0 %v1028, 64
        %v1284 = vpop.permute.xlu0 %1283
        %1285 = vrot.lane.b32.xlu0 %v1029, 64
        %v1286 = vpop.permute.xlu0 %1285
        %v1288 = vsel %vm1031, %v1284, 0
        %v1291 = vsel %vm1031, %v1286, 0
        %1293 = vmatprep.subr.bf16.mxu0 0
        %1294 = vmatpush1.bf16.xpose.msra.mxu0 0
        %1295 = vmatprep.subr.bf16.mxu0 0
        %1296 = vmatpush1.bf16.xpose.msra.mxu0 0
        %1297 = vmatprep.subr.bf16.mxu0 0
        %1298 = vmatpush1.bf16.xpose.msra.mxu0 0
        %1299 = vmatprep.subr.bf16.mxu0 0
        %1300 = vmatpush1.bf16.xpose.msra.mxu0 0
        %1301 = vmatprep.subr.bf16.mxu0 0
        %1302 = vmatpush1.bf16.xpose.msra.mxu0 0
        %1303 = vmatprep.subr.bf16.mxu0 0
        %1304 = vmatpush1.bf16.xpose.msra.mxu0 0
        %1305 = vmatprep.subr.bf16.mxu0 0
        %1306 = vmatpush1.bf16.xpose.msra.mxu0 0
        %1307 = vmatprep.subr.bf16.mxu0 0
        %1308 = vmatpush1.bf16.xpose.msra.mxu0 %v1291
        %1309 = vmatprep.subr.bf16.mxu0 0
        %1310 = vmatpush2.bf16.xpose.msra.mxu0 0
        %1311 = vmatprep.subr.bf16.mxu0 0
        %1312 = vmatpush2.bf16.xpose.msra.mxu0 0
        %1313 = vmatprep.subr.bf16.mxu0 0
        %1314 = vmatpush2.bf16.xpose.msra.mxu0 0
        %1315 = vmatprep.subr.bf16.mxu0 0
        %1316 = vmatpush2.bf16.xpose.msra.mxu0 0
        %1317 = vmatprep.subr.bf16.mxu0 0
        %1318 = vmatpush2.bf16.xpose.msra.mxu0 0
        %1319 = vmatprep.subr.bf16.mxu0 0
        %1320 = vmatpush2.bf16.xpose.msra.mxu0 0
        %1321 = vmatprep.subr.bf16.mxu0 0
        %1322 = vmatpush2.bf16.xpose.msra.mxu0 0
        %1323 = vmatprep.subr.bf16.mxu0 0
        %1324 = vmatpush2.bf16.xpose.msra.mxu0 0
        %1325 = vmatprep.mubr.bf16.mxu0 0
        %1326 = vmatmul.mubr.bf16.gmra.mxu0 %v1288
        %v1327 = vpop.f32.mrf.mxu0
        %v1328 = vadd.f32 0.0, %v1327
        %v1329 = vpop.f32.mrf.mxu0
        %v1330 = vpop.f32.mrf.mxu0
        %v1331 = vadd.f32 0.0, %v1330
        %v1332 = vpop.f32.mrf.mxu0
        %1333 = vdwg.mxu0
        %v1334 = vsel %vm1079, %v1328, -inf
        %1335 = vmax.xlane.f32.xlu0 %v1334
        %v1336 = vpop.xlane.xlu0 %1335
        %v1337 = vsel %vm1083, %v1331, -inf
        %1338 = vmax.xlane.f32.xlu0 %v1337
        %v1339 = vpop.xlane.xlu0 %1338
        %v1340 = vsub.f32 %v1328, %v1336
        %v1341 = vsub.f32 %v1331, %v1339
        %v1342 = vmul.f32 %v1340, 1.442695
        %v1343 = vpow.pop %v1342
        %v1344 = vmul.f32 %v1341, 1.442695
        %v1345 = vpow.pop %v1344
        %v1346 = vsel %vm1079, %v1343, 0.0
        %1347 = vadd.xlane.f32.xlu0 %v1346
        %v1348 = vpop.xlane.xlu0 %1347
        %v1349 = vsel %vm1083, %v1345, 0.0
        %1350 = vadd.xlane.f32.xlu0 %v1349
        %v1351 = vpop.xlane.xlu0 %1350
        %v1352 = vrcp.pop %v1348
        %v1353 = vrcp.pop %v1351
        %v1354 = vmul.f32 %v1343, %v1352
        %v1355 = vmul.f32 %v1345, %v1353
        %v1356 = vpack.c.bf16 %v1355, %v1354
        %1357 = vrot.lane.b32.xlu0 %v1030, 64
        %v1358 = vpop.permute.xlu0 %1357
        %v1360 = vsel %vm1079, %v1356, 0
        %v1363 = vand.u32 %v1358, %v1110
        %1365 = vmatprep.subr.bf16.mxu0 0
        %1366 = vmatpush1.bf16.msra.mxu0 0
        %1367 = vmatprep.subr.bf16.mxu0 0
        %1368 = vmatpush1.bf16.msra.mxu0 0
        %1369 = vmatprep.subr.bf16.mxu0 0
        %1370 = vmatpush1.bf16.msra.mxu0 0
        %1371 = vmatprep.subr.bf16.mxu0 0
        %1372 = vmatpush1.bf16.msra.mxu0 0
        %1373 = vmatprep.subr.bf16.mxu0 0
        %1374 = vmatpush1.bf16.msra.mxu0 0
        %1375 = vmatprep.subr.bf16.mxu0 0
        %1376 = vmatpush1.bf16.msra.mxu0 0
        %1377 = vmatprep.subr.bf16.mxu0 0
        %1378 = vmatpush1.bf16.msra.mxu0 0
        %1379 = vmatprep.subr.bf16.mxu0 0
        %1380 = vmatpush1.bf16.msra.mxu0 %v1363
        %1381 = vmatprep.subr.bf16.mxu0 0
        %1382 = vmatpush2.bf16.msra.mxu0 0
        %1383 = vmatprep.subr.bf16.mxu0 0
        %1384 = vmatpush2.bf16.msra.mxu0 0
        %1385 = vmatprep.subr.bf16.mxu0 0
        %1386 = vmatpush2.bf16.msra.mxu0 0
        %1387 = vmatprep.subr.bf16.mxu0 0
        %1388 = vmatpush2.bf16.msra.mxu0 0
        %1389 = vmatprep.subr.bf16.mxu0 0
        %1390 = vmatpush2.bf16.msra.mxu0 0
        %1391 = vmatprep.subr.bf16.mxu0 0
        %1392 = vmatpush2.bf16.msra.mxu0 0
        %1393 = vmatprep.subr.bf16.mxu0 0
        %1394 = vmatpush2.bf16.msra.mxu0 0
        %1395 = vmatprep.subr.bf16.mxu0 0
        %1396 = vmatpush2.bf16.msra.mxu0 0
        %1397 = vmatprep.mubr.bf16.mxu0 0
        %1398 = vmatmul.mubr.bf16.gmra.mxu0 %v1360
        %v1399 = vpop.f32.mrf.mxu0
        %v1400 = vadd.f32 0.0, %v1399
        %v1401 = vpop.f32.mrf.mxu0
        %v1402 = vpop.f32.mrf.mxu0
        %v1403 = vadd.f32 0.0, %v1402
        %v1404 = vpop.f32.mrf.mxu0
        %1405 = vdwg.mxu0
        %v1406 = vpack.c.bf16 %v1403, %v1400
        %1407 = vrot.lane.b32.xlu0 %v1028, 32
        %v1408 = vpop.permute.xlu0 %1407
        %1409 = vrot.lane.b32.xlu0 %v1029, 32
        %v1410 = vpop.permute.xlu0 %1409
        %v1412 = vsel %vm1031, %v1408, 0
        %v1415 = vsel %vm1031, %v1410, 0
        %1417 = vmatprep.subr.bf16.mxu0 0
        %1418 = vmatpush1.bf16.xpose.msra.mxu0 0
        %1419 = vmatprep.subr.bf16.mxu0 0
        %1420 = vmatpush1.bf16.xpose.msra.mxu0 0
        %1421 = vmatprep.subr.bf16.mxu0 0
        %1422 = vmatpush1.bf16.xpose.msra.mxu0 0
        %1423 = vmatprep.subr.bf16.mxu0 0
        %1424 = vmatpush1.bf16.xpose.msra.mxu0 0
        %1425 = vmatprep.subr.bf16.mxu0 0
        %1426 = vmatpush1.bf16.xpose.msra.mxu0 0
        %1427 = vmatprep.subr.bf16.mxu0 0
        %1428 = vmatpush1.bf16.xpose.msra.mxu0 0
        %1429 = vmatprep.subr.bf16.mxu0 0
        %1430 = vmatpush1.bf16.xpose.msra.mxu0 0
        %1431 = vmatprep.subr.bf16.mxu0 0
        %1432 = vmatpush1.bf16.xpose.msra.mxu0 %v1415
        %1433 = vmatprep.subr.bf16.mxu0 0
        %1434 = vmatpush2.bf16.xpose.msra.mxu0 0
        %1435 = vmatprep.subr.bf16.mxu0 0
        %1436 = vmatpush2.bf16.xpose.msra.mxu0 0
        %1437 = vmatprep.subr.bf16.mxu0 0
        %1438 = vmatpush2.bf16.xpose.msra.mxu0 0
        %1439 = vmatprep.subr.bf16.mxu0 0
        %1440 = vmatpush2.bf16.xpose.msra.mxu0 0
        %1441 = vmatprep.subr.bf16.mxu0 0
        %1442 = vmatpush2.bf16.xpose.msra.mxu0 0
        %1443 = vmatprep.subr.bf16.mxu0 0
        %1444 = vmatpush2.bf16.xpose.msra.mxu0 0
        %1445 = vmatprep.subr.bf16.mxu0 0
        %1446 = vmatpush2.bf16.xpose.msra.mxu0 0
        %1447 = vmatprep.subr.bf16.mxu0 0
        %1448 = vmatpush2.bf16.xpose.msra.mxu0 0
        %1449 = vmatprep.mubr.bf16.mxu0 0
        %1450 = vmatmul.mubr.bf16.gmra.mxu0 %v1412
        %v1451 = vpop.f32.mrf.mxu0
        %v1452 = vadd.f32 0.0, %v1451
        %v1453 = vpop.f32.mrf.mxu0
        %v1454 = vpop.f32.mrf.mxu0
        %v1455 = vadd.f32 0.0, %v1454
        %v1456 = vpop.f32.mrf.mxu0
        %1457 = vdwg.mxu0
        %v1458 = vsel %vm1079, %v1452, -inf
        %1459 = vmax.xlane.f32.xlu0 %v1458
        %v1460 = vpop.xlane.xlu0 %1459
        %v1461 = vsel %vm1083, %v1455, -inf
        %1462 = vmax.xlane.f32.xlu0 %v1461
        %v1463 = vpop.xlane.xlu0 %1462
        %v1464 = vsub.f32 %v1452, %v1460
        %v1465 = vsub.f32 %v1455, %v1463
        %v1466 = vmul.f32 %v1464, 1.442695
        %v1467 = vpow.pop %v1466
        %v1468 = vmul.f32 %v1465, 1.442695
        %v1469 = vpow.pop %v1468
        %v1470 = vsel %vm1079, %v1467, 0.0
        %1471 = vadd.xlane.f32.xlu0 %v1470
        %v1472 = vpop.xlane.xlu0 %1471
        %v1473 = vsel %vm1083, %v1469, 0.0
        %1474 = vadd.xlane.f32.xlu0 %v1473
        %v1475 = vpop.xlane.xlu0 %1474
        %v1476 = vrcp.pop %v1472
        %v1477 = vrcp.pop %v1475
        %v1478 = vmul.f32 %v1467, %v1476
        %v1479 = vmul.f32 %v1469, %v1477
        %v1480 = vpack.c.bf16 %v1479, %v1478
        %1481 = vrot.lane.b32.xlu0 %v1030, 32
        %v1482 = vpop.permute.xlu0 %1481
        %v1484 = vsel %vm1079, %v1480, 0
        %v1487 = vand.u32 %v1482, %v1110
        %1489 = vmatprep.subr.bf16.mxu0 0
        %1490 = vmatpush1.bf16.msra.mxu0 0
        %1491 = vmatprep.subr.bf16.mxu0 0
        %1492 = vmatpush1.bf16.msra.mxu0 0
        %1493 = vmatprep.subr.bf16.mxu0 0
        %1494 = vmatpush1.bf16.msra.mxu0 0
        %1495 = vmatprep.subr.bf16.mxu0 0
        %1496 = vmatpush1.bf16.msra.mxu0 0
        %1497 = vmatprep.subr.bf16.mxu0 0
        %1498 = vmatpush1.bf16.msra.mxu0 0
        %1499 = vmatprep.subr.bf16.mxu0 0
        %1500 = vmatpush1.bf16.msra.mxu0 0
        %1501 = vmatprep.subr.bf16.mxu0 0
        %1502 = vmatpush1.bf16.msra.mxu0 0
        %1503 = vmatprep.subr.bf16.mxu0 0
        %1504 = vmatpush1.bf16.msra.mxu0 %v1487
        %1505 = vmatprep.subr.bf16.mxu0 0
        %1506 = vmatpush2.bf16.msra.mxu0 0
        %1507 = vmatprep.subr.bf16.mxu0 0
        %1508 = vmatpush2.bf16.msra.mxu0 0
        %1509 = vmatprep.subr.bf16.mxu0 0
        %1510 = vmatpush2.bf16.msra.mxu0 0
        %1511 = vmatprep.subr.bf16.mxu0 0
        %1512 = vmatpush2.bf16.msra.mxu0 0
        %1513 = vmatprep.subr.bf16.mxu0 0
        %1514 = vmatpush2.bf16.msra.mxu0 0
        %1515 = vmatprep.subr.bf16.mxu0 0
        %1516 = vmatpush2.bf16.msra.mxu0 0
        %1517 = vmatprep.subr.bf16.mxu0 0
        %1518 = vmatpush2.bf16.msra.mxu0 0
        %1519 = vmatprep.subr.bf16.mxu0 0
        %1520 = vmatpush2.bf16.msra.mxu0 0
        %1521 = vmatprep.mubr.bf16.mxu0 0
        %1522 = vmatmul.mubr.bf16.gmra.mxu0 %v1484
        %v1523 = vpop.f32.mrf.mxu0
        %v1524 = vadd.f32 0.0, %v1523
        %v1525 = vpop.f32.mrf.mxu0
        %v1526 = vpop.f32.mrf.mxu0
        %v1527 = vadd.f32 0.0, %v1526
        %v1528 = vpop.f32.mrf.mxu0
        %1529 = vdwg.mxu0
        %v1530 = vpack.c.bf16 %v1527, %v1524
        %1532 = vrot.lane.b32.xlu0 %v1282, 32
        %v1533 = vpop.permute.xlu0 %1532
        %1535 = vrot.lane.b32.xlu0 %v1406, 64
        %v1536 = vpop.permute.xlu0 %1535
        %1538 = vrot.lane.b32.xlu0 %v1530, 96
        %v1539 = vpop.permute.xlu0 %1538
        %v1542 = vsel %vm1031, %v1155, %v1533
        %vm1543 = vcmask 523264
        %v1545 = vsel %vm1543, %v1542, %v1536
        %vm1546 = vcmask 785408
        %v1548 = vsel %vm1546, %v1545, %v1539
        %v1550 = vld [vmem:[#allocation8] sm:$0xf]
        %v1551 = vld [vmem:[#allocation8 + $0x4] sm:$0xf]
        %v1552 = vld [vmem:[#allocation8 + $0x8] sm:$0xf]
        %v1553 = vld [vmem:[#allocation8 + $0xc] sm:$0xf]
        %v1554 = vld [vmem:[#allocation8 + $0x10] sm:$0xf]
        %v1555 = vld [vmem:[#allocation8 + $0x14] sm:$0xf]
        %v1556 = vld [vmem:[#allocation8 + $0x18] sm:$0xf]
        %v1557 = vld [vmem:[#allocation8 + $0x1c] sm:$0xf]
        %v1558 = vld [vmem:[#allocation8 + $0x20] sm:$0xf]
        %v1559 = vld [vmem:[#allocation8 + $0x24] sm:$0xf]
        %v1560 = vld [vmem:[#allocation8 + $0x28] sm:$0xf]
        %v1561 = vld [vmem:[#allocation8 + $0x2c] sm:$0xf]
        %v1562 = vld [vmem:[#allocation8 + $0x30] sm:$0xf]
        %v1563 = vld [vmem:[#allocation8 + $0x34] sm:$0xf]
        %v1564 = vld [vmem:[#allocation8 + $0x38] sm:$0xf]
        %v1565 = vld [vmem:[#allocation8 + $0x3c] sm:$0xf]
        %v1566 = vld [vmem:[%s8] sm:$0x1]
        %v1568 = vlaneseq
        %v1569 = vshrl.u32 %v1568, 7
        %v1570 = vsub.s32 0, %v1569
        %v1571 = vrot.slane %v1566, %v1570
        %v1589 = vunpack.c.l.b16 %v1550
        %v1590 = vunpack.c.l.b16 %v1551
        %v1591 = vunpack.c.l.b16 %v1552
        %v1592 = vunpack.c.l.b16 %v1553
        %v1593 = vunpack.c.l.b16 %v1554
        %v1594 = vunpack.c.l.b16 %v1555
        %v1595 = vunpack.c.l.b16 %v1556
        %v1596 = vunpack.c.l.b16 %v1557
        %v1597 = vunpack.c.l.b16 %v1558
        %v1598 = vunpack.c.l.b16 %v1559
        %v1599 = vunpack.c.l.b16 %v1560
        %v1600 = vunpack.c.l.b16 %v1561
        %v1601 = vunpack.c.l.b16 %v1562
        %v1602 = vunpack.c.l.b16 %v1563
        %v1603 = vunpack.c.l.b16 %v1564
        %v1604 = vunpack.c.l.b16 %v1565
        %v1605 = vpack.c.b16 %v1590, %v1589
        %v1606 = vpack.c.b16 %v1592, %v1591
        %v1607 = vpack.c.b16 %v1594, %v1593
        %v1608 = vpack.c.b16 %v1596, %v1595
        %v1609 = vpack.c.b16 %v1598, %v1597
        %v1610 = vpack.c.b16 %v1600, %v1599
        %v1611 = vpack.c.b16 %v1602, %v1601
        %v1612 = vpack.c.b16 %v1604, %v1603
        %1621 = vmatprep.subr.bf16.mxu0 0
        %1622 = vmatpush1.bf16.msra.mxu0 %v1612
        %1623 = vmatprep.subr.bf16.mxu0 0
        %1624 = vmatpush1.bf16.msra.mxu0 %v1611
        %1625 = vmatprep.subr.bf16.mxu0 0
        %1626 = vmatpush1.bf16.msra.mxu0 %v1610
        %1627 = vmatprep.subr.bf16.mxu0 0
        %1628 = vmatpush1.bf16.msra.mxu0 %v1609
        %1629 = vmatprep.subr.bf16.mxu0 0
        %1630 = vmatpush1.bf16.msra.mxu0 %v1608
        %1631 = vmatprep.subr.bf16.mxu0 0
        %1632 = vmatpush1.bf16.msra.mxu0 %v1607
        %1633 = vmatprep.subr.bf16.mxu0 0
        %1634 = vmatpush1.bf16.msra.mxu0 %v1606
        %1635 = vmatprep.subr.bf16.mxu0 0
        %1636 = vmatpush1.bf16.msra.mxu0 %v1605
        %1637 = vmatprep.subr.bf16.mxu0 0
        %1638 = vmatpush2.bf16.msra.mxu0 0
        %1639 = vmatprep.subr.bf16.mxu0 0
        %1640 = vmatpush2.bf16.msra.mxu0 0
        %1641 = vmatprep.subr.bf16.mxu0 0
        %1642 = vmatpush2.bf16.msra.mxu0 0
        %1643 = vmatprep.subr.bf16.mxu0 0
        %1644 = vmatpush2.bf16.msra.mxu0 0
        %1645 = vmatprep.subr.bf16.mxu0 0
        %1646 = vmatpush2.bf16.msra.mxu0 0
        %1647 = vmatprep.subr.bf16.mxu0 0
        %1648 = vmatpush2.bf16.msra.mxu0 0
        %1649 = vmatprep.subr.bf16.mxu0 0
        %1650 = vmatpush2.bf16.msra.mxu0 0
        %1651 = vmatprep.subr.bf16.mxu0 0
        %1652 = vmatpush2.bf16.msra.mxu0 0
        %1653 = vmatprep.mubr.bf16.mxu0 0
        %1654 = vmatmul.mubr.bf16.gmra.mxu0 %v1548
        %v1655 = vpop.f32.mrf.mxu0
        %v1656 = vadd.f32 %v1571, %v1655
        %v1657 = vpop.f32.mrf.mxu0
        %v1658 = vpop.f32.mrf.mxu0
        %v1659 = vadd.f32 %v1571, %v1658
        %v1660 = vpop.f32.mrf.mxu0
        %1661 = vdwg.mxu0
        %v1662 = vadd.f32 %v689, %v1656
        %v1663 = vadd.f32 %v690, %v1659
        %v1664 = vld [vmem:[%s13] sm:$0x1]
        %v1665 = vld [vmem:[%s14] sm:$0x1]
        %1666 = vadd.xlane.f32.xlu0 %v1662
        %v1667 = vpop.xlane.xlu0 %1666
        %vm1668 = vcmask 1040384
        %v1669 = vsel %vm1668, %v1663, 0.0
        %1670 = vadd.xlane.f32.xlu0 %v1669
        %v1671 = vpop.xlane.xlu0 %1670
        %v1672 = vrcp.pop 128.0
        %v1673 = vmul.f32 %v1667, %v1672
        %v1674 = vmul.f32 %v1671, %v1672
        %v1675 = vsub.f32 %v1662, %v1673
        %v1676 = vsub.f32 %v1663, %v1674
        %v1677 = vmul.f32 %v1675, %v1675
        %v1678 = vmul.f32 %v1676, %v1676
        %1679 = vadd.xlane.f32.xlu0 %v1677
        %v1680 = vpop.xlane.xlu0 %1679
        %v1681 = vsel %vm1668, %v1678, 0.0
        %1682 = vadd.xlane.f32.xlu0 %v1681
        %v1683 = vpop.xlane.xlu0 %1682
        %v1684 = vmul.f32 %v1680, %v1672
        %v1685 = vmul.f32 %v1683, %v1672
        %v1686 = vadd.f32 %v1684, 1e-05
        %v1687 = vadd.f32 %v1685, 1e-05
        %v1688 = vrsqrt.pop %v1686
        %v1689 = vrsqrt.pop %v1687
        %v1690 = vmul.f32 %v1675, %v1688
        %v1691 = vmul.f32 %v1676, %v1689
        %v1693 = vlaneseq
        %v1694 = vshrl.u32 %v1693, 7
        %v1695 = vsub.s32 0, %v1694
        %v1696 = vrot.slane %v1664, %v1695
        %v1698 = vmul.f32 %v1690, %v1696
        %v1699 = vmul.f32 %v1691, %v1696
        %v1701 = vlaneseq
        %v1702 = vshrl.u32 %v1701, 7
        %v1703 = vsub.s32 0, %v1702
        %v1704 = vrot.slane %v1665, %v1703
        %v1706 = vadd.f32 %v1698, %v1704
        %v1707 = vadd.f32 %v1699, %v1704
        %v1708 = vpack.c.bf16 %v1707, %v1706
        %v1709 = vld [vmem:[#allocation10] sm:$0xff]
        %v1710 = vld [vmem:[#allocation10 + $0x8] sm:$0xff]
        %v1711 = vld [vmem:[#allocation10 + $0x10] sm:$0xff]
        %v1712 = vld [vmem:[#allocation10 + $0x18] sm:$0xff]
        %v1713 = vld [vmem:[#allocation10 + $0x20] sm:$0xff]
        %v1714 = vld [vmem:[#allocation10 + $0x28] sm:$0xff]
        %v1715 = vld [vmem:[#allocation10 + $0x30] sm:$0xff]
        %v1716 = vld [vmem:[#allocation10 + $0x38] sm:$0xff]
        %v1717 = vld [vmem:[#allocation10 + $0x40] sm:$0xff]
        %v1718 = vld [vmem:[#allocation10 + $0x48] sm:$0xff]
        %v1719 = vld [vmem:[#allocation10 + $0x50] sm:$0xff]
        %v1720 = vld [vmem:[#allocation10 + $0x58] sm:$0xff]
        %v1721 = vld [vmem:[#allocation10 + $0x60] sm:$0xff]
        %v1722 = vld [vmem:[#allocation10 + $0x68] sm:$0xff]
        %v1723 = vld [vmem:[#allocation10 + $0x70] sm:$0xff]
        %v1724 = vld [vmem:[#allocation10 + $0x78] sm:$0xff]
        %v1725 = vld [vmem:[%s10] sm:$0x3]
        %v1727 = vlaneseq
        %v1728 = vshrl.u32 %v1727, 7
        %v1729 = vsub.s32 0, %v1728
        %v1730 = vrot.slane %v1725, %v1729
        %v1731 = vlaneseq
        %v1732 = vshrl.u32 %v1731, 7
        %v1733 = vsub.s32 1, %v1732
        %v1734 = vrot.slane %v1725, %v1733
        %v1753 = vunpack.c.l.b16 %v1709
        %v1754 = vunpack.c.h.b16 %v1709
        %v1755 = vunpack.c.l.b16 %v1710
        %v1756 = vunpack.c.h.b16 %v1710
        %v1757 = vunpack.c.l.b16 %v1711
        %v1758 = vunpack.c.h.b16 %v1711
        %v1759 = vunpack.c.l.b16 %v1712
        %v1760 = vunpack.c.h.b16 %v1712
        %v1761 = vunpack.c.l.b16 %v1713
        %v1762 = vunpack.c.h.b16 %v1713
        %v1763 = vunpack.c.l.b16 %v1714
        %v1764 = vunpack.c.h.b16 %v1714
        %v1765 = vunpack.c.l.b16 %v1715
        %v1766 = vunpack.c.h.b16 %v1715
        %v1767 = vunpack.c.l.b16 %v1716
        %v1768 = vunpack.c.h.b16 %v1716
        %v1769 = vunpack.c.l.b16 %v1717
        %v1770 = vunpack.c.h.b16 %v1717
        %v1771 = vunpack.c.l.b16 %v1718
        %v1772 = vunpack.c.h.b16 %v1718
        %v1773 = vunpack.c.l.b16 %v1719
        %v1774 = vunpack.c.h.b16 %v1719
        %v1775 = vunpack.c.l.b16 %v1720
        %v1776 = vunpack.c.h.b16 %v1720
        %v1777 = vunpack.c.l.b16 %v1721
        %v1778 = vunpack.c.h.b16 %v1721
        %v1779 = vunpack.c.l.b16 %v1722
        %v1780 = vunpack.c.h.b16 %v1722
        %v1781 = vunpack.c.l.b16 %v1723
        %v1782 = vunpack.c.h.b16 %v1723
        %v1783 = vunpack.c.l.b16 %v1724
        %v1784 = vunpack.c.h.b16 %v1724
        %v1785 = vpack.c.b16 %v1755, %v1753
        %v1786 = vpack.c.b16 %v1756, %v1754
        %v1787 = vpack.c.b16 %v1759, %v1757
        %v1788 = vpack.c.b16 %v1760, %v1758
        %v1789 = vpack.c.b16 %v1763, %v1761
        %v1790 = vpack.c.b16 %v1764, %v1762
        %v1791 = vpack.c.b16 %v1767, %v1765
        %v1792 = vpack.c.b16 %v1768, %v1766
        %v1793 = vpack.c.b16 %v1771, %v1769
        %v1794 = vpack.c.b16 %v1772, %v1770
        %v1795 = vpack.c.b16 %v1775, %v1773
        %v1796 = vpack.c.b16 %v1776, %v1774
        %v1797 = vpack.c.b16 %v1779, %v1777
        %v1798 = vpack.c.b16 %v1780, %v1778
        %v1799 = vpack.c.b16 %v1783, %v1781
        %v1800 = vpack.c.b16 %v1784, %v1782
        %1817 = vmatprep.subr.bf16.mxu0 %v1800
        %1818 = vmatpush1.bf16.msra.mxu0 %v1799
        %1819 = vmatprep.subr.bf16.mxu0 %v1798
        %1820 = vmatpush1.bf16.msra.mxu0 %v1797
        %1821 = vmatprep.subr.bf16.mxu0 %v1796
        %1822 = vmatpush1.bf16.msra.mxu0 %v1795
        %1823 = vmatprep.subr.bf16.mxu0 %v1794
        %1824 = vmatpush1.bf16.msra.mxu0 %v1793
        %1825 = vmatprep.subr.bf16.mxu0 %v1792
        %1826 = vmatpush1.bf16.msra.mxu0 %v1791
        %1827 = vmatprep.subr.bf16.mxu0 %v1790
        %1828 = vmatpush1.bf16.msra.mxu0 %v1789
        %1829 = vmatprep.subr.bf16.mxu0 %v1788
        %1830 = vmatpush1.bf16.msra.mxu0 %v1787
        %1831 = vmatprep.subr.bf16.mxu0 %v1786
        %1832 = vmatpush1.bf16.msra.mxu0 %v1785
        %1833 = vmatprep.subr.bf16.mxu0 0
        %1834 = vmatpush2.bf16.msra.mxu0 0
        %1835 = vmatprep.subr.bf16.mxu0 0
        %1836 = vmatpush2.bf16.msra.mxu0 0
        %1837 = vmatprep.subr.bf16.mxu0 0
        %1838 = vmatpush2.bf16.msra.mxu0 0
        %1839 = vmatprep.subr.bf16.mxu0 0
        %1840 = vmatpush2.bf16.msra.mxu0 0
        %1841 = vmatprep.subr.bf16.mxu0 0
        %1842 = vmatpush2.bf16.msra.mxu0 0
        %1843 = vmatprep.subr.bf16.mxu0 0
        %1844 = vmatpush2.bf16.msra.mxu0 0
        %1845 = vmatprep.subr.bf16.mxu0 0
        %1846 = vmatpush2.bf16.msra.mxu0 0
        %1847 = vmatprep.subr.bf16.mxu0 0
        %1848 = vmatpush2.bf16.msra.mxu0 0
        %1849 = vmatprep.mubr.bf16.mxu0 0
        %1850 = vmatmul.mubr.bf16.gmra.mxu0 %v1708
        %v1851 = vpop.f32.mrf.mxu0
        %v1852 = vadd.f32 %v1730, %v1851
        %v1853 = vpop.f32.mrf.mxu0
        %v1854 = vadd.f32 %v1734, %v1853
        %v1855 = vpop.f32.mrf.mxu0
        %v1856 = vadd.f32 %v1730, %v1855
        %v1857 = vpop.f32.mrf.mxu0
        %v1858 = vadd.f32 %v1734, %v1857
        %1859 = vdwg.mxu0
        %v1860 = vmax.f32 %v1852, 0.0
        %v1861 = vmax.f32 %v1854, 0.0
        %v1862 = vmax.f32 %v1856, 0.0
        %v1863 = vmax.f32 %v1858, 0.0
        %v1864 = vpack.c.bf16 %v1862, %v1860
        %v1865 = vpack.c.bf16 %v1863, %v1861
        %v1866 = vld [vmem:[#allocation11] sm:$0xf]
        %v1867 = vld [vmem:[#allocation11 + $0x4] sm:$0xf]
        %v1868 = vld [vmem:[#allocation11 + $0x8] sm:$0xf]
        %v1869 = vld [vmem:[#allocation11 + $0xc] sm:$0xf]
        %v1870 = vld [vmem:[#allocation11 + $0x10] sm:$0xf]
        %v1871 = vld [vmem:[#allocation11 + $0x14] sm:$0xf]
        %v1872 = vld [vmem:[#allocation11 + $0x18] sm:$0xf]
        %v1873 = vld [vmem:[#allocation11 + $0x1c] sm:$0xf]
        %v1874 = vld [vmem:[#allocation11 + $0x20] sm:$0xf]
        %v1875 = vld [vmem:[#allocation11 + $0x24] sm:$0xf]
        %v1876 = vld [vmem:[#allocation11 + $0x28] sm:$0xf]
        %v1877 = vld [vmem:[#allocation11 + $0x2c] sm:$0xf]
        %v1878 = vld [vmem:[#allocation11 + $0x30] sm:$0xf]
        %v1879 = vld [vmem:[#allocation11 + $0x34] sm:$0xf]
        %v1880 = vld [vmem:[#allocation11 + $0x38] sm:$0xf]
        %v1881 = vld [vmem:[#allocation11 + $0x3c] sm:$0xf]
        %v1882 = vld [vmem:[#allocation11 + $0x40] sm:$0xf]
        %v1883 = vld [vmem:[#allocation11 + $0x44] sm:$0xf]
        %v1884 = vld [vmem:[#allocation11 + $0x48] sm:$0xf]
        %v1885 = vld [vmem:[#allocation11 + $0x4c] sm:$0xf]
        %v1886 = vld [vmem:[#allocation11 + $0x50] sm:$0xf]
        %v1887 = vld [vmem:[#allocation11 + $0x54] sm:$0xf]
        %v1888 = vld [vmem:[#allocation11 + $0x58] sm:$0xf]
        %v1889 = vld [vmem:[#allocation11 + $0x5c] sm:$0xf]
        %v1890 = vld [vmem:[#allocation11 + $0x60] sm:$0xf]
        %v1891 = vld [vmem:[#allocation11 + $0x64] sm:$0xf]
        %v1892 = vld [vmem:[#allocation11 + $0x68] sm:$0xf]
        %v1893 = vld [vmem:[#allocation11 + $0x6c] sm:$0xf]
        %v1894 = vld [vmem:[#allocation11 + $0x70] sm:$0xf]
        %v1895 = vld [vmem:[#allocation11 + $0x74] sm:$0xf]
        %v1896 = vld [vmem:[#allocation11 + $0x78] sm:$0xf]
        %v1897 = vld [vmem:[#allocation11 + $0x7c] sm:$0xf]
        %v1898 = vld [vmem:[%s12] sm:$0x1]
        %v1900 = vlaneseq
        %v1901 = vshrl.u32 %v1900, 7
        %v1902 = vsub.s32 0, %v1901
        %v1903 = vrot.slane %v1898, %v1902
        %v1937 = vunpack.c.l.b16 %v1866
        %v1938 = vunpack.c.l.b16 %v1867
        %v1939 = vunpack.c.l.b16 %v1868
        %v1940 = vunpack.c.l.b16 %v1869
        %v1941 = vunpack.c.l.b16 %v1870
        %v1942 = vunpack.c.l.b16 %v1871
        %v1943 = vunpack.c.l.b16 %v1872
        %v1944 = vunpack.c.l.b16 %v1873
        %v1945 = vunpack.c.l.b16 %v1874
        %v1946 = vunpack.c.l.b16 %v1875
        %v1947 = vunpack.c.l.b16 %v1876
        %v1948 = vunpack.c.l.b16 %v1877
        %v1949 = vunpack.c.l.b16 %v1878
        %v1950 = vunpack.c.l.b16 %v1879
        %v1951 = vunpack.c.l.b16 %v1880
        %v1952 = vunpack.c.l.b16 %v1881
        %v1953 = vunpack.c.l.b16 %v1882
        %v1954 = vunpack.c.l.b16 %v1883
        %v1955 = vunpack.c.l.b16 %v1884
        %v1956 = vunpack.c.l.b16 %v1885
        %v1957 = vunpack.c.l.b16 %v1886
        %v1958 = vunpack.c.l.b16 %v1887
        %v1959 = vunpack.c.l.b16 %v1888
        %v1960 = vunpack.c.l.b16 %v1889
        %v1961 = vunpack.c.l.b16 %v1890
        %v1962 = vunpack.c.l.b16 %v1891
        %v1963 = vunpack.c.l.b16 %v1892
        %v1964 = vunpack.c.l.b16 %v1893
        %v1965 = vunpack.c.l.b16 %v1894
        %v1966 = vunpack.c.l.b16 %v1895
        %v1967 = vunpack.c.l.b16 %v1896
        %v1968 = vunpack.c.l.b16 %v1897
        %v1969 = vpack.c.b16 %v1938, %v1937
        %v1970 = vpack.c.b16 %v1940, %v1939
        %v1971 = vpack.c.b16 %v1942, %v1941
        %v1972 = vpack.c.b16 %v1944, %v1943
        %v1973 = vpack.c.b16 %v1946, %v1945
        %v1974 = vpack.c.b16 %v1948, %v1947
        %v1975 = vpack.c.b16 %v1950, %v1949
        %v1976 = vpack.c.b16 %v1952, %v1951
        %v1977 = vpack.c.b16 %v1954, %v1953
        %v1978 = vpack.c.b16 %v1956, %v1955
        %v1979 = vpack.c.b16 %v1958, %v1957
        %v1980 = vpack.c.b16 %v1960, %v1959
        %v1981 = vpack.c.b16 %v1962, %v1961
        %v1982 = vpack.c.b16 %v1964, %v1963
        %v1983 = vpack.c.b16 %v1966, %v1965
        %v1984 = vpack.c.b16 %v1968, %v1967
        %2001 = vmatprep.subr.bf16.mxu0 0
        %2002 = vmatpush1.bf16.msra.mxu0 %v1976
        %2003 = vmatprep.subr.bf16.mxu0 0
        %2004 = vmatpush1.bf16.msra.mxu0 %v1975
        %2005 = vmatprep.subr.bf16.mxu0 0
        %2006 = vmatpush1.bf16.msra.mxu0 %v1974
        %2007 = vmatprep.subr.bf16.mxu0 0
        %2008 = vmatpush1.bf16.msra.mxu0 %v1973
        %2009 = vmatprep.subr.bf16.mxu0 0
        %2010 = vmatpush1.bf16.msra.mxu0 %v1972
        %2011 = vmatprep.subr.bf16.mxu0 0
        %2012 = vmatpush1.bf16.msra.mxu0 %v1971
        %2013 = vmatprep.subr.bf16.mxu0 0
        %2014 = vmatpush1.bf16.msra.mxu0 %v1970
        %2015 = vmatprep.subr.bf16.mxu0 0
        %2016 = vmatpush1.bf16.msra.mxu0 %v1969
        %2017 = vmatprep.subr.bf16.mxu0 0
        %2018 = vmatpush2.bf16.msra.mxu0 %v1984
        %2019 = vmatprep.subr.bf16.mxu0 0
        %2020 = vmatpush2.bf16.msra.mxu0 %v1983
        %2021 = vmatprep.subr.bf16.mxu0 0
        %2022 = vmatpush2.bf16.msra.mxu0 %v1982
        %2023 = vmatprep.subr.bf16.mxu0 0
        %2024 = vmatpush2.bf16.msra.mxu0 %v1981
        %2025 = vmatprep.subr.bf16.mxu0 0
        %2026 = vmatpush2.bf16.msra.mxu0 %v1980
        %2027 = vmatprep.subr.bf16.mxu0 0
        %2028 = vmatpush2.bf16.msra.mxu0 %v1979
        %2029 = vmatprep.subr.bf16.mxu0 0
        %2030 = vmatpush2.bf16.msra.mxu0 %v1978
        %2031 = vmatprep.subr.bf16.mxu0 0
        %2032 = vmatpush2.bf16.msra.mxu0 %v1977
        %2033 = vmatprep.mubr.bf16.mxu0 %v1865
        %2034 = vmatmul.mubr.bf16.gmra.mxu0 %v1864
        %v2035 = vpop.f32.mrf.mxu0
        %v2036 = vadd.f32 %v1903, %v2035
        %v2037 = vpop.f32.mrf.mxu0
        %v2038 = vpop.f32.mrf.mxu0
        %v2039 = vadd.f32 %v1903, %v2038
        %v2040 = vpop.f32.mrf.mxu0
        %2041 = vdwg.mxu0
        %v2042 = vadd.f32 %v1706, %v2036
        %v2043 = vadd.f32 %v1707, %v2039
        %v2044 = vld [vmem:[%s15] sm:$0x1]
        %v2045 = vld [vmem:[%s16] sm:$0x1]
        %2046 = vadd.xlane.f32.xlu0 %v2042
        %v2047 = vpop.xlane.xlu0 %2046
        %v2048 = vsel %vm1668, %v2043, 0.0
        %2049 = vadd.xlane.f32.xlu0 %v2048
        %v2050 = vpop.xlane.xlu0 %2049
        %v2051 = vmul.f32 %v2047, %v1672
        %v2052 = vmul.f32 %v2050, %v1672
        %v2053 = vsub.f32 %v2042, %v2051
        %v2054 = vsub.f32 %v2043, %v2052
        %v2055 = vmul.f32 %v2053, %v2053
        %v2056 = vmul.f32 %v2054, %v2054
        %2057 = vadd.xlane.f32.xlu0 %v2055
        %v2058 = vpop.xlane.xlu0 %2057
        %v2059 = vsel %vm1668, %v2056, 0.0
        %2060 = vadd.xlane.f32.xlu0 %v2059
        %v2061 = vpop.xlane.xlu0 %2060
        %v2062 = vmul.f32 %v2058, %v1672
        %v2063 = vmul.f32 %v2061, %v1672
        %v2064 = vadd.f32 %v2062, 1e-05
        %v2065 = vadd.f32 %v2063, 1e-05
        %v2066 = vrsqrt.pop %v2064
        %v2067 = vrsqrt.pop %v2065
        %v2068 = vmul.f32 %v2053, %v2066
        %v2069 = vmul.f32 %v2054, %v2067
        %v2071 = vlaneseq
        %v2072 = vshrl.u32 %v2071, 7
        %v2073 = vsub.s32 0, %v2072
        %v2074 = vrot.slane %v2044, %v2073
        %v2076 = vmul.f32 %v2068, %v2074
        %v2077 = vmul.f32 %v2069, %v2074
        %v2079 = vlaneseq
        %v2080 = vshrl.u32 %v2079, 7
        %v2081 = vsub.s32 0, %v2080
        %v2082 = vrot.slane %v2045, %v2081
        %v2084 = vadd.f32 %v2076, %v2082
        %v2085 = vadd.f32 %v2077, %v2082
        %v2086 = vpack.c.bf16 %v2084, %v2084
        %v2087 = vpack.c.bf16 %v2085, %v2084
        %s2088 = scalar_lea.vmem [#allocation2], 64
        %v2089 = vld [vmem:[%s2088] sm:$0xf]
        %v2090 = vld [vmem:[%s2088 + $0x4] sm:$0xf]
        %v2091 = vld [vmem:[%s2088 + $0x8] sm:$0xf]
        %v2092 = vld [vmem:[%s2088 + $0xc] sm:$0xf]
        %v2093 = vld [vmem:[%s2088 + $0x10] sm:$0xf]
        %v2094 = vld [vmem:[%s2088 + $0x14] sm:$0xf]
        %v2095 = vld [vmem:[%s2088 + $0x18] sm:$0xf]
        %v2096 = vld [vmem:[%s2088 + $0x1c] sm:$0xf]
        %v2097 = vld [vmem:[%s2088 + $0x20] sm:$0xf]
        %v2098 = vld [vmem:[%s2088 + $0x24] sm:$0xf]
        %v2099 = vld [vmem:[%s2088 + $0x28] sm:$0xf]
        %v2100 = vld [vmem:[%s2088 + $0x2c] sm:$0xf]
        %v2101 = vld [vmem:[%s2088 + $0x30] sm:$0xf]
        %v2102 = vld [vmem:[%s2088 + $0x34] sm:$0xf]
        %v2103 = vld [vmem:[%s2088 + $0x38] sm:$0xf]
        %v2104 = vld [vmem:[%s2088 + $0x3c] sm:$0xf]
        %s2105 = scalar_lea.vmem %s4, 1
        %v2106 = vld [vmem:[%s2105] sm:$0x1]
        %v2123 = vunpack.c.l.b16 %v2089
        %v2124 = vunpack.c.l.b16 %v2090
        %v2125 = vunpack.c.l.b16 %v2091
        %v2126 = vunpack.c.l.b16 %v2092
        %v2127 = vunpack.c.l.b16 %v2093
        %v2128 = vunpack.c.l.b16 %v2094
        %v2129 = vunpack.c.l.b16 %v2095
        %v2130 = vunpack.c.l.b16 %v2096
        %v2131 = vunpack.c.l.b16 %v2097
        %v2132 = vunpack.c.l.b16 %v2098
        %v2133 = vunpack.c.l.b16 %v2099
        %v2134 = vunpack.c.l.b16 %v2100
        %v2135 = vunpack.c.l.b16 %v2101
        %v2136 = vunpack.c.l.b16 %v2102
        %v2137 = vunpack.c.l.b16 %v2103
        %v2138 = vunpack.c.l.b16 %v2104
        %v2139 = vpack.c.b16 %v2124, %v2123
        %v2140 = vpack.c.b16 %v2126, %v2125
        %v2141 = vpack.c.b16 %v2128, %v2127
        %v2142 = vpack.c.b16 %v2130, %v2129
        %v2143 = vpack.c.b16 %v2132, %v2131
        %v2144 = vpack.c.b16 %v2134, %v2133
        %v2145 = vpack.c.b16 %v2136, %v2135
        %v2146 = vpack.c.b16 %v2138, %v2137
        %2155 = vmatprep.subr.bf16.mxu0 0
        %2156 = vmatpush1.bf16.msra.mxu0 %v2146
        %2157 = vmatprep.subr.bf16.mxu0 0
        %2158 = vmatpush1.bf16.msra.mxu0 %v2145
        %2159 = vmatprep.subr.bf16.mxu0 0
        %2160 = vmatpush1.bf16.msra.mxu0 %v2144
        %2161 = vmatprep.subr.bf16.mxu0 0
        %2162 = vmatpush1.bf16.msra.mxu0 %v2143
        %2163 = vmatprep.subr.bf16.mxu0 0
        %2164 = vmatpush1.bf16.msra.mxu0 %v2142
        %2165 = vmatprep.subr.bf16.mxu0 0
        %2166 = vmatpush1.bf16.msra.mxu0 %v2141
        %2167 = vmatprep.subr.bf16.mxu0 0
        %2168 = vmatpush1.bf16.msra.mxu0 %v2140
        %2169 = vmatprep.subr.bf16.mxu0 0
        %2170 = vmatpush1.bf16.msra.mxu0 %v2139
        %2171 = vmatprep.subr.bf16.mxu0 0
        %2172 = vmatpush2.bf16.msra.mxu0 0
        %2173 = vmatprep.subr.bf16.mxu0 0
        %2174 = vmatpush2.bf16.msra.mxu0 0
        %2175 = vmatprep.subr.bf16.mxu0 0
        %2176 = vmatpush2.bf16.msra.mxu0 0
        %2177 = vmatprep.subr.bf16.mxu0 0
        %2178 = vmatpush2.bf16.msra.mxu0 0
        %2179 = vmatprep.subr.bf16.mxu0 0
        %2180 = vmatpush2.bf16.msra.mxu0 0
        %2181 = vmatprep.subr.bf16.mxu0 0
        %2182 = vmatpush2.bf16.msra.mxu0 0
        %2183 = vmatprep.subr.bf16.mxu0 0
        %2184 = vmatpush2.bf16.msra.mxu0 0
        %2185 = vmatprep.subr.bf16.mxu0 0
        %2186 = vmatpush2.bf16.msra.mxu0 0
        %2187 = vmatprep.mubr.bf16.mxu0 0
        %2188 = vmatmul.mubr.bf16.gmra.mxu0 %v2086
        %v2189 = vpop.f32.mrf.mxu0
        %v2190 = vadd.f32 %v2106, %v2189
        %v2191 = vpop.f32.mrf.mxu0
        %v2192 = vpop.f32.mrf.mxu0
        %v2193 = vpop.f32.mrf.mxu0
        %2194 = vdwg.mxu0
        %s2195 = scalar_lea.vmem [#allocation5], 64
        %v2196 = vld [vmem:[%s2195] sm:$0xf]
        %v2197 = vld [vmem:[%s2195 + $0x4] sm:$0xf]
        %v2198 = vld [vmem:[%s2195 + $0x8] sm:$0xf]
        %v2199 = vld [vmem:[%s2195 + $0xc] sm:$0xf]
        %v2200 = vld [vmem:[%s2195 + $0x10] sm:$0xf]
        %v2201 = vld [vmem:[%s2195 + $0x14] sm:$0xf]
        %v2202 = vld [vmem:[%s2195 + $0x18] sm:$0xf]
        %v2203 = vld [vmem:[%s2195 + $0x1c] sm:$0xf]
        %v2204 = vld [vmem:[%s2195 + $0x20] sm:$0xf]
        %v2205 = vld [vmem:[%s2195 + $0x24] sm:$0xf]
        %v2206 = vld [vmem:[%s2195 + $0x28] sm:$0xf]
        %v2207 = vld [vmem:[%s2195 + $0x2c] sm:$0xf]
        %v2208 = vld [vmem:[%s2195 + $0x30] sm:$0xf]
        %v2209 = vld [vmem:[%s2195 + $0x34] sm:$0xf]
        %v2210 = vld [vmem:[%s2195 + $0x38] sm:$0xf]
        %v2211 = vld [vmem:[%s2195 + $0x3c] sm:$0xf]
        %s2212 = scalar_lea.vmem %s5, 1
        %v2213 = vld [vmem:[%s2212] sm:$0x1]
        %v2215 = vlaneseq
        %v2216 = vshrl.u32 %v2215, 7
        %v2217 = vsub.s32 0, %v2216
        %v2218 = vrot.slane %v2213, %v2217
        %v2236 = vunpack.c.l.b16 %v2196
        %v2237 = vunpack.c.l.b16 %v2197
        %v2238 = vunpack.c.l.b16 %v2198
        %v2239 = vunpack.c.l.b16 %v2199
        %v2240 = vunpack.c.l.b16 %v2200
        %v2241 = vunpack.c.l.b16 %v2201
        %v2242 = vunpack.c.l.b16 %v2202
        %v2243 = vunpack.c.l.b16 %v2203
        %v2244 = vunpack.c.l.b16 %v2204
        %v2245 = vunpack.c.l.b16 %v2205
        %v2246 = vunpack.c.l.b16 %v2206
        %v2247 = vunpack.c.l.b16 %v2207
        %v2248 = vunpack.c.l.b16 %v2208
        %v2249 = vunpack.c.l.b16 %v2209
        %v2250 = vunpack.c.l.b16 %v2210
        %v2251 = vunpack.c.l.b16 %v2211
        %v2252 = vpack.c.b16 %v2237, %v2236
        %v2253 = vpack.c.b16 %v2239, %v2238
        %v2254 = vpack.c.b16 %v2241, %v2240
        %v2255 = vpack.c.b16 %v2243, %v2242
        %v2256 = vpack.c.b16 %v2245, %v2244
        %v2257 = vpack.c.b16 %v2247, %v2246
        %v2258 = vpack.c.b16 %v2249, %v2248
        %v2259 = vpack.c.b16 %v2251, %v2250
        %2268 = vmatprep.subr.bf16.mxu0 0
        %2269 = vmatpush1.bf16.msra.mxu0 %v2259
        %2270 = vmatprep.subr.bf16.mxu0 0
        %2271 = vmatpush1.bf16.msra.mxu0 %v2258
        %2272 = vmatprep.subr.bf16.mxu0 0
        %2273 = vmatpush1.bf16.msra.mxu0 %v2257
        %2274 = vmatprep.subr.bf16.mxu0 0
        %2275 = vmatpush1.bf16.msra.mxu0 %v2256
        %2276 = vmatprep.subr.bf16.mxu0 0
        %2277 = vmatpush1.bf16.msra.mxu0 %v2255
        %2278 = vmatprep.subr.bf16.mxu0 0
        %2279 = vmatpush1.bf16.msra.mxu0 %v2254
        %2280 = vmatprep.subr.bf16.mxu0 0
        %2281 = vmatpush1.bf16.msra.mxu0 %v2253
        %2282 = vmatprep.subr.bf16.mxu0 0
        %2283 = vmatpush1.bf16.msra.mxu0 %v2252
        %2284 = vmatprep.subr.bf16.mxu0 0
        %2285 = vmatpush2.bf16.msra.mxu0 0
        %2286 = vmatprep.subr.bf16.mxu0 0
        %2287 = vmatpush2.bf16.msra.mxu0 0
        %2288 = vmatprep.subr.bf16.mxu0 0
        %2289 = vmatpush2.bf16.msra.mxu0 0
        %2290 = vmatprep.subr.bf16.mxu0 0
        %2291 = vmatpush2.bf16.msra.mxu0 0
        %2292 = vmatprep.subr.bf16.mxu0 0
        %2293 = vmatpush2.bf16.msra.mxu0 0
        %2294 = vmatprep.subr.bf16.mxu0 0
        %2295 = vmatpush2.bf16.msra.mxu0 0
        %2296 = vmatprep.subr.bf16.mxu0 0
        %2297 = vmatpush2.bf16.msra.mxu0 0
        %2298 = vmatprep.subr.bf16.mxu0 0
        %2299 = vmatpush2.bf16.msra.mxu0 0
        %2300 = vmatprep.mubr.bf16.mxu0 0
        %2301 = vmatmul.mubr.bf16.gmra.mxu0 %v2087
        %v2302 = vpop.f32.mrf.mxu0
        %v2303 = vadd.f32 %v2218, %v2302
        %v2304 = vpop.f32.mrf.mxu0
        %v2305 = vpop.f32.mrf.mxu0
        %v2306 = vadd.f32 %v2218, %v2305
        %v2307 = vpop.f32.mrf.mxu0
        %2308 = vdwg.mxu0
        %s2309 = scalar_lea.vmem [#allocation7], 64
        %v2310 = vld [vmem:[%s2309] sm:$0xf]
        %v2311 = vld [vmem:[%s2309 + $0x4] sm:$0xf]
        %v2312 = vld [vmem:[%s2309 + $0x8] sm:$0xf]
        %v2313 = vld [vmem:[%s2309 + $0xc] sm:$0xf]
        %v2314 = vld [vmem:[%s2309 + $0x10] sm:$0xf]
        %v2315 = vld [vmem:[%s2309 + $0x14] sm:$0xf]
        %v2316 = vld [vmem:[%s2309 + $0x18] sm:$0xf]
        %v2317 = vld [vmem:[%s2309 + $0x1c] sm:$0xf]
        %v2318 = vld [vmem:[%s2309 + $0x20] sm:$0xf]
        %v2319 = vld [vmem:[%s2309 + $0x24] sm:$0xf]
        %v2320 = vld [vmem:[%s2309 + $0x28] sm:$0xf]
        %v2321 = vld [vmem:[%s2309 + $0x2c] sm:$0xf]
        %v2322 = vld [vmem:[%s2309 + $0x30] sm:$0xf]
        %v2323 = vld [vmem:[%s2309 + $0x34] sm:$0xf]
        %v2324 = vld [vmem:[%s2309 + $0x38] sm:$0xf]
        %v2325 = vld [vmem:[%s2309 + $0x3c] sm:$0xf]
        %s2326 = scalar_lea.vmem %s6, 1
        %v2327 = vld [vmem:[%s2326] sm:$0x1]
        %v2329 = vlaneseq
        %v2330 = vshrl.u32 %v2329, 7
        %v2331 = vsub.s32 0, %v2330
        %v2332 = vrot.slane %v2327, %v2331
        %v2350 = vunpack.c.l.b16 %v2310
        %v2351 = vunpack.c.l.b16 %v2311
        %v2352 = vunpack.c.l.b16 %v2312
        %v2353 = vunpack.c.l.b16 %v2313
        %v2354 = vunpack.c.l.b16 %v2314
        %v2355 = vunpack.c.l.b16 %v2315
        %v2356 = vunpack.c.l.b16 %v2316
        %v2357 = vunpack.c.l.b16 %v2317
        %v2358 = vunpack.c.l.b16 %v2318
        %v2359 = vunpack.c.l.b16 %v2319
        %v2360 = vunpack.c.l.b16 %v2320
        %v2361 = vunpack.c.l.b16 %v2321
        %v2362 = vunpack.c.l.b16 %v2322
        %v2363 = vunpack.c.l.b16 %v2323
        %v2364 = vunpack.c.l.b16 %v2324
        %v2365 = vunpack.c.l.b16 %v2325
        %v2366 = vpack.c.b16 %v2351, %v2350
        %v2367 = vpack.c.b16 %v2353, %v2352
        %v2368 = vpack.c.b16 %v2355, %v2354
        %v2369 = vpack.c.b16 %v2357, %v2356
        %v2370 = vpack.c.b16 %v2359, %v2358
        %v2371 = vpack.c.b16 %v2361, %v2360
        %v2372 = vpack.c.b16 %v2363, %v2362
        %v2373 = vpack.c.b16 %v2365, %v2364
        %2382 = vmatprep.subr.bf16.mxu0 0
        %2383 = vmatpush1.bf16.msra.mxu0 %v2373
        %2384 = vmatprep.subr.bf16.mxu0 0
        %2385 = vmatpush1.bf16.msra.mxu0 %v2372
        %2386 = vmatprep.subr.bf16.mxu0 0
        %2387 = vmatpush1.bf16.msra.mxu0 %v2371
        %2388 = vmatprep.subr.bf16.mxu0 0
        %2389 = vmatpush1.bf16.msra.mxu0 %v2370
        %2390 = vmatprep.subr.bf16.mxu0 0
        %2391 = vmatpush1.bf16.msra.mxu0 %v2369
        %2392 = vmatprep.subr.bf16.mxu0 0
        %2393 = vmatpush1.bf16.msra.mxu0 %v2368
        %2394 = vmatprep.subr.bf16.mxu0 0
        %2395 = vmatpush1.bf16.msra.mxu0 %v2367
        %2396 = vmatprep.subr.bf16.mxu0 0
        %2397 = vmatpush1.bf16.msra.mxu0 %v2366
        %2398 = vmatprep.subr.bf16.mxu0 0
        %2399 = vmatpush2.bf16.msra.mxu0 0
        %2400 = vmatprep.subr.bf16.mxu0 0
        %2401 = vmatpush2.bf16.msra.mxu0 0
        %2402 = vmatprep.subr.bf16.mxu0 0
        %2403 = vmatpush2.bf16.msra.mxu0 0
        %2404 = vmatprep.subr.bf16.mxu0 0
        %2405 = vmatpush2.bf16.msra.mxu0 0
        %2406 = vmatprep.subr.bf16.mxu0 0
        %2407 = vmatpush2.bf16.msra.mxu0 0
        %2408 = vmatprep.subr.bf16.mxu0 0
        %2409 = vmatpush2.bf16.msra.mxu0 0
        %2410 = vmatprep.subr.bf16.mxu0 0
        %2411 = vmatpush2.bf16.msra.mxu0 0
        %2412 = vmatprep.subr.bf16.mxu0 0
        %2413 = vmatpush2.bf16.msra.mxu0 0
        %2414 = vmatprep.mubr.bf16.mxu0 0
        %2415 = vmatmul.mubr.bf16.gmra.mxu0 %v2087
        %v2416 = vpop.f32.mrf.mxu0
        %v2417 = vadd.f32 %v2332, %v2416
        %v2418 = vpop.f32.mrf.mxu0
        %v2419 = vpop.f32.mrf.mxu0
        %v2420 = vadd.f32 %v2332, %v2419
        %v2421 = vpop.f32.mrf.mxu0
        %2422 = vdwg.mxu0
        %v2423 = vpack.c.bf16 %v2190, %v2190
        %v2424 = vpack.c.bf16 %v2306, %v2303
        %v2425 = vpack.c.bf16 %v2420, %v2417
        %v2427 = vsel %vm1031, %v2423, 0
        %v2430 = vsel %vm1031, %v2424, 0
        %2432 = vmatprep.subr.bf16.mxu0 0
        %2433 = vmatpush1.bf16.xpose.msra.mxu0 0
        %2434 = vmatprep.subr.bf16.mxu0 0
        %2435 = vmatpush1.bf16.xpose.msra.mxu0 0
        %2436 = vmatprep.subr.bf16.mxu0 0
        %2437 = vmatpush1.bf16.xpose.msra.mxu0 0
        %2438 = vmatprep.subr.bf16.mxu0 0
        %2439 = vmatpush1.bf16.xpose.msra.mxu0 0
        %2440 = vmatprep.subr.bf16.mxu0 0
        %2441 = vmatpush1.bf16.xpose.msra.mxu0 0
        %2442 = vmatprep.subr.bf16.mxu0 0
        %2443 = vmatpush1.bf16.xpose.msra.mxu0 0
        %2444 = vmatprep.subr.bf16.mxu0 0
        %2445 = vmatpush1.bf16.xpose.msra.mxu0 0
        %2446 = vmatprep.subr.bf16.mxu0 0
        %2447 = vmatpush1.bf16.xpose.msra.mxu0 %v2430
        %2448 = vmatprep.subr.bf16.mxu0 0
        %2449 = vmatpush2.bf16.xpose.msra.mxu0 0
        %2450 = vmatprep.subr.bf16.mxu0 0
        %2451 = vmatpush2.bf16.xpose.msra.mxu0 0
        %2452 = vmatprep.subr.bf16.mxu0 0
        %2453 = vmatpush2.bf16.xpose.msra.mxu0 0
        %2454 = vmatprep.subr.bf16.mxu0 0
        %2455 = vmatpush2.bf16.xpose.msra.mxu0 0
        %2456 = vmatprep.subr.bf16.mxu0 0
        %2457 = vmatpush2.bf16.xpose.msra.mxu0 0
        %2458 = vmatprep.subr.bf16.mxu0 0
        %2459 = vmatpush2.bf16.xpose.msra.mxu0 0
        %2460 = vmatprep.subr.bf16.mxu0 0
        %2461 = vmatpush2.bf16.xpose.msra.mxu0 0
        %2462 = vmatprep.subr.bf16.mxu0 0
        %2463 = vmatpush2.bf16.xpose.msra.mxu0 0
        %2464 = vmatprep.mubr.bf16.mxu0 0
        %2465 = vmatmul.mubr.bf16.gmra.mxu0 %v2427
        %v2466 = vpop.f32.mrf.mxu0
        %v2467 = vadd.f32 0.0, %v2466
        %v2468 = vpop.f32.mrf.mxu0
        %v2469 = vpop.f32.mrf.mxu0
        %v2470 = vpop.f32.mrf.mxu0
        %2471 = vdwg.mxu0
        %v2472 = vsel %vm1083, %v2467, -inf
        %2473 = vmax.xlane.f32.xlu0 %v2472
        %v2474 = vpop.xlane.xlu0 %2473
        %v2475 = vsub.f32 %v2467, %v2474
        %v2476 = vmul.f32 %v2475, 1.442695
        %v2477 = vpow.pop %v2476
        %v2478 = vsel %vm1083, %v2477, 0.0
        %2479 = vadd.xlane.f32.xlu0 %v2478
        %v2480 = vpop.xlane.xlu0 %2479
        %v2481 = vrcp.pop %v2480
        %v2482 = vmul.f32 %v2477, %v2481
        %v2483 = vpack.c.bf16 %v2482, %v2482
        %v2485 = vsel %vm1079, %v2483, 0
        %v2488 = vand.u32 %v2425, %v1110
        %2490 = vmatprep.subr.bf16.mxu0 0
        %2491 = vmatpush1.bf16.msra.mxu0 0
        %2492 = vmatprep.subr.bf16.mxu0 0
        %2493 = vmatpush1.bf16.msra.mxu0 0
        %2494 = vmatprep.subr.bf16.mxu0 0
        %2495 = vmatpush1.bf16.msra.mxu0 0
        %2496 = vmatprep.subr.bf16.mxu0 0
        %2497 = vmatpush1.bf16.msra.mxu0 0
        %2498 = vmatprep.subr.bf16.mxu0 0
        %2499 = vmatpush1.bf16.msra.mxu0 0
        %2500 = vmatprep.subr.bf16.mxu0 0
        %2501 = vmatpush1.bf16.msra.mxu0 0
        %2502 = vmatprep.subr.bf16.mxu0 0
        %2503 = vmatpush1.bf16.msra.mxu0 0
        %2504 = vmatprep.subr.bf16.mxu0 0
        %2505 = vmatpush1.bf16.msra.mxu0 %v2488
        %2506 = vmatprep.subr.bf16.mxu0 0
        %2507 = vmatpush2.bf16.msra.mxu0 0
        %2508 = vmatprep.subr.bf16.mxu0 0
        %2509 = vmatpush2.bf16.msra.mxu0 0
        %2510 = vmatprep.subr.bf16.mxu0 0
        %2511 = vmatpush2.bf16.msra.mxu0 0
        %2512 = vmatprep.subr.bf16.mxu0 0
        %2513 = vmatpush2.bf16.msra.mxu0 0
        %2514 = vmatprep.subr.bf16.mxu0 0
        %2515 = vmatpush2.bf16.msra.mxu0 0
        %2516 = vmatprep.subr.bf16.mxu0 0
        %2517 = vmatpush2.bf16.msra.mxu0 0
        %2518 = vmatprep.subr.bf16.mxu0 0
        %2519 = vmatpush2.bf16.msra.mxu0 0
        %2520 = vmatprep.subr.bf16.mxu0 0
        %2521 = vmatpush2.bf16.msra.mxu0 0
        %2522 = vmatprep.mubr.bf16.mxu0 0
        %2523 = vmatmul.mubr.bf16.gmra.mxu0 %v2485
        %v2524 = vpop.f32.mrf.mxu0
        %v2525 = vadd.f32 0.0, %v2524
        %v2526 = vpop.f32.mrf.mxu0
        %v2527 = vpop.f32.mrf.mxu0
        %v2528 = vpop.f32.mrf.mxu0
        %2529 = vdwg.mxu0
        %v2530 = vpack.c.bf16 %v2525, %v2525
        %2532 = vrot.lane.b32.xlu0 %v2423, 96
        %v2533 = vpop.permute.xlu0 %2532
        %2535 = vrot.lane.b32.xlu0 %v2424, 96
        %v2536 = vpop.permute.xlu0 %2535
        %v2538 = vsel %vm1031, %v2533, 0
        %v2541 = vsel %vm1031, %v2536, 0
        %2543 = vmatprep.subr.bf16.mxu0 0
        %2544 = vmatpush1.bf16.xpose.msra.mxu0 0
        %2545 = vmatprep.subr.bf16.mxu0 0
        %2546 = vmatpush1.bf16.xpose.msra.mxu0 0
        %2547 = vmatprep.subr.bf16.mxu0 0
        %2548 = vmatpush1.bf16.xpose.msra.mxu0 0
        %2549 = vmatprep.subr.bf16.mxu0 0
        %2550 = vmatpush1.bf16.xpose.msra.mxu0 0
        %2551 = vmatprep.subr.bf16.mxu0 0
        %2552 = vmatpush1.bf16.xpose.msra.mxu0 0
        %2553 = vmatprep.subr.bf16.mxu0 0
        %2554 = vmatpush1.bf16.xpose.msra.mxu0 0
        %2555 = vmatprep.subr.bf16.mxu0 0
        %2556 = vmatpush1.bf16.xpose.msra.mxu0 0
        %2557 = vmatprep.subr.bf16.mxu0 0
        %2558 = vmatpush1.bf16.xpose.msra.mxu0 %v2541
        %2559 = vmatprep.subr.bf16.mxu0 0
        %2560 = vmatpush2.bf16.xpose.msra.mxu0 0
        %2561 = vmatprep.subr.bf16.mxu0 0
        %2562 = vmatpush2.bf16.xpose.msra.mxu0 0
        %2563 = vmatprep.subr.bf16.mxu0 0
        %2564 = vmatpush2.bf16.xpose.msra.mxu0 0
        %2565 = vmatprep.subr.bf16.mxu0 0
        %2566 = vmatpush2.bf16.xpose.msra.mxu0 0
        %2567 = vmatprep.subr.bf16.mxu0 0
        %2568 = vmatpush2.bf16.xpose.msra.mxu0 0
        %2569 = vmatprep.subr.bf16.mxu0 0
        %2570 = vmatpush2.bf16.xpose.msra.mxu0 0
        %2571 = vmatprep.subr.bf16.mxu0 0
        %2572 = vmatpush2.bf16.xpose.msra.mxu0 0
        %2573 = vmatprep.subr.bf16.mxu0 0
        %2574 = vmatpush2.bf16.xpose.msra.mxu0 0
        %2575 = vmatprep.mubr.bf16.mxu0 0
        %2576 = vmatmul.mubr.bf16.gmra.mxu0 %v2538
        %v2577 = vpop.f32.mrf.mxu0
        %v2578 = vadd.f32 0.0, %v2577
        %v2579 = vpop.f32.mrf.mxu0
        %v2580 = vpop.f32.mrf.mxu0
        %v2581 = vpop.f32.mrf.mxu0
        %2582 = vdwg.mxu0
        %v2583 = vsel %vm1083, %v2578, -inf
        %2584 = vmax.xlane.f32.xlu0 %v2583
        %v2585 = vpop.xlane.xlu0 %2584
        %v2586 = vsub.f32 %v2578, %v2585
        %v2587 = vmul.f32 %v2586, 1.442695
        %v2588 = vpow.pop %v2587
        %v2589 = vsel %vm1083, %v2588, 0.0
        %2590 = vadd.xlane.f32.xlu0 %v2589
        %v2591 = vpop.xlane.xlu0 %2590
        %v2592 = vrcp.pop %v2591
        %v2593 = vmul.f32 %v2588, %v2592
        %v2594 = vpack.c.bf16 %v2593, %v2593
        %2596 = vrot.lane.b32.xlu0 %v2425, 96
        %v2597 = vpop.permute.xlu0 %2596
        %v2599 = vsel %vm1079, %v2594, 0
        %v2602 = vand.u32 %v2597, %v1110
        %2604 = vmatprep.subr.bf16.mxu0 0
        %2605 = vmatpush1.bf16.msra.mxu0 0
        %2606 = vmatprep.subr.bf16.mxu0 0
        %2607 = vmatpush1.bf16.msra.mxu0 0
        %2608 = vmatprep.subr.bf16.mxu0 0
        %2609 = vmatpush1.bf16.msra.mxu0 0
        %2610 = vmatprep.subr.bf16.mxu0 0
        %2611 = vmatpush1.bf16.msra.mxu0 0
        %2612 = vmatprep.subr.bf16.mxu0 0
        %2613 = vmatpush1.bf16.msra.mxu0 0
        %2614 = vmatprep.subr.bf16.mxu0 0
        %2615 = vmatpush1.bf16.msra.mxu0 0
        %2616 = vmatprep.subr.bf16.mxu0 0
        %2617 = vmatpush1.bf16.msra.mxu0 0
        %2618 = vmatprep.subr.bf16.mxu0 0
        %2619 = vmatpush1.bf16.msra.mxu0 %v2602
        %2620 = vmatprep.subr.bf16.mxu0 0
        %2621 = vmatpush2.bf16.msra.mxu0 0
        %2622 = vmatprep.subr.bf16.mxu0 0
        %2623 = vmatpush2.bf16.msra.mxu0 0
        %2624 = vmatprep.subr.bf16.mxu0 0
        %2625 = vmatpush2.bf16.msra.mxu0 0
        %2626 = vmatprep.subr.bf16.mxu0 0
        %2627 = vmatpush2.bf16.msra.mxu0 0
        %2628 = vmatprep.subr.bf16.mxu0 0
        %2629 = vmatpush2.bf16.msra.mxu0 0
        %2630 = vmatprep.subr.bf16.mxu0 0
        %2631 = vmatpush2.bf16.msra.mxu0 0
        %2632 = vmatprep.subr.bf16.mxu0 0
        %2633 = vmatpush2.bf16.msra.mxu0 0
        %2634 = vmatprep.subr.bf16.mxu0 0
        %2635 = vmatpush2.bf16.msra.mxu0 0
        %2636 = vmatprep.mubr.bf16.mxu0 0
        %2637 = vmatmul.mubr.bf16.gmra.mxu0 %v2599
        %v2638 = vpop.f32.mrf.mxu0
        %v2639 = vadd.f32 0.0, %v2638
        %v2640 = vpop.f32.mrf.mxu0
        %v2641 = vpop.f32.mrf.mxu0
        %v2642 = vpop.f32.mrf.mxu0
        %2643 = vdwg.mxu0
        %v2644 = vpack.c.bf16 %v2639, %v2639
        %2645 = vrot.lane.b32.xlu0 %v2423, 64
        %v2646 = vpop.permute.xlu0 %2645
        %2647 = vrot.lane.b32.xlu0 %v2424, 64
        %v2648 = vpop.permute.xlu0 %2647
        %v2650 = vsel %vm1031, %v2646, 0
        %v2653 = vsel %vm1031, %v2648, 0
        %2655 = vmatprep.subr.bf16.mxu0 0
        %2656 = vmatpush1.bf16.xpose.msra.mxu0 0
        %2657 = vmatprep.subr.bf16.mxu0 0
        %2658 = vmatpush1.bf16.xpose.msra.mxu0 0
        %2659 = vmatprep.subr.bf16.mxu0 0
        %2660 = vmatpush1.bf16.xpose.msra.mxu0 0
        %2661 = vmatprep.subr.bf16.mxu0 0
        %2662 = vmatpush1.bf16.xpose.msra.mxu0 0
        %2663 = vmatprep.subr.bf16.mxu0 0
        %2664 = vmatpush1.bf16.xpose.msra.mxu0 0
        %2665 = vmatprep.subr.bf16.mxu0 0
        %2666 = vmatpush1.bf16.xpose.msra.mxu0 0
        %2667 = vmatprep.subr.bf16.mxu0 0
        %2668 = vmatpush1.bf16.xpose.msra.mxu0 0
        %2669 = vmatprep.subr.bf16.mxu0 0
        %2670 = vmatpush1.bf16.xpose.msra.mxu0 %v2653
        %2671 = vmatprep.subr.bf16.mxu0 0
        %2672 = vmatpush2.bf16.xpose.msra.mxu0 0
        %2673 = vmatprep.subr.bf16.mxu0 0
        %2674 = vmatpush2.bf16.xpose.msra.mxu0 0
        %2675 = vmatprep.subr.bf16.mxu0 0
        %2676 = vmatpush2.bf16.xpose.msra.mxu0 0
        %2677 = vmatprep.subr.bf16.mxu0 0
        %2678 = vmatpush2.bf16.xpose.msra.mxu0 0
        %2679 = vmatprep.subr.bf16.mxu0 0
        %2680 = vmatpush2.bf16.xpose.msra.mxu0 0
        %2681 = vmatprep.subr.bf16.mxu0 0
        %2682 = vmatpush2.bf16.xpose.msra.mxu0 0
        %2683 = vmatprep.subr.bf16.mxu0 0
        %2684 = vmatpush2.bf16.xpose.msra.mxu0 0
        %2685 = vmatprep.subr.bf16.mxu0 0
        %2686 = vmatpush2.bf16.xpose.msra.mxu0 0
        %2687 = vmatprep.mubr.bf16.mxu0 0
        %2688 = vmatmul.mubr.bf16.gmra.mxu0 %v2650
        %v2689 = vpop.f32.mrf.mxu0
        %v2690 = vadd.f32 0.0, %v2689
        %v2691 = vpop.f32.mrf.mxu0
        %v2692 = vpop.f32.mrf.mxu0
        %v2693 = vpop.f32.mrf.mxu0
        %2694 = vdwg.mxu0
        %v2695 = vsel %vm1083, %v2690, -inf
        %2696 = vmax.xlane.f32.xlu0 %v2695
        %v2697 = vpop.xlane.xlu0 %2696
        %v2698 = vsub.f32 %v2690, %v2697
        %v2699 = vmul.f32 %v2698, 1.442695
        %v2700 = vpow.pop %v2699
        %v2701 = vsel %vm1083, %v2700, 0.0
        %2702 = vadd.xlane.f32.xlu0 %v2701
        %v2703 = vpop.xlane.xlu0 %2702
        %v2704 = vrcp.pop %v2703
        %v2705 = vmul.f32 %v2700, %v2704
        %v2706 = vpack.c.bf16 %v2705, %v2705
        %2707 = vrot.lane.b32.xlu0 %v2425, 64
        %v2708 = vpop.permute.xlu0 %2707
        %v2710 = vsel %vm1079, %v2706, 0
        %v2713 = vand.u32 %v2708, %v1110
        %2715 = vmatprep.subr.bf16.mxu0 0
        %2716 = vmatpush1.bf16.msra.mxu0 0
        %2717 = vmatprep.subr.bf16.mxu0 0
        %2718 = vmatpush1.bf16.msra.mxu0 0
        %2719 = vmatprep.subr.bf16.mxu0 0
        %2720 = vmatpush1.bf16.msra.mxu0 0
        %2721 = vmatprep.subr.bf16.mxu0 0
        %2722 = vmatpush1.bf16.msra.mxu0 0
        %2723 = vmatprep.subr.bf16.mxu0 0
        %2724 = vmatpush1.bf16.msra.mxu0 0
        %2725 = vmatprep.subr.bf16.mxu0 0
        %2726 = vmatpush1.bf16.msra.mxu0 0
        %2727 = vmatprep.subr.bf16.mxu0 0
        %2728 = vmatpush1.bf16.msra.mxu0 0
        %2729 = vmatprep.subr.bf16.mxu0 0
        %2730 = vmatpush1.bf16.msra.mxu0 %v2713
        %2731 = vmatprep.subr.bf16.mxu0 0
        %2732 = vmatpush2.bf16.msra.mxu0 0
        %2733 = vmatprep.subr.bf16.mxu0 0
        %2734 = vmatpush2.bf16.msra.mxu0 0
        %2735 = vmatprep.subr.bf16.mxu0 0
        %2736 = vmatpush2.bf16.msra.mxu0 0
        %2737 = vmatprep.subr.bf16.mxu0 0
        %2738 = vmatpush2.bf16.msra.mxu0 0
        %2739 = vmatprep.subr.bf16.mxu0 0
        %2740 = vmatpush2.bf16.msra.mxu0 0
        %2741 = vmatprep.subr.bf16.mxu0 0
        %2742 = vmatpush2.bf16.msra.mxu0 0
        %2743 = vmatprep.subr.bf16.mxu0 0
        %2744 = vmatpush2.bf16.msra.mxu0 0
        %2745 = vmatprep.subr.bf16.mxu0 0
        %2746 = vmatpush2.bf16.msra.mxu0 0
        %2747 = vmatprep.mubr.bf16.mxu0 0
        %2748 = vmatmul.mubr.bf16.gmra.mxu0 %v2710
        %v2749 = vpop.f32.mrf.mxu0
        %v2750 = vadd.f32 0.0, %v2749
        %v2751 = vpop.f32.mrf.mxu0
        %v2752 = vpop.f32.mrf.mxu0
        %v2753 = vpop.f32.mrf.mxu0
        %2754 = vdwg.mxu0
        %v2755 = vpack.c.bf16 %v2750, %v2750
        %2756 = vrot.lane.b32.xlu0 %v2423, 32
        %v2757 = vpop.permute.xlu0 %2756
        %2758 = vrot.lane.b32.xlu0 %v2424, 32
        %v2759 = vpop.permute.xlu0 %2758
        %v2761 = vsel %vm1031, %v2757, 0
        %v2764 = vsel %vm1031, %v2759, 0
        %2766 = vmatprep.subr.bf16.mxu0 0
        %2767 = vmatpush1.bf16.xpose.msra.mxu0 0
        %2768 = vmatprep.subr.bf16.mxu0 0
        %2769 = vmatpush1.bf16.xpose.msra.mxu0 0
        %2770 = vmatprep.subr.bf16.mxu0 0
        %2771 = vmatpush1.bf16.xpose.msra.mxu0 0
        %2772 = vmatprep.subr.bf16.mxu0 0
        %2773 = vmatpush1.bf16.xpose.msra.mxu0 0
        %2774 = vmatprep.subr.bf16.mxu0 0
        %2775 = vmatpush1.bf16.xpose.msra.mxu0 0
        %2776 = vmatprep.subr.bf16.mxu0 0
        %2777 = vmatpush1.bf16.xpose.msra.mxu0 0
        %2778 = vmatprep.subr.bf16.mxu0 0
        %2779 = vmatpush1.bf16.xpose.msra.mxu0 0
        %2780 = vmatprep.subr.bf16.mxu0 0
        %2781 = vmatpush1.bf16.xpose.msra.mxu0 %v2764
        %2782 = vmatprep.subr.bf16.mxu0 0
        %2783 = vmatpush2.bf16.xpose.msra.mxu0 0
        %2784 = vmatprep.subr.bf16.mxu0 0
        %2785 = vmatpush2.bf16.xpose.msra.mxu0 0
        %2786 = vmatprep.subr.bf16.mxu0 0
        %2787 = vmatpush2.bf16.xpose.msra.mxu0 0
        %2788 = vmatprep.subr.bf16.mxu0 0
        %2789 = vmatpush2.bf16.xpose.msra.mxu0 0
        %2790 = vmatprep.subr.bf16.mxu0 0
        %2791 = vmatpush2.bf16.xpose.msra.mxu0 0
        %2792 = vmatprep.subr.bf16.mxu0 0
        %2793 = vmatpush2.bf16.xpose.msra.mxu0 0
        %2794 = vmatprep.subr.bf16.mxu0 0
        %2795 = vmatpush2.bf16.xpose.msra.mxu0 0
        %2796 = vmatprep.subr.bf16.mxu0 0
        %2797 = vmatpush2.bf16.xpose.msra.mxu0 0
        %2798 = vmatprep.mubr.bf16.mxu0 0
        %2799 = vmatmul.mubr.bf16.gmra.mxu0 %v2761
        %v2800 = vpop.f32.mrf.mxu0
        %v2801 = vadd.f32 0.0, %v2800
        %v2802 = vpop.f32.mrf.mxu0
        %v2803 = vpop.f32.mrf.mxu0
        %v2804 = vpop.f32.mrf.mxu0
        %2805 = vdwg.mxu0
        %v2806 = vsel %vm1083, %v2801, -inf
        %2807 = vmax.xlane.f32.xlu0 %v2806
        %v2808 = vpop.xlane.xlu0 %2807
        %v2809 = vsub.f32 %v2801, %v2808
        %v2810 = vmul.f32 %v2809, 1.442695
        %v2811 = vpow.pop %v2810
        %v2812 = vsel %vm1083, %v2811, 0.0
        %2813 = vadd.xlane.f32.xlu0 %v2812
        %v2814 = vpop.xlane.xlu0 %2813
        %v2815 = vrcp.pop %v2814
        %v2816 = vmul.f32 %v2811, %v2815
        %v2817 = vpack.c.bf16 %v2816, %v2816
        %2818 = vrot.lane.b32.xlu0 %v2425, 32
        %v2819 = vpop.permute.xlu0 %2818
        %v2821 = vsel %vm1079, %v2817, 0
        %v2824 = vand.u32 %v2819, %v1110
        %2826 = vmatprep.subr.bf16.mxu0 0
        %2827 = vmatpush1.bf16.msra.mxu0 0
        %2828 = vmatprep.subr.bf16.mxu0 0
        %2829 = vmatpush1.bf16.msra.mxu0 0
        %2830 = vmatprep.subr.bf16.mxu0 0
        %2831 = vmatpush1.bf16.msra.mxu0 0
        %2832 = vmatprep.subr.bf16.mxu0 0
        %2833 = vmatpush1.bf16.msra.mxu0 0
        %2834 = vmatprep.subr.bf16.mxu0 0
        %2835 = vmatpush1.bf16.msra.mxu0 0
        %2836 = vmatprep.subr.bf16.mxu0 0
        %2837 = vmatpush1.bf16.msra.mxu0 0
        %2838 = vmatprep.subr.bf16.mxu0 0
        %2839 = vmatpush1.bf16.msra.mxu0 0
        %2840 = vmatprep.subr.bf16.mxu0 0
        %2841 = vmatpush1.bf16.msra.mxu0 %v2824
        %2842 = vmatprep.subr.bf16.mxu0 0
        %2843 = vmatpush2.bf16.msra.mxu0 0
        %2844 = vmatprep.subr.bf16.mxu0 0
        %2845 = vmatpush2.bf16.msra.mxu0 0
        %2846 = vmatprep.subr.bf16.mxu0 0
        %2847 = vmatpush2.bf16.msra.mxu0 0
        %2848 = vmatprep.subr.bf16.mxu0 0
        %2849 = vmatpush2.bf16.msra.mxu0 0
        %2850 = vmatprep.subr.bf16.mxu0 0
        %2851 = vmatpush2.bf16.msra.mxu0 0
        %2852 = vmatprep.subr.bf16.mxu0 0
        %2853 = vmatpush2.bf16.msra.mxu0 0
        %2854 = vmatprep.subr.bf16.mxu0 0
        %2855 = vmatpush2.bf16.msra.mxu0 0
        %2856 = vmatprep.subr.bf16.mxu0 0
        %2857 = vmatpush2.bf16.msra.mxu0 0
        %2858 = vmatprep.mubr.bf16.mxu0 0
        %2859 = vmatmul.mubr.bf16.gmra.mxu0 %v2821
        %v2860 = vpop.f32.mrf.mxu0
        %v2861 = vadd.f32 0.0, %v2860
        %v2862 = vpop.f32.mrf.mxu0
        %v2863 = vpop.f32.mrf.mxu0
        %v2864 = vpop.f32.mrf.mxu0
        %2865 = vdwg.mxu0
        %v2866 = vpack.c.bf16 %v2861, %v2861
        %2868 = vrot.lane.b32.xlu0 %v2644, 32
        %v2869 = vpop.permute.xlu0 %2868
        %2871 = vrot.lane.b32.xlu0 %v2755, 64
        %v2872 = vpop.permute.xlu0 %2871
        %2874 = vrot.lane.b32.xlu0 %v2866, 96
        %v2875 = vpop.permute.xlu0 %2874
        %v2878 = vsel %vm1031, %v2530, %v2869
        %v2880 = vsel %vm1543, %v2878, %v2872
        %v2882 = vsel %vm1546, %v2880, %v2875
        %s2884 = scalar_lea.vmem [#allocation8], 64
        %v2885 = vld [vmem:[%s2884] sm:$0xf]
        %v2886 = vld [vmem:[%s2884 + $0x4] sm:$0xf]
        %v2887 = vld [vmem:[%s2884 + $0x8] sm:$0xf]
        %v2888 = vld [vmem:[%s2884 + $0xc] sm:$0xf]
        %v2889 = vld [vmem:[%s2884 + $0x10] sm:$0xf]
        %v2890 = vld [vmem:[%s2884 + $0x14] sm:$0xf]
        %v2891 = vld [vmem:[%s2884 + $0x18] sm:$0xf]
        %v2892 = vld [vmem:[%s2884 + $0x1c] sm:$0xf]
        %v2893 = vld [vmem:[%s2884 + $0x20] sm:$0xf]
        %v2894 = vld [vmem:[%s2884 + $0x24] sm:$0xf]
        %v2895 = vld [vmem:[%s2884 + $0x28] sm:$0xf]
        %v2896 = vld [vmem:[%s2884 + $0x2c] sm:$0xf]
        %v2897 = vld [vmem:[%s2884 + $0x30] sm:$0xf]
        %v2898 = vld [vmem:[%s2884 + $0x34] sm:$0xf]
        %v2899 = vld [vmem:[%s2884 + $0x38] sm:$0xf]
        %v2900 = vld [vmem:[%s2884 + $0x3c] sm:$0xf]
        %s2901 = scalar_lea.vmem %s8, 1
        %v2902 = vld [vmem:[%s2901] sm:$0x1]
        %v2919 = vunpack.c.l.b16 %v2885
        %v2920 = vunpack.c.l.b16 %v2886
        %v2921 = vunpack.c.l.b16 %v2887
        %v2922 = vunpack.c.l.b16 %v2888
        %v2923 = vunpack.c.l.b16 %v2889
        %v2924 = vunpack.c.l.b16 %v2890
        %v2925 = vunpack.c.l.b16 %v2891
        %v2926 = vunpack.c.l.b16 %v2892
        %v2927 = vunpack.c.l.b16 %v2893
        %v2928 = vunpack.c.l.b16 %v2894
        %v2929 = vunpack.c.l.b16 %v2895
        %v2930 = vunpack.c.l.b16 %v2896
        %v2931 = vunpack.c.l.b16 %v2897
        %v2932 = vunpack.c.l.b16 %v2898
        %v2933 = vunpack.c.l.b16 %v2899
        %v2934 = vunpack.c.l.b16 %v2900
        %v2935 = vpack.c.b16 %v2920, %v2919
        %v2936 = vpack.c.b16 %v2922, %v2921
        %v2937 = vpack.c.b16 %v2924, %v2923
        %v2938 = vpack.c.b16 %v2926, %v2925
        %v2939 = vpack.c.b16 %v2928, %v2927
        %v2940 = vpack.c.b16 %v2930, %v2929
        %v2941 = vpack.c.b16 %v2932, %v2931
        %v2942 = vpack.c.b16 %v2934, %v2933
        %2951 = vmatprep.subr.bf16.mxu0 0
        %2952 = vmatpush1.bf16.msra.mxu0 %v2942
        %2953 = vmatprep.subr.bf16.mxu0 0
        %2954 = vmatpush1.bf16.msra.mxu0 %v2941
        %2955 = vmatprep.subr.bf16.mxu0 0
        %2956 = vmatpush1.bf16.msra.mxu0 %v2940
        %2957 = vmatprep.subr.bf16.mxu0 0
        %2958 = vmatpush1.bf16.msra.mxu0 %v2939
        %2959 = vmatprep.subr.bf16.mxu0 0
        %2960 = vmatpush1.bf16.msra.mxu0 %v2938
        %2961 = vmatprep.subr.bf16.mxu0 0
        %2962 = vmatpush1.bf16.msra.mxu0 %v2937
        %2963 = vmatprep.subr.bf16.mxu0 0
        %2964 = vmatpush1.bf16.msra.mxu0 %v2936
        %2965 = vmatprep.subr.bf16.mxu0 0
        %2966 = vmatpush1.bf16.msra.mxu0 %v2935
        %2967 = vmatprep.subr.bf16.mxu0 0
        %2968 = vmatpush2.bf16.msra.mxu0 0
        %2969 = vmatprep.subr.bf16.mxu0 0
        %2970 = vmatpush2.bf16.msra.mxu0 0
        %2971 = vmatprep.subr.bf16.mxu0 0
        %2972 = vmatpush2.bf16.msra.mxu0 0
        %2973 = vmatprep.subr.bf16.mxu0 0
        %2974 = vmatpush2.bf16.msra.mxu0 0
        %2975 = vmatprep.subr.bf16.mxu0 0
        %2976 = vmatpush2.bf16.msra.mxu0 0
        %2977 = vmatprep.subr.bf16.mxu0 0
        %2978 = vmatpush2.bf16.msra.mxu0 0
        %2979 = vmatprep.subr.bf16.mxu0 0
        %2980 = vmatpush2.bf16.msra.mxu0 0
        %2981 = vmatprep.subr.bf16.mxu0 0
        %2982 = vmatpush2.bf16.msra.mxu0 0
        %2983 = vmatprep.mubr.bf16.mxu0 0
        %2984 = vmatmul.mubr.bf16.gmra.mxu0 %v2882
        %v2985 = vpop.f32.mrf.mxu0
        %v2986 = vadd.f32 %v2902, %v2985
        %v2987 = vpop.f32.mrf.mxu0
        %v2988 = vpop.f32.mrf.mxu0
        %v2989 = vpop.f32.mrf.mxu0
        %2990 = vdwg.mxu0
        %v2991 = vadd.f32 %v2084, %v2986
        %s2992 = scalar_lea.vmem %s13, 1
        %v2993 = vld [vmem:[%s2992] sm:$0x1]
        %s2994 = scalar_lea.vmem %s14, 1
        %v2995 = vld [vmem:[%s2994] sm:$0x1]
        %v2996 = vsel %vm1668, %v2991, 0.0
        %2997 = vadd.xlane.f32.xlu0 %v2996
        %v2998 = vpop.xlane.xlu0 %2997
        %v2999 = vmul.f32 %v2998, %v1672
        %v3000 = vsub.f32 %v2991, %v2999
        %v3001 = vmul.f32 %v3000, %v3000
        %v3002 = vsel %vm1668, %v3001, 0.0
        %3003 = vadd.xlane.f32.xlu0 %v3002
        %v3004 = vpop.xlane.xlu0 %3003
        %v3005 = vmul.f32 %v3004, %v1672
        %v3006 = vadd.f32 %v3005, 1e-05
        %v3007 = vrsqrt.pop %v3006
        %v3008 = vmul.f32 %v3000, %v3007
        %v3009 = vmul.f32 %v3008, %v2993
        %v3010 = vadd.f32 %v3009, %v2995
        %v3011 = vpack.c.bf16 %v3010, %v3010
        %s3012 = scalar_lea.vmem [#allocation10], 128
        %v3013 = vld [vmem:[%s3012] sm:$0xff]
        %v3014 = vld [vmem:[%s3012 + $0x8] sm:$0xff]
        %v3015 = vld [vmem:[%s3012 + $0x10] sm:$0xff]
        %v3016 = vld [vmem:[%s3012 + $0x18] sm:$0xff]
        %v3017 = vld [vmem:[%s3012 + $0x20] sm:$0xff]
        %v3018 = vld [vmem:[%s3012 + $0x28] sm:$0xff]
        %v3019 = vld [vmem:[%s3012 + $0x30] sm:$0xff]
        %v3020 = vld [vmem:[%s3012 + $0x38] sm:$0xff]
        %v3021 = vld [vmem:[%s3012 + $0x40] sm:$0xff]
        %v3022 = vld [vmem:[%s3012 + $0x48] sm:$0xff]
        %v3023 = vld [vmem:[%s3012 + $0x50] sm:$0xff]
        %v3024 = vld [vmem:[%s3012 + $0x58] sm:$0xff]
        %v3025 = vld [vmem:[%s3012 + $0x60] sm:$0xff]
        %v3026 = vld [vmem:[%s3012 + $0x68] sm:$0xff]
        %v3027 = vld [vmem:[%s3012 + $0x70] sm:$0xff]
        %v3028 = vld [vmem:[%s3012 + $0x78] sm:$0xff]
        %s3029 = scalar_lea.vmem %s10, 2
        %v3030 = vld [vmem:[%s3029] sm:$0x3]
        %v3047 = vunpack.c.l.b16 %v3013
        %v3048 = vunpack.c.h.b16 %v3013
        %v3049 = vunpack.c.l.b16 %v3014
        %v3050 = vunpack.c.h.b16 %v3014
        %v3051 = vunpack.c.l.b16 %v3015
        %v3052 = vunpack.c.h.b16 %v3015
        %v3053 = vunpack.c.l.b16 %v3016
        %v3054 = vunpack.c.h.b16 %v3016
        %v3055 = vunpack.c.l.b16 %v3017
        %v3056 = vunpack.c.h.b16 %v3017
        %v3057 = vunpack.c.l.b16 %v3018
        %v3058 = vunpack.c.h.b16 %v3018
        %v3059 = vunpack.c.l.b16 %v3019
        %v3060 = vunpack.c.h.b16 %v3019
        %v3061 = vunpack.c.l.b16 %v3020
        %v3062 = vunpack.c.h.b16 %v3020
        %v3063 = vunpack.c.l.b16 %v3021
        %v3064 = vunpack.c.h.b16 %v3021
        %v3065 = vunpack.c.l.b16 %v3022
        %v3066 = vunpack.c.h.b16 %v3022
        %v3067 = vunpack.c.l.b16 %v3023
        %v3068 = vunpack.c.h.b16 %v3023
        %v3069 = vunpack.c.l.b16 %v3024
        %v3070 = vunpack.c.h.b16 %v3024
        %v3071 = vunpack.c.l.b16 %v3025
        %v3072 = vunpack.c.h.b16 %v3025
        %v3073 = vunpack.c.l.b16 %v3026
        %v3074 = vunpack.c.h.b16 %v3026
        %v3075 = vunpack.c.l.b16 %v3027
        %v3076 = vunpack.c.h.b16 %v3027
        %v3077 = vunpack.c.l.b16 %v3028
        %v3078 = vunpack.c.h.b16 %v3028
        %v3079 = vpack.c.b16 %v3049, %v3047
        %v3080 = vpack.c.b16 %v3050, %v3048
        %v3081 = vpack.c.b16 %v3053, %v3051
        %v3082 = vpack.c.b16 %v3054, %v3052
        %v3083 = vpack.c.b16 %v3057, %v3055
        %v3084 = vpack.c.b16 %v3058, %v3056
        %v3085 = vpack.c.b16 %v3061, %v3059
        %v3086 = vpack.c.b16 %v3062, %v3060
        %v3087 = vpack.c.b16 %v3065, %v3063
        %v3088 = vpack.c.b16 %v3066, %v3064
        %v3089 = vpack.c.b16 %v3069, %v3067
        %v3090 = vpack.c.b16 %v3070, %v3068
        %v3091 = vpack.c.b16 %v3073, %v3071
        %v3092 = vpack.c.b16 %v3074, %v3072
        %v3093 = vpack.c.b16 %v3077, %v3075
        %v3094 = vpack.c.b16 %v3078, %v3076
        %v3112 = vlaneseq
        %v3113 = vshrl.u32 %v3112, 7
        %v3114 = vsub.s32 0, %v3113
        %v3115 = vrot.slane %v3030, %v3114
        %v3116 = vlaneseq
        %v3117 = vshrl.u32 %v3116, 7
        %v3118 = vsub.s32 1, %v3117
        %v3119 = vrot.slane %v3030, %v3118
        %3122 = vmatprep.subr.bf16.mxu0 %v3094
        %3123 = vmatpush1.bf16.msra.mxu0 %v3093
        %3124 = vmatprep.subr.bf16.mxu0 %v3092
        %3125 = vmatpush1.bf16.msra.mxu0 %v3091
        %3126 = vmatprep.subr.bf16.mxu0 %v3090
        %3127 = vmatpush1.bf16.msra.mxu0 %v3089
        %3128 = vmatprep.subr.bf16.mxu0 %v3088
        %3129 = vmatpush1.bf16.msra.mxu0 %v3087
        %3130 = vmatprep.subr.bf16.mxu0 %v3086
        %3131 = vmatpush1.bf16.msra.mxu0 %v3085
        %3132 = vmatprep.subr.bf16.mxu0 %v3084
        %3133 = vmatpush1.bf16.msra.mxu0 %v3083
        %3134 = vmatprep.subr.bf16.mxu0 %v3082
        %3135 = vmatpush1.bf16.msra.mxu0 %v3081
        %3136 = vmatprep.subr.bf16.mxu0 %v3080
        %3137 = vmatpush1.bf16.msra.mxu0 %v3079
        %3138 = vmatprep.subr.bf16.mxu0 0
        %3139 = vmatpush2.bf16.msra.mxu0 0
        %3140 = vmatprep.subr.bf16.mxu0 0
        %3141 = vmatpush2.bf16.msra.mxu0 0
        %3142 = vmatprep.subr.bf16.mxu0 0
        %3143 = vmatpush2.bf16.msra.mxu0 0
        %3144 = vmatprep.subr.bf16.mxu0 0
        %3145 = vmatpush2.bf16.msra.mxu0 0
        %3146 = vmatprep.subr.bf16.mxu0 0
        %3147 = vmatpush2.bf16.msra.mxu0 0
        %3148 = vmatprep.subr.bf16.mxu0 0
        %3149 = vmatpush2.bf16.msra.mxu0 0
        %3150 = vmatprep.subr.bf16.mxu0 0
        %3151 = vmatpush2.bf16.msra.mxu0 0
        %3152 = vmatprep.subr.bf16.mxu0 0
        %3153 = vmatpush2.bf16.msra.mxu0 0
        %3154 = vmatprep.mubr.bf16.mxu0 0
        %3155 = vmatmul.mubr.bf16.gmra.mxu0 %v3011
        %v3156 = vpop.f32.mrf.mxu0
        %v3157 = vadd.f32 %v3115, %v3156
        %v3158 = vpop.f32.mrf.mxu0
        %v3159 = vadd.f32 %v3119, %v3158
        %v3160 = vpop.f32.mrf.mxu0
        %v3161 = vpop.f32.mrf.mxu0
        %3162 = vdwg.mxu0
        %v3163 = vmax.f32 %v3157, 0.0
        %v3164 = vmax.f32 %v3159, 0.0
        %v3165 = vpack.c.bf16 %v3163, %v3163
        %v3166 = vpack.c.bf16 %v3164, %v3164
        %s3167 = scalar_lea.vmem [#allocation11], 128
        %v3168 = vld [vmem:[%s3167] sm:$0xf]
        %v3169 = vld [vmem:[%s3167 + $0x4] sm:$0xf]
        %v3170 = vld [vmem:[%s3167 + $0x8] sm:$0xf]
        %v3171 = vld [vmem:[%s3167 + $0xc] sm:$0xf]
        %v3172 = vld [vmem:[%s3167 + $0x10] sm:$0xf]
        %v3173 = vld [vmem:[%s3167 + $0x14] sm:$0xf]
        %v3174 = vld [vmem:[%s3167 + $0x18] sm:$0xf]
        %v3175 = vld [vmem:[%s3167 + $0x1c] sm:$0xf]
        %v3176 = vld [vmem:[%s3167 + $0x20] sm:$0xf]
        %v3177 = vld [vmem:[%s3167 + $0x24] sm:$0xf]
        %v3178 = vld [vmem:[%s3167 + $0x28] sm:$0xf]
        %v3179 = vld [vmem:[%s3167 + $0x2c] sm:$0xf]
        %v3180 = vld [vmem:[%s3167 + $0x30] sm:$0xf]
        %v3181 = vld [vmem:[%s3167 + $0x34] sm:$0xf]
        %v3182 = vld [vmem:[%s3167 + $0x38] sm:$0xf]
        %v3183 = vld [vmem:[%s3167 + $0x3c] sm:$0xf]
        %v3184 = vld [vmem:[%s3167 + $0x40] sm:$0xf]
        %v3185 = vld [vmem:[%s3167 + $0x44] sm:$0xf]
        %v3186 = vld [vmem:[%s3167 + $0x48] sm:$0xf]
        %v3187 = vld [vmem:[%s3167 + $0x4c] sm:$0xf]
        %v3188 = vld [vmem:[%s3167 + $0x50] sm:$0xf]
        %v3189 = vld [vmem:[%s3167 + $0x54] sm:$0xf]
        %v3190 = vld [vmem:[%s3167 + $0x58] sm:$0xf]
        %v3191 = vld [vmem:[%s3167 + $0x5c] sm:$0xf]
        %v3192 = vld [vmem:[%s3167 + $0x60] sm:$0xf]
        %v3193 = vld [vmem:[%s3167 + $0x64] sm:$0xf]
        %v3194 = vld [vmem:[%s3167 + $0x68] sm:$0xf]
        %v3195 = vld [vmem:[%s3167 + $0x6c] sm:$0xf]
        %v3196 = vld [vmem:[%s3167 + $0x70] sm:$0xf]
        %v3197 = vld [vmem:[%s3167 + $0x74] sm:$0xf]
        %v3198 = vld [vmem:[%s3167 + $0x78] sm:$0xf]
        %v3199 = vld [vmem:[%s3167 + $0x7c] sm:$0xf]
        %s3200 = scalar_lea.vmem %s12, 1
        %v3201 = vld [vmem:[%s3200] sm:$0x1]
        %v3234 = vunpack.c.l.b16 %v3168
        %v3235 = vunpack.c.l.b16 %v3169
        %v3236 = vunpack.c.l.b16 %v3170
        %v3237 = vunpack.c.l.b16 %v3171
        %v3238 = vunpack.c.l.b16 %v3172
        %v3239 = vunpack.c.l.b16 %v3173
        %v3240 = vunpack.c.l.b16 %v3174
        %v3241 = vunpack.c.l.b16 %v3175
        %v3242 = vunpack.c.l.b16 %v3176
        %v3243 = vunpack.c.l.b16 %v3177
        %v3244 = vunpack.c.l.b16 %v3178
        %v3245 = vunpack.c.l.b16 %v3179
        %v3246 = vunpack.c.l.b16 %v3180
        %v3247 = vunpack.c.l.b16 %v3181
        %v3248 = vunpack.c.l.b16 %v3182
        %v3249 = vunpack.c.l.b16 %v3183
        %v3250 = vunpack.c.l.b16 %v3184
        %v3251 = vunpack.c.l.b16 %v3185
        %v3252 = vunpack.c.l.b16 %v3186
        %v3253 = vunpack.c.l.b16 %v3187
        %v3254 = vunpack.c.l.b16 %v3188
        %v3255 = vunpack.c.l.b16 %v3189
        %v3256 = vunpack.c.l.b16 %v3190
        %v3257 = vunpack.c.l.b16 %v3191
        %v3258 = vunpack.c.l.b16 %v3192
        %v3259 = vunpack.c.l.b16 %v3193
        %v3260 = vunpack.c.l.b16 %v3194
        %v3261 = vunpack.c.l.b16 %v3195
        %v3262 = vunpack.c.l.b16 %v3196
        %v3263 = vunpack.c.l.b16 %v3197
        %v3264 = vunpack.c.l.b16 %v3198
        %v3265 = vunpack.c.l.b16 %v3199
        %v3266 = vpack.c.b16 %v3235, %v3234
        %v3267 = vpack.c.b16 %v3237, %v3236
        %v3268 = vpack.c.b16 %v3239, %v3238
        %v3269 = vpack.c.b16 %v3241, %v3240
        %v3270 = vpack.c.b16 %v3243, %v3242
        %v3271 = vpack.c.b16 %v3245, %v3244
        %v3272 = vpack.c.b16 %v3247, %v3246
        %v3273 = vpack.c.b16 %v3249, %v3248
        %v3274 = vpack.c.b16 %v3251, %v3250
        %v3275 = vpack.c.b16 %v3253, %v3252
        %v3276 = vpack.c.b16 %v3255, %v3254
        %v3277 = vpack.c.b16 %v3257, %v3256
        %v3278 = vpack.c.b16 %v3259, %v3258
        %v3279 = vpack.c.b16 %v3261, %v3260
        %v3280 = vpack.c.b16 %v3263, %v3262
        %v3281 = vpack.c.b16 %v3265, %v3264
        %3298 = vmatprep.subr.bf16.mxu0 0
        %3299 = vmatpush1.bf16.msra.mxu0 %v3273
        %3300 = vmatprep.subr.bf16.mxu0 0
        %3301 = vmatpush1.bf16.msra.mxu0 %v3272
        %3302 = vmatprep.subr.bf16.mxu0 0
        %3303 = vmatpush1.bf16.msra.mxu0 %v3271
        %3304 = vmatprep.subr.bf16.mxu0 0
        %3305 = vmatpush1.bf16.msra.mxu0 %v3270
        %3306 = vmatprep.subr.bf16.mxu0 0
        %3307 = vmatpush1.bf16.msra.mxu0 %v3269
        %3308 = vmatprep.subr.bf16.mxu0 0
        %3309 = vmatpush1.bf16.msra.mxu0 %v3268
        %3310 = vmatprep.subr.bf16.mxu0 0
        %3311 = vmatpush1.bf16.msra.mxu0 %v3267
        %3312 = vmatprep.subr.bf16.mxu0 0
        %3313 = vmatpush1.bf16.msra.mxu0 %v3266
        %3314 = vmatprep.subr.bf16.mxu0 0
        %3315 = vmatpush2.bf16.msra.mxu0 %v3281
        %3316 = vmatprep.subr.bf16.mxu0 0
        %3317 = vmatpush2.bf16.msra.mxu0 %v3280
        %3318 = vmatprep.subr.bf16.mxu0 0
        %3319 = vmatpush2.bf16.msra.mxu0 %v3279
        %3320 = vmatprep.subr.bf16.mxu0 0
        %3321 = vmatpush2.bf16.msra.mxu0 %v3278
        %3322 = vmatprep.subr.bf16.mxu0 0
        %3323 = vmatpush2.bf16.msra.mxu0 %v3277
        %3324 = vmatprep.subr.bf16.mxu0 0
        %3325 = vmatpush2.bf16.msra.mxu0 %v3276
        %3326 = vmatprep.subr.bf16.mxu0 0
        %3327 = vmatpush2.bf16.msra.mxu0 %v3275
        %3328 = vmatprep.subr.bf16.mxu0 0
        %3329 = vmatpush2.bf16.msra.mxu0 %v3274
        %3330 = vmatprep.mubr.bf16.mxu0 %v3166
        %3331 = vmatmul.mubr.bf16.gmra.mxu0 %v3165
        %v3332 = vpop.f32.mrf.mxu0
        %v3333 = vadd.f32 %v3201, %v3332
        %v3334 = vpop.f32.mrf.mxu0
        %v3335 = vpop.f32.mrf.mxu0
        %v3336 = vpop.f32.mrf.mxu0
        %3337 = vdwg.mxu0
        %v3338 = vadd.f32 %v3010, %v3333
        %s3339 = scalar_lea.vmem %s15, 1
        %v3340 = vld [vmem:[%s3339] sm:$0x1]
        %s3341 = scalar_lea.vmem %s16, 1
        %v3342 = vld [vmem:[%s3341] sm:$0x1]
        %v3343 = vsel %vm1668, %v3338, 0.0
        %3344 = vadd.xlane.f32.xlu0 %v3343
        %v3345 = vpop.xlane.xlu0 %3344
        %v3346 = vmul.f32 %v3345, %v1672
        %v3347 = vsub.f32 %v3338, %v3346
        %v3348 = vmul.f32 %v3347, %v3347
        %v3349 = vsel %vm1668, %v3348, 0.0
        %3350 = vadd.xlane.f32.xlu0 %v3349
        %v3351 = vpop.xlane.xlu0 %3350
        %v3352 = vmul.f32 %v3351, %v1672
        %v3353 = vadd.f32 %v3352, 1e-05
        %v3354 = vrsqrt.pop %v3353
        %v3355 = vmul.f32 %v3347, %v3354
        %v3356 = vmul.f32 %v3355, %v3340
        %v3357 = vadd.f32 %v3356, %v3342
        %v3358 = vld [vmem:[%s17] sm:$0x1]
        %v3359 = vmul.f32 %v3357, %v3358
        %v3360 = vld [vmem:[%s18] sm:$0x1]
        %v3361 = vadd.f32 %v3359, %v3360
        %3362 = vst [vmem:[%s682] sm:$0x1] %v3361
        %s3363 = sand.u32 %s449, 1
        %s3364 = scalar_lea.sflag [#allocation4], %s3363
        %s3365 = sand.u32 %s449, 1
        %s3366 = scalar_lea.vmem [#allocation13], %s3365
        // Predicated region
        $region121: #{tpu_custom_call.1} parent=95 // pred_check
          %p3367 = pneg %p459
        $region122: #{tpu_custom_call.1} parent=95 // pred_check_branch
          %3369 = sbr.rel (%p3367) target = $region124
        $region123: #{tpu_custom_call.1} parent=95 // pred_region
          %s3371 = ssub.s32 16, 16
          %3372 = vsyncadd %s3364, %s3371
          %s3373 = smul.addr %s37, 16
          %s3374 = scalar_lea.hbm %s19, %s3373
          %s3376 = sshll.u32 %s3366, 4
          %s3377 = int_to_ptr.vmem [resolvable:$true] %s3376
          %3379 = dma.vmem_to_hbm [thread:$0]  %s3377, 16, %s3374, %s3364
        $region124: #{tpu_custom_call.1} parent=95 // pred_fallthru
          _
      $region96: #{tpu_custom_call.1} parent=5 // pred_fallthru
        _
      %p3380 = scmp.le.s32.totalorder 2, %s32
      // Predicated region
      $region125: #{tpu_custom_call.1} parent=5 // pred_check
        %p3381 = pneg %p3380
      $region126: #{tpu_custom_call.1} parent=5 // pred_check_branch
        %3383 = sbr.rel (%p3381) target = $region128
      $region127: #{tpu_custom_call.1} parent=5 // pred_region
        %s3384 = ssub.s32 %s32, 2
        // Predicated region
        $region129: #{tpu_custom_call.1} parent=127 // pred_check
          %p3385 = pneg %p465
        $region130: #{tpu_custom_call.1} parent=127 // pred_check_branch
          %3387 = sbr.rel (%p3385) target = $region132
        $region131: #{tpu_custom_call.1} parent=127 // pred_region
          %s3388 = sand.u32 %s450, 1
          %s3389 = scalar_lea.sflag [#allocation4], %s3388
          %s3390 = sand.u32 %s450, 1
          %s3391 = scalar_lea.vmem [#allocation13], %s3390
          %3392 = dma.done %s3389, 16
        $region132: #{tpu_custom_call.1} parent=127 // pred_fallthru
          _
      $region128: #{tpu_custom_call.1} parent=5 // pred_fallthru
        _
    $region6: #{tpu_custom_call.1} parent=1 // loop_footer
      %s36 = sadd.s32 1, %s32
    $region7: #{tpu_custom_call.1} parent=1 // loop_footer_branch
      %31 = sbr.rel target = $region3
    $region8: #{tpu_custom_call.1} parent=1 // loop_exit
      _
    %3393 = vsyncpa [#allocation3], 1
    %s3394 = scalar_lea.sflag [#allocation3], 1
    %3395 = vsyncpa %s3394, 1
    %3396 = vsyncpa [#allocation6], 1
    %3397 = vsyncpa [#allocation9], 1
    %3398 = vsyncpa [#allocation12], 1
    %3399 = vsyncpa [#allocation4], 1
    %s3400 = scalar_lea.sflag [#allocation4], 1
    %3401 = vsyncpa %s3400, 1

</llo_original>
